<compile_context>
chip_gen: v5e
topology: v5e:2x2
jax: 0.10.0
libtpu: 0.0.40
codegen_flags: <defaults>
</compile_context>

<pallas_src>
import functools

import jax
import jax.numpy as jnp
from jax import lax
from jax.experimental import pallas as pl
from jax.experimental.pallas import tpu as pltpu


def _round_up(x, m):
    return (x + m - 1) // m * m


def _pick_tile(padded, candidates):
    """Largest candidate that divides the padded extent (padded % 128 == 0)."""
    for c in candidates:
        if padded % c == 0:
            return c
    return 128


# ----------------------------- Pallas kernels ------------------------------


def _fused_matmul_kernel(a_ref, w_ref, bs_ref, o_ref, acc_ref, *, relu):
    """One (bm, bn) tile of relu_opt(A @ W + bias) + shift.

    Grid = (M tiles, N tiles, K tiles); the K axis is last ("arbitrary") and
    accumulated into an f32 VMEM scratch, init/finalized with pl.when.
    bs_ref row 0 = bias, row 1 = shift (stacked: one broadcast operand only).
    """
    @pl.when(pl.program_id(2) == 0)
    def _():
        acc_ref[...] = jnp.zeros_like(acc_ref)

    acc_ref[...] += jnp.dot(a_ref[...], w_ref[...],
                            preferred_element_type=jnp.float32)

    @pl.when(pl.program_id(2) == pl.num_programs(2) - 1)
    def _():
        y = acc_ref[...] + bs_ref[0:1, :]
        if relu:
            y = jnp.maximum(y, 0.0)
        y = y + bs_ref[1:2, :]
        o_ref[...] = y.astype(o_ref.dtype)


def _max3_kernel(a_ref, b_ref, c_ref, o_ref):
    """Elementwise max of three tiles (MaxPool1d(k=3) over gathered taps)."""
    o_ref[...] = jnp.maximum(jnp.maximum(a_ref[...], b_ref[...]), c_ref[...])


# ---------------------------- fused matmul wrapper --------------------------


def fused_matmul(a, w, bias, shift, *, relu, out_dtype=jnp.float32):
    """relu_opt(a @ w + bias) + shift, tiled for the MXU.

    a: [M, K]; w: [K, N]  (both cast to bf16 for the MXU)
    bias, shift: [N] f32 per-output-channel vectors (f32 epilogue).
    Returns [M, N] in out_dtype (padding sliced off).
    """
    M, K = a.shape
    K2, N = w.shape
    assert K == K2

    # Lane-dense / MXU-friendly padded sizes and tile shapes.
    bm = min(256, _round_up(M, 8))
    Mp = _round_up(M, bm)
    Np = _round_up(N, 128)
    Kp = _round_up(K, 128)
    bn = _pick_tile(Np, (512, 384, 256, 128))
    bk = _pick_tile(Kp, (1024, 768, 512, 384, 256, 128))

    a_p = jnp.pad(a.astype(jnp.bfloat16), ((0, Mp - M), (0, Kp - K)))
    w_p = jnp.pad(w.astype(jnp.bfloat16), ((0, Kp - K), (0, Np - N)))
    bs = jnp.zeros((8, Np), jnp.float32)
    bs = bs.at[0, :N].set(bias.astype(jnp.float32))
    bs = bs.at[1, :N].set(shift.astype(jnp.float32))

    out_bytes = Mp * Np * jnp.dtype(out_dtype).itemsize
    grid = (Mp // bm, Np // bn, Kp // bk)
    cost = pl.CostEstimate(
        flops=2 * Mp * Np * Kp,
        transcendentals=0,
        bytes_accessed=2 * Mp * Kp + 2 * Kp * Np + out_bytes + 4 * 8 * Np)

    out = pl.pallas_call(
        functools.partial(_fused_matmul_kernel, relu=relu),
        out_shape=jax.ShapeDtypeStruct((Mp, Np), out_dtype),
        grid_spec=pltpu.PrefetchScalarGridSpec(
            num_scalar_prefetch=0,
            grid=grid,
            in_specs=[
                pl.BlockSpec((bm, bk), lambda i, j, k: (i, k)),
                pl.BlockSpec((bk, bn), lambda i, j, k: (k, j)),
                pl.BlockSpec((8, bn), lambda i, j, k: (0, j)),
            ],
            out_specs=pl.BlockSpec((bm, bn), lambda i, j, k: (i, j)),
            scratch_shapes=[pltpu.VMEM((bm, bn), jnp.float32)],
        ),
        compiler_params=pltpu.CompilerParams(
            dimension_semantics=("parallel", "parallel", "arbitrary"),
            vmem_limit_bytes=32 * 1024 * 1024,
        ),
        cost_estimate=cost,
    )(a_p, w_p, bs)
    return out[:M, :N]


# ------------------------------ conv / pool glue -----------------------------


def _im2col(x_blc, k, stride, pad):
    """x: [B, L, C] -> patches [B, L_out, k*C] (tap-major, channel-minor)."""
    B, L, C = x_blc.shape
    xp = jnp.pad(x_blc, ((0, 0), (pad, pad), (0, 0)))
    L_out = (L + 2 * pad - k) // stride + 1
    cols = [xp[:, j:j + stride * (L_out - 1) + 1:stride, :] for j in range(k)]
    patches = jnp.stack(cols, axis=2)            # [B, L_out, k, C]
    return patches.reshape(B, L_out, k * C)


def conv1d_relu_bn(x_blc, w_eff, b_eff, shift, *, stride, pad):
    """Fused Conv1d + bias + ReLU + BatchNorm(inference affine), channels-last.

    x_blc: [B, L, Cin]; w_eff: [Cout, Cin, K] with BN scale pre-folded.
    Returns [B, L_out, Cout] bf16 (f32 accumulate/epilogue inside the kernel).
    """
    B, L, Cin = x_blc.shape
    Cout, _, K = w_eff.shape
    x16 = x_blc.astype(jnp.bfloat16)             # bf16 operands halve HBM traffic
    if K == 1 and stride == 1 and pad == 0:
        A = x16.reshape(B * L, Cin)              # 1x1 conv: no im2col copy at all
        L_out = L
    else:
        # TODO(synk): true in-kernel im2col (K-tap accumulation) needs
        # element-offset block indexing / manual DMA; host-side bf16 im2col is
        # used for the K>1 convolutions.
        patches = _im2col(x16, K, stride, pad)   # [B, L_out, K*Cin]
        L_out = patches.shape[1]
        A = patches.reshape(B * L_out, K * Cin)
    Wm = jnp.transpose(w_eff, (2, 1, 0)).reshape(K * Cin, Cout)
    out = fused_matmul(A, Wm, b_eff, shift, relu=True, out_dtype=jnp.bfloat16)
    return out.reshape(B, L_out, Cout)


def maxpool1d_k3_s2_p1(x_blc):
    """MaxPool1d(kernel=3, stride=2, padding=1) on channels-last [B, L, C]."""
    B, L, C = x_blc.shape
    dtype = x_blc.dtype
    L_out = (L - 1) // 2 + 1
    Cp = _round_up(C, 128)
    neg = jnp.array(-jnp.inf, dtype)
    xc = jnp.pad(x_blc, ((0, 0), (0, 0), (0, Cp - C)))
    xp = jnp.pad(xc, ((0, 0), (1, 1), (0, 0)), constant_values=neg)
    # Three stride-2 window taps (host/XLA strided views), flattened to rows.
    taps = [xp[:, t:t + 2 * (L_out - 1) + 1:2, :].reshape(B * L_out, Cp)
            for t in range(3)]

    M = B * L_out
    bm = min(512, _round_up(M, 8))
    Mp = _round_up(M, bm)
    taps = [jnp.pad(t_, ((0, Mp - M), (0, 0))) for t_ in taps]
    bc = 256 if Cp % 256 == 0 else 128
    grid = (Mp // bm, Cp // bc)
    nbytes = jnp.dtype(dtype).itemsize
    cost = pl.CostEstimate(flops=2 * Mp * Cp, transcendentals=0,
                           bytes_accessed=4 * nbytes * Mp * Cp)

    out = pl.pallas_call(
        _max3_kernel,
        out_shape=jax.ShapeDtypeStruct((Mp, Cp), dtype),
        grid_spec=pltpu.PrefetchScalarGridSpec(
            num_scalar_prefetch=0,
            grid=grid,
            in_specs=[pl.BlockSpec((bm, bc), lambda i, j: (i, j))] * 3,
            out_specs=pl.BlockSpec((bm, bc), lambda i, j: (i, j)),
        ),
        compiler_params=pltpu.CompilerParams(
            dimension_semantics=("parallel", "parallel"),
            vmem_limit_bytes=32 * 1024 * 1024,
        ),
        cost_estimate=cost,
    )(*taps)
    return out[:M, :C].reshape(B, L_out, C)


# ------------------------------ parameter init -------------------------------


def init_params(key, in_width, in_channels, num_classes):
    """Random parameters matching the PyTorch AlexNet (1-D) layer shapes."""
    eps = 1e-5
    # (cin, cout, K, stride, pad, followed_by_maxpool)
    conv_defs = [
        (in_channels, 96, 11, 4, 5, True),
        (96, 256, 5, 1, 2, True),
        (256, 384, 3, 1, 1, False),
        (384, 384, 1, 1, 0, False),
        (384, 256, 1, 1, 0, True),
    ]
    features = []
    for (cin, cout, k, s, p, pool) in conv_defs:
        key, k1, k2, k3, k4, k5, k6 = jax.random.split(key, 7)
        bound = 1.0 / (cin * k) ** 0.5
        w = jax.random.uniform(k1, (cout, cin, k), jnp.float32, -bound, bound)
        b = jax.random.uniform(k2, (cout,), jnp.float32, -bound, bound)
        # Inference-mode BatchNorm1d statistics / affine (gamma > 0 so the
        # ReLU / scale fold below is valid; PyTorch's default gamma=1 > 0).
        gamma = jax.random.uniform(k3, (cout,), jnp.float32, 0.5, 1.5)
        beta = jax.random.uniform(k4, (cout,), jnp.float32, -0.5, 0.5)
        mean = jax.random.uniform(k5, (cout,), jnp.float32, -0.1, 0.1)
        var = jax.random.uniform(k6, (cout,), jnp.float32, 0.5, 1.5)
        bn_scale = gamma / jnp.sqrt(var + eps)
        bn_shift = beta - mean * bn_scale
        # Fold:  BN(relu(conv + b)) = relu(conv*(w*s) + b*s) + shift   (s > 0)
        w_eff = w * bn_scale[:, None, None]
        b_eff = b * bn_scale
        features.append(dict(w=w, b=b, bn_scale=bn_scale, bn_shift=bn_shift,
                             w_eff=w_eff, b_eff=b_eff,
                             stride=s, pad=p, pool=pool))

    # Classifier input width — mirrors the arithmetic in the PyTorch module.
    lw = (in_width - 1) // 4 + 1
    lw = (lw - 1) // 2 + 1
    lw = (lw - 1) // 2 + 1
    lw = (lw - 1) // 2 + 1
    fc_defs = [(lw * 256, 4096, True), (4096, 4096, True),
               (4096, num_classes, False)]
    classifier = []
    for (fin, fout, relu) in fc_defs:
        key, k1, k2 = jax.random.split(key, 3)
        bound = 1.0 / fin ** 0.5
        w = jax.random.uniform(k1, (fin, fout), jnp.float32, -bound, bound)
        b = jax.random.uniform(k2, (fout,), jnp.float32, -bound, bound)
        classifier.append(dict(w=w, b=b, relu=relu))
    return dict(features=features, classifier=classifier)


# -------------------------------- forward pass -------------------------------


def alexnet_forward(params, x_ncl):
    """x_ncl: [B, in_channels, in_width] (PyTorch NCL) -> [B, num_classes]."""
    # TODO(synk): training-mode BatchNorm (batch statistics) and Dropout masks
    # are not implemented; eval/inference semantics are used (Dropout=identity).
    x = jnp.transpose(x_ncl, (0, 2, 1))                 # NCL -> [B, L, C]
    for layer in params["features"]:
        x = conv1d_relu_bn(x, layer["w_eff"], layer["b_eff"],
                           layer["bn_shift"], stride=layer["stride"],
                           pad=layer["pad"])
        if layer["pool"]:
            x = maxpool1d_k3_s2_p1(x)
    B, L, C = x.shape
    x = jnp.transpose(x, (0, 2, 1)).reshape(B, C * L)   # torch.flatten(x, 1)
    n_fc = len(params["classifier"])
    for idx, fc in enumerate(params["classifier"]):
        zero = jnp.zeros((fc["w"].shape[1],), jnp.float32)
        out_dtype = jnp.float32 if idx == n_fc - 1 else jnp.bfloat16
        x = fused_matmul(x, fc["w"], fc["b"], zero, relu=fc["relu"],
                         out_dtype=out_dtype)
    return x


# ------------------------------- JAX references ------------------------------


def alexnet_reference(params, x_ncl, *, match_bf16):
    """Pure-JAX reference.

    match_bf16=True : same folded weights / bf16 matmul operands as the Pallas
                      path (tight check of the kernel machinery).
    match_bf16=False: f32, literal PyTorch op order
                      Conv -> +bias -> ReLU -> BatchNorm affine -> MaxPool.
    """
    x = x_ncl
    for layer in params["features"]:
        if match_bf16:
            y = lax.conv_general_dilated(
                x.astype(jnp.bfloat16), layer["w_eff"].astype(jnp.bfloat16),
                (layer["stride"],), [(layer["pad"], layer["pad"])],
                dimension_numbers=("NCH", "OIH", "NCH"),
                preferred_element_type=jnp.float32)
            y = y + layer["b_eff"][None, :, None]
            y = jnp.maximum(y, 0.0)
            y = y + layer["bn_shift"][None, :, None]
        else:
            y = lax.conv_general_dilated(
                x, layer["w"], (layer["stride"],),
                [(layer["pad"], layer["pad"])],
                dimension_numbers=("NCH", "OIH", "NCH"))
            y = y + layer["b"][None, :, None]
            y = jnp.maximum(y, 0.0)
            y = (y * layer["bn_scale"][None, :, None]
                 + layer["bn_shift"][None, :, None])
        if layer["pool"]:
            y = lax.reduce_window(y, -jnp.inf, lax.max,
                                  window_dimensions=(1, 1, 3),
                                  window_strides=(1, 1, 2),
                                  padding=((0, 0), (0, 0), (1, 1)))
        x = y
    x = x.reshape(x.shape[0], -1)
    for fc in params["classifier"]:
        if match_bf16:
            y = jnp.dot(x.astype(jnp.bfloat16), fc["w"].astype(jnp.bfloat16),
                        preferred_element_type=jnp.float32) + fc["b"]
        else:
            y = jnp.dot(x, fc["w"]) + fc["b"]
        if fc["relu"]:
            y = jnp.maximum(y, 0.0)
        x = y
    return x


# ----------------------------------- main ------------------------------------

if __name__ == "__main__":
    B, in_channels, in_width, num_classes = 2, 4, 16, 10
    key = jax.random.PRNGKey(0)
    kx, kp = jax.random.split(key)
    x = jax.random.normal(kx, (B, in_channels, in_width), jnp.float32)
    params = init_params(kp, in_width, in_channels, num_classes)

    fwd = jax.jit(lambda inp: alexnet_forward(params, inp))
    out = jax.block_until_ready(fwd(x))
    assert out.shape == (B, num_classes), out.shape
    assert out.dtype == jnp.float32, out.dtype

    # Tight check vs. a reference using the same bf16 operands / folded BN.
    ref_matched = alexnet_reference(params, x, match_bf16=True)
    if not bool(jnp.allclose(out, ref_matched, atol=1e-2, rtol=1e-2)):
        raise AssertionError("Pallas AlexNet mismatch vs matched bf16 reference")

    # Loose check vs. the literal f32 PyTorch-order reference (bf16 matmul
    # operands / bf16 activation storage are the only sources of deviation).
    ref_f32 = alexnet_reference(params, x, match_bf16=False)
    if not bool(jnp.allclose(out, ref_f32, atol=1e-1, rtol=1e-1)):
        raise AssertionError("Pallas AlexNet mismatch vs f32 PyTorch-order reference")

    print("KERNEL_OK")
</pallas_src>

<mosaic_0001>
module attributes {stable_mosaic.version = 11 : i64} {
  func.func @_fused_matmul_kernel(%arg0: i32, %arg1: i32, %arg2: i32, %arg3: memref<8x128xbf16, #tpu.memory_space<vmem>>, %arg4: memref<128x128xbf16, #tpu.memory_space<vmem>>, %arg5: memref<8x128xf32, #tpu.memory_space<vmem>>, %arg6: memref<8x128xbf16, #tpu.memory_space<vmem>>, %arg7: memref<8x128xf32, #tpu.memory_space<vmem>>) attributes {dimension_semantics = [#tpu.dimension_semantics<parallel>, #tpu.dimension_semantics<parallel>, #tpu.dimension_semantics<arbitrary>], iteration_bounds = array<i64: 1, 1, 1>, scalar_prefetch = 0 : i64, scratch_operands = 1 : i64, tpu.core_type = #tpu.core_type<tc>, window_params = [{transform_indices = @transform_0, window_bounds = array<i64: 8, 128>}, {transform_indices = @transform_1, window_bounds = array<i64: 128, 128>}, {transform_indices = @transform_2, window_bounds = array<i64: 8, 128>}, {transform_indices = @transform_3, window_bounds = array<i64: 8, 128>}]} {
    %c0_i32 = arith.constant 0 : i32
    %0 = arith.cmpi eq, %arg2, %c0_i32 : i32
    %1 = arith.extui %0 : i1 to i32
    %c0_i32_0 = arith.constant 0 : i32
    %2 = arith.cmpi ne, %1, %c0_i32_0 : i32
    scf.if %2 {
      %cst_10 = arith.constant 0.000000e+00 : f32
      %12 = vector.broadcast %cst_10 : f32 to vector<8x128xf32>
      %c0_11 = arith.constant 0 : index
      %c0_12 = arith.constant 0 : index
      %13 = vector.load %arg7[%c0_11, %c0_12] : memref<8x128xf32, #tpu.memory_space<vmem>>, vector<8x128xf32>
      tpu.vector_store %arg7[%c0_11, %c0_12], %12 {strides = array<i32>} : memref<8x128xf32, #tpu.memory_space<vmem>>, vector<8x128xf32>,
    } else {
    }
    %c0 = arith.constant 0 : index
    %c0_1 = arith.constant 0 : index
    %3 = vector.load %arg7[%c0, %c0_1] : memref<8x128xf32, #tpu.memory_space<vmem>>, vector<8x128xf32>
    %c0_2 = arith.constant 0 : index
    %c0_3 = arith.constant 0 : index
    %4 = vector.load %arg3[%c0_2, %c0_3] : memref<8x128xbf16, #tpu.memory_space<vmem>>, vector<8x128xbf16>
    %c0_4 = arith.constant 0 : index
    %c0_5 = arith.constant 0 : index
    %5 = vector.load %arg4[%c0_4, %c0_5] : memref<128x128xbf16, #tpu.memory_space<vmem>>, vector<128x128xbf16>
    %cst = arith.constant dense<0.000000e+00> : vector<8x128xf32>
    %6 = tpu.matmul %4, %5, %cst {dimension_numbers = #tpu.dot_dimension_numbers<[1], [0], [0], [1], [0, 0, 1, 1], [], []>} : vector<8x128xbf16>, vector<128x128xbf16>, vector<8x128xf32> -> vector<8x128xf32>
    %7 = arith.addf %3, %6 : vector<8x128xf32>
    %c0_6 = arith.constant 0 : index
    %c0_7 = arith.constant 0 : index
    %8 = vector.load %arg7[%c0_6, %c0_7] : memref<8x128xf32, #tpu.memory_space<vmem>>, vector<8x128xf32>
    tpu.vector_store %arg7[%c0_6, %c0_7], %7 {strides = array<i32>} : memref<8x128xf32, #tpu.memory_space<vmem>>, vector<8x128xf32>,
    %c0_i32_8 = arith.constant 0 : i32
    %9 = arith.cmpi eq, %arg2, %c0_i32_8 : i32
    %10 = arith.extui %9 : i1 to i32
    %c0_i32_9 = arith.constant 0 : i32
    %11 = arith.cmpi ne, %10, %c0_i32_9 : i32
    scf.if %11 {
      %c0_10 = arith.constant 0 : index
      %c0_11 = arith.constant 0 : index
      %12 = vector.load %arg7[%c0_10, %c0_11] : memref<8x128xf32, #tpu.memory_space<vmem>>, vector<8x128xf32>
      %c0_12 = arith.constant 0 : index
      %c0_13 = arith.constant 0 : index
      %13 = vector.load %arg5[%c0_12, %c0_13] : memref<8x128xf32, #tpu.memory_space<vmem>>, vector<1x128xf32>
      %14 = vector.broadcast %13 : vector<1x128xf32> to vector<8x128xf32>
      %15 = arith.addf %12, %14 : vector<8x128xf32>
      %cst_14 = arith.constant 0.000000e+00 : f32
      %16 = vector.broadcast %cst_14 : f32 to vector<8x128xf32>
      %17 = arith.maximumf %15, %16 : vector<8x128xf32>
      %c1 = arith.constant 1 : index
      %c0_15 = arith.constant 0 : index
      %18 = vector.load %arg5[%c1, %c0_15] : memref<8x128xf32, #tpu.memory_space<vmem>>, vector<1x128xf32>
      %19 = vector.broadcast %18 : vector<1x128xf32> to vector<8x128xf32>
      %20 = arith.addf %17, %19 : vector<8x128xf32>
      %21 = arith.truncf %20 : vector<8x128xf32> to vector<8x128xbf16>
      %c0_16 = arith.constant 0 : index
      %c0_17 = arith.constant 0 : index
      %22 = vector.load %arg6[%c0_16, %c0_17] : memref<8x128xbf16, #tpu.memory_space<vmem>>, vector<8x128xbf16>
      tpu.vector_store %arg6[%c0_16, %c0_17], %21 {strides = array<i32>} : memref<8x128xbf16, #tpu.memory_space<vmem>>, vector<8x128xbf16>,
    } else {
    }
    return
  }
  func.func @transform_0(%arg0: i32, %arg1: i32, %arg2: i32) -> (i32, i32) {
    %c0_i32 = arith.constant 0 : i32
    return %arg0, %arg2 : i32, i32
  }
  func.func @transform_1(%arg0: i32, %arg1: i32, %arg2: i32) -> (i32, i32) {
    %c0_i32 = arith.constant 0 : i32
    return %arg2, %arg1 : i32, i32
  }
  func.func @transform_2(%arg0: i32, %arg1: i32, %arg2: i32) -> (i32, i32) {
    %c0_i32 = arith.constant 0 : i32
    %c0_i32_0 = arith.constant 0 : i32
    return %c0_i32, %arg1 : i32, i32
  }
  func.func @transform_3(%arg0: i32, %arg1: i32, %arg2: i32) -> (i32, i32) {
    %c0_i32 = arith.constant 0 : i32
    return %arg0, %arg1 : i32, i32
  }
}

module attributes {stable_mosaic.version = 11 : i64} {
  func.func @_fused_matmul_kernel(%arg0: i32, %arg1: i32, %arg2: i32, %arg3: memref<8x512xbf16, #tpu.memory_space<vmem>>, %arg4: memref<512x256xbf16, #tpu.memory_space<vmem>>, %arg5: memref<8x256xf32, #tpu.memory_space<vmem>>, %arg6: memref<8x256xbf16, #tpu.memory_space<vmem>>, %arg7: memref<8x256xf32, #tpu.memory_space<vmem>>) attributes {dimension_semantics = [#tpu.dimension_semantics<parallel>, #tpu.dimension_semantics<parallel>, #tpu.dimension_semantics<arbitrary>], iteration_bounds = array<i64: 1, 1, 1>, scalar_prefetch = 0 : i64, scratch_operands = 1 : i64, tpu.core_type = #tpu.core_type<tc>, window_params = [{transform_indices = @transform_0, window_bounds = array<i64: 8, 512>}, {transform_indices = @transform_1, window_bounds = array<i64: 512, 256>}, {transform_indices = @transform_2, window_bounds = array<i64: 8, 256>}, {transform_indices = @transform_3, window_bounds = array<i64: 8, 256>}]} {
    %c0_i32 = arith.constant 0 : i32
    %0 = arith.cmpi eq, %arg2, %c0_i32 : i32
    %1 = arith.extui %0 : i1 to i32
    %c0_i32_0 = arith.constant 0 : i32
    %2 = arith.cmpi ne, %1, %c0_i32_0 : i32
    scf.if %2 {
      %cst_10 = arith.constant 0.000000e+00 : f32
      %12 = vector.broadcast %cst_10 : f32 to vector<8x256xf32>
      %c0_11 = arith.constant 0 : index
      %c0_12 = arith.constant 0 : index
      %13 = vector.load %arg7[%c0_11, %c0_12] : memref<8x256xf32, #tpu.memory_space<vmem>>, vector<8x256xf32>
      tpu.vector_store %arg7[%c0_11, %c0_12], %12 {strides = array<i32>} : memref<8x256xf32, #tpu.memory_space<vmem>>, vector<8x256xf32>,
    } else {
    }
    %c0 = arith.constant 0 : index
    %c0_1 = arith.constant 0 : index
    %3 = vector.load %arg7[%c0, %c0_1] : memref<8x256xf32, #tpu.memory_space<vmem>>, vector<8x256xf32>
    %c0_2 = arith.constant 0 : index
    %c0_3 = arith.constant 0 : index
    %4 = vector.load %arg3[%c0_2, %c0_3] : memref<8x512xbf16, #tpu.memory_space<vmem>>, vector<8x512xbf16>
    %c0_4 = arith.constant 0 : index
    %c0_5 = arith.constant 0 : index
    %5 = vector.load %arg4[%c0_4, %c0_5] : memref<512x256xbf16, #tpu.memory_space<vmem>>, vector<512x256xbf16>
    %cst = arith.constant dense<0.000000e+00> : vector<8x256xf32>
    %6 = tpu.matmul %4, %5, %cst {dimension_numbers = #tpu.dot_dimension_numbers<[1], [0], [0], [1], [0, 0, 1, 1], [], []>} : vector<8x512xbf16>, vector<512x256xbf16>, vector<8x256xf32> -> vector<8x256xf32>
    %7 = arith.addf %3, %6 : vector<8x256xf32>
    %c0_6 = arith.constant 0 : index
    %c0_7 = arith.constant 0 : index
    %8 = vector.load %arg7[%c0_6, %c0_7] : memref<8x256xf32, #tpu.memory_space<vmem>>, vector<8x256xf32>
    tpu.vector_store %arg7[%c0_6, %c0_7], %7 {strides = array<i32>} : memref<8x256xf32, #tpu.memory_space<vmem>>, vector<8x256xf32>,
    %c0_i32_8 = arith.constant 0 : i32
    %9 = arith.cmpi eq, %arg2, %c0_i32_8 : i32
    %10 = arith.extui %9 : i1 to i32
    %c0_i32_9 = arith.constant 0 : i32
    %11 = arith.cmpi ne, %10, %c0_i32_9 : i32
    scf.if %11 {
      %c0_10 = arith.constant 0 : index
      %c0_11 = arith.constant 0 : index
      %12 = vector.load %arg7[%c0_10, %c0_11] : memref<8x256xf32, #tpu.memory_space<vmem>>, vector<8x256xf32>
      %c0_12 = arith.constant 0 : index
      %c0_13 = arith.constant 0 : index
      %13 = vector.load %arg5[%c0_12, %c0_13] : memref<8x256xf32, #tpu.memory_space<vmem>>, vector<1x256xf32>
      %14 = vector.broadcast %13 : vector<1x256xf32> to vector<8x256xf32>
      %15 = arith.addf %12, %14 : vector<8x256xf32>
      %cst_14 = arith.constant 0.000000e+00 : f32
      %16 = vector.broadcast %cst_14 : f32 to vector<8x256xf32>
      %17 = arith.maximumf %15, %16 : vector<8x256xf32>
      %c1 = arith.constant 1 : index
      %c0_15 = arith.constant 0 : index
      %18 = vector.load %arg5[%c1, %c0_15] : memref<8x256xf32, #tpu.memory_space<vmem>>, vector<1x256xf32>
      %19 = vector.broadcast %18 : vector<1x256xf32> to vector<8x256xf32>
      %20 = arith.addf %17, %19 : vector<8x256xf32>
      %21 = arith.truncf %20 : vector<8x256xf32> to vector<8x256xbf16>
      %c0_16 = arith.constant 0 : index
      %c0_17 = arith.constant 0 : index
      %22 = vector.load %arg6[%c0_16, %c0_17] : memref<8x256xbf16, #tpu.memory_space<vmem>>, vector<8x256xbf16>
      tpu.vector_store %arg6[%c0_16, %c0_17], %21 {strides = array<i32>} : memref<8x256xbf16, #tpu.memory_space<vmem>>, vector<8x256xbf16>,
    } else {
    }
    return
  }
  func.func @transform_0(%arg0: i32, %arg1: i32, %arg2: i32) -> (i32, i32) {
    %c0_i32 = arith.constant 0 : i32
    return %arg0, %arg2 : i32, i32
  }
  func.func @transform_1(%arg0: i32, %arg1: i32, %arg2: i32) -> (i32, i32) {
    %c0_i32 = arith.constant 0 : i32
    return %arg2, %arg1 : i32, i32
  }
  func.func @transform_2(%arg0: i32, %arg1: i32, %arg2: i32) -> (i32, i32) {
    %c0_i32 = arith.constant 0 : i32
    %c0_i32_0 = arith.constant 0 : i32
    return %c0_i32, %arg1 : i32, i32
  }
  func.func @transform_3(%arg0: i32, %arg1: i32, %arg2: i32) -> (i32, i32) {
    %c0_i32 = arith.constant 0 : i32
    return %arg0, %arg1 : i32, i32
  }
}

module attributes {stable_mosaic.version = 11 : i64} {
  func.func @_max3_kernel(%arg0: i32, %arg1: i32, %arg2: memref<8x128xbf16, #tpu.memory_space<vmem>>, %arg3: memref<8x128xbf16, #tpu.memory_space<vmem>>, %arg4: memref<8x128xbf16, #tpu.memory_space<vmem>>, %arg5: memref<8x128xbf16, #tpu.memory_space<vmem>>) attributes {dimension_semantics = [#tpu.dimension_semantics<parallel>, #tpu.dimension_semantics<parallel>], iteration_bounds = array<i64: 1, 1>, scalar_prefetch = 0 : i64, scratch_operands = 0 : i64, tpu.core_type = #tpu.core_type<tc>, window_params = [{transform_indices = @transform_0, window_bounds = array<i64: 8, 128>}, {transform_indices = @transform_1, window_bounds = array<i64: 8, 128>}, {transform_indices = @transform_2, window_bounds = array<i64: 8, 128>}, {transform_indices = @transform_3, window_bounds = array<i64: 8, 128>}]} {
    %c0 = arith.constant 0 : index
    %c0_0 = arith.constant 0 : index
    %0 = vector.load %arg2[%c0, %c0_0] : memref<8x128xbf16, #tpu.memory_space<vmem>>, vector<8x128xbf16>
    %c0_1 = arith.constant 0 : index
    %c0_2 = arith.constant 0 : index
    %1 = vector.load %arg3[%c0_1, %c0_2] : memref<8x128xbf16, #tpu.memory_space<vmem>>, vector<8x128xbf16>
    %2 = arith.maximumf %0, %1 : vector<8x128xbf16>
    %c0_3 = arith.constant 0 : index
    %c0_4 = arith.constant 0 : index
    %3 = vector.load %arg4[%c0_3, %c0_4] : memref<8x128xbf16, #tpu.memory_space<vmem>>, vector<8x128xbf16>
    %4 = arith.maximumf %2, %3 : vector<8x128xbf16>
    %c0_5 = arith.constant 0 : index
    %c0_6 = arith.constant 0 : index
    %5 = vector.load %arg5[%c0_5, %c0_6] : memref<8x128xbf16, #tpu.memory_space<vmem>>, vector<8x128xbf16>
    tpu.vector_store %arg5[%c0_5, %c0_6], %4 {strides = array<i32>} : memref<8x128xbf16, #tpu.memory_space<vmem>>, vector<8x128xbf16>,
    return
  }
  func.func @transform_0(%arg0: i32, %arg1: i32) -> (i32, i32) {
    %c0_i32 = arith.constant 0 : i32
    return %arg0, %arg1 : i32, i32
  }
  func.func @transform_1(%arg0: i32, %arg1: i32) -> (i32, i32) {
    %c0_i32 = arith.constant 0 : i32
    return %arg0, %arg1 : i32, i32
  }
  func.func @transform_2(%arg0: i32, %arg1: i32) -> (i32, i32) {
    %c0_i32 = arith.constant 0 : i32
    return %arg0, %arg1 : i32, i32
  }
  func.func @transform_3(%arg0: i32, %arg1: i32) -> (i32, i32) {
    %c0_i32 = arith.constant 0 : i32
    return %arg0, %arg1 : i32, i32
  }
}

module attributes {stable_mosaic.version = 11 : i64} {
  func.func @_fused_matmul_kernel(%arg0: i32, %arg1: i32, %arg2: i32, %arg3: memref<8x768xbf16, #tpu.memory_space<vmem>>, %arg4: memref<768x384xbf16, #tpu.memory_space<vmem>>, %arg5: memref<8x384xf32, #tpu.memory_space<vmem>>, %arg6: memref<8x384xbf16, #tpu.memory_space<vmem>>, %arg7: memref<8x384xf32, #tpu.memory_space<vmem>>) attributes {dimension_semantics = [#tpu.dimension_semantics<parallel>, #tpu.dimension_semantics<parallel>, #tpu.dimension_semantics<arbitrary>], iteration_bounds = array<i64: 1, 1, 1>, scalar_prefetch = 0 : i64, scratch_operands = 1 : i64, tpu.core_type = #tpu.core_type<tc>, window_params = [{transform_indices = @transform_0, window_bounds = array<i64: 8, 768>}, {transform_indices = @transform_1, window_bounds = array<i64: 768, 384>}, {transform_indices = @transform_2, window_bounds = array<i64: 8, 384>}, {transform_indices = @transform_3, window_bounds = array<i64: 8, 384>}]} {
    %c0_i32 = arith.constant 0 : i32
    %0 = arith.cmpi eq, %arg2, %c0_i32 : i32
    %1 = arith.extui %0 : i1 to i32
    %c0_i32_0 = arith.constant 0 : i32
    %2 = arith.cmpi ne, %1, %c0_i32_0 : i32
    scf.if %2 {
      %cst_10 = arith.constant 0.000000e+00 : f32
      %12 = vector.broadcast %cst_10 : f32 to vector<8x384xf32>
      %c0_11 = arith.constant 0 : index
      %c0_12 = arith.constant 0 : index
      %13 = vector.load %arg7[%c0_11, %c0_12] : memref<8x384xf32, #tpu.memory_space<vmem>>, vector<8x384xf32>
      tpu.vector_store %arg7[%c0_11, %c0_12], %12 {strides = array<i32>} : memref<8x384xf32, #tpu.memory_space<vmem>>, vector<8x384xf32>,
    } else {
    }
    %c0 = arith.constant 0 : index
    %c0_1 = arith.constant 0 : index
    %3 = vector.load %arg7[%c0, %c0_1] : memref<8x384xf32, #tpu.memory_space<vmem>>, vector<8x384xf32>
    %c0_2 = arith.constant 0 : index
    %c0_3 = arith.constant 0 : index
    %4 = vector.load %arg3[%c0_2, %c0_3] : memref<8x768xbf16, #tpu.memory_space<vmem>>, vector<8x768xbf16>
    %c0_4 = arith.constant 0 : index
    %c0_5 = arith.constant 0 : index
    %5 = vector.load %arg4[%c0_4, %c0_5] : memref<768x384xbf16, #tpu.memory_space<vmem>>, vector<768x384xbf16>
    %cst = arith.constant dense<0.000000e+00> : vector<8x384xf32>
    %6 = tpu.matmul %4, %5, %cst {dimension_numbers = #tpu.dot_dimension_numbers<[1], [0], [0], [1], [0, 0, 1, 1], [], []>} : vector<8x768xbf16>, vector<768x384xbf16>, vector<8x384xf32> -> vector<8x384xf32>
    %7 = arith.addf %3, %6 : vector<8x384xf32>
    %c0_6 = arith.constant 0 : index
    %c0_7 = arith.constant 0 : index
    %8 = vector.load %arg7[%c0_6, %c0_7] : memref<8x384xf32, #tpu.memory_space<vmem>>, vector<8x384xf32>
    tpu.vector_store %arg7[%c0_6, %c0_7], %7 {strides = array<i32>} : memref<8x384xf32, #tpu.memory_space<vmem>>, vector<8x384xf32>,
    %c0_i32_8 = arith.constant 0 : i32
    %9 = arith.cmpi eq, %arg2, %c0_i32_8 : i32
    %10 = arith.extui %9 : i1 to i32
    %c0_i32_9 = arith.constant 0 : i32
    %11 = arith.cmpi ne, %10, %c0_i32_9 : i32
    scf.if %11 {
      %c0_10 = arith.constant 0 : index
      %c0_11 = arith.constant 0 : index
      %12 = vector.load %arg7[%c0_10, %c0_11] : memref<8x384xf32, #tpu.memory_space<vmem>>, vector<8x384xf32>
      %c0_12 = arith.constant 0 : index
      %c0_13 = arith.constant 0 : index
      %13 = vector.load %arg5[%c0_12, %c0_13] : memref<8x384xf32, #tpu.memory_space<vmem>>, vector<1x384xf32>
      %14 = vector.broadcast %13 : vector<1x384xf32> to vector<8x384xf32>
      %15 = arith.addf %12, %14 : vector<8x384xf32>
      %cst_14 = arith.constant 0.000000e+00 : f32
      %16 = vector.broadcast %cst_14 : f32 to vector<8x384xf32>
      %17 = arith.maximumf %15, %16 : vector<8x384xf32>
      %c1 = arith.constant 1 : index
      %c0_15 = arith.constant 0 : index
      %18 = vector.load %arg5[%c1, %c0_15] : memref<8x384xf32, #tpu.memory_space<vmem>>, vector<1x384xf32>
      %19 = vector.broadcast %18 : vector<1x384xf32> to vector<8x384xf32>
      %20 = arith.addf %17, %19 : vector<8x384xf32>
      %21 = arith.truncf %20 : vector<8x384xf32> to vector<8x384xbf16>
      %c0_16 = arith.constant 0 : index
      %c0_17 = arith.constant 0 : index
      %22 = vector.load %arg6[%c0_16, %c0_17] : memref<8x384xbf16, #tpu.memory_space<vmem>>, vector<8x384xbf16>
      tpu.vector_store %arg6[%c0_16, %c0_17], %21 {strides = array<i32>} : memref<8x384xbf16, #tpu.memory_space<vmem>>, vector<8x384xbf16>,
    } else {
    }
    return
  }
  func.func @transform_0(%arg0: i32, %arg1: i32, %arg2: i32) -> (i32, i32) {
    %c0_i32 = arith.constant 0 : i32
    return %arg0, %arg2 : i32, i32
  }
  func.func @transform_1(%arg0: i32, %arg1: i32, %arg2: i32) -> (i32, i32) {
    %c0_i32 = arith.constant 0 : i32
    return %arg2, %arg1 : i32, i32
  }
  func.func @transform_2(%arg0: i32, %arg1: i32, %arg2: i32) -> (i32, i32) {
    %c0_i32 = arith.constant 0 : i32
    %c0_i32_0 = arith.constant 0 : i32
    return %c0_i32, %arg1 : i32, i32
  }
  func.func @transform_3(%arg0: i32, %arg1: i32, %arg2: i32) -> (i32, i32) {
    %c0_i32 = arith.constant 0 : i32
    return %arg0, %arg1 : i32, i32
  }
}

module attributes {stable_mosaic.version = 11 : i64} {
  func.func @_fused_matmul_kernel(%arg0: i32, %arg1: i32, %arg2: i32, %arg3: memref<8x384xbf16, #tpu.memory_space<vmem>>, %arg4: memref<384x384xbf16, #tpu.memory_space<vmem>>, %arg5: memref<8x384xf32, #tpu.memory_space<vmem>>, %arg6: memref<8x384xbf16, #tpu.memory_space<vmem>>, %arg7: memref<8x384xf32, #tpu.memory_space<vmem>>) attributes {dimension_semantics = [#tpu.dimension_semantics<parallel>, #tpu.dimension_semantics<parallel>, #tpu.dimension_semantics<arbitrary>], iteration_bounds = array<i64: 1, 1, 1>, scalar_prefetch = 0 : i64, scratch_operands = 1 : i64, tpu.core_type = #tpu.core_type<tc>, window_params = [{transform_indices = @transform_0, window_bounds = array<i64: 8, 384>}, {transform_indices = @transform_1, window_bounds = array<i64: 384, 384>}, {transform_indices = @transform_2, window_bounds = array<i64: 8, 384>}, {transform_indices = @transform_3, window_bounds = array<i64: 8, 384>}]} {
    %c0_i32 = arith.constant 0 : i32
    %0 = arith.cmpi eq, %arg2, %c0_i32 : i32
    %1 = arith.extui %0 : i1 to i32
    %c0_i32_0 = arith.constant 0 : i32
    %2 = arith.cmpi ne, %1, %c0_i32_0 : i32
    scf.if %2 {
      %cst_10 = arith.constant 0.000000e+00 : f32
      %12 = vector.broadcast %cst_10 : f32 to vector<8x384xf32>
      %c0_11 = arith.constant 0 : index
      %c0_12 = arith.constant 0 : index
      %13 = vector.load %arg7[%c0_11, %c0_12] : memref<8x384xf32, #tpu.memory_space<vmem>>, vector<8x384xf32>
      tpu.vector_store %arg7[%c0_11, %c0_12], %12 {strides = array<i32>} : memref<8x384xf32, #tpu.memory_space<vmem>>, vector<8x384xf32>,
    } else {
    }
    %c0 = arith.constant 0 : index
    %c0_1 = arith.constant 0 : index
    %3 = vector.load %arg7[%c0, %c0_1] : memref<8x384xf32, #tpu.memory_space<vmem>>, vector<8x384xf32>
    %c0_2 = arith.constant 0 : index
    %c0_3 = arith.constant 0 : index
    %4 = vector.load %arg3[%c0_2, %c0_3] : memref<8x384xbf16, #tpu.memory_space<vmem>>, vector<8x384xbf16>
    %c0_4 = arith.constant 0 : index
    %c0_5 = arith.constant 0 : index
    %5 = vector.load %arg4[%c0_4, %c0_5] : memref<384x384xbf16, #tpu.memory_space<vmem>>, vector<384x384xbf16>
    %cst = arith.constant dense<0.000000e+00> : vector<8x384xf32>
    %6 = tpu.matmul %4, %5, %cst {dimension_numbers = #tpu.dot_dimension_numbers<[1], [0], [0], [1], [0, 0, 1, 1], [], []>} : vector<8x384xbf16>, vector<384x384xbf16>, vector<8x384xf32> -> vector<8x384xf32>
    %7 = arith.addf %3, %6 : vector<8x384xf32>
    %c0_6 = arith.constant 0 : index
    %c0_7 = arith.constant 0 : index
    %8 = vector.load %arg7[%c0_6, %c0_7] : memref<8x384xf32, #tpu.memory_space<vmem>>, vector<8x384xf32>
    tpu.vector_store %arg7[%c0_6, %c0_7], %7 {strides = array<i32>} : memref<8x384xf32, #tpu.memory_space<vmem>>, vector<8x384xf32>,
    %c0_i32_8 = arith.constant 0 : i32
    %9 = arith.cmpi eq, %arg2, %c0_i32_8 : i32
    %10 = arith.extui %9 : i1 to i32
    %c0_i32_9 = arith.constant 0 : i32
    %11 = arith.cmpi ne, %10, %c0_i32_9 : i32
    scf.if %11 {
      %c0_10 = arith.constant 0 : index
      %c0_11 = arith.constant 0 : index
      %12 = vector.load %arg7[%c0_10, %c0_11] : memref<8x384xf32, #tpu.memory_space<vmem>>, vector<8x384xf32>
      %c0_12 = arith.constant 0 : index
      %c0_13 = arith.constant 0 : index
      %13 = vector.load %arg5[%c0_12, %c0_13] : memref<8x384xf32, #tpu.memory_space<vmem>>, vector<1x384xf32>
      %14 = vector.broadcast %13 : vector<1x384xf32> to vector<8x384xf32>
      %15 = arith.addf %12, %14 : vector<8x384xf32>
      %cst_14 = arith.constant 0.000000e+00 : f32
      %16 = vector.broadcast %cst_14 : f32 to vector<8x384xf32>
      %17 = arith.maximumf %15, %16 : vector<8x384xf32>
      %c1 = arith.constant 1 : index
      %c0_15 = arith.constant 0 : index
      %18 = vector.load %arg5[%c1, %c0_15] : memref<8x384xf32, #tpu.memory_space<vmem>>, vector<1x384xf32>
      %19 = vector.broadcast %18 : vector<1x384xf32> to vector<8x384xf32>
      %20 = arith.addf %17, %19 : vector<8x384xf32>
      %21 = arith.truncf %20 : vector<8x384xf32> to vector<8x384xbf16>
      %c0_16 = arith.constant 0 : index
      %c0_17 = arith.constant 0 : index
      %22 = vector.load %arg6[%c0_16, %c0_17] : memref<8x384xbf16, #tpu.memory_space<vmem>>, vector<8x384xbf16>
      tpu.vector_store %arg6[%c0_16, %c0_17], %21 {strides = array<i32>} : memref<8x384xbf16, #tpu.memory_space<vmem>>, vector<8x384xbf16>,
    } else {
    }
    return
  }
  func.func @transform_0(%arg0: i32, %arg1: i32, %arg2: i32) -> (i32, i32) {
    %c0_i32 = arith.constant 0 : i32
    return %arg0, %arg2 : i32, i32
  }
  func.func @transform_1(%arg0: i32, %arg1: i32, %arg2: i32) -> (i32, i32) {
    %c0_i32 = arith.constant 0 : i32
    return %arg2, %arg1 : i32, i32
  }
  func.func @transform_2(%arg0: i32, %arg1: i32, %arg2: i32) -> (i32, i32) {
    %c0_i32 = arith.constant 0 : i32
    %c0_i32_0 = arith.constant 0 : i32
    return %c0_i32, %arg1 : i32, i32
  }
  func.func @transform_3(%arg0: i32, %arg1: i32, %arg2: i32) -> (i32, i32) {
    %c0_i32 = arith.constant 0 : i32
    return %arg0, %arg1 : i32, i32
  }
}

module attributes {stable_mosaic.version = 11 : i64} {
  func.func @_max3_kernel(%arg0: i32, %arg1: i32, %arg2: memref<8x256xbf16, #tpu.memory_space<vmem>>, %arg3: memref<8x256xbf16, #tpu.memory_space<vmem>>, %arg4: memref<8x256xbf16, #tpu.memory_space<vmem>>, %arg5: memref<8x256xbf16, #tpu.memory_space<vmem>>) attributes {dimension_semantics = [#tpu.dimension_semantics<parallel>, #tpu.dimension_semantics<parallel>], iteration_bounds = array<i64: 1, 1>, scalar_prefetch = 0 : i64, scratch_operands = 0 : i64, tpu.core_type = #tpu.core_type<tc>, window_params = [{transform_indices = @transform_0, window_bounds = array<i64: 8, 256>}, {transform_indices = @transform_1, window_bounds = array<i64: 8, 256>}, {transform_indices = @transform_2, window_bounds = array<i64: 8, 256>}, {transform_indices = @transform_3, window_bounds = array<i64: 8, 256>}]} {
    %c0 = arith.constant 0 : index
    %c0_0 = arith.constant 0 : index
    %0 = vector.load %arg2[%c0, %c0_0] : memref<8x256xbf16, #tpu.memory_space<vmem>>, vector<8x256xbf16>
    %c0_1 = arith.constant 0 : index
    %c0_2 = arith.constant 0 : index
    %1 = vector.load %arg3[%c0_1, %c0_2] : memref<8x256xbf16, #tpu.memory_space<vmem>>, vector<8x256xbf16>
    %2 = arith.maximumf %0, %1 : vector<8x256xbf16>
    %c0_3 = arith.constant 0 : index
    %c0_4 = arith.constant 0 : index
    %3 = vector.load %arg4[%c0_3, %c0_4] : memref<8x256xbf16, #tpu.memory_space<vmem>>, vector<8x256xbf16>
    %4 = arith.maximumf %2, %3 : vector<8x256xbf16>
    %c0_5 = arith.constant 0 : index
    %c0_6 = arith.constant 0 : index
    %5 = vector.load %arg5[%c0_5, %c0_6] : memref<8x256xbf16, #tpu.memory_space<vmem>>, vector<8x256xbf16>
    tpu.vector_store %arg5[%c0_5, %c0_6], %4 {strides = array<i32>} : memref<8x256xbf16, #tpu.memory_space<vmem>>, vector<8x256xbf16>,
    return
  }
  func.func @transform_0(%arg0: i32, %arg1: i32) -> (i32, i32) {
    %c0_i32 = arith.constant 0 : i32
    return %arg0, %arg1 : i32, i32
  }
  func.func @transform_1(%arg0: i32, %arg1: i32) -> (i32, i32) {
    %c0_i32 = arith.constant 0 : i32
    return %arg0, %arg1 : i32, i32
  }
  func.func @transform_2(%arg0: i32, %arg1: i32) -> (i32, i32) {
    %c0_i32 = arith.constant 0 : i32
    return %arg0, %arg1 : i32, i32
  }
  func.func @transform_3(%arg0: i32, %arg1: i32) -> (i32, i32) {
    %c0_i32 = arith.constant 0 : i32
    return %arg0, %arg1 : i32, i32
  }
}

module attributes {stable_mosaic.version = 11 : i64} {
  func.func @_fused_matmul_kernel(%arg0: i32, %arg1: i32, %arg2: i32, %arg3: memref<8x384xbf16, #tpu.memory_space<vmem>>, %arg4: memref<384x256xbf16, #tpu.memory_space<vmem>>, %arg5: memref<8x256xf32, #tpu.memory_space<vmem>>, %arg6: memref<8x256xbf16, #tpu.memory_space<vmem>>, %arg7: memref<8x256xf32, #tpu.memory_space<vmem>>) attributes {dimension_semantics = [#tpu.dimension_semantics<parallel>, #tpu.dimension_semantics<parallel>, #tpu.dimension_semantics<arbitrary>], iteration_bounds = array<i64: 1, 1, 1>, scalar_prefetch = 0 : i64, scratch_operands = 1 : i64, tpu.core_type = #tpu.core_type<tc>, window_params = [{transform_indices = @transform_0, window_bounds = array<i64: 8, 384>}, {transform_indices = @transform_1, window_bounds = array<i64: 384, 256>}, {transform_indices = @transform_2, window_bounds = array<i64: 8, 256>}, {transform_indices = @transform_3, window_bounds = array<i64: 8, 256>}]} {
    %c0_i32 = arith.constant 0 : i32
    %0 = arith.cmpi eq, %arg2, %c0_i32 : i32
    %1 = arith.extui %0 : i1 to i32
    %c0_i32_0 = arith.constant 0 : i32
    %2 = arith.cmpi ne, %1, %c0_i32_0 : i32
    scf.if %2 {
      %cst_10 = arith.constant 0.000000e+00 : f32
      %12 = vector.broadcast %cst_10 : f32 to vector<8x256xf32>
      %c0_11 = arith.constant 0 : index
      %c0_12 = arith.constant 0 : index
      %13 = vector.load %arg7[%c0_11, %c0_12] : memref<8x256xf32, #tpu.memory_space<vmem>>, vector<8x256xf32>
      tpu.vector_store %arg7[%c0_11, %c0_12], %12 {strides = array<i32>} : memref<8x256xf32, #tpu.memory_space<vmem>>, vector<8x256xf32>,
    } else {
    }
    %c0 = arith.constant 0 : index
    %c0_1 = arith.constant 0 : index
    %3 = vector.load %arg7[%c0, %c0_1] : memref<8x256xf32, #tpu.memory_space<vmem>>, vector<8x256xf32>
    %c0_2 = arith.constant 0 : index
    %c0_3 = arith.constant 0 : index
    %4 = vector.load %arg3[%c0_2, %c0_3] : memref<8x384xbf16, #tpu.memory_space<vmem>>, vector<8x384xbf16>
    %c0_4 = arith.constant 0 : index
    %c0_5 = arith.constant 0 : index
    %5 = vector.load %arg4[%c0_4, %c0_5] : memref<384x256xbf16, #tpu.memory_space<vmem>>, vector<384x256xbf16>
    %cst = arith.constant dense<0.000000e+00> : vector<8x256xf32>
    %6 = tpu.matmul %4, %5, %cst {dimension_numbers = #tpu.dot_dimension_numbers<[1], [0], [0], [1], [0, 0, 1, 1], [], []>} : vector<8x384xbf16>, vector<384x256xbf16>, vector<8x256xf32> -> vector<8x256xf32>
    %7 = arith.addf %3, %6 : vector<8x256xf32>
    %c0_6 = arith.constant 0 : index
    %c0_7 = arith.constant 0 : index
    %8 = vector.load %arg7[%c0_6, %c0_7] : memref<8x256xf32, #tpu.memory_space<vmem>>, vector<8x256xf32>
    tpu.vector_store %arg7[%c0_6, %c0_7], %7 {strides = array<i32>} : memref<8x256xf32, #tpu.memory_space<vmem>>, vector<8x256xf32>,
    %c0_i32_8 = arith.constant 0 : i32
    %9 = arith.cmpi eq, %arg2, %c0_i32_8 : i32
    %10 = arith.extui %9 : i1 to i32
    %c0_i32_9 = arith.constant 0 : i32
    %11 = arith.cmpi ne, %10, %c0_i32_9 : i32
    scf.if %11 {
      %c0_10 = arith.constant 0 : index
      %c0_11 = arith.constant 0 : index
      %12 = vector.load %arg7[%c0_10, %c0_11] : memref<8x256xf32, #tpu.memory_space<vmem>>, vector<8x256xf32>
      %c0_12 = arith.constant 0 : index
      %c0_13 = arith.constant 0 : index
      %13 = vector.load %arg5[%c0_12, %c0_13] : memref<8x256xf32, #tpu.memory_space<vmem>>, vector<1x256xf32>
      %14 = vector.broadcast %13 : vector<1x256xf32> to vector<8x256xf32>
      %15 = arith.addf %12, %14 : vector<8x256xf32>
      %cst_14 = arith.constant 0.000000e+00 : f32
      %16 = vector.broadcast %cst_14 : f32 to vector<8x256xf32>
      %17 = arith.maximumf %15, %16 : vector<8x256xf32>
      %c1 = arith.constant 1 : index
      %c0_15 = arith.constant 0 : index
      %18 = vector.load %arg5[%c1, %c0_15] : memref<8x256xf32, #tpu.memory_space<vmem>>, vector<1x256xf32>
      %19 = vector.broadcast %18 : vector<1x256xf32> to vector<8x256xf32>
      %20 = arith.addf %17, %19 : vector<8x256xf32>
      %21 = arith.truncf %20 : vector<8x256xf32> to vector<8x256xbf16>
      %c0_16 = arith.constant 0 : index
      %c0_17 = arith.constant 0 : index
      %22 = vector.load %arg6[%c0_16, %c0_17] : memref<8x256xbf16, #tpu.memory_space<vmem>>, vector<8x256xbf16>
      tpu.vector_store %arg6[%c0_16, %c0_17], %21 {strides = array<i32>} : memref<8x256xbf16, #tpu.memory_space<vmem>>, vector<8x256xbf16>,
    } else {
    }
    return
  }
  func.func @transform_0(%arg0: i32, %arg1: i32, %arg2: i32) -> (i32, i32) {
    %c0_i32 = arith.constant 0 : i32
    return %arg0, %arg2 : i32, i32
  }
  func.func @transform_1(%arg0: i32, %arg1: i32, %arg2: i32) -> (i32, i32) {
    %c0_i32 = arith.constant 0 : i32
    return %arg2, %arg1 : i32, i32
  }
  func.func @transform_2(%arg0: i32, %arg1: i32, %arg2: i32) -> (i32, i32) {
    %c0_i32 = arith.constant 0 : i32
    %c0_i32_0 = arith.constant 0 : i32
    return %c0_i32, %arg1 : i32, i32
  }
  func.func @transform_3(%arg0: i32, %arg1: i32, %arg2: i32) -> (i32, i32) {
    %c0_i32 = arith.constant 0 : i32
    return %arg0, %arg1 : i32, i32
  }
}

module attributes {stable_mosaic.version = 11 : i64} {
  func.func @_fused_matmul_kernel(%arg0: i32, %arg1: i32, %arg2: i32, %arg3: memref<8x1024xbf16, #tpu.memory_space<vmem>>, %arg4: memref<1024x512xbf16, #tpu.memory_space<vmem>>, %arg5: memref<8x512xf32, #tpu.memory_space<vmem>>, %arg6: memref<8x512xbf16, #tpu.memory_space<vmem>>, %arg7: memref<8x512xf32, #tpu.memory_space<vmem>>) attributes {dimension_semantics = [#tpu.dimension_semantics<parallel>, #tpu.dimension_semantics<parallel>, #tpu.dimension_semantics<arbitrary>], iteration_bounds = array<i64: 1, 8, 4>, scalar_prefetch = 0 : i64, scratch_operands = 1 : i64, tpu.core_type = #tpu.core_type<tc>, window_params = [{transform_indices = @transform_0, window_bounds = array<i64: 8, 1024>}, {transform_indices = @transform_1, window_bounds = array<i64: 1024, 512>}, {transform_indices = @transform_2, window_bounds = array<i64: 8, 512>}, {transform_indices = @transform_3, window_bounds = array<i64: 8, 512>}]} {
    %c0_i32 = arith.constant 0 : i32
    %0 = arith.cmpi eq, %arg2, %c0_i32 : i32
    %1 = arith.extui %0 : i1 to i32
    %c0_i32_0 = arith.constant 0 : i32
    %2 = arith.cmpi ne, %1, %c0_i32_0 : i32
    scf.if %2 {
      %cst_9 = arith.constant 0.000000e+00 : f32
      %12 = vector.broadcast %cst_9 : f32 to vector<8x512xf32>
      %c0_10 = arith.constant 0 : index
      %c0_11 = arith.constant 0 : index
      %13 = vector.load %arg7[%c0_10, %c0_11] : memref<8x512xf32, #tpu.memory_space<vmem>>, vector<8x512xf32>
      tpu.vector_store %arg7[%c0_10, %c0_11], %12 {strides = array<i32>} : memref<8x512xf32, #tpu.memory_space<vmem>>, vector<8x512xf32>,
    } else {
    }
    %c0 = arith.constant 0 : index
    %c0_1 = arith.constant 0 : index
    %3 = vector.load %arg7[%c0, %c0_1] : memref<8x512xf32, #tpu.memory_space<vmem>>, vector<8x512xf32>
    %c0_2 = arith.constant 0 : index
    %c0_3 = arith.constant 0 : index
    %4 = vector.load %arg3[%c0_2, %c0_3] : memref<8x1024xbf16, #tpu.memory_space<vmem>>, vector<8x1024xbf16>
    %c0_4 = arith.constant 0 : index
    %c0_5 = arith.constant 0 : index
    %5 = vector.load %arg4[%c0_4, %c0_5] : memref<1024x512xbf16, #tpu.memory_space<vmem>>, vector<1024x512xbf16>
    %cst = arith.constant dense<0.000000e+00> : vector<8x512xf32>
    %6 = tpu.matmul %4, %5, %cst {dimension_numbers = #tpu.dot_dimension_numbers<[1], [0], [0], [1], [0, 0, 1, 1], [], []>} : vector<8x1024xbf16>, vector<1024x512xbf16>, vector<8x512xf32> -> vector<8x512xf32>
    %7 = arith.addf %3, %6 : vector<8x512xf32>
    %c0_6 = arith.constant 0 : index
    %c0_7 = arith.constant 0 : index
    %8 = vector.load %arg7[%c0_6, %c0_7] : memref<8x512xf32, #tpu.memory_space<vmem>>, vector<8x512xf32>
    tpu.vector_store %arg7[%c0_6, %c0_7], %7 {strides = array<i32>} : memref<8x512xf32, #tpu.memory_space<vmem>>, vector<8x512xf32>,
    %c3_i32 = arith.constant 3 : i32
    %9 = arith.cmpi eq, %arg2, %c3_i32 : i32
    %10 = arith.extui %9 : i1 to i32
    %c0_i32_8 = arith.constant 0 : i32
    %11 = arith.cmpi ne, %10, %c0_i32_8 : i32
    scf.if %11 {
      %c0_9 = arith.constant 0 : index
      %c0_10 = arith.constant 0 : index
      %12 = vector.load %arg7[%c0_9, %c0_10] : memref<8x512xf32, #tpu.memory_space<vmem>>, vector<8x512xf32>
      %c0_11 = arith.constant 0 : index
      %c0_12 = arith.constant 0 : index
      %13 = vector.load %arg5[%c0_11, %c0_12] : memref<8x512xf32, #tpu.memory_space<vmem>>, vector<1x512xf32>
      %14 = vector.broadcast %13 : vector<1x512xf32> to vector<8x512xf32>
      %15 = arith.addf %12, %14 : vector<8x512xf32>
      %cst_13 = arith.constant 0.000000e+00 : f32
      %16 = vector.broadcast %cst_13 : f32 to vector<8x512xf32>
      %17 = arith.maximumf %15, %16 : vector<8x512xf32>
      %c1 = arith.constant 1 : index
      %c0_14 = arith.constant 0 : index
      %18 = vector.load %arg5[%c1, %c0_14] : memref<8x512xf32, #tpu.memory_space<vmem>>, vector<1x512xf32>
      %19 = vector.broadcast %18 : vector<1x512xf32> to vector<8x512xf32>
      %20 = arith.addf %17, %19 : vector<8x512xf32>
      %21 = arith.truncf %20 : vector<8x512xf32> to vector<8x512xbf16>
      %c0_15 = arith.constant 0 : index
      %c0_16 = arith.constant 0 : index
      %22 = vector.load %arg6[%c0_15, %c0_16] : memref<8x512xbf16, #tpu.memory_space<vmem>>, vector<8x512xbf16>
      tpu.vector_store %arg6[%c0_15, %c0_16], %21 {strides = array<i32>} : memref<8x512xbf16, #tpu.memory_space<vmem>>, vector<8x512xbf16>,
    } else {
    }
    return
  }
  func.func @transform_0(%arg0: i32, %arg1: i32, %arg2: i32) -> (i32, i32) {
    %c0_i32 = arith.constant 0 : i32
    return %arg0, %arg2 : i32, i32
  }
  func.func @transform_1(%arg0: i32, %arg1: i32, %arg2: i32) -> (i32, i32) {
    %c0_i32 = arith.constant 0 : i32
    return %arg2, %arg1 : i32, i32
  }
  func.func @transform_2(%arg0: i32, %arg1: i32, %arg2: i32) -> (i32, i32) {
    %c0_i32 = arith.constant 0 : i32
    %c0_i32_0 = arith.constant 0 : i32
    return %c0_i32, %arg1 : i32, i32
  }
  func.func @transform_3(%arg0: i32, %arg1: i32, %arg2: i32) -> (i32, i32) {
    %c0_i32 = arith.constant 0 : i32
    return %arg0, %arg1 : i32, i32
  }
}

module attributes {stable_mosaic.version = 11 : i64} {
  func.func @_fused_matmul_kernel(%arg0: i32, %arg1: i32, %arg2: i32, %arg3: memref<8x256xbf16, #tpu.memory_space<vmem>>, %arg4: memref<256x512xbf16, #tpu.memory_space<vmem>>, %arg5: memref<8x512xf32, #tpu.memory_space<vmem>>, %arg6: memref<8x512xbf16, #tpu.memory_space<vmem>>, %arg7: memref<8x512xf32, #tpu.memory_space<vmem>>) attributes {dimension_semantics = [#tpu.dimension_semantics<parallel>, #tpu.dimension_semantics<parallel>, #tpu.dimension_semantics<arbitrary>], iteration_bounds = array<i64: 1, 8, 1>, scalar_prefetch = 0 : i64, scratch_operands = 1 : i64, tpu.core_type = #tpu.core_type<tc>, window_params = [{transform_indices = @transform_0, window_bounds = array<i64: 8, 256>}, {transform_indices = @transform_1, window_bounds = array<i64: 256, 512>}, {transform_indices = @transform_2, window_bounds = array<i64: 8, 512>}, {transform_indices = @transform_3, window_bounds = array<i64: 8, 512>}]} {
    %c0_i32 = arith.constant 0 : i32
    %0 = arith.cmpi eq, %arg2, %c0_i32 : i32
    %1 = arith.extui %0 : i1 to i32
    %c0_i32_0 = arith.constant 0 : i32
    %2 = arith.cmpi ne, %1, %c0_i32_0 : i32
    scf.if %2 {
      %cst_10 = arith.constant 0.000000e+00 : f32
      %12 = vector.broadcast %cst_10 : f32 to vector<8x512xf32>
      %c0_11 = arith.constant 0 : index
      %c0_12 = arith.constant 0 : index
      %13 = vector.load %arg7[%c0_11, %c0_12] : memref<8x512xf32, #tpu.memory_space<vmem>>, vector<8x512xf32>
      tpu.vector_store %arg7[%c0_11, %c0_12], %12 {strides = array<i32>} : memref<8x512xf32, #tpu.memory_space<vmem>>, vector<8x512xf32>,
    } else {
    }
    %c0 = arith.constant 0 : index
    %c0_1 = arith.constant 0 : index
    %3 = vector.load %arg7[%c0, %c0_1] : memref<8x512xf32, #tpu.memory_space<vmem>>, vector<8x512xf32>
    %c0_2 = arith.constant 0 : index
    %c0_3 = arith.constant 0 : index
    %4 = vector.load %arg3[%c0_2, %c0_3] : memref<8x256xbf16, #tpu.memory_space<vmem>>, vector<8x256xbf16>
    %c0_4 = arith.constant 0 : index
    %c0_5 = arith.constant 0 : index
    %5 = vector.load %arg4[%c0_4, %c0_5] : memref<256x512xbf16, #tpu.memory_space<vmem>>, vector<256x512xbf16>
    %cst = arith.constant dense<0.000000e+00> : vector<8x512xf32>
    %6 = tpu.matmul %4, %5, %cst {dimension_numbers = #tpu.dot_dimension_numbers<[1], [0], [0], [1], [0, 0, 1, 1], [], []>} : vector<8x256xbf16>, vector<256x512xbf16>, vector<8x512xf32> -> vector<8x512xf32>
    %7 = arith.addf %3, %6 : vector<8x512xf32>
    %c0_6 = arith.constant 0 : index
    %c0_7 = arith.constant 0 : index
    %8 = vector.load %arg7[%c0_6, %c0_7] : memref<8x512xf32, #tpu.memory_space<vmem>>, vector<8x512xf32>
    tpu.vector_store %arg7[%c0_6, %c0_7], %7 {strides = array<i32>} : memref<8x512xf32, #tpu.memory_space<vmem>>, vector<8x512xf32>,
    %c0_i32_8 = arith.constant 0 : i32
    %9 = arith.cmpi eq, %arg2, %c0_i32_8 : i32
    %10 = arith.extui %9 : i1 to i32
    %c0_i32_9 = arith.constant 0 : i32
    %11 = arith.cmpi ne, %10, %c0_i32_9 : i32
    scf.if %11 {
      %c0_10 = arith.constant 0 : index
      %c0_11 = arith.constant 0 : index
      %12 = vector.load %arg7[%c0_10, %c0_11] : memref<8x512xf32, #tpu.memory_space<vmem>>, vector<8x512xf32>
      %c0_12 = arith.constant 0 : index
      %c0_13 = arith.constant 0 : index
      %13 = vector.load %arg5[%c0_12, %c0_13] : memref<8x512xf32, #tpu.memory_space<vmem>>, vector<1x512xf32>
      %14 = vector.broadcast %13 : vector<1x512xf32> to vector<8x512xf32>
      %15 = arith.addf %12, %14 : vector<8x512xf32>
      %cst_14 = arith.constant 0.000000e+00 : f32
      %16 = vector.broadcast %cst_14 : f32 to vector<8x512xf32>
      %17 = arith.maximumf %15, %16 : vector<8x512xf32>
      %c1 = arith.constant 1 : index
      %c0_15 = arith.constant 0 : index
      %18 = vector.load %arg5[%c1, %c0_15] : memref<8x512xf32, #tpu.memory_space<vmem>>, vector<1x512xf32>
      %19 = vector.broadcast %18 : vector<1x512xf32> to vector<8x512xf32>
      %20 = arith.addf %17, %19 : vector<8x512xf32>
      %21 = arith.truncf %20 : vector<8x512xf32> to vector<8x512xbf16>
      %c0_16 = arith.constant 0 : index
      %c0_17 = arith.constant 0 : index
      %22 = vector.load %arg6[%c0_16, %c0_17] : memref<8x512xbf16, #tpu.memory_space<vmem>>, vector<8x512xbf16>
      tpu.vector_store %arg6[%c0_16, %c0_17], %21 {strides = array<i32>} : memref<8x512xbf16, #tpu.memory_space<vmem>>, vector<8x512xbf16>,
    } else {
    }
    return
  }
  func.func @transform_0(%arg0: i32, %arg1: i32, %arg2: i32) -> (i32, i32) {
    %c0_i32 = arith.constant 0 : i32
    return %arg0, %arg2 : i32, i32
  }
  func.func @transform_1(%arg0: i32, %arg1: i32, %arg2: i32) -> (i32, i32) {
    %c0_i32 = arith.constant 0 : i32
    return %arg2, %arg1 : i32, i32
  }
  func.func @transform_2(%arg0: i32, %arg1: i32, %arg2: i32) -> (i32, i32) {
    %c0_i32 = arith.constant 0 : i32
    %c0_i32_0 = arith.constant 0 : i32
    return %c0_i32, %arg1 : i32, i32
  }
  func.func @transform_3(%arg0: i32, %arg1: i32, %arg2: i32) -> (i32, i32) {
    %c0_i32 = arith.constant 0 : i32
    return %arg0, %arg1 : i32, i32
  }
}

module attributes {stable_mosaic.version = 11 : i64} {
  func.func @_fused_matmul_kernel(%arg0: i32, %arg1: i32, %arg2: i32, %arg3: memref<8x1024xbf16, #tpu.memory_space<vmem>>, %arg4: memref<1024x128xbf16, #tpu.memory_space<vmem>>, %arg5: memref<8x128xf32, #tpu.memory_space<vmem>>, %arg6: memref<8x128xf32, #tpu.memory_space<vmem>>, %arg7: memref<8x128xf32, #tpu.memory_space<vmem>>) attributes {dimension_semantics = [#tpu.dimension_semantics<parallel>, #tpu.dimension_semantics<parallel>, #tpu.dimension_semantics<arbitrary>], iteration_bounds = array<i64: 1, 1, 4>, scalar_prefetch = 0 : i64, scratch_operands = 1 : i64, tpu.core_type = #tpu.core_type<tc>, window_params = [{transform_indices = @transform_0, window_bounds = array<i64: 8, 1024>}, {transform_indices = @transform_1, window_bounds = array<i64: 1024, 128>}, {transform_indices = @transform_2, window_bounds = array<i64: 8, 128>}, {transform_indices = @transform_3, window_bounds = array<i64: 8, 128>}]} {
    %c0_i32 = arith.constant 0 : i32
    %0 = arith.cmpi eq, %arg2, %c0_i32 : i32
    %1 = arith.extui %0 : i1 to i32
    %c0_i32_0 = arith.constant 0 : i32
    %2 = arith.cmpi ne, %1, %c0_i32_0 : i32
    scf.if %2 {
      %cst_9 = arith.constant 0.000000e+00 : f32
      %12 = vector.broadcast %cst_9 : f32 to vector<8x128xf32>
      %c0_10 = arith.constant 0 : index
      %c0_11 = arith.constant 0 : index
      %13 = vector.load %arg7[%c0_10, %c0_11] : memref<8x128xf32, #tpu.memory_space<vmem>>, vector<8x128xf32>
      tpu.vector_store %arg7[%c0_10, %c0_11], %12 {strides = array<i32>} : memref<8x128xf32, #tpu.memory_space<vmem>>, vector<8x128xf32>,
    } else {
    }
    %c0 = arith.constant 0 : index
    %c0_1 = arith.constant 0 : index
    %3 = vector.load %arg7[%c0, %c0_1] : memref<8x128xf32, #tpu.memory_space<vmem>>, vector<8x128xf32>
    %c0_2 = arith.constant 0 : index
    %c0_3 = arith.constant 0 : index
    %4 = vector.load %arg3[%c0_2, %c0_3] : memref<8x1024xbf16, #tpu.memory_space<vmem>>, vector<8x1024xbf16>
    %c0_4 = arith.constant 0 : index
    %c0_5 = arith.constant 0 : index
    %5 = vector.load %arg4[%c0_4, %c0_5] : memref<1024x128xbf16, #tpu.memory_space<vmem>>, vector<1024x128xbf16>
    %cst = arith.constant dense<0.000000e+00> : vector<8x128xf32>
    %6 = tpu.matmul %4, %5, %cst {dimension_numbers = #tpu.dot_dimension_numbers<[1], [0], [0], [1], [0, 0, 1, 1], [], []>} : vector<8x1024xbf16>, vector<1024x128xbf16>, vector<8x128xf32> -> vector<8x128xf32>
    %7 = arith.addf %3, %6 : vector<8x128xf32>
    %c0_6 = arith.constant 0 : index
    %c0_7 = arith.constant 0 : index
    %8 = vector.load %arg7[%c0_6, %c0_7] : memref<8x128xf32, #tpu.memory_space<vmem>>, vector<8x128xf32>
    tpu.vector_store %arg7[%c0_6, %c0_7], %7 {strides = array<i32>} : memref<8x128xf32, #tpu.memory_space<vmem>>, vector<8x128xf32>,
    %c3_i32 = arith.constant 3 : i32
    %9 = arith.cmpi eq, %arg2, %c3_i32 : i32
    %10 = arith.extui %9 : i1 to i32
    %c0_i32_8 = arith.constant 0 : i32
    %11 = arith.cmpi ne, %10, %c0_i32_8 : i32
    scf.if %11 {
      %c0_9 = arith.constant 0 : index
      %c0_10 = arith.constant 0 : index
      %12 = vector.load %arg7[%c0_9, %c0_10] : memref<8x128xf32, #tpu.memory_space<vmem>>, vector<8x128xf32>
      %c0_11 = arith.constant 0 : index
      %c0_12 = arith.constant 0 : index
      %13 = vector.load %arg5[%c0_11, %c0_12] : memref<8x128xf32, #tpu.memory_space<vmem>>, vector<1x128xf32>
      %14 = vector.broadcast %13 : vector<1x128xf32> to vector<8x128xf32>
      %15 = arith.addf %12, %14 : vector<8x128xf32>
      %c1 = arith.constant 1 : index
      %c0_13 = arith.constant 0 : index
      %16 = vector.load %arg5[%c1, %c0_13] : memref<8x128xf32, #tpu.memory_space<vmem>>, vector<1x128xf32>
      %17 = vector.broadcast %16 : vector<1x128xf32> to vector<8x128xf32>
      %18 = arith.addf %15, %17 : vector<8x128xf32>
      %c0_14 = arith.constant 0 : index
      %c0_15 = arith.constant 0 : index
      %19 = vector.load %arg6[%c0_14, %c0_15] : memref<8x128xf32, #tpu.memory_space<vmem>>, vector<8x128xf32>
      tpu.vector_store %arg6[%c0_14, %c0_15], %18 {strides = array<i32>} : memref<8x128xf32, #tpu.memory_space<vmem>>, vector<8x128xf32>,
    } else {
    }
    return
  }
  func.func @transform_0(%arg0: i32, %arg1: i32, %arg2: i32) -> (i32, i32) {
    %c0_i32 = arith.constant 0 : i32
    return %arg0, %arg2 : i32, i32
  }
  func.func @transform_1(%arg0: i32, %arg1: i32, %arg2: i32) -> (i32, i32) {
    %c0_i32 = arith.constant 0 : i32
    return %arg2, %arg1 : i32, i32
  }
  func.func @transform_2(%arg0: i32, %arg1: i32, %arg2: i32) -> (i32, i32) {
    %c0_i32 = arith.constant 0 : i32
    %c0_i32_0 = arith.constant 0 : i32
    return %c0_i32, %arg1 : i32, i32
  }
  func.func @transform_3(%arg0: i32, %arg1: i32, %arg2: i32) -> (i32, i32) {
    %c0_i32 = arith.constant 0 : i32
    return %arg0, %arg1 : i32, i32
  }
}

</mosaic_0001>

<llo_original>
// kernel: _lambda_.11
$region0: #{_lambda_.11}
  #allocation0 [shape = 'u32[]', space=smem, size = 0x4, offset = 0x4, fixed_abs, tag = 'smem constant byte address 0x4 - core index']
  #allocation1 [shape = 'u32[72,128]{1,0:T(1,128)}', space=vmem, size = 0x9000, scoped, tag = 'internal scratch']
  #allocation2 [shape = 'f32[8,128]{1,0:T(8,128)}', space=vmem, size = 0x1000, scoped, tag = 'scratch operand']
  %s0 = inlined_call_operand.vmem [shape: bf16[8,128], index: 0, kind: input, shape index: {}]
  %s1 = inlined_call_operand.hbm [shape: bf16[128,128], index: 1, kind: input, shape index: {}]
  %s2 = inlined_call_operand.hbm [shape: f32[8,128], index: 2, kind: input, shape index: {}]
  %s3 = inlined_call_operand.vmem [shape: bf16[8,128], index: 3, kind: output, shape index: {}]
  %s4 = sld [smem:[#allocation0]]
  $region38: #{_lambda_.11} parent=0
    _
  %s6 = ssub.s32 1, %s4
  %s7 = scalar_select 0, %s6, %s4
  $region1: #{_lambda_.11} parent=0
    #allocation3 [shape = 'u8[32768]{0}', space=vmem, size = 0x8000, scoped, tag = 'input window, operand 1, single buffered']
    #allocation4 [shape = 's32[1]{0}', space=sflag, size = 0x4, scoped, tag = 'scoped memory for _lambda_.11']
    #allocation5 [shape = 'u8[4096]{0}', space=vmem, size = 0x1000, scoped, tag = 'input window, operand 2, single buffered']
    #allocation6 [shape = 's32[1]{0}', space=sflag, size = 0x4, scoped, tag = 'scoped memory for _lambda_.11']
    %8 = vsyncpa [#allocation4], 0
    %9 = vsyncpa [#allocation6], 0
    // Predicated region
    $region2: #{_lambda_.11} parent=1 // pred_check
      _
    $region3: #{_lambda_.11} parent=1 // pred_check_branch
      %11 = sbr.rel (0) target = $region5
    $region4: #{_lambda_.11} parent=1 // pred_region
      _
    $region5: #{_lambda_.11} parent=1 // pred_fallthru
      _
    // Predicated region
    $region6: #{_lambda_.11} parent=1 // pred_check
      _
    $region7: #{_lambda_.11} parent=1 // pred_check_branch
      %13 = sbr.rel (0) target = $region9
    $region8: #{_lambda_.11} parent=1 // pred_region
      %15 = vsyncadd [#allocation4], 0
      %s16 = sshll.u32 %s1, 4
      %s17 = int_to_ptr.hbm [resolvable:$true] %s16
      %s18 = sshll.u32 [#allocation3], 4
      %s19 = int_to_ptr.vmem [resolvable:$true] %s18
      %24 = dma.hbm_to_vmem [thread:$0]  %s17, 1024, %s19, [#allocation4], 64, 64, 4
    $region9: #{_lambda_.11} parent=1 // pred_fallthru
      _
    // Predicated region
    $region10: #{_lambda_.11} parent=1 // pred_check
      _
    $region11: #{_lambda_.11} parent=1 // pred_check_branch
      %26 = sbr.rel (0) target = $region13
    $region12: #{_lambda_.11} parent=1 // pred_region
      %28 = vsyncadd [#allocation6], 0
      %s30 = sshll.u32 %s2, 4
      %s31 = int_to_ptr.hbm [resolvable:$true] %s30
      %s32 = sshll.u32 [#allocation5], 4
      %s33 = int_to_ptr.vmem [resolvable:$true] %s32
      %35 = dma.hbm_to_vmem [thread:$0]  %s31, 128, %s33, [#allocation6]
    $region13: #{_lambda_.11} parent=1 // pred_fallthru
      _
    // Predicated region
    $region14: #{_lambda_.11} parent=1 // pred_check
      _
    $region15: #{_lambda_.11} parent=1 // pred_check_branch
      %37 = sbr.rel (0) target = $region17
    $region16: #{_lambda_.11} parent=1 // pred_region
      %39 = dma.done [#allocation4], 1024
    $region17: #{_lambda_.11} parent=1 // pred_fallthru
      _
    // Predicated region
    $region18: #{_lambda_.11} parent=1 // pred_check
      _
    $region19: #{_lambda_.11} parent=1 // pred_check_branch
      %41 = sbr.rel (0) target = $region21
    $region20: #{_lambda_.11} parent=1 // pred_region
      %43 = dma.done [#allocation6], 128
    $region21: #{_lambda_.11} parent=1 // pred_fallthru
      _
    %p44 = scmp.eq.s32.totalorder 0, 0
    // Predicated region
    $region22: #{_lambda_.11} parent=1 // pred_check
      %p45 = pneg %p44
    $region23: #{_lambda_.11} parent=1 // pred_check_branch
      %47 = sbr.rel (%p45) target = $region25
    $region24: #{_lambda_.11} parent=1 // pred_region
      %48 = vst [vmem:[#allocation2] sm:$0xff] 0.0
    $region25: #{_lambda_.11} parent=1 // pred_fallthru
      _
    %v49 = vld [vmem:[#allocation2] sm:$0xff]
    %v50 = vld [vmem:[%s0] sm:$0xf]
    %v51 = vld [vmem:[#allocation3] sm:$0xf]
    %v52 = vld [vmem:[#allocation3 + $0x4] sm:$0xf]
    %v53 = vld [vmem:[#allocation3 + $0x8] sm:$0xf]
    %v54 = vld [vmem:[#allocation3 + $0xc] sm:$0xf]
    %v55 = vld [vmem:[#allocation3 + $0x10] sm:$0xf]
    %v56 = vld [vmem:[#allocation3 + $0x14] sm:$0xf]
    %v57 = vld [vmem:[#allocation3 + $0x18] sm:$0xf]
    %v58 = vld [vmem:[#allocation3 + $0x1c] sm:$0xf]
    %v59 = vld [vmem:[#allocation3 + $0x20] sm:$0xf]
    %v60 = vld [vmem:[#allocation3 + $0x24] sm:$0xf]
    %v61 = vld [vmem:[#allocation3 + $0x28] sm:$0xf]
    %v62 = vld [vmem:[#allocation3 + $0x2c] sm:$0xf]
    %v63 = vld [vmem:[#allocation3 + $0x30] sm:$0xf]
    %v64 = vld [vmem:[#allocation3 + $0x34] sm:$0xf]
    %v65 = vld [vmem:[#allocation3 + $0x38] sm:$0xf]
    %v66 = vld [vmem:[#allocation3 + $0x3c] sm:$0xf]
    %v83 = vunpack.c.l.b16 %v51
    %v84 = vunpack.c.l.b16 %v52
    %v85 = vunpack.c.l.b16 %v53
    %v86 = vunpack.c.l.b16 %v54
    %v87 = vunpack.c.l.b16 %v55
    %v88 = vunpack.c.l.b16 %v56
    %v89 = vunpack.c.l.b16 %v57
    %v90 = vunpack.c.l.b16 %v58
    %v91 = vunpack.c.l.b16 %v59
    %v92 = vunpack.c.l.b16 %v60
    %v93 = vunpack.c.l.b16 %v61
    %v94 = vunpack.c.l.b16 %v62
    %v95 = vunpack.c.l.b16 %v63
    %v96 = vunpack.c.l.b16 %v64
    %v97 = vunpack.c.l.b16 %v65
    %v98 = vunpack.c.l.b16 %v66
    %v99 = vpack.c.b16 %v84, %v83
    %v100 = vpack.c.b16 %v86, %v85
    %v101 = vpack.c.b16 %v88, %v87
    %v102 = vpack.c.b16 %v90, %v89
    %v103 = vpack.c.b16 %v92, %v91
    %v104 = vpack.c.b16 %v94, %v93
    %v105 = vpack.c.b16 %v96, %v95
    %v106 = vpack.c.b16 %v98, %v97
    %115 = vmatpush.bf16.msra.mxu0 %v106
    %116 = vmatpush.bf16.msra.mxu0 %v105
    %117 = vmatpush.bf16.msra.mxu0 %v104
    %118 = vmatpush.bf16.msra.mxu0 %v103
    %119 = vmatpush.bf16.msra.mxu0 %v102
    %120 = vmatpush.bf16.msra.mxu0 %v101
    %121 = vmatpush.bf16.msra.mxu0 %v100
    %122 = vmatpush.bf16.msra.mxu0 %v99
    %123 = vmatmul.bf16.gmra.mxu0 %v50
    %v124 = vpop.f32.mrf.mxu0
    %v125 = vadd.f32 0.0, %v124
    %v126 = vpop.f32.mrf.mxu0
    %127 = vdwg.mxu0
    %v128 = vadd.f32 %v49, %v125
    %129 = vst [vmem:[#allocation2] sm:$0xff] %v128
    // Predicated region
    $region26: #{_lambda_.11} parent=1 // pred_check
      %p130 = pneg %p44
    $region27: #{_lambda_.11} parent=1 // pred_check_branch
      %132 = sbr.rel (%p130) target = $region29
    $region28: #{_lambda_.11} parent=1 // pred_region
      %v133 = vld [vmem:[#allocation2] sm:$0xff]
      %v134 = vld [vmem:[#allocation5] sm:$0x1]
      %v135 = vperm.slane %v134, 0
      %v136 = vadd.f32 %v133, %v135
      %v137 = vmax.f32 %v136, 0.0
      %v138 = vld [vmem:[#allocation5 + $0x1] sm:$0x1]
      %v139 = vperm.slane %v138, 0
      %v140 = vadd.f32 %v137, %v139
      %v141 = vpack.c.bf16 %v140, %v140
      %142 = vst [vmem:[%s3] sm:$0xf] %v141
    $region29: #{_lambda_.11} parent=1 // pred_fallthru
      _
    // Predicated region
    $region30: #{_lambda_.11} parent=1 // pred_check
      _
    $region31: #{_lambda_.11} parent=1 // pred_check_branch
      %144 = sbr.rel (0) target = $region33
    $region32: #{_lambda_.11} parent=1 // pred_region
      _
    $region33: #{_lambda_.11} parent=1 // pred_fallthru
      _
    // Predicated region
    $region34: #{_lambda_.11} parent=1 // pred_check
      _
    $region35: #{_lambda_.11} parent=1 // pred_check_branch
      %146 = sbr.rel (0) target = $region37
    $region36: #{_lambda_.11} parent=1 // pred_region
      _
    $region37: #{_lambda_.11} parent=1 // pred_fallthru
      _
    %147 = vsyncpa [#allocation4], 1
    %148 = vsyncpa [#allocation6], 1

// kernel: _lambda_.12
$region0: #{_lambda_.12}
  #allocation0 [shape = 'u32[]', space=smem, size = 0x4, offset = 0x4, fixed_abs, tag = 'smem constant byte address 0x4 - core index']
  #allocation1 [shape = 'u32[72,128]{1,0:T(1,128)}', space=vmem, size = 0x9000, scoped, tag = 'internal scratch']
  %s0 = inlined_call_operand.vmem [shape: bf16[8,128], index: 0, kind: input, shape index: {}]
  %s1 = inlined_call_operand.vmem [shape: bf16[8,128], index: 1, kind: input, shape index: {}]
  %s2 = inlined_call_operand.vmem [shape: bf16[8,128], index: 2, kind: input, shape index: {}]
  %s3 = inlined_call_operand.vmem [shape: bf16[8,128], index: 3, kind: output, shape index: {}]
  %s4 = sld [smem:[#allocation0]]
  $region22: #{_lambda_.12} parent=0
    _
  %s6 = ssub.s32 1, %s4
  %s7 = scalar_select 0, %s6, %s4
  // Predicated region
  $region2: #{_lambda_.12} parent=0 // pred_check
    _
  $region3: #{_lambda_.12} parent=0 // pred_check_branch
    %9 = sbr.rel (0) target = $region5
  $region4: #{_lambda_.12} parent=0 // pred_region
    _
  $region5: #{_lambda_.12} parent=0 // pred_fallthru
    _
  // Predicated region
  $region6: #{_lambda_.12} parent=0 // pred_check
    _
  $region7: #{_lambda_.12} parent=0 // pred_check_branch
    %11 = sbr.rel (0) target = $region9
  $region8: #{_lambda_.12} parent=0 // pred_region
    _
  $region9: #{_lambda_.12} parent=0 // pred_fallthru
    _
  // Predicated region
  $region10: #{_lambda_.12} parent=0 // pred_check
    _
  $region11: #{_lambda_.12} parent=0 // pred_check_branch
    %13 = sbr.rel (0) target = $region13
  $region12: #{_lambda_.12} parent=0 // pred_region
    _
  $region13: #{_lambda_.12} parent=0 // pred_fallthru
    _
  %v14 = vld [vmem:[%s0] sm:$0xf]
  %v15 = vld [vmem:[%s1] sm:$0xf]
  %v16 = vunpack.c.l.bf16 %v14
  %v17 = vunpack.c.l.bf16 %v15
  %v18 = vmax.f32 %v16, %v17
  %v19 = vpack.c.bf16 %v18, %v18
  %v20 = vld [vmem:[%s2] sm:$0xf]
  %v21 = vunpack.c.l.bf16 %v19
  %v22 = vunpack.c.l.bf16 %v20
  %v23 = vmax.f32 %v21, %v22
  %v24 = vpack.c.bf16 %v23, %v23
  %25 = vst [vmem:[%s3] sm:$0xf] %v24
  // Predicated region
  $region14: #{_lambda_.12} parent=0 // pred_check
    _
  $region15: #{_lambda_.12} parent=0 // pred_check_branch
    %27 = sbr.rel (0) target = $region17
  $region16: #{_lambda_.12} parent=0 // pred_region
    _
  $region17: #{_lambda_.12} parent=0 // pred_fallthru
    _
  // Predicated region
  $region18: #{_lambda_.12} parent=0 // pred_check
    _
  $region19: #{_lambda_.12} parent=0 // pred_check_branch
    %29 = sbr.rel (0) target = $region21
  $region20: #{_lambda_.12} parent=0 // pred_region
    _
  $region21: #{_lambda_.12} parent=0 // pred_fallthru
    _

// kernel: _lambda_.13
$region0: #{_lambda_.13}
  #allocation0 [shape = 'u32[]', space=smem, size = 0x4, offset = 0x4, fixed_abs, tag = 'smem constant byte address 0x4 - core index']
  #allocation1 [shape = 'u32[72,128]{1,0:T(1,128)}', space=vmem, size = 0x9000, scoped, tag = 'internal scratch']
  #allocation2 [shape = 'f32[8,256]{1,0:T(8,128)}', space=vmem, size = 0x2000, scoped, tag = 'scratch operand']
  %s0 = inlined_call_operand.vmem [shape: bf16[8,512], index: 0, kind: input, shape index: {}]
  %s1 = inlined_call_operand.hbm [shape: bf16[512,256], index: 1, kind: input, shape index: {}]
  %s2 = inlined_call_operand.hbm [shape: f32[8,256], index: 2, kind: input, shape index: {}]
  %s3 = inlined_call_operand.vmem [shape: bf16[8,256], index: 3, kind: output, shape index: {}]
  %s4 = sld [smem:[#allocation0]]
  $region38: #{_lambda_.13} parent=0
    _
  %s6 = ssub.s32 1, %s4
  %s7 = scalar_select 0, %s6, %s4
  $region1: #{_lambda_.13} parent=0
    #allocation3 [shape = 'u8[262144]{0}', space=vmem, size = 0x40000, scoped, tag = 'input window, operand 1, single buffered']
    #allocation4 [shape = 's32[1]{0}', space=sflag, size = 0x4, scoped, tag = 'scoped memory for _lambda_.13']
    #allocation5 [shape = 'u8[8192]{0}', space=vmem, size = 0x2000, scoped, tag = 'input window, operand 2, single buffered']
    #allocation6 [shape = 's32[1]{0}', space=sflag, size = 0x4, scoped, tag = 'scoped memory for _lambda_.13']
    %8 = vsyncpa [#allocation4], 0
    %9 = vsyncpa [#allocation6], 0
    // Predicated region
    $region2: #{_lambda_.13} parent=1 // pred_check
      _
    $region3: #{_lambda_.13} parent=1 // pred_check_branch
      %11 = sbr.rel (0) target = $region5
    $region4: #{_lambda_.13} parent=1 // pred_region
      _
    $region5: #{_lambda_.13} parent=1 // pred_fallthru
      _
    // Predicated region
    $region6: #{_lambda_.13} parent=1 // pred_check
      _
    $region7: #{_lambda_.13} parent=1 // pred_check_branch
      %13 = sbr.rel (0) target = $region9
    $region8: #{_lambda_.13} parent=1 // pred_region
      %15 = vsyncadd [#allocation4], 0
      %s16 = sshll.u32 %s1, 4
      %s17 = int_to_ptr.hbm [resolvable:$true] %s16
      %s18 = sshll.u32 [#allocation3], 4
      %s19 = int_to_ptr.vmem [resolvable:$true] %s18
      %24 = dma.hbm_to_vmem [thread:$0]  %s17, 8192, %s19, [#allocation4], 128, 128, 8
    $region9: #{_lambda_.13} parent=1 // pred_fallthru
      _
    // Predicated region
    $region10: #{_lambda_.13} parent=1 // pred_check
      _
    $region11: #{_lambda_.13} parent=1 // pred_check_branch
      %26 = sbr.rel (0) target = $region13
    $region12: #{_lambda_.13} parent=1 // pred_region
      %28 = vsyncadd [#allocation6], 0
      %s30 = sshll.u32 %s2, 4
      %s31 = int_to_ptr.hbm [resolvable:$true] %s30
      %s32 = sshll.u32 [#allocation5], 4
      %s33 = int_to_ptr.vmem [resolvable:$true] %s32
      %35 = dma.hbm_to_vmem [thread:$0]  %s31, 256, %s33, [#allocation6]
    $region13: #{_lambda_.13} parent=1 // pred_fallthru
      _
    // Predicated region
    $region14: #{_lambda_.13} parent=1 // pred_check
      _
    $region15: #{_lambda_.13} parent=1 // pred_check_branch
      %37 = sbr.rel (0) target = $region17
    $region16: #{_lambda_.13} parent=1 // pred_region
      %39 = dma.done [#allocation4], 8192
    $region17: #{_lambda_.13} parent=1 // pred_fallthru
      _
    // Predicated region
    $region18: #{_lambda_.13} parent=1 // pred_check
      _
    $region19: #{_lambda_.13} parent=1 // pred_check_branch
      %41 = sbr.rel (0) target = $region21
    $region20: #{_lambda_.13} parent=1 // pred_region
      %43 = dma.done [#allocation6], 256
    $region21: #{_lambda_.13} parent=1 // pred_fallthru
      _
    %p44 = scmp.eq.s32.totalorder 0, 0
    // Predicated region
    $region22: #{_lambda_.13} parent=1 // pred_check
      %p45 = pneg %p44
    $region23: #{_lambda_.13} parent=1 // pred_check_branch
      %47 = sbr.rel (%p45) target = $region25
    $region24: #{_lambda_.13} parent=1 // pred_region
      %48 = vst [vmem:[#allocation2] sm:$0xff] 0.0
      %49 = vst [vmem:[#allocation2 + $0x8] sm:$0xff] 0.0
    $region25: #{_lambda_.13} parent=1 // pred_fallthru
      _
    %v50 = vld [vmem:[#allocation2] sm:$0xff]
    %v51 = vld [vmem:[#allocation2 + $0x8] sm:$0xff]
    %v52 = vld [vmem:[%s0] sm:$0xff]
    %v53 = vld [vmem:[%s0 + $0x8] sm:$0xff]
    %v54 = vld [vmem:[#allocation3] sm:$0xff]
    %v55 = vld [vmem:[#allocation3 + $0x8] sm:$0xff]
    %v56 = vld [vmem:[#allocation3 + $0x10] sm:$0xff]
    %v57 = vld [vmem:[#allocation3 + $0x18] sm:$0xff]
    %v58 = vld [vmem:[#allocation3 + $0x20] sm:$0xff]
    %v59 = vld [vmem:[#allocation3 + $0x28] sm:$0xff]
    %v60 = vld [vmem:[#allocation3 + $0x30] sm:$0xff]
    %v61 = vld [vmem:[#allocation3 + $0x38] sm:$0xff]
    %v62 = vld [vmem:[#allocation3 + $0x40] sm:$0xff]
    %v63 = vld [vmem:[#allocation3 + $0x48] sm:$0xff]
    %v64 = vld [vmem:[#allocation3 + $0x50] sm:$0xff]
    %v65 = vld [vmem:[#allocation3 + $0x58] sm:$0xff]
    %v66 = vld [vmem:[#allocation3 + $0x60] sm:$0xff]
    %v67 = vld [vmem:[#allocation3 + $0x68] sm:$0xff]
    %v68 = vld [vmem:[#allocation3 + $0x70] sm:$0xff]
    %v69 = vld [vmem:[#allocation3 + $0x78] sm:$0xff]
    %v70 = vld [vmem:[#allocation3 + $0x80] sm:$0xff]
    %v71 = vld [vmem:[#allocation3 + $0x88] sm:$0xff]
    %v72 = vld [vmem:[#allocation3 + $0x90] sm:$0xff]
    %v73 = vld [vmem:[#allocation3 + $0x98] sm:$0xff]
    %v74 = vld [vmem:[#allocation3 + $0xa0] sm:$0xff]
    %v75 = vld [vmem:[#allocation3 + $0xa8] sm:$0xff]
    %v76 = vld [vmem:[#allocation3 + $0xb0] sm:$0xff]
    %v77 = vld [vmem:[#allocation3 + $0xb8] sm:$0xff]
    %v78 = vld [vmem:[#allocation3 + $0xc0] sm:$0xff]
    %v79 = vld [vmem:[#allocation3 + $0xc8] sm:$0xff]
    %v80 = vld [vmem:[#allocation3 + $0xd0] sm:$0xff]
    %v81 = vld [vmem:[#allocation3 + $0xd8] sm:$0xff]
    %v82 = vld [vmem:[#allocation3 + $0xe0] sm:$0xff]
    %v83 = vld [vmem:[#allocation3 + $0xe8] sm:$0xff]
    %v84 = vld [vmem:[#allocation3 + $0xf0] sm:$0xff]
    %v85 = vld [vmem:[#allocation3 + $0xf8] sm:$0xff]
    %v86 = vld [vmem:[#allocation3 + $0x100] sm:$0xff]
    %v87 = vld [vmem:[#allocation3 + $0x108] sm:$0xff]
    %v88 = vld [vmem:[#allocation3 + $0x110] sm:$0xff]
    %v89 = vld [vmem:[#allocation3 + $0x118] sm:$0xff]
    %v90 = vld [vmem:[#allocation3 + $0x120] sm:$0xff]
    %v91 = vld [vmem:[#allocation3 + $0x128] sm:$0xff]
    %v92 = vld [vmem:[#allocation3 + $0x130] sm:$0xff]
    %v93 = vld [vmem:[#allocation3 + $0x138] sm:$0xff]
    %v94 = vld [vmem:[#allocation3 + $0x140] sm:$0xff]
    %v95 = vld [vmem:[#allocation3 + $0x148] sm:$0xff]
    %v96 = vld [vmem:[#allocation3 + $0x150] sm:$0xff]
    %v97 = vld [vmem:[#allocation3 + $0x158] sm:$0xff]
    %v98 = vld [vmem:[#allocation3 + $0x160] sm:$0xff]
    %v99 = vld [vmem:[#allocation3 + $0x168] sm:$0xff]
    %v100 = vld [vmem:[#allocation3 + $0x170] sm:$0xff]
    %v101 = vld [vmem:[#allocation3 + $0x178] sm:$0xff]
    %v102 = vld [vmem:[#allocation3 + $0x180] sm:$0xff]
    %v103 = vld [vmem:[#allocation3 + $0x188] sm:$0xff]
    %v104 = vld [vmem:[#allocation3 + $0x190] sm:$0xff]
    %v105 = vld [vmem:[#allocation3 + $0x198] sm:$0xff]
    %v106 = vld [vmem:[#allocation3 + $0x1a0] sm:$0xff]
    %v107 = vld [vmem:[#allocation3 + $0x1a8] sm:$0xff]
    %v108 = vld [vmem:[#allocation3 + $0x1b0] sm:$0xff]
    %v109 = vld [vmem:[#allocation3 + $0x1b8] sm:$0xff]
    %v110 = vld [vmem:[#allocation3 + $0x1c0] sm:$0xff]
    %v111 = vld [vmem:[#allocation3 + $0x1c8] sm:$0xff]
    %v112 = vld [vmem:[#allocation3 + $0x1d0] sm:$0xff]
    %v113 = vld [vmem:[#allocation3 + $0x1d8] sm:$0xff]
    %v114 = vld [vmem:[#allocation3 + $0x1e0] sm:$0xff]
    %v115 = vld [vmem:[#allocation3 + $0x1e8] sm:$0xff]
    %v116 = vld [vmem:[#allocation3 + $0x1f0] sm:$0xff]
    %v117 = vld [vmem:[#allocation3 + $0x1f8] sm:$0xff]
    %v120 = vunpack.c.l.b16 %v52
    %v121 = vunpack.c.h.b16 %v52
    %v122 = vunpack.c.l.b16 %v53
    %v123 = vunpack.c.h.b16 %v53
    %v124 = vpack.c.b16 %v120, %v120
    %v125 = vpack.c.b16 %v121, %v121
    %v126 = vpack.c.b16 %v122, %v122
    %v127 = vpack.c.b16 %v123, %v123
    %v196 = vunpack.c.l.b16 %v54
    %v197 = vunpack.c.h.b16 %v54
    %v198 = vunpack.c.l.b16 %v55
    %v199 = vunpack.c.h.b16 %v55
    %v200 = vunpack.c.l.b16 %v56
    %v201 = vunpack.c.h.b16 %v56
    %v202 = vunpack.c.l.b16 %v57
    %v203 = vunpack.c.h.b16 %v57
    %v204 = vunpack.c.l.b16 %v58
    %v205 = vunpack.c.h.b16 %v58
    %v206 = vunpack.c.l.b16 %v59
    %v207 = vunpack.c.h.b16 %v59
    %v208 = vunpack.c.l.b16 %v60
    %v209 = vunpack.c.h.b16 %v60
    %v210 = vunpack.c.l.b16 %v61
    %v211 = vunpack.c.h.b16 %v61
    %v212 = vunpack.c.l.b16 %v62
    %v213 = vunpack.c.h.b16 %v62
    %v214 = vunpack.c.l.b16 %v63
    %v215 = vunpack.c.h.b16 %v63
    %v216 = vunpack.c.l.b16 %v64
    %v217 = vunpack.c.h.b16 %v64
    %v218 = vunpack.c.l.b16 %v65
    %v219 = vunpack.c.h.b16 %v65
    %v220 = vunpack.c.l.b16 %v66
    %v221 = vunpack.c.h.b16 %v66
    %v222 = vunpack.c.l.b16 %v67
    %v223 = vunpack.c.h.b16 %v67
    %v224 = vunpack.c.l.b16 %v68
    %v225 = vunpack.c.h.b16 %v68
    %v226 = vunpack.c.l.b16 %v69
    %v227 = vunpack.c.h.b16 %v69
    %v228 = vunpack.c.l.b16 %v70
    %v229 = vunpack.c.h.b16 %v70
    %v230 = vunpack.c.l.b16 %v71
    %v231 = vunpack.c.h.b16 %v71
    %v232 = vunpack.c.l.b16 %v72
    %v233 = vunpack.c.h.b16 %v72
    %v234 = vunpack.c.l.b16 %v73
    %v235 = vunpack.c.h.b16 %v73
    %v236 = vunpack.c.l.b16 %v74
    %v237 = vunpack.c.h.b16 %v74
    %v238 = vunpack.c.l.b16 %v75
    %v239 = vunpack.c.h.b16 %v75
    %v240 = vunpack.c.l.b16 %v76
    %v241 = vunpack.c.h.b16 %v76
    %v242 = vunpack.c.l.b16 %v77
    %v243 = vunpack.c.h.b16 %v77
    %v244 = vunpack.c.l.b16 %v78
    %v245 = vunpack.c.h.b16 %v78
    %v246 = vunpack.c.l.b16 %v79
    %v247 = vunpack.c.h.b16 %v79
    %v248 = vunpack.c.l.b16 %v80
    %v249 = vunpack.c.h.b16 %v80
    %v250 = vunpack.c.l.b16 %v81
    %v251 = vunpack.c.h.b16 %v81
    %v252 = vunpack.c.l.b16 %v82
    %v253 = vunpack.c.h.b16 %v82
    %v254 = vunpack.c.l.b16 %v83
    %v255 = vunpack.c.h.b16 %v83
    %v256 = vunpack.c.l.b16 %v84
    %v257 = vunpack.c.h.b16 %v84
    %v258 = vunpack.c.l.b16 %v85
    %v259 = vunpack.c.h.b16 %v85
    %v260 = vunpack.c.l.b16 %v86
    %v261 = vunpack.c.h.b16 %v86
    %v262 = vunpack.c.l.b16 %v87
    %v263 = vunpack.c.h.b16 %v87
    %v264 = vunpack.c.l.b16 %v88
    %v265 = vunpack.c.h.b16 %v88
    %v266 = vunpack.c.l.b16 %v89
    %v267 = vunpack.c.h.b16 %v89
    %v268 = vunpack.c.l.b16 %v90
    %v269 = vunpack.c.h.b16 %v90
    %v270 = vunpack.c.l.b16 %v91
    %v271 = vunpack.c.h.b16 %v91
    %v272 = vunpack.c.l.b16 %v92
    %v273 = vunpack.c.h.b16 %v92
    %v274 = vunpack.c.l.b16 %v93
    %v275 = vunpack.c.h.b16 %v93
    %v276 = vunpack.c.l.b16 %v94
    %v277 = vunpack.c.h.b16 %v94
    %v278 = vunpack.c.l.b16 %v95
    %v279 = vunpack.c.h.b16 %v95
    %v280 = vunpack.c.l.b16 %v96
    %v281 = vunpack.c.h.b16 %v96
    %v282 = vunpack.c.l.b16 %v97
    %v283 = vunpack.c.h.b16 %v97
    %v284 = vunpack.c.l.b16 %v98
    %v285 = vunpack.c.h.b16 %v98
    %v286 = vunpack.c.l.b16 %v99
    %v287 = vunpack.c.h.b16 %v99
    %v288 = vunpack.c.l.b16 %v100
    %v289 = vunpack.c.h.b16 %v100
    %v290 = vunpack.c.l.b16 %v101
    %v291 = vunpack.c.h.b16 %v101
    %v292 = vunpack.c.l.b16 %v102
    %v293 = vunpack.c.h.b16 %v102
    %v294 = vunpack.c.l.b16 %v103
    %v295 = vunpack.c.h.b16 %v103
    %v296 = vunpack.c.l.b16 %v104
    %v297 = vunpack.c.h.b16 %v104
    %v298 = vunpack.c.l.b16 %v105
    %v299 = vunpack.c.h.b16 %v105
    %v300 = vunpack.c.l.b16 %v106
    %v301 = vunpack.c.h.b16 %v106
    %v302 = vunpack.c.l.b16 %v107
    %v303 = vunpack.c.h.b16 %v107
    %v304 = vunpack.c.l.b16 %v108
    %v305 = vunpack.c.h.b16 %v108
    %v306 = vunpack.c.l.b16 %v109
    %v307 = vunpack.c.h.b16 %v109
    %v308 = vunpack.c.l.b16 %v110
    %v309 = vunpack.c.h.b16 %v110
    %v310 = vunpack.c.l.b16 %v111
    %v311 = vunpack.c.h.b16 %v111
    %v312 = vunpack.c.l.b16 %v112
    %v313 = vunpack.c.h.b16 %v112
    %v314 = vunpack.c.l.b16 %v113
    %v315 = vunpack.c.h.b16 %v113
    %v316 = vunpack.c.l.b16 %v114
    %v317 = vunpack.c.h.b16 %v114
    %v318 = vunpack.c.l.b16 %v115
    %v319 = vunpack.c.h.b16 %v115
    %v320 = vunpack.c.l.b16 %v116
    %v321 = vunpack.c.h.b16 %v116
    %v322 = vunpack.c.l.b16 %v117
    %v323 = vunpack.c.h.b16 %v117
    %v324 = vpack.c.b16 %v198, %v196
    %v325 = vpack.c.b16 %v199, %v197
    %v326 = vpack.c.b16 %v202, %v200
    %v327 = vpack.c.b16 %v203, %v201
    %v328 = vpack.c.b16 %v206, %v204
    %v329 = vpack.c.b16 %v207, %v205
    %v330 = vpack.c.b16 %v210, %v208
    %v331 = vpack.c.b16 %v211, %v209
    %v332 = vpack.c.b16 %v214, %v212
    %v333 = vpack.c.b16 %v215, %v213
    %v334 = vpack.c.b16 %v218, %v216
    %v335 = vpack.c.b16 %v219, %v217
    %v336 = vpack.c.b16 %v222, %v220
    %v337 = vpack.c.b16 %v223, %v221
    %v338 = vpack.c.b16 %v226, %v224
    %v339 = vpack.c.b16 %v227, %v225
    %v340 = vpack.c.b16 %v230, %v228
    %v341 = vpack.c.b16 %v231, %v229
    %v342 = vpack.c.b16 %v234, %v232
    %v343 = vpack.c.b16 %v235, %v233
    %v344 = vpack.c.b16 %v238, %v236
    %v345 = vpack.c.b16 %v239, %v237
    %v346 = vpack.c.b16 %v242, %v240
    %v347 = vpack.c.b16 %v243, %v241
    %v348 = vpack.c.b16 %v246, %v244
    %v349 = vpack.c.b16 %v247, %v245
    %v350 = vpack.c.b16 %v250, %v248
    %v351 = vpack.c.b16 %v251, %v249
    %v352 = vpack.c.b16 %v254, %v252
    %v353 = vpack.c.b16 %v255, %v253
    %v354 = vpack.c.b16 %v258, %v256
    %v355 = vpack.c.b16 %v259, %v257
    %v356 = vpack.c.b16 %v262, %v260
    %v357 = vpack.c.b16 %v263, %v261
    %v358 = vpack.c.b16 %v266, %v264
    %v359 = vpack.c.b16 %v267, %v265
    %v360 = vpack.c.b16 %v270, %v268
    %v361 = vpack.c.b16 %v271, %v269
    %v362 = vpack.c.b16 %v274, %v272
    %v363 = vpack.c.b16 %v275, %v273
    %v364 = vpack.c.b16 %v278, %v276
    %v365 = vpack.c.b16 %v279, %v277
    %v366 = vpack.c.b16 %v282, %v280
    %v367 = vpack.c.b16 %v283, %v281
    %v368 = vpack.c.b16 %v286, %v284
    %v369 = vpack.c.b16 %v287, %v285
    %v370 = vpack.c.b16 %v290, %v288
    %v371 = vpack.c.b16 %v291, %v289
    %v372 = vpack.c.b16 %v294, %v292
    %v373 = vpack.c.b16 %v295, %v293
    %v374 = vpack.c.b16 %v298, %v296
    %v375 = vpack.c.b16 %v299, %v297
    %v376 = vpack.c.b16 %v302, %v300
    %v377 = vpack.c.b16 %v303, %v301
    %v378 = vpack.c.b16 %v306, %v304
    %v379 = vpack.c.b16 %v307, %v305
    %v380 = vpack.c.b16 %v310, %v308
    %v381 = vpack.c.b16 %v311, %v309
    %v382 = vpack.c.b16 %v314, %v312
    %v383 = vpack.c.b16 %v315, %v313
    %v384 = vpack.c.b16 %v318, %v316
    %v385 = vpack.c.b16 %v319, %v317
    %v386 = vpack.c.b16 %v322, %v320
    %v387 = vpack.c.b16 %v323, %v321
    %452 = vmatpush.bf16.msra.mxu0 %v338
    %453 = vmatpush.bf16.msra.mxu0 %v336
    %454 = vmatpush.bf16.msra.mxu0 %v334
    %455 = vmatpush.bf16.msra.mxu0 %v332
    %456 = vmatpush.bf16.msra.mxu0 %v330
    %457 = vmatpush.bf16.msra.mxu0 %v328
    %458 = vmatpush.bf16.msra.mxu0 %v326
    %459 = vmatpush.bf16.msra.mxu0 %v324
    %460 = vmatmul.bf16.gmra.mxu0 %v124
    %v461 = vpop.f32.mrf.mxu0
    %v462 = vadd.f32 0.0, %v461
    %v463 = vpop.f32.mrf.mxu0
    %464 = vdwg.mxu0
    %465 = vmatpush.bf16.msra.mxu0 %v354
    %466 = vmatpush.bf16.msra.mxu0 %v352
    %467 = vmatpush.bf16.msra.mxu0 %v350
    %468 = vmatpush.bf16.msra.mxu0 %v348
    %469 = vmatpush.bf16.msra.mxu0 %v346
    %470 = vmatpush.bf16.msra.mxu0 %v344
    %471 = vmatpush.bf16.msra.mxu0 %v342
    %472 = vmatpush.bf16.msra.mxu0 %v340
    %473 = vmatmul.bf16.gmra.mxu0 %v125
    %v474 = vpop.f32.mrf.mxu0
    %v475 = vadd.f32 %v462, %v474
    %v476 = vpop.f32.mrf.mxu0
    %477 = vdwg.mxu0
    %478 = vmatpush.bf16.msra.mxu0 %v370
    %479 = vmatpush.bf16.msra.mxu0 %v368
    %480 = vmatpush.bf16.msra.mxu0 %v366
    %481 = vmatpush.bf16.msra.mxu0 %v364
    %482 = vmatpush.bf16.msra.mxu0 %v362
    %483 = vmatpush.bf16.msra.mxu0 %v360
    %484 = vmatpush.bf16.msra.mxu0 %v358
    %485 = vmatpush.bf16.msra.mxu0 %v356
    %486 = vmatmul.bf16.gmra.mxu0 %v126
    %v487 = vpop.f32.mrf.mxu0
    %v488 = vadd.f32 %v475, %v487
    %v489 = vpop.f32.mrf.mxu0
    %490 = vdwg.mxu0
    %491 = vmatpush.bf16.msra.mxu0 %v386
    %492 = vmatpush.bf16.msra.mxu0 %v384
    %493 = vmatpush.bf16.msra.mxu0 %v382
    %494 = vmatpush.bf16.msra.mxu0 %v380
    %495 = vmatpush.bf16.msra.mxu0 %v378
    %496 = vmatpush.bf16.msra.mxu0 %v376
    %497 = vmatpush.bf16.msra.mxu0 %v374
    %498 = vmatpush.bf16.msra.mxu0 %v372
    %499 = vmatmul.bf16.gmra.mxu0 %v127
    %v500 = vpop.f32.mrf.mxu0
    %v501 = vadd.f32 %v488, %v500
    %v502 = vpop.f32.mrf.mxu0
    %503 = vdwg.mxu0
    %504 = vmatpush.bf16.msra.mxu0 %v339
    %505 = vmatpush.bf16.msra.mxu0 %v337
    %506 = vmatpush.bf16.msra.mxu0 %v335
    %507 = vmatpush.bf16.msra.mxu0 %v333
    %508 = vmatpush.bf16.msra.mxu0 %v331
    %509 = vmatpush.bf16.msra.mxu0 %v329
    %510 = vmatpush.bf16.msra.mxu0 %v327
    %511 = vmatpush.bf16.msra.mxu0 %v325
    %512 = vmatmul.bf16.gmra.mxu0 %v124
    %v513 = vpop.f32.mrf.mxu0
    %v514 = vadd.f32 0.0, %v513
    %v515 = vpop.f32.mrf.mxu0
    %516 = vdwg.mxu0
    %517 = vmatpush.bf16.msra.mxu0 %v355
    %518 = vmatpush.bf16.msra.mxu0 %v353
    %519 = vmatpush.bf16.msra.mxu0 %v351
    %520 = vmatpush.bf16.msra.mxu0 %v349
    %521 = vmatpush.bf16.msra.mxu0 %v347
    %522 = vmatpush.bf16.msra.mxu0 %v345
    %523 = vmatpush.bf16.msra.mxu0 %v343
    %524 = vmatpush.bf16.msra.mxu0 %v341
    %525 = vmatmul.bf16.gmra.mxu0 %v125
    %v526 = vpop.f32.mrf.mxu0
    %v527 = vadd.f32 %v514, %v526
    %v528 = vpop.f32.mrf.mxu0
    %529 = vdwg.mxu0
    %530 = vmatpush.bf16.msra.mxu0 %v371
    %531 = vmatpush.bf16.msra.mxu0 %v369
    %532 = vmatpush.bf16.msra.mxu0 %v367
    %533 = vmatpush.bf16.msra.mxu0 %v365
    %534 = vmatpush.bf16.msra.mxu0 %v363
    %535 = vmatpush.bf16.msra.mxu0 %v361
    %536 = vmatpush.bf16.msra.mxu0 %v359
    %537 = vmatpush.bf16.msra.mxu0 %v357
    %538 = vmatmul.bf16.gmra.mxu0 %v126
    %v539 = vpop.f32.mrf.mxu0
    %v540 = vadd.f32 %v527, %v539
    %v541 = vpop.f32.mrf.mxu0
    %542 = vdwg.mxu0
    %543 = vmatpush.bf16.msra.mxu0 %v387
    %544 = vmatpush.bf16.msra.mxu0 %v385
    %545 = vmatpush.bf16.msra.mxu0 %v383
    %546 = vmatpush.bf16.msra.mxu0 %v381
    %547 = vmatpush.bf16.msra.mxu0 %v379
    %548 = vmatpush.bf16.msra.mxu0 %v377
    %549 = vmatpush.bf16.msra.mxu0 %v375
    %550 = vmatpush.bf16.msra.mxu0 %v373
    %551 = vmatmul.bf16.gmra.mxu0 %v127
    %v552 = vpop.f32.mrf.mxu0
    %v553 = vadd.f32 %v540, %v552
    %v554 = vpop.f32.mrf.mxu0
    %555 = vdwg.mxu0
    %v556 = vadd.f32 %v50, %v501
    %v557 = vadd.f32 %v51, %v553
    %558 = vst [vmem:[#allocation2] sm:$0xff] %v556
    %559 = vst [vmem:[#allocation2 + $0x8] sm:$0xff] %v557
    // Predicated region
    $region26: #{_lambda_.13} parent=1 // pred_check
      %p560 = pneg %p44
    $region27: #{_lambda_.13} parent=1 // pred_check_branch
      %562 = sbr.rel (%p560) target = $region29
    $region28: #{_lambda_.13} parent=1 // pred_region
      %v563 = vld [vmem:[#allocation2] sm:$0xff]
      %v564 = vld [vmem:[#allocation2 + $0x8] sm:$0xff]
      %v565 = vld [vmem:[#allocation5] ss:$8 sm:$0x3]
      %v567 = vperm.slane %v565, 0
      %v568 = vperm.slane %v565, 1
      %v571 = vadd.f32 %v563, %v567
      %v572 = vadd.f32 %v564, %v568
      %v573 = vmax.f32 %v571, 0.0
      %v574 = vmax.f32 %v572, 0.0
      %s575 = scalar_lea.vmem [#allocation5], 1
      %v576 = vld [vmem:[%s575] ss:$8 sm:$0x3]
      %v578 = vperm.slane %v576, 0
      %v579 = vperm.slane %v576, 1
      %v582 = vadd.f32 %v573, %v578
      %v583 = vadd.f32 %v574, %v579
      %v584 = vpack.c.bf16 %v583, %v582
      %585 = vst [vmem:[%s3] sm:$0xff] %v584
    $region29: #{_lambda_.13} parent=1 // pred_fallthru
      _
    // Predicated region
    $region30: #{_lambda_.13} parent=1 // pred_check
      _
    $region31: #{_lambda_.13} parent=1 // pred_check_branch
      %587 = sbr.rel (0) target = $region33
    $region32: #{_lambda_.13} parent=1 // pred_region
      _
    $region33: #{_lambda_.13} parent=1 // pred_fallthru
      _
    // Predicated region
    $region34: #{_lambda_.13} parent=1 // pred_check
      _
    $region35: #{_lambda_.13} parent=1 // pred_check_branch
      %589 = sbr.rel (0) target = $region37
    $region36: #{_lambda_.13} parent=1 // pred_region
      _
    $region37: #{_lambda_.13} parent=1 // pred_fallthru
      _
    %590 = vsyncpa [#allocation4], 1
    %591 = vsyncpa [#allocation6], 1

// kernel: _lambda_.14
$region0: #{_lambda_.14}
  #allocation0 [shape = 'u32[]', space=smem, size = 0x4, offset = 0x4, fixed_abs, tag = 'smem constant byte address 0x4 - core index']
  #allocation1 [shape = 'u32[72,128]{1,0:T(1,128)}', space=vmem, size = 0x9000, scoped, tag = 'internal scratch']
  %s0 = inlined_call_operand.vmem [shape: bf16[8,256], index: 0, kind: input, shape index: {}, may-alias: {0,2}]
  %s1 = inlined_call_operand.vmem [shape: bf16[8,256], index: 1, kind: input, shape index: {}]
  %s2 = inlined_call_operand.vmem [shape: bf16[8,256], index: 2, kind: input, shape index: {}, may-alias: {0,2}]
  %s3 = inlined_call_operand.vmem [shape: bf16[8,256], index: 3, kind: output, shape index: {}]
  %s4 = sld [smem:[#allocation0]]
  $region22: #{_lambda_.14} parent=0
    _
  %s6 = ssub.s32 1, %s4
  %s7 = scalar_select 0, %s6, %s4
  // Predicated region
  $region2: #{_lambda_.14} parent=0 // pred_check
    _
  $region3: #{_lambda_.14} parent=0 // pred_check_branch
    %9 = sbr.rel (0) target = $region5
  $region4: #{_lambda_.14} parent=0 // pred_region
    _
  $region5: #{_lambda_.14} parent=0 // pred_fallthru
    _
  // Predicated region
  $region6: #{_lambda_.14} parent=0 // pred_check
    _
  $region7: #{_lambda_.14} parent=0 // pred_check_branch
    %11 = sbr.rel (0) target = $region9
  $region8: #{_lambda_.14} parent=0 // pred_region
    _
  $region9: #{_lambda_.14} parent=0 // pred_fallthru
    _
  // Predicated region
  $region10: #{_lambda_.14} parent=0 // pred_check
    _
  $region11: #{_lambda_.14} parent=0 // pred_check_branch
    %13 = sbr.rel (0) target = $region13
  $region12: #{_lambda_.14} parent=0 // pred_region
    _
  $region13: #{_lambda_.14} parent=0 // pred_fallthru
    _
  %v14 = vld [vmem:[%s0] sm:$0xff]
  %v15 = vld [vmem:[%s1] sm:$0xff]
  %v16 = vunpack.c.l.bf16 %v14
  %v17 = vunpack.c.h.bf16 %v14
  %v18 = vunpack.c.l.bf16 %v15
  %v19 = vunpack.c.h.bf16 %v15
  %v20 = vmax.f32 %v16, %v18
  %v21 = vmax.f32 %v17, %v19
  %v22 = vpack.c.bf16 %v21, %v20
  %v23 = vld [vmem:[%s2] sm:$0xff]
  %v24 = vunpack.c.l.bf16 %v22
  %v25 = vunpack.c.h.bf16 %v22
  %v26 = vunpack.c.l.bf16 %v23
  %v27 = vunpack.c.h.bf16 %v23
  %v28 = vmax.f32 %v24, %v26
  %v29 = vmax.f32 %v25, %v27
  %v30 = vpack.c.bf16 %v29, %v28
  %31 = vst [vmem:[%s3] sm:$0xff] %v30
  // Predicated region
  $region14: #{_lambda_.14} parent=0 // pred_check
    _
  $region15: #{_lambda_.14} parent=0 // pred_check_branch
    %33 = sbr.rel (0) target = $region17
  $region16: #{_lambda_.14} parent=0 // pred_region
    _
  $region17: #{_lambda_.14} parent=0 // pred_fallthru
    _
  // Predicated region
  $region18: #{_lambda_.14} parent=0 // pred_check
    _
  $region19: #{_lambda_.14} parent=0 // pred_check_branch
    %35 = sbr.rel (0) target = $region21
  $region20: #{_lambda_.14} parent=0 // pred_region
    _
  $region21: #{_lambda_.14} parent=0 // pred_fallthru
    _

// kernel: _lambda_.17
$region0: #{_lambda_.17}
  #allocation0 [shape = 'u32[]', space=smem, size = 0x4, offset = 0x4, fixed_abs, tag = 'smem constant byte address 0x4 - core index']
  #allocation1 [shape = 'u32[72,128]{1,0:T(1,128)}', space=vmem, size = 0x9000, scoped, tag = 'internal scratch']
  #allocation2 [shape = 'f32[8,256]{1,0:T(8,128)}', space=vmem, size = 0x2000, scoped, tag = 'scratch operand']
  %s0 = inlined_call_operand.vmem [shape: bf16[8,384], index: 0, kind: input, shape index: {}]
  %s1 = inlined_call_operand.hbm [shape: bf16[384,256], index: 1, kind: input, shape index: {}]
  %s2 = inlined_call_operand.hbm [shape: f32[8,256], index: 2, kind: input, shape index: {}]
  %s3 = inlined_call_operand.vmem [shape: bf16[8,256], index: 3, kind: output, shape index: {}]
  %s4 = sld [smem:[#allocation0]]
  $region38: #{_lambda_.17} parent=0
    _
  %s6 = ssub.s32 1, %s4
  %s7 = scalar_select 0, %s6, %s4
  $region1: #{_lambda_.17} parent=0
    #allocation3 [shape = 'u8[196608]{0}', space=vmem, size = 0x30000, scoped, tag = 'input window, operand 1, single buffered']
    #allocation4 [shape = 's32[1]{0}', space=sflag, size = 0x4, scoped, tag = 'scoped memory for _lambda_.17']
    #allocation5 [shape = 'u8[8192]{0}', space=vmem, size = 0x2000, scoped, tag = 'input window, operand 2, single buffered']
    #allocation6 [shape = 's32[1]{0}', space=sflag, size = 0x4, scoped, tag = 'scoped memory for _lambda_.17']
    %8 = vsyncpa [#allocation4], 0
    %9 = vsyncpa [#allocation6], 0
    // Predicated region
    $region2: #{_lambda_.17} parent=1 // pred_check
      _
    $region3: #{_lambda_.17} parent=1 // pred_check_branch
      %11 = sbr.rel (0) target = $region5
    $region4: #{_lambda_.17} parent=1 // pred_region
      _
    $region5: #{_lambda_.17} parent=1 // pred_fallthru
      _
    // Predicated region
    $region6: #{_lambda_.17} parent=1 // pred_check
      _
    $region7: #{_lambda_.17} parent=1 // pred_check_branch
      %13 = sbr.rel (0) target = $region9
    $region8: #{_lambda_.17} parent=1 // pred_region
      %15 = vsyncadd [#allocation4], 0
      %s16 = sshll.u32 %s1, 4
      %s17 = int_to_ptr.hbm [resolvable:$true] %s16
      %s18 = sshll.u32 [#allocation3], 4
      %s19 = int_to_ptr.vmem [resolvable:$true] %s18
      %24 = dma.hbm_to_vmem [thread:$0]  %s17, 6144, %s19, [#allocation4], 128, 128, 8
    $region9: #{_lambda_.17} parent=1 // pred_fallthru
      _
    // Predicated region
    $region10: #{_lambda_.17} parent=1 // pred_check
      _
    $region11: #{_lambda_.17} parent=1 // pred_check_branch
      %26 = sbr.rel (0) target = $region13
    $region12: #{_lambda_.17} parent=1 // pred_region
      %28 = vsyncadd [#allocation6], 0
      %s30 = sshll.u32 %s2, 4
      %s31 = int_to_ptr.hbm [resolvable:$true] %s30
      %s32 = sshll.u32 [#allocation5], 4
      %s33 = int_to_ptr.vmem [resolvable:$true] %s32
      %35 = dma.hbm_to_vmem [thread:$0]  %s31, 256, %s33, [#allocation6]
    $region13: #{_lambda_.17} parent=1 // pred_fallthru
      _
    // Predicated region
    $region14: #{_lambda_.17} parent=1 // pred_check
      _
    $region15: #{_lambda_.17} parent=1 // pred_check_branch
      %37 = sbr.rel (0) target = $region17
    $region16: #{_lambda_.17} parent=1 // pred_region
      %39 = dma.done [#allocation4], 6144
    $region17: #{_lambda_.17} parent=1 // pred_fallthru
      _
    // Predicated region
    $region18: #{_lambda_.17} parent=1 // pred_check
      _
    $region19: #{_lambda_.17} parent=1 // pred_check_branch
      %41 = sbr.rel (0) target = $region21
    $region20: #{_lambda_.17} parent=1 // pred_region
      %43 = dma.done [#allocation6], 256
    $region21: #{_lambda_.17} parent=1 // pred_fallthru
      _
    %p44 = scmp.eq.s32.totalorder 0, 0
    // Predicated region
    $region22: #{_lambda_.17} parent=1 // pred_check
      %p45 = pneg %p44
    $region23: #{_lambda_.17} parent=1 // pred_check_branch
      %47 = sbr.rel (%p45) target = $region25
    $region24: #{_lambda_.17} parent=1 // pred_region
      %48 = vst [vmem:[#allocation2] sm:$0xff] 0.0
      %49 = vst [vmem:[#allocation2 + $0x8] sm:$0xff] 0.0
    $region25: #{_lambda_.17} parent=1 // pred_fallthru
      _
    %v50 = vld [vmem:[#allocation2] sm:$0xff]
    %v51 = vld [vmem:[#allocation2 + $0x8] sm:$0xff]
    %v52 = vld [vmem:[%s0] sm:$0xff]
    %v53 = vld [vmem:[%s0 + $0x8] sm:$0xf]
    %v54 = vld [vmem:[#allocation3] sm:$0xff]
    %v55 = vld [vmem:[#allocation3 + $0x8] sm:$0xff]
    %v56 = vld [vmem:[#allocation3 + $0x10] sm:$0xff]
    %v57 = vld [vmem:[#allocation3 + $0x18] sm:$0xff]
    %v58 = vld [vmem:[#allocation3 + $0x20] sm:$0xff]
    %v59 = vld [vmem:[#allocation3 + $0x28] sm:$0xff]
    %v60 = vld [vmem:[#allocation3 + $0x30] sm:$0xff]
    %v61 = vld [vmem:[#allocation3 + $0x38] sm:$0xff]
    %v62 = vld [vmem:[#allocation3 + $0x40] sm:$0xff]
    %v63 = vld [vmem:[#allocation3 + $0x48] sm:$0xff]
    %v64 = vld [vmem:[#allocation3 + $0x50] sm:$0xff]
    %v65 = vld [vmem:[#allocation3 + $0x58] sm:$0xff]
    %v66 = vld [vmem:[#allocation3 + $0x60] sm:$0xff]
    %v67 = vld [vmem:[#allocation3 + $0x68] sm:$0xff]
    %v68 = vld [vmem:[#allocation3 + $0x70] sm:$0xff]
    %v69 = vld [vmem:[#allocation3 + $0x78] sm:$0xff]
    %v70 = vld [vmem:[#allocation3 + $0x80] sm:$0xff]
    %v71 = vld [vmem:[#allocation3 + $0x88] sm:$0xff]
    %v72 = vld [vmem:[#allocation3 + $0x90] sm:$0xff]
    %v73 = vld [vmem:[#allocation3 + $0x98] sm:$0xff]
    %v74 = vld [vmem:[#allocation3 + $0xa0] sm:$0xff]
    %v75 = vld [vmem:[#allocation3 + $0xa8] sm:$0xff]
    %v76 = vld [vmem:[#allocation3 + $0xb0] sm:$0xff]
    %v77 = vld [vmem:[#allocation3 + $0xb8] sm:$0xff]
    %v78 = vld [vmem:[#allocation3 + $0xc0] sm:$0xff]
    %v79 = vld [vmem:[#allocation3 + $0xc8] sm:$0xff]
    %v80 = vld [vmem:[#allocation3 + $0xd0] sm:$0xff]
    %v81 = vld [vmem:[#allocation3 + $0xd8] sm:$0xff]
    %v82 = vld [vmem:[#allocation3 + $0xe0] sm:$0xff]
    %v83 = vld [vmem:[#allocation3 + $0xe8] sm:$0xff]
    %v84 = vld [vmem:[#allocation3 + $0xf0] sm:$0xff]
    %v85 = vld [vmem:[#allocation3 + $0xf8] sm:$0xff]
    %v86 = vld [vmem:[#allocation3 + $0x100] sm:$0xff]
    %v87 = vld [vmem:[#allocation3 + $0x108] sm:$0xff]
    %v88 = vld [vmem:[#allocation3 + $0x110] sm:$0xff]
    %v89 = vld [vmem:[#allocation3 + $0x118] sm:$0xff]
    %v90 = vld [vmem:[#allocation3 + $0x120] sm:$0xff]
    %v91 = vld [vmem:[#allocation3 + $0x128] sm:$0xff]
    %v92 = vld [vmem:[#allocation3 + $0x130] sm:$0xff]
    %v93 = vld [vmem:[#allocation3 + $0x138] sm:$0xff]
    %v94 = vld [vmem:[#allocation3 + $0x140] sm:$0xff]
    %v95 = vld [vmem:[#allocation3 + $0x148] sm:$0xff]
    %v96 = vld [vmem:[#allocation3 + $0x150] sm:$0xff]
    %v97 = vld [vmem:[#allocation3 + $0x158] sm:$0xff]
    %v98 = vld [vmem:[#allocation3 + $0x160] sm:$0xff]
    %v99 = vld [vmem:[#allocation3 + $0x168] sm:$0xff]
    %v100 = vld [vmem:[#allocation3 + $0x170] sm:$0xff]
    %v101 = vld [vmem:[#allocation3 + $0x178] sm:$0xff]
    %v104 = vunpack.c.l.b16 %v52
    %v105 = vunpack.c.h.b16 %v52
    %v106 = vunpack.c.l.b16 %v53
    %v107 = vpack.c.b16 %v104, %v104
    %v108 = vpack.c.b16 %v105, %v105
    %v109 = vpack.c.b16 %v106, %v106
    %v161 = vunpack.c.l.b16 %v54
    %v162 = vunpack.c.h.b16 %v54
    %v163 = vunpack.c.l.b16 %v55
    %v164 = vunpack.c.h.b16 %v55
    %v165 = vunpack.c.l.b16 %v56
    %v166 = vunpack.c.h.b16 %v56
    %v167 = vunpack.c.l.b16 %v57
    %v168 = vunpack.c.h.b16 %v57
    %v169 = vunpack.c.l.b16 %v58
    %v170 = vunpack.c.h.b16 %v58
    %v171 = vunpack.c.l.b16 %v59
    %v172 = vunpack.c.h.b16 %v59
    %v173 = vunpack.c.l.b16 %v60
    %v174 = vunpack.c.h.b16 %v60
    %v175 = vunpack.c.l.b16 %v61
    %v176 = vunpack.c.h.b16 %v61
    %v177 = vunpack.c.l.b16 %v62
    %v178 = vunpack.c.h.b16 %v62
    %v179 = vunpack.c.l.b16 %v63
    %v180 = vunpack.c.h.b16 %v63
    %v181 = vunpack.c.l.b16 %v64
    %v182 = vunpack.c.h.b16 %v64
    %v183 = vunpack.c.l.b16 %v65
    %v184 = vunpack.c.h.b16 %v65
    %v185 = vunpack.c.l.b16 %v66
    %v186 = vunpack.c.h.b16 %v66
    %v187 = vunpack.c.l.b16 %v67
    %v188 = vunpack.c.h.b16 %v67
    %v189 = vunpack.c.l.b16 %v68
    %v190 = vunpack.c.h.b16 %v68
    %v191 = vunpack.c.l.b16 %v69
    %v192 = vunpack.c.h.b16 %v69
    %v193 = vunpack.c.l.b16 %v70
    %v194 = vunpack.c.h.b16 %v70
    %v195 = vunpack.c.l.b16 %v71
    %v196 = vunpack.c.h.b16 %v71
    %v197 = vunpack.c.l.b16 %v72
    %v198 = vunpack.c.h.b16 %v72
    %v199 = vunpack.c.l.b16 %v73
    %v200 = vunpack.c.h.b16 %v73
    %v201 = vunpack.c.l.b16 %v74
    %v202 = vunpack.c.h.b16 %v74
    %v203 = vunpack.c.l.b16 %v75
    %v204 = vunpack.c.h.b16 %v75
    %v205 = vunpack.c.l.b16 %v76
    %v206 = vunpack.c.h.b16 %v76
    %v207 = vunpack.c.l.b16 %v77
    %v208 = vunpack.c.h.b16 %v77
    %v209 = vunpack.c.l.b16 %v78
    %v210 = vunpack.c.h.b16 %v78
    %v211 = vunpack.c.l.b16 %v79
    %v212 = vunpack.c.h.b16 %v79
    %v213 = vunpack.c.l.b16 %v80
    %v214 = vunpack.c.h.b16 %v80
    %v215 = vunpack.c.l.b16 %v81
    %v216 = vunpack.c.h.b16 %v81
    %v217 = vunpack.c.l.b16 %v82
    %v218 = vunpack.c.h.b16 %v82
    %v219 = vunpack.c.l.b16 %v83
    %v220 = vunpack.c.h.b16 %v83
    %v221 = vunpack.c.l.b16 %v84
    %v222 = vunpack.c.h.b16 %v84
    %v223 = vunpack.c.l.b16 %v85
    %v224 = vunpack.c.h.b16 %v85
    %v225 = vunpack.c.l.b16 %v86
    %v226 = vunpack.c.h.b16 %v86
    %v227 = vunpack.c.l.b16 %v87
    %v228 = vunpack.c.h.b16 %v87
    %v229 = vunpack.c.l.b16 %v88
    %v230 = vunpack.c.h.b16 %v88
    %v231 = vunpack.c.l.b16 %v89
    %v232 = vunpack.c.h.b16 %v89
    %v233 = vunpack.c.l.b16 %v90
    %v234 = vunpack.c.h.b16 %v90
    %v235 = vunpack.c.l.b16 %v91
    %v236 = vunpack.c.h.b16 %v91
    %v237 = vunpack.c.l.b16 %v92
    %v238 = vunpack.c.h.b16 %v92
    %v239 = vunpack.c.l.b16 %v93
    %v240 = vunpack.c.h.b16 %v93
    %v241 = vunpack.c.l.b16 %v94
    %v242 = vunpack.c.h.b16 %v94
    %v243 = vunpack.c.l.b16 %v95
    %v244 = vunpack.c.h.b16 %v95
    %v245 = vunpack.c.l.b16 %v96
    %v246 = vunpack.c.h.b16 %v96
    %v247 = vunpack.c.l.b16 %v97
    %v248 = vunpack.c.h.b16 %v97
    %v249 = vunpack.c.l.b16 %v98
    %v250 = vunpack.c.h.b16 %v98
    %v251 = vunpack.c.l.b16 %v99
    %v252 = vunpack.c.h.b16 %v99
    %v253 = vunpack.c.l.b16 %v100
    %v254 = vunpack.c.h.b16 %v100
    %v255 = vunpack.c.l.b16 %v101
    %v256 = vunpack.c.h.b16 %v101
    %v257 = vpack.c.b16 %v163, %v161
    %v258 = vpack.c.b16 %v164, %v162
    %v259 = vpack.c.b16 %v167, %v165
    %v260 = vpack.c.b16 %v168, %v166
    %v261 = vpack.c.b16 %v171, %v169
    %v262 = vpack.c.b16 %v172, %v170
    %v263 = vpack.c.b16 %v175, %v173
    %v264 = vpack.c.b16 %v176, %v174
    %v265 = vpack.c.b16 %v179, %v177
    %v266 = vpack.c.b16 %v180, %v178
    %v267 = vpack.c.b16 %v183, %v181
    %v268 = vpack.c.b16 %v184, %v182
    %v269 = vpack.c.b16 %v187, %v185
    %v270 = vpack.c.b16 %v188, %v186
    %v271 = vpack.c.b16 %v191, %v189
    %v272 = vpack.c.b16 %v192, %v190
    %v273 = vpack.c.b16 %v195, %v193
    %v274 = vpack.c.b16 %v196, %v194
    %v275 = vpack.c.b16 %v199, %v197
    %v276 = vpack.c.b16 %v200, %v198
    %v277 = vpack.c.b16 %v203, %v201
    %v278 = vpack.c.b16 %v204, %v202
    %v279 = vpack.c.b16 %v207, %v205
    %v280 = vpack.c.b16 %v208, %v206
    %v281 = vpack.c.b16 %v211, %v209
    %v282 = vpack.c.b16 %v212, %v210
    %v283 = vpack.c.b16 %v215, %v213
    %v284 = vpack.c.b16 %v216, %v214
    %v285 = vpack.c.b16 %v219, %v217
    %v286 = vpack.c.b16 %v220, %v218
    %v287 = vpack.c.b16 %v223, %v221
    %v288 = vpack.c.b16 %v224, %v222
    %v289 = vpack.c.b16 %v227, %v225
    %v290 = vpack.c.b16 %v228, %v226
    %v291 = vpack.c.b16 %v231, %v229
    %v292 = vpack.c.b16 %v232, %v230
    %v293 = vpack.c.b16 %v235, %v233
    %v294 = vpack.c.b16 %v236, %v234
    %v295 = vpack.c.b16 %v239, %v237
    %v296 = vpack.c.b16 %v240, %v238
    %v297 = vpack.c.b16 %v243, %v241
    %v298 = vpack.c.b16 %v244, %v242
    %v299 = vpack.c.b16 %v247, %v245
    %v300 = vpack.c.b16 %v248, %v246
    %v301 = vpack.c.b16 %v251, %v249
    %v302 = vpack.c.b16 %v252, %v250
    %v303 = vpack.c.b16 %v255, %v253
    %v304 = vpack.c.b16 %v256, %v254
    %353 = vmatpush.bf16.msra.mxu0 %v271
    %354 = vmatpush.bf16.msra.mxu0 %v269
    %355 = vmatpush.bf16.msra.mxu0 %v267
    %356 = vmatpush.bf16.msra.mxu0 %v265
    %357 = vmatpush.bf16.msra.mxu0 %v263
    %358 = vmatpush.bf16.msra.mxu0 %v261
    %359 = vmatpush.bf16.msra.mxu0 %v259
    %360 = vmatpush.bf16.msra.mxu0 %v257
    %361 = vmatmul.bf16.gmra.mxu0 %v107
    %v362 = vpop.f32.mrf.mxu0
    %v363 = vadd.f32 0.0, %v362
    %v364 = vpop.f32.mrf.mxu0
    %365 = vdwg.mxu0
    %366 = vmatpush.bf16.msra.mxu0 %v287
    %367 = vmatpush.bf16.msra.mxu0 %v285
    %368 = vmatpush.bf16.msra.mxu0 %v283
    %369 = vmatpush.bf16.msra.mxu0 %v281
    %370 = vmatpush.bf16.msra.mxu0 %v279
    %371 = vmatpush.bf16.msra.mxu0 %v277
    %372 = vmatpush.bf16.msra.mxu0 %v275
    %373 = vmatpush.bf16.msra.mxu0 %v273
    %374 = vmatmul.bf16.gmra.mxu0 %v108
    %v375 = vpop.f32.mrf.mxu0
    %v376 = vadd.f32 %v363, %v375
    %v377 = vpop.f32.mrf.mxu0
    %378 = vdwg.mxu0
    %379 = vmatpush.bf16.msra.mxu0 %v303
    %380 = vmatpush.bf16.msra.mxu0 %v301
    %381 = vmatpush.bf16.msra.mxu0 %v299
    %382 = vmatpush.bf16.msra.mxu0 %v297
    %383 = vmatpush.bf16.msra.mxu0 %v295
    %384 = vmatpush.bf16.msra.mxu0 %v293
    %385 = vmatpush.bf16.msra.mxu0 %v291
    %386 = vmatpush.bf16.msra.mxu0 %v289
    %387 = vmatmul.bf16.gmra.mxu0 %v109
    %v388 = vpop.f32.mrf.mxu0
    %v389 = vadd.f32 %v376, %v388
    %v390 = vpop.f32.mrf.mxu0
    %391 = vdwg.mxu0
    %392 = vmatpush.bf16.msra.mxu0 %v272
    %393 = vmatpush.bf16.msra.mxu0 %v270
    %394 = vmatpush.bf16.msra.mxu0 %v268
    %395 = vmatpush.bf16.msra.mxu0 %v266
    %396 = vmatpush.bf16.msra.mxu0 %v264
    %397 = vmatpush.bf16.msra.mxu0 %v262
    %398 = vmatpush.bf16.msra.mxu0 %v260
    %399 = vmatpush.bf16.msra.mxu0 %v258
    %400 = vmatmul.bf16.gmra.mxu0 %v107
    %v401 = vpop.f32.mrf.mxu0
    %v402 = vadd.f32 0.0, %v401
    %v403 = vpop.f32.mrf.mxu0
    %404 = vdwg.mxu0
    %405 = vmatpush.bf16.msra.mxu0 %v288
    %406 = vmatpush.bf16.msra.mxu0 %v286
    %407 = vmatpush.bf16.msra.mxu0 %v284
    %408 = vmatpush.bf16.msra.mxu0 %v282
    %409 = vmatpush.bf16.msra.mxu0 %v280
    %410 = vmatpush.bf16.msra.mxu0 %v278
    %411 = vmatpush.bf16.msra.mxu0 %v276
    %412 = vmatpush.bf16.msra.mxu0 %v274
    %413 = vmatmul.bf16.gmra.mxu0 %v108
    %v414 = vpop.f32.mrf.mxu0
    %v415 = vadd.f32 %v402, %v414
    %v416 = vpop.f32.mrf.mxu0
    %417 = vdwg.mxu0
    %418 = vmatpush.bf16.msra.mxu0 %v304
    %419 = vmatpush.bf16.msra.mxu0 %v302
    %420 = vmatpush.bf16.msra.mxu0 %v300
    %421 = vmatpush.bf16.msra.mxu0 %v298
    %422 = vmatpush.bf16.msra.mxu0 %v296
    %423 = vmatpush.bf16.msra.mxu0 %v294
    %424 = vmatpush.bf16.msra.mxu0 %v292
    %425 = vmatpush.bf16.msra.mxu0 %v290
    %426 = vmatmul.bf16.gmra.mxu0 %v109
    %v427 = vpop.f32.mrf.mxu0
    %v428 = vadd.f32 %v415, %v427
    %v429 = vpop.f32.mrf.mxu0
    %430 = vdwg.mxu0
    %v431 = vadd.f32 %v50, %v389
    %v432 = vadd.f32 %v51, %v428
    %433 = vst [vmem:[#allocation2] sm:$0xff] %v431
    %434 = vst [vmem:[#allocation2 + $0x8] sm:$0xff] %v432
    // Predicated region
    $region26: #{_lambda_.17} parent=1 // pred_check
      %p435 = pneg %p44
    $region27: #{_lambda_.17} parent=1 // pred_check_branch
      %437 = sbr.rel (%p435) target = $region29
    $region28: #{_lambda_.17} parent=1 // pred_region
      %v438 = vld [vmem:[#allocation2] sm:$0xff]
      %v439 = vld [vmem:[#allocation2 + $0x8] sm:$0xff]
      %v440 = vld [vmem:[#allocation5] ss:$8 sm:$0x3]
      %v442 = vperm.slane %v440, 0
      %v443 = vperm.slane %v440, 1
      %v446 = vadd.f32 %v438, %v442
      %v447 = vadd.f32 %v439, %v443
      %v448 = vmax.f32 %v446, 0.0
      %v449 = vmax.f32 %v447, 0.0
      %s450 = scalar_lea.vmem [#allocation5], 1
      %v451 = vld [vmem:[%s450] ss:$8 sm:$0x3]
      %v453 = vperm.slane %v451, 0
      %v454 = vperm.slane %v451, 1
      %v457 = vadd.f32 %v448, %v453
      %v458 = vadd.f32 %v449, %v454
      %v459 = vpack.c.bf16 %v458, %v457
      %460 = vst [vmem:[%s3] sm:$0xff] %v459
    $region29: #{_lambda_.17} parent=1 // pred_fallthru
      _
    // Predicated region
    $region30: #{_lambda_.17} parent=1 // pred_check
      _
    $region31: #{_lambda_.17} parent=1 // pred_check_branch
      %462 = sbr.rel (0) target = $region33
    $region32: #{_lambda_.17} parent=1 // pred_region
      _
    $region33: #{_lambda_.17} parent=1 // pred_fallthru
      _
    // Predicated region
    $region34: #{_lambda_.17} parent=1 // pred_check
      _
    $region35: #{_lambda_.17} parent=1 // pred_check_branch
      %464 = sbr.rel (0) target = $region37
    $region36: #{_lambda_.17} parent=1 // pred_region
      _
    $region37: #{_lambda_.17} parent=1 // pred_fallthru
      _
    %465 = vsyncpa [#allocation4], 1
    %466 = vsyncpa [#allocation6], 1

// kernel: _lambda_.16
$region0: #{_lambda_.16}
  #allocation0 [shape = 'u32[]', space=smem, size = 0x4, offset = 0x4, fixed_abs, tag = 'smem constant byte address 0x4 - core index']
  #allocation1 [shape = 'u32[72,128]{1,0:T(1,128)}', space=vmem, size = 0x9000, scoped, tag = 'internal scratch']
  #allocation2 [shape = 'f32[8,384]{1,0:T(8,128)}', space=vmem, size = 0x3000, scoped, tag = 'scratch operand']
  %s0 = inlined_call_operand.vmem [shape: bf16[8,384], index: 0, kind: input, shape index: {}]
  %s1 = inlined_call_operand.hbm [shape: bf16[384,384], index: 1, kind: input, shape index: {}]
  %s2 = inlined_call_operand.hbm [shape: f32[8,384], index: 2, kind: input, shape index: {}]
  %s3 = inlined_call_operand.vmem [shape: bf16[8,384], index: 3, kind: output, shape index: {}]
  %s4 = sld [smem:[#allocation0]]
  $region38: #{_lambda_.16} parent=0
    _
  %s6 = ssub.s32 1, %s4
  %s7 = scalar_select 0, %s6, %s4
  $region1: #{_lambda_.16} parent=0
    #allocation3 [shape = 'u8[294912]{0}', space=vmem, size = 0x48000, scoped, tag = 'input window, operand 1, single buffered']
    #allocation4 [shape = 's32[1]{0}', space=sflag, size = 0x4, scoped, tag = 'scoped memory for _lambda_.16']
    #allocation5 [shape = 'u8[12288]{0}', space=vmem, size = 0x3000, scoped, tag = 'input window, operand 2, single buffered']
    #allocation6 [shape = 's32[1]{0}', space=sflag, size = 0x4, scoped, tag = 'scoped memory for _lambda_.16']
    %8 = vsyncpa [#allocation4], 0
    %9 = vsyncpa [#allocation6], 0
    // Predicated region
    $region2: #{_lambda_.16} parent=1 // pred_check
      _
    $region3: #{_lambda_.16} parent=1 // pred_check_branch
      %11 = sbr.rel (0) target = $region5
    $region4: #{_lambda_.16} parent=1 // pred_region
      _
    $region5: #{_lambda_.16} parent=1 // pred_fallthru
      _
    // Predicated region
    $region6: #{_lambda_.16} parent=1 // pred_check
      _
    $region7: #{_lambda_.16} parent=1 // pred_check_branch
      %13 = sbr.rel (0) target = $region9
    $region8: #{_lambda_.16} parent=1 // pred_region
      %15 = vsyncadd [#allocation4], 0
      %s16 = sshll.u32 %s1, 4
      %s17 = int_to_ptr.hbm [resolvable:$true] %s16
      %s18 = sshll.u32 [#allocation3], 4
      %s19 = int_to_ptr.vmem [resolvable:$true] %s18
      %24 = dma.hbm_to_vmem [thread:$0]  %s17, 9216, %s19, [#allocation4], 192, 192, 12
    $region9: #{_lambda_.16} parent=1 // pred_fallthru
      _
    // Predicated region
    $region10: #{_lambda_.16} parent=1 // pred_check
      _
    $region11: #{_lambda_.16} parent=1 // pred_check_branch
      %26 = sbr.rel (0) target = $region13
    $region12: #{_lambda_.16} parent=1 // pred_region
      %28 = vsyncadd [#allocation6], 0
      %s30 = sshll.u32 %s2, 4
      %s31 = int_to_ptr.hbm [resolvable:$true] %s30
      %s32 = sshll.u32 [#allocation5], 4
      %s33 = int_to_ptr.vmem [resolvable:$true] %s32
      %35 = dma.hbm_to_vmem [thread:$0]  %s31, 384, %s33, [#allocation6]
    $region13: #{_lambda_.16} parent=1 // pred_fallthru
      _
    // Predicated region
    $region14: #{_lambda_.16} parent=1 // pred_check
      _
    $region15: #{_lambda_.16} parent=1 // pred_check_branch
      %37 = sbr.rel (0) target = $region17
    $region16: #{_lambda_.16} parent=1 // pred_region
      %39 = dma.done [#allocation4], 9216
    $region17: #{_lambda_.16} parent=1 // pred_fallthru
      _
    // Predicated region
    $region18: #{_lambda_.16} parent=1 // pred_check
      _
    $region19: #{_lambda_.16} parent=1 // pred_check_branch
      %41 = sbr.rel (0) target = $region21
    $region20: #{_lambda_.16} parent=1 // pred_region
      %43 = dma.done [#allocation6], 384
    $region21: #{_lambda_.16} parent=1 // pred_fallthru
      _
    %p44 = scmp.eq.s32.totalorder 0, 0
    // Predicated region
    $region22: #{_lambda_.16} parent=1 // pred_check
      %p45 = pneg %p44
    $region23: #{_lambda_.16} parent=1 // pred_check_branch
      %47 = sbr.rel (%p45) target = $region25
    $region24: #{_lambda_.16} parent=1 // pred_region
      %48 = vst [vmem:[#allocation2] sm:$0xff] 0.0
      %49 = vst [vmem:[#allocation2 + $0x8] sm:$0xff] 0.0
      %50 = vst [vmem:[#allocation2 + $0x10] sm:$0xff] 0.0
    $region25: #{_lambda_.16} parent=1 // pred_fallthru
      _
    %v51 = vld [vmem:[#allocation2] sm:$0xff]
    %v52 = vld [vmem:[#allocation2 + $0x8] sm:$0xff]
    %v53 = vld [vmem:[#allocation2 + $0x10] sm:$0xff]
    %v54 = vld [vmem:[%s0] sm:$0xff]
    %v55 = vld [vmem:[%s0 + $0x8] sm:$0xf]
    %v56 = vld [vmem:[#allocation3] sm:$0xff]
    %v57 = vld [vmem:[#allocation3 + $0x8] sm:$0xf]
    %v58 = vld [vmem:[#allocation3 + $0xc] sm:$0xff]
    %v59 = vld [vmem:[#allocation3 + $0x14] sm:$0xf]
    %v60 = vld [vmem:[#allocation3 + $0x18] sm:$0xff]
    %v61 = vld [vmem:[#allocation3 + $0x20] sm:$0xf]
    %v62 = vld [vmem:[#allocation3 + $0x24] sm:$0xff]
    %v63 = vld [vmem:[#allocation3 + $0x2c] sm:$0xf]
    %v64 = vld [vmem:[#allocation3 + $0x30] sm:$0xff]
    %v65 = vld [vmem:[#allocation3 + $0x38] sm:$0xf]
    %v66 = vld [vmem:[#allocation3 + $0x3c] sm:$0xff]
    %v67 = vld [vmem:[#allocation3 + $0x44] sm:$0xf]
    %v68 = vld [vmem:[#allocation3 + $0x48] sm:$0xff]
    %v69 = vld [vmem:[#allocation3 + $0x50] sm:$0xf]
    %v70 = vld [vmem:[#allocation3 + $0x54] sm:$0xff]
    %v71 = vld [vmem:[#allocation3 + $0x5c] sm:$0xf]
    %v72 = vld [vmem:[#allocation3 + $0x60] sm:$0xff]
    %v73 = vld [vmem:[#allocation3 + $0x68] sm:$0xf]
    %v74 = vld [vmem:[#allocation3 + $0x6c] sm:$0xff]
    %v75 = vld [vmem:[#allocation3 + $0x74] sm:$0xf]
    %v76 = vld [vmem:[#allocation3 + $0x78] sm:$0xff]
    %v77 = vld [vmem:[#allocation3 + $0x80] sm:$0xf]
    %v78 = vld [vmem:[#allocation3 + $0x84] sm:$0xff]
    %v79 = vld [vmem:[#allocation3 + $0x8c] sm:$0xf]
    %v80 = vld [vmem:[#allocation3 + $0x90] sm:$0xff]
    %v81 = vld [vmem:[#allocation3 + $0x98] sm:$0xf]
    %v82 = vld [vmem:[#allocation3 + $0x9c] sm:$0xff]
    %v83 = vld [vmem:[#allocation3 + $0xa4] sm:$0xf]
    %v84 = vld [vmem:[#allocation3 + $0xa8] sm:$0xff]
    %v85 = vld [vmem:[#allocation3 + $0xb0] sm:$0xf]
    %v86 = vld [vmem:[#allocation3 + $0xb4] sm:$0xff]
    %v87 = vld [vmem:[#allocation3 + $0xbc] sm:$0xf]
    %v88 = vld [vmem:[#allocation3 + $0xc0] sm:$0xff]
    %v89 = vld [vmem:[#allocation3 + $0xc8] sm:$0xf]
    %v90 = vld [vmem:[#allocation3 + $0xcc] sm:$0xff]
    %v91 = vld [vmem:[#allocation3 + $0xd4] sm:$0xf]
    %v92 = vld [vmem:[#allocation3 + $0xd8] sm:$0xff]
    %v93 = vld [vmem:[#allocation3 + $0xe0] sm:$0xf]
    %v94 = vld [vmem:[#allocation3 + $0xe4] sm:$0xff]
    %v95 = vld [vmem:[#allocation3 + $0xec] sm:$0xf]
    %v96 = vld [vmem:[#allocation3 + $0xf0] sm:$0xff]
    %v97 = vld [vmem:[#allocation3 + $0xf8] sm:$0xf]
    %v98 = vld [vmem:[#allocation3 + $0xfc] sm:$0xff]
    %v99 = vld [vmem:[#allocation3 + $0x104] sm:$0xf]
    %v100 = vld [vmem:[#allocation3 + $0x108] sm:$0xff]
    %v101 = vld [vmem:[#allocation3 + $0x110] sm:$0xf]
    %v102 = vld [vmem:[#allocation3 + $0x114] sm:$0xff]
    %v103 = vld [vmem:[#allocation3 + $0x11c] sm:$0xf]
    %v104 = vld [vmem:[#allocation3 + $0x120] sm:$0xff]
    %v105 = vld [vmem:[#allocation3 + $0x128] sm:$0xf]
    %v106 = vld [vmem:[#allocation3 + $0x12c] sm:$0xff]
    %v107 = vld [vmem:[#allocation3 + $0x134] sm:$0xf]
    %v108 = vld [vmem:[#allocation3 + $0x138] sm:$0xff]
    %v109 = vld [vmem:[#allocation3 + $0x140] sm:$0xf]
    %v110 = vld [vmem:[#allocation3 + $0x144] sm:$0xff]
    %v111 = vld [vmem:[#allocation3 + $0x14c] sm:$0xf]
    %v112 = vld [vmem:[#allocation3 + $0x150] sm:$0xff]
    %v113 = vld [vmem:[#allocation3 + $0x158] sm:$0xf]
    %v114 = vld [vmem:[#allocation3 + $0x15c] sm:$0xff]
    %v115 = vld [vmem:[#allocation3 + $0x164] sm:$0xf]
    %v116 = vld [vmem:[#allocation3 + $0x168] sm:$0xff]
    %v117 = vld [vmem:[#allocation3 + $0x170] sm:$0xf]
    %v118 = vld [vmem:[#allocation3 + $0x174] sm:$0xff]
    %v119 = vld [vmem:[#allocation3 + $0x17c] sm:$0xf]
    %v120 = vld [vmem:[#allocation3 + $0x180] sm:$0xff]
    %v121 = vld [vmem:[#allocation3 + $0x188] sm:$0xf]
    %v122 = vld [vmem:[#allocation3 + $0x18c] sm:$0xff]
    %v123 = vld [vmem:[#allocation3 + $0x194] sm:$0xf]
    %v124 = vld [vmem:[#allocation3 + $0x198] sm:$0xff]
    %v125 = vld [vmem:[#allocation3 + $0x1a0] sm:$0xf]
    %v126 = vld [vmem:[#allocation3 + $0x1a4] sm:$0xff]
    %v127 = vld [vmem:[#allocation3 + $0x1ac] sm:$0xf]
    %v128 = vld [vmem:[#allocation3 + $0x1b0] sm:$0xff]
    %v129 = vld [vmem:[#allocation3 + $0x1b8] sm:$0xf]
    %v130 = vld [vmem:[#allocation3 + $0x1bc] sm:$0xff]
    %v131 = vld [vmem:[#allocation3 + $0x1c4] sm:$0xf]
    %v132 = vld [vmem:[#allocation3 + $0x1c8] sm:$0xff]
    %v133 = vld [vmem:[#allocation3 + $0x1d0] sm:$0xf]
    %v134 = vld [vmem:[#allocation3 + $0x1d4] sm:$0xff]
    %v135 = vld [vmem:[#allocation3 + $0x1dc] sm:$0xf]
    %v136 = vld [vmem:[#allocation3 + $0x1e0] sm:$0xff]
    %v137 = vld [vmem:[#allocation3 + $0x1e8] sm:$0xf]
    %v138 = vld [vmem:[#allocation3 + $0x1ec] sm:$0xff]
    %v139 = vld [vmem:[#allocation3 + $0x1f4] sm:$0xf]
    %v140 = vld [vmem:[#allocation3 + $0x1f8] sm:$0xff]
    %v141 = vld [vmem:[#allocation3 + $0x200] sm:$0xf]
    %v142 = vld [vmem:[#allocation3 + $0x204] sm:$0xff]
    %v143 = vld [vmem:[#allocation3 + $0x20c] sm:$0xf]
    %v144 = vld [vmem:[#allocation3 + $0x210] sm:$0xff]
    %v145 = vld [vmem:[#allocation3 + $0x218] sm:$0xf]
    %v146 = vld [vmem:[#allocation3 + $0x21c] sm:$0xff]
    %v147 = vld [vmem:[#allocation3 + $0x224] sm:$0xf]
    %v148 = vld [vmem:[#allocation3 + $0x228] sm:$0xff]
    %v149 = vld [vmem:[#allocation3 + $0x230] sm:$0xf]
    %v150 = vld [vmem:[#allocation3 + $0x234] sm:$0xff]
    %v151 = vld [vmem:[#allocation3 + $0x23c] sm:$0xf]
    %v154 = vunpack.c.l.b16 %v54
    %v155 = vunpack.c.h.b16 %v54
    %v156 = vunpack.c.l.b16 %v55
    %v157 = vpack.c.b16 %v154, %v154
    %v158 = vpack.c.b16 %v155, %v155
    %v159 = vpack.c.b16 %v156, %v156
    %v259 = vunpack.c.l.b16 %v56
    %v260 = vunpack.c.h.b16 %v56
    %v261 = vunpack.c.l.b16 %v57
    %v262 = vunpack.c.l.b16 %v58
    %v263 = vunpack.c.h.b16 %v58
    %v264 = vunpack.c.l.b16 %v59
    %v265 = vunpack.c.l.b16 %v60
    %v266 = vunpack.c.h.b16 %v60
    %v267 = vunpack.c.l.b16 %v61
    %v268 = vunpack.c.l.b16 %v62
    %v269 = vunpack.c.h.b16 %v62
    %v270 = vunpack.c.l.b16 %v63
    %v271 = vunpack.c.l.b16 %v64
    %v272 = vunpack.c.h.b16 %v64
    %v273 = vunpack.c.l.b16 %v65
    %v274 = vunpack.c.l.b16 %v66
    %v275 = vunpack.c.h.b16 %v66
    %v276 = vunpack.c.l.b16 %v67
    %v277 = vunpack.c.l.b16 %v68
    %v278 = vunpack.c.h.b16 %v68
    %v279 = vunpack.c.l.b16 %v69
    %v280 = vunpack.c.l.b16 %v70
    %v281 = vunpack.c.h.b16 %v70
    %v282 = vunpack.c.l.b16 %v71
    %v283 = vunpack.c.l.b16 %v72
    %v284 = vunpack.c.h.b16 %v72
    %v285 = vunpack.c.l.b16 %v73
    %v286 = vunpack.c.l.b16 %v74
    %v287 = vunpack.c.h.b16 %v74
    %v288 = vunpack.c.l.b16 %v75
    %v289 = vunpack.c.l.b16 %v76
    %v290 = vunpack.c.h.b16 %v76
    %v291 = vunpack.c.l.b16 %v77
    %v292 = vunpack.c.l.b16 %v78
    %v293 = vunpack.c.h.b16 %v78
    %v294 = vunpack.c.l.b16 %v79
    %v295 = vunpack.c.l.b16 %v80
    %v296 = vunpack.c.h.b16 %v80
    %v297 = vunpack.c.l.b16 %v81
    %v298 = vunpack.c.l.b16 %v82
    %v299 = vunpack.c.h.b16 %v82
    %v300 = vunpack.c.l.b16 %v83
    %v301 = vunpack.c.l.b16 %v84
    %v302 = vunpack.c.h.b16 %v84
    %v303 = vunpack.c.l.b16 %v85
    %v304 = vunpack.c.l.b16 %v86
    %v305 = vunpack.c.h.b16 %v86
    %v306 = vunpack.c.l.b16 %v87
    %v307 = vunpack.c.l.b16 %v88
    %v308 = vunpack.c.h.b16 %v88
    %v309 = vunpack.c.l.b16 %v89
    %v310 = vunpack.c.l.b16 %v90
    %v311 = vunpack.c.h.b16 %v90
    %v312 = vunpack.c.l.b16 %v91
    %v313 = vunpack.c.l.b16 %v92
    %v314 = vunpack.c.h.b16 %v92
    %v315 = vunpack.c.l.b16 %v93
    %v316 = vunpack.c.l.b16 %v94
    %v317 = vunpack.c.h.b16 %v94
    %v318 = vunpack.c.l.b16 %v95
    %v319 = vunpack.c.l.b16 %v96
    %v320 = vunpack.c.h.b16 %v96
    %v321 = vunpack.c.l.b16 %v97
    %v322 = vunpack.c.l.b16 %v98
    %v323 = vunpack.c.h.b16 %v98
    %v324 = vunpack.c.l.b16 %v99
    %v325 = vunpack.c.l.b16 %v100
    %v326 = vunpack.c.h.b16 %v100
    %v327 = vunpack.c.l.b16 %v101
    %v328 = vunpack.c.l.b16 %v102
    %v329 = vunpack.c.h.b16 %v102
    %v330 = vunpack.c.l.b16 %v103
    %v331 = vunpack.c.l.b16 %v104
    %v332 = vunpack.c.h.b16 %v104
    %v333 = vunpack.c.l.b16 %v105
    %v334 = vunpack.c.l.b16 %v106
    %v335 = vunpack.c.h.b16 %v106
    %v336 = vunpack.c.l.b16 %v107
    %v337 = vunpack.c.l.b16 %v108
    %v338 = vunpack.c.h.b16 %v108
    %v339 = vunpack.c.l.b16 %v109
    %v340 = vunpack.c.l.b16 %v110
    %v341 = vunpack.c.h.b16 %v110
    %v342 = vunpack.c.l.b16 %v111
    %v343 = vunpack.c.l.b16 %v112
    %v344 = vunpack.c.h.b16 %v112
    %v345 = vunpack.c.l.b16 %v113
    %v346 = vunpack.c.l.b16 %v114
    %v347 = vunpack.c.h.b16 %v114
    %v348 = vunpack.c.l.b16 %v115
    %v349 = vunpack.c.l.b16 %v116
    %v350 = vunpack.c.h.b16 %v116
    %v351 = vunpack.c.l.b16 %v117
    %v352 = vunpack.c.l.b16 %v118
    %v353 = vunpack.c.h.b16 %v118
    %v354 = vunpack.c.l.b16 %v119
    %v355 = vunpack.c.l.b16 %v120
    %v356 = vunpack.c.h.b16 %v120
    %v357 = vunpack.c.l.b16 %v121
    %v358 = vunpack.c.l.b16 %v122
    %v359 = vunpack.c.h.b16 %v122
    %v360 = vunpack.c.l.b16 %v123
    %v361 = vunpack.c.l.b16 %v124
    %v362 = vunpack.c.h.b16 %v124
    %v363 = vunpack.c.l.b16 %v125
    %v364 = vunpack.c.l.b16 %v126
    %v365 = vunpack.c.h.b16 %v126
    %v366 = vunpack.c.l.b16 %v127
    %v367 = vunpack.c.l.b16 %v128
    %v368 = vunpack.c.h.b16 %v128
    %v369 = vunpack.c.l.b16 %v129
    %v370 = vunpack.c.l.b16 %v130
    %v371 = vunpack.c.h.b16 %v130
    %v372 = vunpack.c.l.b16 %v131
    %v373 = vunpack.c.l.b16 %v132
    %v374 = vunpack.c.h.b16 %v132
    %v375 = vunpack.c.l.b16 %v133
    %v376 = vunpack.c.l.b16 %v134
    %v377 = vunpack.c.h.b16 %v134
    %v378 = vunpack.c.l.b16 %v135
    %v379 = vunpack.c.l.b16 %v136
    %v380 = vunpack.c.h.b16 %v136
    %v381 = vunpack.c.l.b16 %v137
    %v382 = vunpack.c.l.b16 %v138
    %v383 = vunpack.c.h.b16 %v138
    %v384 = vunpack.c.l.b16 %v139
    %v385 = vunpack.c.l.b16 %v140
    %v386 = vunpack.c.h.b16 %v140
    %v387 = vunpack.c.l.b16 %v141
    %v388 = vunpack.c.l.b16 %v142
    %v389 = vunpack.c.h.b16 %v142
    %v390 = vunpack.c.l.b16 %v143
    %v391 = vunpack.c.l.b16 %v144
    %v392 = vunpack.c.h.b16 %v144
    %v393 = vunpack.c.l.b16 %v145
    %v394 = vunpack.c.l.b16 %v146
    %v395 = vunpack.c.h.b16 %v146
    %v396 = vunpack.c.l.b16 %v147
    %v397 = vunpack.c.l.b16 %v148
    %v398 = vunpack.c.h.b16 %v148
    %v399 = vunpack.c.l.b16 %v149
    %v400 = vunpack.c.l.b16 %v150
    %v401 = vunpack.c.h.b16 %v150
    %v402 = vunpack.c.l.b16 %v151
    %v403 = vpack.c.b16 %v262, %v259
    %v404 = vpack.c.b16 %v263, %v260
    %v405 = vpack.c.b16 %v264, %v261
    %v406 = vpack.c.b16 %v268, %v265
    %v407 = vpack.c.b16 %v269, %v266
    %v408 = vpack.c.b16 %v270, %v267
    %v409 = vpack.c.b16 %v274, %v271
    %v410 = vpack.c.b16 %v275, %v272
    %v411 = vpack.c.b16 %v276, %v273
    %v412 = vpack.c.b16 %v280, %v277
    %v413 = vpack.c.b16 %v281, %v278
    %v414 = vpack.c.b16 %v282, %v279
    %v415 = vpack.c.b16 %v286, %v283
    %v416 = vpack.c.b16 %v287, %v284
    %v417 = vpack.c.b16 %v288, %v285
    %v418 = vpack.c.b16 %v292, %v289
    %v419 = vpack.c.b16 %v293, %v290
    %v420 = vpack.c.b16 %v294, %v291
    %v421 = vpack.c.b16 %v298, %v295
    %v422 = vpack.c.b16 %v299, %v296
    %v423 = vpack.c.b16 %v300, %v297
    %v424 = vpack.c.b16 %v304, %v301
    %v425 = vpack.c.b16 %v305, %v302
    %v426 = vpack.c.b16 %v306, %v303
    %v427 = vpack.c.b16 %v310, %v307
    %v428 = vpack.c.b16 %v311, %v308
    %v429 = vpack.c.b16 %v312, %v309
    %v430 = vpack.c.b16 %v316, %v313
    %v431 = vpack.c.b16 %v317, %v314
    %v432 = vpack.c.b16 %v318, %v315
    %v433 = vpack.c.b16 %v322, %v319
    %v434 = vpack.c.b16 %v323, %v320
    %v435 = vpack.c.b16 %v324, %v321
    %v436 = vpack.c.b16 %v328, %v325
    %v437 = vpack.c.b16 %v329, %v326
    %v438 = vpack.c.b16 %v330, %v327
    %v439 = vpack.c.b16 %v334, %v331
    %v440 = vpack.c.b16 %v335, %v332
    %v441 = vpack.c.b16 %v336, %v333
    %v442 = vpack.c.b16 %v340, %v337
    %v443 = vpack.c.b16 %v341, %v338
    %v444 = vpack.c.b16 %v342, %v339
    %v445 = vpack.c.b16 %v346, %v343
    %v446 = vpack.c.b16 %v347, %v344
    %v447 = vpack.c.b16 %v348, %v345
    %v448 = vpack.c.b16 %v352, %v349
    %v449 = vpack.c.b16 %v353, %v350
    %v450 = vpack.c.b16 %v354, %v351
    %v451 = vpack.c.b16 %v358, %v355
    %v452 = vpack.c.b16 %v359, %v356
    %v453 = vpack.c.b16 %v360, %v357
    %v454 = vpack.c.b16 %v364, %v361
    %v455 = vpack.c.b16 %v365, %v362
    %v456 = vpack.c.b16 %v366, %v363
    %v457 = vpack.c.b16 %v370, %v367
    %v458 = vpack.c.b16 %v371, %v368
    %v459 = vpack.c.b16 %v372, %v369
    %v460 = vpack.c.b16 %v376, %v373
    %v461 = vpack.c.b16 %v377, %v374
    %v462 = vpack.c.b16 %v378, %v375
    %v463 = vpack.c.b16 %v382, %v379
    %v464 = vpack.c.b16 %v383, %v380
    %v465 = vpack.c.b16 %v384, %v381
    %v466 = vpack.c.b16 %v388, %v385
    %v467 = vpack.c.b16 %v389, %v386
    %v468 = vpack.c.b16 %v390, %v387
    %v469 = vpack.c.b16 %v394, %v391
    %v470 = vpack.c.b16 %v395, %v392
    %v471 = vpack.c.b16 %v396, %v393
    %v472 = vpack.c.b16 %v400, %v397
    %v473 = vpack.c.b16 %v401, %v398
    %v474 = vpack.c.b16 %v402, %v399
    %547 = vmatpush.bf16.msra.mxu0 %v424
    %548 = vmatpush.bf16.msra.mxu0 %v421
    %549 = vmatpush.bf16.msra.mxu0 %v418
    %550 = vmatpush.bf16.msra.mxu0 %v415
    %551 = vmatpush.bf16.msra.mxu0 %v412
    %552 = vmatpush.bf16.msra.mxu0 %v409
    %553 = vmatpush.bf16.msra.mxu0 %v406
    %554 = vmatpush.bf16.msra.mxu0 %v403
    %555 = vmatmul.bf16.gmra.mxu0 %v157
    %v556 = vpop.f32.mrf.mxu0
    %v557 = vadd.f32 0.0, %v556
    %v558 = vpop.f32.mrf.mxu0
    %559 = vdwg.mxu0
    %560 = vmatpush.bf16.msra.mxu0 %v448
    %561 = vmatpush.bf16.msra.mxu0 %v445
    %562 = vmatpush.bf16.msra.mxu0 %v442
    %563 = vmatpush.bf16.msra.mxu0 %v439
    %564 = vmatpush.bf16.msra.mxu0 %v436
    %565 = vmatpush.bf16.msra.mxu0 %v433
    %566 = vmatpush.bf16.msra.mxu0 %v430
    %567 = vmatpush.bf16.msra.mxu0 %v427
    %568 = vmatmul.bf16.gmra.mxu0 %v158
    %v569 = vpop.f32.mrf.mxu0
    %v570 = vadd.f32 %v557, %v569
    %v571 = vpop.f32.mrf.mxu0
    %572 = vdwg.mxu0
    %573 = vmatpush.bf16.msra.mxu0 %v472
    %574 = vmatpush.bf16.msra.mxu0 %v469
    %575 = vmatpush.bf16.msra.mxu0 %v466
    %576 = vmatpush.bf16.msra.mxu0 %v463
    %577 = vmatpush.bf16.msra.mxu0 %v460
    %578 = vmatpush.bf16.msra.mxu0 %v457
    %579 = vmatpush.bf16.msra.mxu0 %v454
    %580 = vmatpush.bf16.msra.mxu0 %v451
    %581 = vmatmul.bf16.gmra.mxu0 %v159
    %v582 = vpop.f32.mrf.mxu0
    %v583 = vadd.f32 %v570, %v582
    %v584 = vpop.f32.mrf.mxu0
    %585 = vdwg.mxu0
    %586 = vmatpush.bf16.msra.mxu0 %v425
    %587 = vmatpush.bf16.msra.mxu0 %v422
    %588 = vmatpush.bf16.msra.mxu0 %v419
    %589 = vmatpush.bf16.msra.mxu0 %v416
    %590 = vmatpush.bf16.msra.mxu0 %v413
    %591 = vmatpush.bf16.msra.mxu0 %v410
    %592 = vmatpush.bf16.msra.mxu0 %v407
    %593 = vmatpush.bf16.msra.mxu0 %v404
    %594 = vmatmul.bf16.gmra.mxu0 %v157
    %v595 = vpop.f32.mrf.mxu0
    %v596 = vadd.f32 0.0, %v595
    %v597 = vpop.f32.mrf.mxu0
    %598 = vdwg.mxu0
    %599 = vmatpush.bf16.msra.mxu0 %v449
    %600 = vmatpush.bf16.msra.mxu0 %v446
    %601 = vmatpush.bf16.msra.mxu0 %v443
    %602 = vmatpush.bf16.msra.mxu0 %v440
    %603 = vmatpush.bf16.msra.mxu0 %v437
    %604 = vmatpush.bf16.msra.mxu0 %v434
    %605 = vmatpush.bf16.msra.mxu0 %v431
    %606 = vmatpush.bf16.msra.mxu0 %v428
    %607 = vmatmul.bf16.gmra.mxu0 %v158
    %v608 = vpop.f32.mrf.mxu0
    %v609 = vadd.f32 %v596, %v608
    %v610 = vpop.f32.mrf.mxu0
    %611 = vdwg.mxu0
    %612 = vmatpush.bf16.msra.mxu0 %v473
    %613 = vmatpush.bf16.msra.mxu0 %v470
    %614 = vmatpush.bf16.msra.mxu0 %v467
    %615 = vmatpush.bf16.msra.mxu0 %v464
    %616 = vmatpush.bf16.msra.mxu0 %v461
    %617 = vmatpush.bf16.msra.mxu0 %v458
    %618 = vmatpush.bf16.msra.mxu0 %v455
    %619 = vmatpush.bf16.msra.mxu0 %v452
    %620 = vmatmul.bf16.gmra.mxu0 %v159
    %v621 = vpop.f32.mrf.mxu0
    %v622 = vadd.f32 %v609, %v621
    %v623 = vpop.f32.mrf.mxu0
    %624 = vdwg.mxu0
    %625 = vmatpush.bf16.msra.mxu0 %v426
    %626 = vmatpush.bf16.msra.mxu0 %v423
    %627 = vmatpush.bf16.msra.mxu0 %v420
    %628 = vmatpush.bf16.msra.mxu0 %v417
    %629 = vmatpush.bf16.msra.mxu0 %v414
    %630 = vmatpush.bf16.msra.mxu0 %v411
    %631 = vmatpush.bf16.msra.mxu0 %v408
    %632 = vmatpush.bf16.msra.mxu0 %v405
    %633 = vmatmul.bf16.gmra.mxu0 %v157
    %v634 = vpop.f32.mrf.mxu0
    %v635 = vadd.f32 0.0, %v634
    %v636 = vpop.f32.mrf.mxu0
    %637 = vdwg.mxu0
    %638 = vmatpush.bf16.msra.mxu0 %v450
    %639 = vmatpush.bf16.msra.mxu0 %v447
    %640 = vmatpush.bf16.msra.mxu0 %v444
    %641 = vmatpush.bf16.msra.mxu0 %v441
    %642 = vmatpush.bf16.msra.mxu0 %v438
    %643 = vmatpush.bf16.msra.mxu0 %v435
    %644 = vmatpush.bf16.msra.mxu0 %v432
    %645 = vmatpush.bf16.msra.mxu0 %v429
    %646 = vmatmul.bf16.gmra.mxu0 %v158
    %v647 = vpop.f32.mrf.mxu0
    %v648 = vadd.f32 %v635, %v647
    %v649 = vpop.f32.mrf.mxu0
    %650 = vdwg.mxu0
    %651 = vmatpush.bf16.msra.mxu0 %v474
    %652 = vmatpush.bf16.msra.mxu0 %v471
    %653 = vmatpush.bf16.msra.mxu0 %v468
    %654 = vmatpush.bf16.msra.mxu0 %v465
    %655 = vmatpush.bf16.msra.mxu0 %v462
    %656 = vmatpush.bf16.msra.mxu0 %v459
    %657 = vmatpush.bf16.msra.mxu0 %v456
    %658 = vmatpush.bf16.msra.mxu0 %v453
    %659 = vmatmul.bf16.gmra.mxu0 %v159
    %v660 = vpop.f32.mrf.mxu0
    %v661 = vadd.f32 %v648, %v660
    %v662 = vpop.f32.mrf.mxu0
    %663 = vdwg.mxu0
    %v664 = vadd.f32 %v51, %v583
    %v665 = vadd.f32 %v52, %v622
    %v666 = vadd.f32 %v53, %v661
    %667 = vst [vmem:[#allocation2] sm:$0xff] %v664
    %668 = vst [vmem:[#allocation2 + $0x8] sm:$0xff] %v665
    %669 = vst [vmem:[#allocation2 + $0x10] sm:$0xff] %v666
    // Predicated region
    $region26: #{_lambda_.16} parent=1 // pred_check
      %p670 = pneg %p44
    $region27: #{_lambda_.16} parent=1 // pred_check_branch
      %672 = sbr.rel (%p670) target = $region29
    $region28: #{_lambda_.16} parent=1 // pred_region
      %v673 = vld [vmem:[#allocation2] sm:$0xff]
      %v674 = vld [vmem:[#allocation2 + $0x8] sm:$0xff]
      %v675 = vld [vmem:[#allocation2 + $0x10] sm:$0xff]
      %v676 = vld [vmem:[#allocation5] ss:$8 sm:$0x7]
      %v678 = vperm.slane %v676, 0
      %v679 = vperm.slane %v676, 1
      %v680 = vperm.slane %v676, 2
      %v684 = vadd.f32 %v673, %v678
      %v685 = vadd.f32 %v674, %v679
      %v686 = vadd.f32 %v675, %v680
      %v687 = vmax.f32 %v684, 0.0
      %v688 = vmax.f32 %v685, 0.0
      %v689 = vmax.f32 %v686, 0.0
      %s690 = scalar_lea.vmem [#allocation5], 1
      %v691 = vld [vmem:[%s690] ss:$8 sm:$0x7]
      %v693 = vperm.slane %v691, 0
      %v694 = vperm.slane %v691, 1
      %v695 = vperm.slane %v691, 2
      %v699 = vadd.f32 %v687, %v693
      %v700 = vadd.f32 %v688, %v694
      %v701 = vadd.f32 %v689, %v695
      %v702 = vpack.c.bf16 %v700, %v699
      %v703 = vpack.c.bf16 %v701, %v701
      %704 = vst [vmem:[%s3] sm:$0xff] %v702
      %705 = vst [vmem:[%s3 + $0x8] sm:$0xf] %v703
    $region29: #{_lambda_.16} parent=1 // pred_fallthru
      _
    // Predicated region
    $region30: #{_lambda_.16} parent=1 // pred_check
      _
    $region31: #{_lambda_.16} parent=1 // pred_check_branch
      %707 = sbr.rel (0) target = $region33
    $region32: #{_lambda_.16} parent=1 // pred_region
      _
    $region33: #{_lambda_.16} parent=1 // pred_fallthru
      _
    // Predicated region
    $region34: #{_lambda_.16} parent=1 // pred_check
      _
    $region35: #{_lambda_.16} parent=1 // pred_check_branch
      %709 = sbr.rel (0) target = $region37
    $region36: #{_lambda_.16} parent=1 // pred_region
      _
    $region37: #{_lambda_.16} parent=1 // pred_fallthru
      _
    %710 = vsyncpa [#allocation4], 1
    %711 = vsyncpa [#allocation6], 1

// kernel: _lambda_.15
$region0: #{_lambda_.15}
  #allocation0 [shape = 'u32[]', space=smem, size = 0x4, offset = 0x4, fixed_abs, tag = 'smem constant byte address 0x4 - core index']
  #allocation1 [shape = 'u32[72,128]{1,0:T(1,128)}', space=vmem, size = 0x9000, scoped, tag = 'internal scratch']
  #allocation2 [shape = 'f32[8,384]{1,0:T(8,128)}', space=vmem, size = 0x3000, scoped, tag = 'scratch operand']
  %s0 = inlined_call_operand.vmem [shape: bf16[8,768], index: 0, kind: input, shape index: {}]
  %s1 = inlined_call_operand.hbm [shape: bf16[768,384], index: 1, kind: input, shape index: {}]
  %s2 = inlined_call_operand.hbm [shape: f32[8,384], index: 2, kind: input, shape index: {}]
  %s3 = inlined_call_operand.vmem [shape: bf16[8,384], index: 3, kind: output, shape index: {}]
  %s4 = sld [smem:[#allocation0]]
  $region38: #{_lambda_.15} parent=0
    _
  %s6 = ssub.s32 1, %s4
  %s7 = scalar_select 0, %s6, %s4
  $region1: #{_lambda_.15} parent=0
    #allocation3 [shape = 'u8[589824]{0}', space=vmem, size = 0x90000, scoped, tag = 'input window, operand 1, single buffered']
    #allocation4 [shape = 's32[1]{0}', space=sflag, size = 0x4, scoped, tag = 'scoped memory for _lambda_.15']
    #allocation5 [shape = 'u8[12288]{0}', space=vmem, size = 0x3000, scoped, tag = 'input window, operand 2, single buffered']
    #allocation6 [shape = 's32[1]{0}', space=sflag, size = 0x4, scoped, tag = 'scoped memory for _lambda_.15']
    %8 = vsyncpa [#allocation4], 0
    %9 = vsyncpa [#allocation6], 0
    // Predicated region
    $region2: #{_lambda_.15} parent=1 // pred_check
      _
    $region3: #{_lambda_.15} parent=1 // pred_check_branch
      %11 = sbr.rel (0) target = $region5
    $region4: #{_lambda_.15} parent=1 // pred_region
      _
    $region5: #{_lambda_.15} parent=1 // pred_fallthru
      _
    // Predicated region
    $region6: #{_lambda_.15} parent=1 // pred_check
      _
    $region7: #{_lambda_.15} parent=1 // pred_check_branch
      %13 = sbr.rel (0) target = $region9
    $region8: #{_lambda_.15} parent=1 // pred_region
      %15 = vsyncadd [#allocation4], 0
      %s16 = sshll.u32 %s1, 4
      %s17 = int_to_ptr.hbm [resolvable:$true] %s16
      %s18 = sshll.u32 [#allocation3], 4
      %s19 = int_to_ptr.vmem [resolvable:$true] %s18
      %24 = dma.hbm_to_vmem [thread:$0]  %s17, 18432, %s19, [#allocation4], 192, 192, 12
    $region9: #{_lambda_.15} parent=1 // pred_fallthru
      _
    // Predicated region
    $region10: #{_lambda_.15} parent=1 // pred_check
      _
    $region11: #{_lambda_.15} parent=1 // pred_check_branch
      %26 = sbr.rel (0) target = $region13
    $region12: #{_lambda_.15} parent=1 // pred_region
      %28 = vsyncadd [#allocation6], 0
      %s30 = sshll.u32 %s2, 4
      %s31 = int_to_ptr.hbm [resolvable:$true] %s30
      %s32 = sshll.u32 [#allocation5], 4
      %s33 = int_to_ptr.vmem [resolvable:$true] %s32
      %35 = dma.hbm_to_vmem [thread:$0]  %s31, 384, %s33, [#allocation6]
    $region13: #{_lambda_.15} parent=1 // pred_fallthru
      _
    // Predicated region
    $region14: #{_lambda_.15} parent=1 // pred_check
      _
    $region15: #{_lambda_.15} parent=1 // pred_check_branch
      %37 = sbr.rel (0) target = $region17
    $region16: #{_lambda_.15} parent=1 // pred_region
      %39 = dma.done [#allocation4], 18432
    $region17: #{_lambda_.15} parent=1 // pred_fallthru
      _
    // Predicated region
    $region18: #{_lambda_.15} parent=1 // pred_check
      _
    $region19: #{_lambda_.15} parent=1 // pred_check_branch
      %41 = sbr.rel (0) target = $region21
    $region20: #{_lambda_.15} parent=1 // pred_region
      %43 = dma.done [#allocation6], 384
    $region21: #{_lambda_.15} parent=1 // pred_fallthru
      _
    %p44 = scmp.eq.s32.totalorder 0, 0
    // Predicated region
    $region22: #{_lambda_.15} parent=1 // pred_check
      %p45 = pneg %p44
    $region23: #{_lambda_.15} parent=1 // pred_check_branch
      %47 = sbr.rel (%p45) target = $region25
    $region24: #{_lambda_.15} parent=1 // pred_region
      %48 = vst [vmem:[#allocation2] sm:$0xff] 0.0
      %49 = vst [vmem:[#allocation2 + $0x8] sm:$0xff] 0.0
      %50 = vst [vmem:[#allocation2 + $0x10] sm:$0xff] 0.0
    $region25: #{_lambda_.15} parent=1 // pred_fallthru
      _
    %v51 = vld [vmem:[#allocation2] sm:$0xff]
    %v52 = vld [vmem:[#allocation2 + $0x8] sm:$0xff]
    %v53 = vld [vmem:[#allocation2 + $0x10] sm:$0xff]
    %v54 = vld [vmem:[%s0] sm:$0xff]
    %v55 = vld [vmem:[%s0 + $0x8] sm:$0xff]
    %v56 = vld [vmem:[%s0 + $0x10] sm:$0xff]
    %v57 = vld [vmem:[#allocation3] sm:$0xff]
    %v58 = vld [vmem:[#allocation3 + $0x8] sm:$0xf]
    %v59 = vld [vmem:[#allocation3 + $0xc] sm:$0xff]
    %v60 = vld [vmem:[#allocation3 + $0x14] sm:$0xf]
    %v61 = vld [vmem:[#allocation3 + $0x18] sm:$0xff]
    %v62 = vld [vmem:[#allocation3 + $0x20] sm:$0xf]
    %v63 = vld [vmem:[#allocation3 + $0x24] sm:$0xff]
    %v64 = vld [vmem:[#allocation3 + $0x2c] sm:$0xf]
    %v65 = vld [vmem:[#allocation3 + $0x30] sm:$0xff]
    %v66 = vld [vmem:[#allocation3 + $0x38] sm:$0xf]
    %v67 = vld [vmem:[#allocation3 + $0x3c] sm:$0xff]
    %v68 = vld [vmem:[#allocation3 + $0x44] sm:$0xf]
    %v69 = vld [vmem:[#allocation3 + $0x48] sm:$0xff]
    %v70 = vld [vmem:[#allocation3 + $0x50] sm:$0xf]
    %v71 = vld [vmem:[#allocation3 + $0x54] sm:$0xff]
    %v72 = vld [vmem:[#allocation3 + $0x5c] sm:$0xf]
    %v73 = vld [vmem:[#allocation3 + $0x60] sm:$0xff]
    %v74 = vld [vmem:[#allocation3 + $0x68] sm:$0xf]
    %v75 = vld [vmem:[#allocation3 + $0x6c] sm:$0xff]
    %v76 = vld [vmem:[#allocation3 + $0x74] sm:$0xf]
    %v77 = vld [vmem:[#allocation3 + $0x78] sm:$0xff]
    %v78 = vld [vmem:[#allocation3 + $0x80] sm:$0xf]
    %v79 = vld [vmem:[#allocation3 + $0x84] sm:$0xff]
    %v80 = vld [vmem:[#allocation3 + $0x8c] sm:$0xf]
    %v81 = vld [vmem:[#allocation3 + $0x90] sm:$0xff]
    %v82 = vld [vmem:[#allocation3 + $0x98] sm:$0xf]
    %v83 = vld [vmem:[#allocation3 + $0x9c] sm:$0xff]
    %v84 = vld [vmem:[#allocation3 + $0xa4] sm:$0xf]
    %v85 = vld [vmem:[#allocation3 + $0xa8] sm:$0xff]
    %v86 = vld [vmem:[#allocation3 + $0xb0] sm:$0xf]
    %v87 = vld [vmem:[#allocation3 + $0xb4] sm:$0xff]
    %v88 = vld [vmem:[#allocation3 + $0xbc] sm:$0xf]
    %v89 = vld [vmem:[#allocation3 + $0xc0] sm:$0xff]
    %v90 = vld [vmem:[#allocation3 + $0xc8] sm:$0xf]
    %v91 = vld [vmem:[#allocation3 + $0xcc] sm:$0xff]
    %v92 = vld [vmem:[#allocation3 + $0xd4] sm:$0xf]
    %v93 = vld [vmem:[#allocation3 + $0xd8] sm:$0xff]
    %v94 = vld [vmem:[#allocation3 + $0xe0] sm:$0xf]
    %v95 = vld [vmem:[#allocation3 + $0xe4] sm:$0xff]
    %v96 = vld [vmem:[#allocation3 + $0xec] sm:$0xf]
    %v97 = vld [vmem:[#allocation3 + $0xf0] sm:$0xff]
    %v98 = vld [vmem:[#allocation3 + $0xf8] sm:$0xf]
    %v99 = vld [vmem:[#allocation3 + $0xfc] sm:$0xff]
    %v100 = vld [vmem:[#allocation3 + $0x104] sm:$0xf]
    %v101 = vld [vmem:[#allocation3 + $0x108] sm:$0xff]
    %v102 = vld [vmem:[#allocation3 + $0x110] sm:$0xf]
    %v103 = vld [vmem:[#allocation3 + $0x114] sm:$0xff]
    %v104 = vld [vmem:[#allocation3 + $0x11c] sm:$0xf]
    %v105 = vld [vmem:[#allocation3 + $0x120] sm:$0xff]
    %v106 = vld [vmem:[#allocation3 + $0x128] sm:$0xf]
    %v107 = vld [vmem:[#allocation3 + $0x12c] sm:$0xff]
    %v108 = vld [vmem:[#allocation3 + $0x134] sm:$0xf]
    %v109 = vld [vmem:[#allocation3 + $0x138] sm:$0xff]
    %v110 = vld [vmem:[#allocation3 + $0x140] sm:$0xf]
    %v111 = vld [vmem:[#allocation3 + $0x144] sm:$0xff]
    %v112 = vld [vmem:[#allocation3 + $0x14c] sm:$0xf]
    %v113 = vld [vmem:[#allocation3 + $0x150] sm:$0xff]
    %v114 = vld [vmem:[#allocation3 + $0x158] sm:$0xf]
    %v115 = vld [vmem:[#allocation3 + $0x15c] sm:$0xff]
    %v116 = vld [vmem:[#allocation3 + $0x164] sm:$0xf]
    %v117 = vld [vmem:[#allocation3 + $0x168] sm:$0xff]
    %v118 = vld [vmem:[#allocation3 + $0x170] sm:$0xf]
    %v119 = vld [vmem:[#allocation3 + $0x174] sm:$0xff]
    %v120 = vld [vmem:[#allocation3 + $0x17c] sm:$0xf]
    %v121 = vld [vmem:[#allocation3 + $0x180] sm:$0xff]
    %v122 = vld [vmem:[#allocation3 + $0x188] sm:$0xf]
    %v123 = vld [vmem:[#allocation3 + $0x18c] sm:$0xff]
    %v124 = vld [vmem:[#allocation3 + $0x194] sm:$0xf]
    %v125 = vld [vmem:[#allocation3 + $0x198] sm:$0xff]
    %v126 = vld [vmem:[#allocation3 + $0x1a0] sm:$0xf]
    %v127 = vld [vmem:[#allocation3 + $0x1a4] sm:$0xff]
    %v128 = vld [vmem:[#allocation3 + $0x1ac] sm:$0xf]
    %v129 = vld [vmem:[#allocation3 + $0x1b0] sm:$0xff]
    %v130 = vld [vmem:[#allocation3 + $0x1b8] sm:$0xf]
    %v131 = vld [vmem:[#allocation3 + $0x1bc] sm:$0xff]
    %v132 = vld [vmem:[#allocation3 + $0x1c4] sm:$0xf]
    %v133 = vld [vmem:[#allocation3 + $0x1c8] sm:$0xff]
    %v134 = vld [vmem:[#allocation3 + $0x1d0] sm:$0xf]
    %v135 = vld [vmem:[#allocation3 + $0x1d4] sm:$0xff]
    %v136 = vld [vmem:[#allocation3 + $0x1dc] sm:$0xf]
    %v137 = vld [vmem:[#allocation3 + $0x1e0] sm:$0xff]
    %v138 = vld [vmem:[#allocation3 + $0x1e8] sm:$0xf]
    %v139 = vld [vmem:[#allocation3 + $0x1ec] sm:$0xff]
    %v140 = vld [vmem:[#allocation3 + $0x1f4] sm:$0xf]
    %v141 = vld [vmem:[#allocation3 + $0x1f8] sm:$0xff]
    %v142 = vld [vmem:[#allocation3 + $0x200] sm:$0xf]
    %v143 = vld [vmem:[#allocation3 + $0x204] sm:$0xff]
    %v144 = vld [vmem:[#allocation3 + $0x20c] sm:$0xf]
    %v145 = vld [vmem:[#allocation3 + $0x210] sm:$0xff]
    %v146 = vld [vmem:[#allocation3 + $0x218] sm:$0xf]
    %v147 = vld [vmem:[#allocation3 + $0x21c] sm:$0xff]
    %v148 = vld [vmem:[#allocation3 + $0x224] sm:$0xf]
    %v149 = vld [vmem:[#allocation3 + $0x228] sm:$0xff]
    %v150 = vld [vmem:[#allocation3 + $0x230] sm:$0xf]
    %v151 = vld [vmem:[#allocation3 + $0x234] sm:$0xff]
    %v152 = vld [vmem:[#allocation3 + $0x23c] sm:$0xf]
    %v153 = vld [vmem:[#allocation3 + $0x240] sm:$0xff]
    %v154 = vld [vmem:[#allocation3 + $0x248] sm:$0xf]
    %v155 = vld [vmem:[#allocation3 + $0x24c] sm:$0xff]
    %v156 = vld [vmem:[#allocation3 + $0x254] sm:$0xf]
    %v157 = vld [vmem:[#allocation3 + $0x258] sm:$0xff]
    %v158 = vld [vmem:[#allocation3 + $0x260] sm:$0xf]
    %v159 = vld [vmem:[#allocation3 + $0x264] sm:$0xff]
    %v160 = vld [vmem:[#allocation3 + $0x26c] sm:$0xf]
    %v161 = vld [vmem:[#allocation3 + $0x270] sm:$0xff]
    %v162 = vld [vmem:[#allocation3 + $0x278] sm:$0xf]
    %v163 = vld [vmem:[#allocation3 + $0x27c] sm:$0xff]
    %v164 = vld [vmem:[#allocation3 + $0x284] sm:$0xf]
    %v165 = vld [vmem:[#allocation3 + $0x288] sm:$0xff]
    %v166 = vld [vmem:[#allocation3 + $0x290] sm:$0xf]
    %v167 = vld [vmem:[#allocation3 + $0x294] sm:$0xff]
    %v168 = vld [vmem:[#allocation3 + $0x29c] sm:$0xf]
    %v169 = vld [vmem:[#allocation3 + $0x2a0] sm:$0xff]
    %v170 = vld [vmem:[#allocation3 + $0x2a8] sm:$0xf]
    %v171 = vld [vmem:[#allocation3 + $0x2ac] sm:$0xff]
    %v172 = vld [vmem:[#allocation3 + $0x2b4] sm:$0xf]
    %v173 = vld [vmem:[#allocation3 + $0x2b8] sm:$0xff]
    %v174 = vld [vmem:[#allocation3 + $0x2c0] sm:$0xf]
    %v175 = vld [vmem:[#allocation3 + $0x2c4] sm:$0xff]
    %v176 = vld [vmem:[#allocation3 + $0x2cc] sm:$0xf]
    %v177 = vld [vmem:[#allocation3 + $0x2d0] sm:$0xff]
    %v178 = vld [vmem:[#allocation3 + $0x2d8] sm:$0xf]
    %v179 = vld [vmem:[#allocation3 + $0x2dc] sm:$0xff]
    %v180 = vld [vmem:[#allocation3 + $0x2e4] sm:$0xf]
    %v181 = vld [vmem:[#allocation3 + $0x2e8] sm:$0xff]
    %v182 = vld [vmem:[#allocation3 + $0x2f0] sm:$0xf]
    %v183 = vld [vmem:[#allocation3 + $0x2f4] sm:$0xff]
    %v184 = vld [vmem:[#allocation3 + $0x2fc] sm:$0xf]
    %v185 = vld [vmem:[#allocation3 + $0x300] sm:$0xff]
    %v186 = vld [vmem:[#allocation3 + $0x308] sm:$0xf]
    %v187 = vld [vmem:[#allocation3 + $0x30c] sm:$0xff]
    %v188 = vld [vmem:[#allocation3 + $0x314] sm:$0xf]
    %v189 = vld [vmem:[#allocation3 + $0x318] sm:$0xff]
    %v190 = vld [vmem:[#allocation3 + $0x320] sm:$0xf]
    %v191 = vld [vmem:[#allocation3 + $0x324] sm:$0xff]
    %v192 = vld [vmem:[#allocation3 + $0x32c] sm:$0xf]
    %v193 = vld [vmem:[#allocation3 + $0x330] sm:$0xff]
    %v194 = vld [vmem:[#allocation3 + $0x338] sm:$0xf]
    %v195 = vld [vmem:[#allocation3 + $0x33c] sm:$0xff]
    %v196 = vld [vmem:[#allocation3 + $0x344] sm:$0xf]
    %v197 = vld [vmem:[#allocation3 + $0x348] sm:$0xff]
    %v198 = vld [vmem:[#allocation3 + $0x350] sm:$0xf]
    %v199 = vld [vmem:[#allocation3 + $0x354] sm:$0xff]
    %v200 = vld [vmem:[#allocation3 + $0x35c] sm:$0xf]
    %v201 = vld [vmem:[#allocation3 + $0x360] sm:$0xff]
    %v202 = vld [vmem:[#allocation3 + $0x368] sm:$0xf]
    %v203 = vld [vmem:[#allocation3 + $0x36c] sm:$0xff]
    %v204 = vld [vmem:[#allocation3 + $0x374] sm:$0xf]
    %v205 = vld [vmem:[#allocation3 + $0x378] sm:$0xff]
    %v206 = vld [vmem:[#allocation3 + $0x380] sm:$0xf]
    %v207 = vld [vmem:[#allocation3 + $0x384] sm:$0xff]
    %v208 = vld [vmem:[#allocation3 + $0x38c] sm:$0xf]
    %v209 = vld [vmem:[#allocation3 + $0x390] sm:$0xff]
    %v210 = vld [vmem:[#allocation3 + $0x398] sm:$0xf]
    %v211 = vld [vmem:[#allocation3 + $0x39c] sm:$0xff]
    %v212 = vld [vmem:[#allocation3 + $0x3a4] sm:$0xf]
    %v213 = vld [vmem:[#allocation3 + $0x3a8] sm:$0xff]
    %v214 = vld [vmem:[#allocation3 + $0x3b0] sm:$0xf]
    %v215 = vld [vmem:[#allocation3 + $0x3b4] sm:$0xff]
    %v216 = vld [vmem:[#allocation3 + $0x3bc] sm:$0xf]
    %v217 = vld [vmem:[#allocation3 + $0x3c0] sm:$0xff]
    %v218 = vld [vmem:[#allocation3 + $0x3c8] sm:$0xf]
    %v219 = vld [vmem:[#allocation3 + $0x3cc] sm:$0xff]
    %v220 = vld [vmem:[#allocation3 + $0x3d4] sm:$0xf]
    %v221 = vld [vmem:[#allocation3 + $0x3d8] sm:$0xff]
    %v222 = vld [vmem:[#allocation3 + $0x3e0] sm:$0xf]
    %v223 = vld [vmem:[#allocation3 + $0x3e4] sm:$0xff]
    %v224 = vld [vmem:[#allocation3 + $0x3ec] sm:$0xf]
    %v225 = vld [vmem:[#allocation3 + $0x3f0] sm:$0xff]
    %v226 = vld [vmem:[#allocation3 + $0x3f8] sm:$0xf]
    %v227 = vld [vmem:[#allocation3 + $0x3fc] sm:$0xff]
    %v228 = vld [vmem:[#allocation3 + $0x404] sm:$0xf]
    %v229 = vld [vmem:[#allocation3 + $0x408] sm:$0xff]
    %v230 = vld [vmem:[#allocation3 + $0x410] sm:$0xf]
    %v231 = vld [vmem:[#allocation3 + $0x414] sm:$0xff]
    %v232 = vld [vmem:[#allocation3 + $0x41c] sm:$0xf]
    %v233 = vld [vmem:[#allocation3 + $0x420] sm:$0xff]
    %v234 = vld [vmem:[#allocation3 + $0x428] sm:$0xf]
    %v235 = vld [vmem:[#allocation3 + $0x42c] sm:$0xff]
    %v236 = vld [vmem:[#allocation3 + $0x434] sm:$0xf]
    %v237 = vld [vmem:[#allocation3 + $0x438] sm:$0xff]
    %v238 = vld [vmem:[#allocation3 + $0x440] sm:$0xf]
    %v239 = vld [vmem:[#allocation3 + $0x444] sm:$0xff]
    %v240 = vld [vmem:[#allocation3 + $0x44c] sm:$0xf]
    %v241 = vld [vmem:[#allocation3 + $0x450] sm:$0xff]
    %v242 = vld [vmem:[#allocation3 + $0x458] sm:$0xf]
    %v243 = vld [vmem:[#allocation3 + $0x45c] sm:$0xff]
    %v244 = vld [vmem:[#allocation3 + $0x464] sm:$0xf]
    %v245 = vld [vmem:[#allocation3 + $0x468] sm:$0xff]
    %v246 = vld [vmem:[#allocation3 + $0x470] sm:$0xf]
    %v247 = vld [vmem:[#allocation3 + $0x474] sm:$0xff]
    %v248 = vld [vmem:[#allocation3 + $0x47c] sm:$0xf]
    %v252 = vunpack.c.l.b16 %v54
    %v253 = vunpack.c.h.b16 %v54
    %v254 = vunpack.c.l.b16 %v55
    %v255 = vunpack.c.h.b16 %v55
    %v256 = vunpack.c.l.b16 %v56
    %v257 = vunpack.c.h.b16 %v56
    %v258 = vpack.c.b16 %v252, %v252
    %v259 = vpack.c.b16 %v253, %v253
    %v260 = vpack.c.b16 %v254, %v254
    %v261 = vpack.c.b16 %v255, %v255
    %v262 = vpack.c.b16 %v256, %v256
    %v263 = vpack.c.b16 %v257, %v257
    %v462 = vunpack.c.l.b16 %v57
    %v463 = vunpack.c.h.b16 %v57
    %v464 = vunpack.c.l.b16 %v58
    %v465 = vunpack.c.l.b16 %v59
    %v466 = vunpack.c.h.b16 %v59
    %v467 = vunpack.c.l.b16 %v60
    %v468 = vunpack.c.l.b16 %v61
    %v469 = vunpack.c.h.b16 %v61
    %v470 = vunpack.c.l.b16 %v62
    %v471 = vunpack.c.l.b16 %v63
    %v472 = vunpack.c.h.b16 %v63
    %v473 = vunpack.c.l.b16 %v64
    %v474 = vunpack.c.l.b16 %v65
    %v475 = vunpack.c.h.b16 %v65
    %v476 = vunpack.c.l.b16 %v66
    %v477 = vunpack.c.l.b16 %v67
    %v478 = vunpack.c.h.b16 %v67
    %v479 = vunpack.c.l.b16 %v68
    %v480 = vunpack.c.l.b16 %v69
    %v481 = vunpack.c.h.b16 %v69
    %v482 = vunpack.c.l.b16 %v70
    %v483 = vunpack.c.l.b16 %v71
    %v484 = vunpack.c.h.b16 %v71
    %v485 = vunpack.c.l.b16 %v72
    %v486 = vunpack.c.l.b16 %v73
    %v487 = vunpack.c.h.b16 %v73
    %v488 = vunpack.c.l.b16 %v74
    %v489 = vunpack.c.l.b16 %v75
    %v490 = vunpack.c.h.b16 %v75
    %v491 = vunpack.c.l.b16 %v76
    %v492 = vunpack.c.l.b16 %v77
    %v493 = vunpack.c.h.b16 %v77
    %v494 = vunpack.c.l.b16 %v78
    %v495 = vunpack.c.l.b16 %v79
    %v496 = vunpack.c.h.b16 %v79
    %v497 = vunpack.c.l.b16 %v80
    %v498 = vunpack.c.l.b16 %v81
    %v499 = vunpack.c.h.b16 %v81
    %v500 = vunpack.c.l.b16 %v82
    %v501 = vunpack.c.l.b16 %v83
    %v502 = vunpack.c.h.b16 %v83
    %v503 = vunpack.c.l.b16 %v84
    %v504 = vunpack.c.l.b16 %v85
    %v505 = vunpack.c.h.b16 %v85
    %v506 = vunpack.c.l.b16 %v86
    %v507 = vunpack.c.l.b16 %v87
    %v508 = vunpack.c.h.b16 %v87
    %v509 = vunpack.c.l.b16 %v88
    %v510 = vunpack.c.l.b16 %v89
    %v511 = vunpack.c.h.b16 %v89
    %v512 = vunpack.c.l.b16 %v90
    %v513 = vunpack.c.l.b16 %v91
    %v514 = vunpack.c.h.b16 %v91
    %v515 = vunpack.c.l.b16 %v92
    %v516 = vunpack.c.l.b16 %v93
    %v517 = vunpack.c.h.b16 %v93
    %v518 = vunpack.c.l.b16 %v94
    %v519 = vunpack.c.l.b16 %v95
    %v520 = vunpack.c.h.b16 %v95
    %v521 = vunpack.c.l.b16 %v96
    %v522 = vunpack.c.l.b16 %v97
    %v523 = vunpack.c.h.b16 %v97
    %v524 = vunpack.c.l.b16 %v98
    %v525 = vunpack.c.l.b16 %v99
    %v526 = vunpack.c.h.b16 %v99
    %v527 = vunpack.c.l.b16 %v100
    %v528 = vunpack.c.l.b16 %v101
    %v529 = vunpack.c.h.b16 %v101
    %v530 = vunpack.c.l.b16 %v102
    %v531 = vunpack.c.l.b16 %v103
    %v532 = vunpack.c.h.b16 %v103
    %v533 = vunpack.c.l.b16 %v104
    %v534 = vunpack.c.l.b16 %v105
    %v535 = vunpack.c.h.b16 %v105
    %v536 = vunpack.c.l.b16 %v106
    %v537 = vunpack.c.l.b16 %v107
    %v538 = vunpack.c.h.b16 %v107
    %v539 = vunpack.c.l.b16 %v108
    %v540 = vunpack.c.l.b16 %v109
    %v541 = vunpack.c.h.b16 %v109
    %v542 = vunpack.c.l.b16 %v110
    %v543 = vunpack.c.l.b16 %v111
    %v544 = vunpack.c.h.b16 %v111
    %v545 = vunpack.c.l.b16 %v112
    %v546 = vunpack.c.l.b16 %v113
    %v547 = vunpack.c.h.b16 %v113
    %v548 = vunpack.c.l.b16 %v114
    %v549 = vunpack.c.l.b16 %v115
    %v550 = vunpack.c.h.b16 %v115
    %v551 = vunpack.c.l.b16 %v116
    %v552 = vunpack.c.l.b16 %v117
    %v553 = vunpack.c.h.b16 %v117
    %v554 = vunpack.c.l.b16 %v118
    %v555 = vunpack.c.l.b16 %v119
    %v556 = vunpack.c.h.b16 %v119
    %v557 = vunpack.c.l.b16 %v120
    %v558 = vunpack.c.l.b16 %v121
    %v559 = vunpack.c.h.b16 %v121
    %v560 = vunpack.c.l.b16 %v122
    %v561 = vunpack.c.l.b16 %v123
    %v562 = vunpack.c.h.b16 %v123
    %v563 = vunpack.c.l.b16 %v124
    %v564 = vunpack.c.l.b16 %v125
    %v565 = vunpack.c.h.b16 %v125
    %v566 = vunpack.c.l.b16 %v126
    %v567 = vunpack.c.l.b16 %v127
    %v568 = vunpack.c.h.b16 %v127
    %v569 = vunpack.c.l.b16 %v128
    %v570 = vunpack.c.l.b16 %v129
    %v571 = vunpack.c.h.b16 %v129
    %v572 = vunpack.c.l.b16 %v130
    %v573 = vunpack.c.l.b16 %v131
    %v574 = vunpack.c.h.b16 %v131
    %v575 = vunpack.c.l.b16 %v132
    %v576 = vunpack.c.l.b16 %v133
    %v577 = vunpack.c.h.b16 %v133
    %v578 = vunpack.c.l.b16 %v134
    %v579 = vunpack.c.l.b16 %v135
    %v580 = vunpack.c.h.b16 %v135
    %v581 = vunpack.c.l.b16 %v136
    %v582 = vunpack.c.l.b16 %v137
    %v583 = vunpack.c.h.b16 %v137
    %v584 = vunpack.c.l.b16 %v138
    %v585 = vunpack.c.l.b16 %v139
    %v586 = vunpack.c.h.b16 %v139
    %v587 = vunpack.c.l.b16 %v140
    %v588 = vunpack.c.l.b16 %v141
    %v589 = vunpack.c.h.b16 %v141
    %v590 = vunpack.c.l.b16 %v142
    %v591 = vunpack.c.l.b16 %v143
    %v592 = vunpack.c.h.b16 %v143
    %v593 = vunpack.c.l.b16 %v144
    %v594 = vunpack.c.l.b16 %v145
    %v595 = vunpack.c.h.b16 %v145
    %v596 = vunpack.c.l.b16 %v146
    %v597 = vunpack.c.l.b16 %v147
    %v598 = vunpack.c.h.b16 %v147
    %v599 = vunpack.c.l.b16 %v148
    %v600 = vunpack.c.l.b16 %v149
    %v601 = vunpack.c.h.b16 %v149
    %v602 = vunpack.c.l.b16 %v150
    %v603 = vunpack.c.l.b16 %v151
    %v604 = vunpack.c.h.b16 %v151
    %v605 = vunpack.c.l.b16 %v152
    %v606 = vunpack.c.l.b16 %v153
    %v607 = vunpack.c.h.b16 %v153
    %v608 = vunpack.c.l.b16 %v154
    %v609 = vunpack.c.l.b16 %v155
    %v610 = vunpack.c.h.b16 %v155
    %v611 = vunpack.c.l.b16 %v156
    %v612 = vunpack.c.l.b16 %v157
    %v613 = vunpack.c.h.b16 %v157
    %v614 = vunpack.c.l.b16 %v158
    %v615 = vunpack.c.l.b16 %v159
    %v616 = vunpack.c.h.b16 %v159
    %v617 = vunpack.c.l.b16 %v160
    %v618 = vunpack.c.l.b16 %v161
    %v619 = vunpack.c.h.b16 %v161
    %v620 = vunpack.c.l.b16 %v162
    %v621 = vunpack.c.l.b16 %v163
    %v622 = vunpack.c.h.b16 %v163
    %v623 = vunpack.c.l.b16 %v164
    %v624 = vunpack.c.l.b16 %v165
    %v625 = vunpack.c.h.b16 %v165
    %v626 = vunpack.c.l.b16 %v166
    %v627 = vunpack.c.l.b16 %v167
    %v628 = vunpack.c.h.b16 %v167
    %v629 = vunpack.c.l.b16 %v168
    %v630 = vunpack.c.l.b16 %v169
    %v631 = vunpack.c.h.b16 %v169
    %v632 = vunpack.c.l.b16 %v170
    %v633 = vunpack.c.l.b16 %v171
    %v634 = vunpack.c.h.b16 %v171
    %v635 = vunpack.c.l.b16 %v172
    %v636 = vunpack.c.l.b16 %v173
    %v637 = vunpack.c.h.b16 %v173
    %v638 = vunpack.c.l.b16 %v174
    %v639 = vunpack.c.l.b16 %v175
    %v640 = vunpack.c.h.b16 %v175
    %v641 = vunpack.c.l.b16 %v176
    %v642 = vunpack.c.l.b16 %v177
    %v643 = vunpack.c.h.b16 %v177
    %v644 = vunpack.c.l.b16 %v178
    %v645 = vunpack.c.l.b16 %v179
    %v646 = vunpack.c.h.b16 %v179
    %v647 = vunpack.c.l.b16 %v180
    %v648 = vunpack.c.l.b16 %v181
    %v649 = vunpack.c.h.b16 %v181
    %v650 = vunpack.c.l.b16 %v182
    %v651 = vunpack.c.l.b16 %v183
    %v652 = vunpack.c.h.b16 %v183
    %v653 = vunpack.c.l.b16 %v184
    %v654 = vunpack.c.l.b16 %v185
    %v655 = vunpack.c.h.b16 %v185
    %v656 = vunpack.c.l.b16 %v186
    %v657 = vunpack.c.l.b16 %v187
    %v658 = vunpack.c.h.b16 %v187
    %v659 = vunpack.c.l.b16 %v188
    %v660 = vunpack.c.l.b16 %v189
    %v661 = vunpack.c.h.b16 %v189
    %v662 = vunpack.c.l.b16 %v190
    %v663 = vunpack.c.l.b16 %v191
    %v664 = vunpack.c.h.b16 %v191
    %v665 = vunpack.c.l.b16 %v192
    %v666 = vunpack.c.l.b16 %v193
    %v667 = vunpack.c.h.b16 %v193
    %v668 = vunpack.c.l.b16 %v194
    %v669 = vunpack.c.l.b16 %v195
    %v670 = vunpack.c.h.b16 %v195
    %v671 = vunpack.c.l.b16 %v196
    %v672 = vunpack.c.l.b16 %v197
    %v673 = vunpack.c.h.b16 %v197
    %v674 = vunpack.c.l.b16 %v198
    %v675 = vunpack.c.l.b16 %v199
    %v676 = vunpack.c.h.b16 %v199
    %v677 = vunpack.c.l.b16 %v200
    %v678 = vunpack.c.l.b16 %v201
    %v679 = vunpack.c.h.b16 %v201
    %v680 = vunpack.c.l.b16 %v202
    %v681 = vunpack.c.l.b16 %v203
    %v682 = vunpack.c.h.b16 %v203
    %v683 = vunpack.c.l.b16 %v204
    %v684 = vunpack.c.l.b16 %v205
    %v685 = vunpack.c.h.b16 %v205
    %v686 = vunpack.c.l.b16 %v206
    %v687 = vunpack.c.l.b16 %v207
    %v688 = vunpack.c.h.b16 %v207
    %v689 = vunpack.c.l.b16 %v208
    %v690 = vunpack.c.l.b16 %v209
    %v691 = vunpack.c.h.b16 %v209
    %v692 = vunpack.c.l.b16 %v210
    %v693 = vunpack.c.l.b16 %v211
    %v694 = vunpack.c.h.b16 %v211
    %v695 = vunpack.c.l.b16 %v212
    %v696 = vunpack.c.l.b16 %v213
    %v697 = vunpack.c.h.b16 %v213
    %v698 = vunpack.c.l.b16 %v214
    %v699 = vunpack.c.l.b16 %v215
    %v700 = vunpack.c.h.b16 %v215
    %v701 = vunpack.c.l.b16 %v216
    %v702 = vunpack.c.l.b16 %v217
    %v703 = vunpack.c.h.b16 %v217
    %v704 = vunpack.c.l.b16 %v218
    %v705 = vunpack.c.l.b16 %v219
    %v706 = vunpack.c.h.b16 %v219
    %v707 = vunpack.c.l.b16 %v220
    %v708 = vunpack.c.l.b16 %v221
    %v709 = vunpack.c.h.b16 %v221
    %v710 = vunpack.c.l.b16 %v222
    %v711 = vunpack.c.l.b16 %v223
    %v712 = vunpack.c.h.b16 %v223
    %v713 = vunpack.c.l.b16 %v224
    %v714 = vunpack.c.l.b16 %v225
    %v715 = vunpack.c.h.b16 %v225
    %v716 = vunpack.c.l.b16 %v226
    %v717 = vunpack.c.l.b16 %v227
    %v718 = vunpack.c.h.b16 %v227
    %v719 = vunpack.c.l.b16 %v228
    %v720 = vunpack.c.l.b16 %v229
    %v721 = vunpack.c.h.b16 %v229
    %v722 = vunpack.c.l.b16 %v230
    %v723 = vunpack.c.l.b16 %v231
    %v724 = vunpack.c.h.b16 %v231
    %v725 = vunpack.c.l.b16 %v232
    %v726 = vunpack.c.l.b16 %v233
    %v727 = vunpack.c.h.b16 %v233
    %v728 = vunpack.c.l.b16 %v234
    %v729 = vunpack.c.l.b16 %v235
    %v730 = vunpack.c.h.b16 %v235
    %v731 = vunpack.c.l.b16 %v236
    %v732 = vunpack.c.l.b16 %v237
    %v733 = vunpack.c.h.b16 %v237
    %v734 = vunpack.c.l.b16 %v238
    %v735 = vunpack.c.l.b16 %v239
    %v736 = vunpack.c.h.b16 %v239
    %v737 = vunpack.c.l.b16 %v240
    %v738 = vunpack.c.l.b16 %v241
    %v739 = vunpack.c.h.b16 %v241
    %v740 = vunpack.c.l.b16 %v242
    %v741 = vunpack.c.l.b16 %v243
    %v742 = vunpack.c.h.b16 %v243
    %v743 = vunpack.c.l.b16 %v244
    %v744 = vunpack.c.l.b16 %v245
    %v745 = vunpack.c.h.b16 %v245
    %v746 = vunpack.c.l.b16 %v246
    %v747 = vunpack.c.l.b16 %v247
    %v748 = vunpack.c.h.b16 %v247
    %v749 = vunpack.c.l.b16 %v248
    %v750 = vpack.c.b16 %v465, %v462
    %v751 = vpack.c.b16 %v466, %v463
    %v752 = vpack.c.b16 %v467, %v464
    %v753 = vpack.c.b16 %v471, %v468
    %v754 = vpack.c.b16 %v472, %v469
    %v755 = vpack.c.b16 %v473, %v470
    %v756 = vpack.c.b16 %v477, %v474
    %v757 = vpack.c.b16 %v478, %v475
    %v758 = vpack.c.b16 %v479, %v476
    %v759 = vpack.c.b16 %v483, %v480
    %v760 = vpack.c.b16 %v484, %v481
    %v761 = vpack.c.b16 %v485, %v482
    %v762 = vpack.c.b16 %v489, %v486
    %v763 = vpack.c.b16 %v490, %v487
    %v764 = vpack.c.b16 %v491, %v488
    %v765 = vpack.c.b16 %v495, %v492
    %v766 = vpack.c.b16 %v496, %v493
    %v767 = vpack.c.b16 %v497, %v494
    %v768 = vpack.c.b16 %v501, %v498
    %v769 = vpack.c.b16 %v502, %v499
    %v770 = vpack.c.b16 %v503, %v500
    %v771 = vpack.c.b16 %v507, %v504
    %v772 = vpack.c.b16 %v508, %v505
    %v773 = vpack.c.b16 %v509, %v506
    %v774 = vpack.c.b16 %v513, %v510
    %v775 = vpack.c.b16 %v514, %v511
    %v776 = vpack.c.b16 %v515, %v512
    %v777 = vpack.c.b16 %v519, %v516
    %v778 = vpack.c.b16 %v520, %v517
    %v779 = vpack.c.b16 %v521, %v518
    %v780 = vpack.c.b16 %v525, %v522
    %v781 = vpack.c.b16 %v526, %v523
    %v782 = vpack.c.b16 %v527, %v524
    %v783 = vpack.c.b16 %v531, %v528
    %v784 = vpack.c.b16 %v532, %v529
    %v785 = vpack.c.b16 %v533, %v530
    %v786 = vpack.c.b16 %v537, %v534
    %v787 = vpack.c.b16 %v538, %v535
    %v788 = vpack.c.b16 %v539, %v536
    %v789 = vpack.c.b16 %v543, %v540
    %v790 = vpack.c.b16 %v544, %v541
    %v791 = vpack.c.b16 %v545, %v542
    %v792 = vpack.c.b16 %v549, %v546
    %v793 = vpack.c.b16 %v550, %v547
    %v794 = vpack.c.b16 %v551, %v548
    %v795 = vpack.c.b16 %v555, %v552
    %v796 = vpack.c.b16 %v556, %v553
    %v797 = vpack.c.b16 %v557, %v554
    %v798 = vpack.c.b16 %v561, %v558
    %v799 = vpack.c.b16 %v562, %v559
    %v800 = vpack.c.b16 %v563, %v560
    %v801 = vpack.c.b16 %v567, %v564
    %v802 = vpack.c.b16 %v568, %v565
    %v803 = vpack.c.b16 %v569, %v566
    %v804 = vpack.c.b16 %v573, %v570
    %v805 = vpack.c.b16 %v574, %v571
    %v806 = vpack.c.b16 %v575, %v572
    %v807 = vpack.c.b16 %v579, %v576
    %v808 = vpack.c.b16 %v580, %v577
    %v809 = vpack.c.b16 %v581, %v578
    %v810 = vpack.c.b16 %v585, %v582
    %v811 = vpack.c.b16 %v586, %v583
    %v812 = vpack.c.b16 %v587, %v584
    %v813 = vpack.c.b16 %v591, %v588
    %v814 = vpack.c.b16 %v592, %v589
    %v815 = vpack.c.b16 %v593, %v590
    %v816 = vpack.c.b16 %v597, %v594
    %v817 = vpack.c.b16 %v598, %v595
    %v818 = vpack.c.b16 %v599, %v596
    %v819 = vpack.c.b16 %v603, %v600
    %v820 = vpack.c.b16 %v604, %v601
    %v821 = vpack.c.b16 %v605, %v602
    %v822 = vpack.c.b16 %v609, %v606
    %v823 = vpack.c.b16 %v610, %v607
    %v824 = vpack.c.b16 %v611, %v608
    %v825 = vpack.c.b16 %v615, %v612
    %v826 = vpack.c.b16 %v616, %v613
    %v827 = vpack.c.b16 %v617, %v614
    %v828 = vpack.c.b16 %v621, %v618
    %v829 = vpack.c.b16 %v622, %v619
    %v830 = vpack.c.b16 %v623, %v620
    %v831 = vpack.c.b16 %v627, %v624
    %v832 = vpack.c.b16 %v628, %v625
    %v833 = vpack.c.b16 %v629, %v626
    %v834 = vpack.c.b16 %v633, %v630
    %v835 = vpack.c.b16 %v634, %v631
    %v836 = vpack.c.b16 %v635, %v632
    %v837 = vpack.c.b16 %v639, %v636
    %v838 = vpack.c.b16 %v640, %v637
    %v839 = vpack.c.b16 %v641, %v638
    %v840 = vpack.c.b16 %v645, %v642
    %v841 = vpack.c.b16 %v646, %v643
    %v842 = vpack.c.b16 %v647, %v644
    %v843 = vpack.c.b16 %v651, %v648
    %v844 = vpack.c.b16 %v652, %v649
    %v845 = vpack.c.b16 %v653, %v650
    %v846 = vpack.c.b16 %v657, %v654
    %v847 = vpack.c.b16 %v658, %v655
    %v848 = vpack.c.b16 %v659, %v656
    %v849 = vpack.c.b16 %v663, %v660
    %v850 = vpack.c.b16 %v664, %v661
    %v851 = vpack.c.b16 %v665, %v662
    %v852 = vpack.c.b16 %v669, %v666
    %v853 = vpack.c.b16 %v670, %v667
    %v854 = vpack.c.b16 %v671, %v668
    %v855 = vpack.c.b16 %v675, %v672
    %v856 = vpack.c.b16 %v676, %v673
    %v857 = vpack.c.b16 %v677, %v674
    %v858 = vpack.c.b16 %v681, %v678
    %v859 = vpack.c.b16 %v682, %v679
    %v860 = vpack.c.b16 %v683, %v680
    %v861 = vpack.c.b16 %v687, %v684
    %v862 = vpack.c.b16 %v688, %v685
    %v863 = vpack.c.b16 %v689, %v686
    %v864 = vpack.c.b16 %v693, %v690
    %v865 = vpack.c.b16 %v694, %v691
    %v866 = vpack.c.b16 %v695, %v692
    %v867 = vpack.c.b16 %v699, %v696
    %v868 = vpack.c.b16 %v700, %v697
    %v869 = vpack.c.b16 %v701, %v698
    %v870 = vpack.c.b16 %v705, %v702
    %v871 = vpack.c.b16 %v706, %v703
    %v872 = vpack.c.b16 %v707, %v704
    %v873 = vpack.c.b16 %v711, %v708
    %v874 = vpack.c.b16 %v712, %v709
    %v875 = vpack.c.b16 %v713, %v710
    %v876 = vpack.c.b16 %v717, %v714
    %v877 = vpack.c.b16 %v718, %v715
    %v878 = vpack.c.b16 %v719, %v716
    %v879 = vpack.c.b16 %v723, %v720
    %v880 = vpack.c.b16 %v724, %v721
    %v881 = vpack.c.b16 %v725, %v722
    %v882 = vpack.c.b16 %v729, %v726
    %v883 = vpack.c.b16 %v730, %v727
    %v884 = vpack.c.b16 %v731, %v728
    %v885 = vpack.c.b16 %v735, %v732
    %v886 = vpack.c.b16 %v736, %v733
    %v887 = vpack.c.b16 %v737, %v734
    %v888 = vpack.c.b16 %v741, %v738
    %v889 = vpack.c.b16 %v742, %v739
    %v890 = vpack.c.b16 %v743, %v740
    %v891 = vpack.c.b16 %v747, %v744
    %v892 = vpack.c.b16 %v748, %v745
    %v893 = vpack.c.b16 %v749, %v746
    %1038 = vmatpush.bf16.msra.mxu0 %v771
    %1039 = vmatpush.bf16.msra.mxu0 %v768
    %1040 = vmatpush.bf16.msra.mxu0 %v765
    %1041 = vmatpush.bf16.msra.mxu0 %v762
    %1042 = vmatpush.bf16.msra.mxu0 %v759
    %1043 = vmatpush.bf16.msra.mxu0 %v756
    %1044 = vmatpush.bf16.msra.mxu0 %v753
    %1045 = vmatpush.bf16.msra.mxu0 %v750
    %1046 = vmatmul.bf16.gmra.mxu0 %v258
    %v1047 = vpop.f32.mrf.mxu0
    %v1048 = vadd.f32 0.0, %v1047
    %v1049 = vpop.f32.mrf.mxu0
    %1050 = vdwg.mxu0
    %1051 = vmatpush.bf16.msra.mxu0 %v795
    %1052 = vmatpush.bf16.msra.mxu0 %v792
    %1053 = vmatpush.bf16.msra.mxu0 %v789
    %1054 = vmatpush.bf16.msra.mxu0 %v786
    %1055 = vmatpush.bf16.msra.mxu0 %v783
    %1056 = vmatpush.bf16.msra.mxu0 %v780
    %1057 = vmatpush.bf16.msra.mxu0 %v777
    %1058 = vmatpush.bf16.msra.mxu0 %v774
    %1059 = vmatmul.bf16.gmra.mxu0 %v259
    %v1060 = vpop.f32.mrf.mxu0
    %v1061 = vadd.f32 %v1048, %v1060
    %v1062 = vpop.f32.mrf.mxu0
    %1063 = vdwg.mxu0
    %1064 = vmatpush.bf16.msra.mxu0 %v819
    %1065 = vmatpush.bf16.msra.mxu0 %v816
    %1066 = vmatpush.bf16.msra.mxu0 %v813
    %1067 = vmatpush.bf16.msra.mxu0 %v810
    %1068 = vmatpush.bf16.msra.mxu0 %v807
    %1069 = vmatpush.bf16.msra.mxu0 %v804
    %1070 = vmatpush.bf16.msra.mxu0 %v801
    %1071 = vmatpush.bf16.msra.mxu0 %v798
    %1072 = vmatmul.bf16.gmra.mxu0 %v260
    %v1073 = vpop.f32.mrf.mxu0
    %v1074 = vadd.f32 %v1061, %v1073
    %v1075 = vpop.f32.mrf.mxu0
    %1076 = vdwg.mxu0
    %1077 = vmatpush.bf16.msra.mxu0 %v843
    %1078 = vmatpush.bf16.msra.mxu0 %v840
    %1079 = vmatpush.bf16.msra.mxu0 %v837
    %1080 = vmatpush.bf16.msra.mxu0 %v834
    %1081 = vmatpush.bf16.msra.mxu0 %v831
    %1082 = vmatpush.bf16.msra.mxu0 %v828
    %1083 = vmatpush.bf16.msra.mxu0 %v825
    %1084 = vmatpush.bf16.msra.mxu0 %v822
    %1085 = vmatmul.bf16.gmra.mxu0 %v261
    %v1086 = vpop.f32.mrf.mxu0
    %v1087 = vadd.f32 %v1074, %v1086
    %v1088 = vpop.f32.mrf.mxu0
    %1089 = vdwg.mxu0
    %1090 = vmatpush.bf16.msra.mxu0 %v867
    %1091 = vmatpush.bf16.msra.mxu0 %v864
    %1092 = vmatpush.bf16.msra.mxu0 %v861
    %1093 = vmatpush.bf16.msra.mxu0 %v858
    %1094 = vmatpush.bf16.msra.mxu0 %v855
    %1095 = vmatpush.bf16.msra.mxu0 %v852
    %1096 = vmatpush.bf16.msra.mxu0 %v849
    %1097 = vmatpush.bf16.msra.mxu0 %v846
    %1098 = vmatmul.bf16.gmra.mxu0 %v262
    %v1099 = vpop.f32.mrf.mxu0
    %v1100 = vadd.f32 %v1087, %v1099
    %v1101 = vpop.f32.mrf.mxu0
    %1102 = vdwg.mxu0
    %1103 = vmatpush.bf16.msra.mxu0 %v891
    %1104 = vmatpush.bf16.msra.mxu0 %v888
    %1105 = vmatpush.bf16.msra.mxu0 %v885
    %1106 = vmatpush.bf16.msra.mxu0 %v882
    %1107 = vmatpush.bf16.msra.mxu0 %v879
    %1108 = vmatpush.bf16.msra.mxu0 %v876
    %1109 = vmatpush.bf16.msra.mxu0 %v873
    %1110 = vmatpush.bf16.msra.mxu0 %v870
    %1111 = vmatmul.bf16.gmra.mxu0 %v263
    %v1112 = vpop.f32.mrf.mxu0
    %v1113 = vadd.f32 %v1100, %v1112
    %v1114 = vpop.f32.mrf.mxu0
    %1115 = vdwg.mxu0
    %1116 = vmatpush.bf16.msra.mxu0 %v772
    %1117 = vmatpush.bf16.msra.mxu0 %v769
    %1118 = vmatpush.bf16.msra.mxu0 %v766
    %1119 = vmatpush.bf16.msra.mxu0 %v763
    %1120 = vmatpush.bf16.msra.mxu0 %v760
    %1121 = vmatpush.bf16.msra.mxu0 %v757
    %1122 = vmatpush.bf16.msra.mxu0 %v754
    %1123 = vmatpush.bf16.msra.mxu0 %v751
    %1124 = vmatmul.bf16.gmra.mxu0 %v258
    %v1125 = vpop.f32.mrf.mxu0
    %v1126 = vadd.f32 0.0, %v1125
    %v1127 = vpop.f32.mrf.mxu0
    %1128 = vdwg.mxu0
    %1129 = vmatpush.bf16.msra.mxu0 %v796
    %1130 = vmatpush.bf16.msra.mxu0 %v793
    %1131 = vmatpush.bf16.msra.mxu0 %v790
    %1132 = vmatpush.bf16.msra.mxu0 %v787
    %1133 = vmatpush.bf16.msra.mxu0 %v784
    %1134 = vmatpush.bf16.msra.mxu0 %v781
    %1135 = vmatpush.bf16.msra.mxu0 %v778
    %1136 = vmatpush.bf16.msra.mxu0 %v775
    %1137 = vmatmul.bf16.gmra.mxu0 %v259
    %v1138 = vpop.f32.mrf.mxu0
    %v1139 = vadd.f32 %v1126, %v1138
    %v1140 = vpop.f32.mrf.mxu0
    %1141 = vdwg.mxu0
    %1142 = vmatpush.bf16.msra.mxu0 %v820
    %1143 = vmatpush.bf16.msra.mxu0 %v817
    %1144 = vmatpush.bf16.msra.mxu0 %v814
    %1145 = vmatpush.bf16.msra.mxu0 %v811
    %1146 = vmatpush.bf16.msra.mxu0 %v808
    %1147 = vmatpush.bf16.msra.mxu0 %v805
    %1148 = vmatpush.bf16.msra.mxu0 %v802
    %1149 = vmatpush.bf16.msra.mxu0 %v799
    %1150 = vmatmul.bf16.gmra.mxu0 %v260
    %v1151 = vpop.f32.mrf.mxu0
    %v1152 = vadd.f32 %v1139, %v1151
    %v1153 = vpop.f32.mrf.mxu0
    %1154 = vdwg.mxu0
    %1155 = vmatpush.bf16.msra.mxu0 %v844
    %1156 = vmatpush.bf16.msra.mxu0 %v841
    %1157 = vmatpush.bf16.msra.mxu0 %v838
    %1158 = vmatpush.bf16.msra.mxu0 %v835
    %1159 = vmatpush.bf16.msra.mxu0 %v832
    %1160 = vmatpush.bf16.msra.mxu0 %v829
    %1161 = vmatpush.bf16.msra.mxu0 %v826
    %1162 = vmatpush.bf16.msra.mxu0 %v823
    %1163 = vmatmul.bf16.gmra.mxu0 %v261
    %v1164 = vpop.f32.mrf.mxu0
    %v1165 = vadd.f32 %v1152, %v1164
    %v1166 = vpop.f32.mrf.mxu0
    %1167 = vdwg.mxu0
    %1168 = vmatpush.bf16.msra.mxu0 %v868
    %1169 = vmatpush.bf16.msra.mxu0 %v865
    %1170 = vmatpush.bf16.msra.mxu0 %v862
    %1171 = vmatpush.bf16.msra.mxu0 %v859
    %1172 = vmatpush.bf16.msra.mxu0 %v856
    %1173 = vmatpush.bf16.msra.mxu0 %v853
    %1174 = vmatpush.bf16.msra.mxu0 %v850
    %1175 = vmatpush.bf16.msra.mxu0 %v847
    %1176 = vmatmul.bf16.gmra.mxu0 %v262
    %v1177 = vpop.f32.mrf.mxu0
    %v1178 = vadd.f32 %v1165, %v1177
    %v1179 = vpop.f32.mrf.mxu0
    %1180 = vdwg.mxu0
    %1181 = vmatpush.bf16.msra.mxu0 %v892
    %1182 = vmatpush.bf16.msra.mxu0 %v889
    %1183 = vmatpush.bf16.msra.mxu0 %v886
    %1184 = vmatpush.bf16.msra.mxu0 %v883
    %1185 = vmatpush.bf16.msra.mxu0 %v880
    %1186 = vmatpush.bf16.msra.mxu0 %v877
    %1187 = vmatpush.bf16.msra.mxu0 %v874
    %1188 = vmatpush.bf16.msra.mxu0 %v871
    %1189 = vmatmul.bf16.gmra.mxu0 %v263
    %v1190 = vpop.f32.mrf.mxu0
    %v1191 = vadd.f32 %v1178, %v1190
    %v1192 = vpop.f32.mrf.mxu0
    %1193 = vdwg.mxu0
    %1194 = vmatpush.bf16.msra.mxu0 %v773
    %1195 = vmatpush.bf16.msra.mxu0 %v770
    %1196 = vmatpush.bf16.msra.mxu0 %v767
    %1197 = vmatpush.bf16.msra.mxu0 %v764
    %1198 = vmatpush.bf16.msra.mxu0 %v761
    %1199 = vmatpush.bf16.msra.mxu0 %v758
    %1200 = vmatpush.bf16.msra.mxu0 %v755
    %1201 = vmatpush.bf16.msra.mxu0 %v752
    %1202 = vmatmul.bf16.gmra.mxu0 %v258
    %v1203 = vpop.f32.mrf.mxu0
    %v1204 = vadd.f32 0.0, %v1203
    %v1205 = vpop.f32.mrf.mxu0
    %1206 = vdwg.mxu0
    %1207 = vmatpush.bf16.msra.mxu0 %v797
    %1208 = vmatpush.bf16.msra.mxu0 %v794
    %1209 = vmatpush.bf16.msra.mxu0 %v791
    %1210 = vmatpush.bf16.msra.mxu0 %v788
    %1211 = vmatpush.bf16.msra.mxu0 %v785
    %1212 = vmatpush.bf16.msra.mxu0 %v782
    %1213 = vmatpush.bf16.msra.mxu0 %v779
    %1214 = vmatpush.bf16.msra.mxu0 %v776
    %1215 = vmatmul.bf16.gmra.mxu0 %v259
    %v1216 = vpop.f32.mrf.mxu0
    %v1217 = vadd.f32 %v1204, %v1216
    %v1218 = vpop.f32.mrf.mxu0
    %1219 = vdwg.mxu0
    %1220 = vmatpush.bf16.msra.mxu0 %v821
    %1221 = vmatpush.bf16.msra.mxu0 %v818
    %1222 = vmatpush.bf16.msra.mxu0 %v815
    %1223 = vmatpush.bf16.msra.mxu0 %v812
    %1224 = vmatpush.bf16.msra.mxu0 %v809
    %1225 = vmatpush.bf16.msra.mxu0 %v806
    %1226 = vmatpush.bf16.msra.mxu0 %v803
    %1227 = vmatpush.bf16.msra.mxu0 %v800
    %1228 = vmatmul.bf16.gmra.mxu0 %v260
    %v1229 = vpop.f32.mrf.mxu0
    %v1230 = vadd.f32 %v1217, %v1229
    %v1231 = vpop.f32.mrf.mxu0
    %1232 = vdwg.mxu0
    %1233 = vmatpush.bf16.msra.mxu0 %v845
    %1234 = vmatpush.bf16.msra.mxu0 %v842
    %1235 = vmatpush.bf16.msra.mxu0 %v839
    %1236 = vmatpush.bf16.msra.mxu0 %v836
    %1237 = vmatpush.bf16.msra.mxu0 %v833
    %1238 = vmatpush.bf16.msra.mxu0 %v830
    %1239 = vmatpush.bf16.msra.mxu0 %v827
    %1240 = vmatpush.bf16.msra.mxu0 %v824
    %1241 = vmatmul.bf16.gmra.mxu0 %v261
    %v1242 = vpop.f32.mrf.mxu0
    %v1243 = vadd.f32 %v1230, %v1242
    %v1244 = vpop.f32.mrf.mxu0
    %1245 = vdwg.mxu0
    %1246 = vmatpush.bf16.msra.mxu0 %v869
    %1247 = vmatpush.bf16.msra.mxu0 %v866
    %1248 = vmatpush.bf16.msra.mxu0 %v863
    %1249 = vmatpush.bf16.msra.mxu0 %v860
    %1250 = vmatpush.bf16.msra.mxu0 %v857
    %1251 = vmatpush.bf16.msra.mxu0 %v854
    %1252 = vmatpush.bf16.msra.mxu0 %v851
    %1253 = vmatpush.bf16.msra.mxu0 %v848
    %1254 = vmatmul.bf16.gmra.mxu0 %v262
    %v1255 = vpop.f32.mrf.mxu0
    %v1256 = vadd.f32 %v1243, %v1255
    %v1257 = vpop.f32.mrf.mxu0
    %1258 = vdwg.mxu0
    %1259 = vmatpush.bf16.msra.mxu0 %v893
    %1260 = vmatpush.bf16.msra.mxu0 %v890
    %1261 = vmatpush.bf16.msra.mxu0 %v887
    %1262 = vmatpush.bf16.msra.mxu0 %v884
    %1263 = vmatpush.bf16.msra.mxu0 %v881
    %1264 = vmatpush.bf16.msra.mxu0 %v878
    %1265 = vmatpush.bf16.msra.mxu0 %v875
    %1266 = vmatpush.bf16.msra.mxu0 %v872
    %1267 = vmatmul.bf16.gmra.mxu0 %v263
    %v1268 = vpop.f32.mrf.mxu0
    %v1269 = vadd.f32 %v1256, %v1268
    %v1270 = vpop.f32.mrf.mxu0
    %1271 = vdwg.mxu0
    %v1272 = vadd.f32 %v51, %v1113
    %v1273 = vadd.f32 %v52, %v1191
    %v1274 = vadd.f32 %v53, %v1269
    %1275 = vst [vmem:[#allocation2] sm:$0xff] %v1272
    %1276 = vst [vmem:[#allocation2 + $0x8] sm:$0xff] %v1273
    %1277 = vst [vmem:[#allocation2 + $0x10] sm:$0xff] %v1274
    // Predicated region
    $region26: #{_lambda_.15} parent=1 // pred_check
      %p1278 = pneg %p44
    $region27: #{_lambda_.15} parent=1 // pred_check_branch
      %1280 = sbr.rel (%p1278) target = $region29
    $region28: #{_lambda_.15} parent=1 // pred_region
      %v1281 = vld [vmem:[#allocation2] sm:$0xff]
      %v1282 = vld [vmem:[#allocation2 + $0x8] sm:$0xff]
      %v1283 = vld [vmem:[#allocation2 + $0x10] sm:$0xff]
      %v1284 = vld [vmem:[#allocation5] ss:$8 sm:$0x7]
      %v1286 = vperm.slane %v1284, 0
      %v1287 = vperm.slane %v1284, 1
      %v1288 = vperm.slane %v1284, 2
      %v1292 = vadd.f32 %v1281, %v1286
      %v1293 = vadd.f32 %v1282, %v1287
      %v1294 = vadd.f32 %v1283, %v1288
      %v1295 = vmax.f32 %v1292, 0.0
      %v1296 = vmax.f32 %v1293, 0.0
      %v1297 = vmax.f32 %v1294, 0.0
      %s1298 = scalar_lea.vmem [#allocation5], 1
      %v1299 = vld [vmem:[%s1298] ss:$8 sm:$0x7]
      %v1301 = vperm.slane %v1299, 0
      %v1302 = vperm.slane %v1299, 1
      %v1303 = vperm.slane %v1299, 2
      %v1307 = vadd.f32 %v1295, %v1301
      %v1308 = vadd.f32 %v1296, %v1302
      %v1309 = vadd.f32 %v1297, %v1303
      %v1310 = vpack.c.bf16 %v1308, %v1307
      %v1311 = vpack.c.bf16 %v1309, %v1309
      %1312 = vst [vmem:[%s3] sm:$0xff] %v1310
      %1313 = vst [vmem:[%s3 + $0x8] sm:$0xf] %v1311
    $region29: #{_lambda_.15} parent=1 // pred_fallthru
      _
    // Predicated region
    $region30: #{_lambda_.15} parent=1 // pred_check
      _
    $region31: #{_lambda_.15} parent=1 // pred_check_branch
      %1315 = sbr.rel (0) target = $region33
    $region32: #{_lambda_.15} parent=1 // pred_region
      _
    $region33: #{_lambda_.15} parent=1 // pred_fallthru
      _
    // Predicated region
    $region34: #{_lambda_.15} parent=1 // pred_check
      _
    $region35: #{_lambda_.15} parent=1 // pred_check_branch
      %1317 = sbr.rel (0) target = $region37
    $region36: #{_lambda_.15} parent=1 // pred_region
      _
    $region37: #{_lambda_.15} parent=1 // pred_fallthru
      _
    %1318 = vsyncpa [#allocation4], 1
    %1319 = vsyncpa [#allocation6], 1

// kernel: _lambda_.21
$region0: #{_lambda_.21}
  #allocation0 [shape = 'u32[]', space=smem, size = 0x4, offset = 0x4, fixed_abs, tag = 'smem constant byte address 0x4 - core index']
  #allocation1 [shape = 'u32[72,128]{1,0:T(1,128)}', space=vmem, size = 0x9000, scoped, tag = 'internal scratch']
  #allocation2 [shape = 'f32[8,128]{1,0:T(8,128)}', space=vmem, size = 0x1000, scoped, tag = 'scratch operand']
  %s0 = inlined_call_operand.vmem [shape: bf16[8,4096], index: 0, kind: input, shape index: {}]
  %s1 = inlined_call_operand.vmem [shape: bf16[4096,128], index: 1, kind: input, shape index: {}]
  %s2 = inlined_call_operand.vmem [shape: f32[8,128], index: 2, kind: input, shape index: {}]
  %s3 = inlined_call_operand.vmem [shape: f32[8,128], index: 3, kind: output, shape index: {}]
  %s4 = sld [smem:[#allocation0]]
  $region53: #{_lambda_.21} parent=0
    _
  %s6 = ssub.s32 1, %s4
  %s7 = scalar_select 0, %s6, %s4
  loop: start=0, step=1, limit=6
  $region2: #{_lambda_.21} parent=0 // loop_pre_header
    _
  $region3: #{_lambda_.21} parent=0 // loop_header
    %s9 = sphi 0, %s13
    %p10 = scmp.ge.s32.totalorder %s9, 6
    %s16 = sphi 0, %s35
    %s17 = sphi 0, %s31
    %s18 = sphi 0, %s27
    %s19 = sphi 0, %s16
    %s20 = sphi 0, %s17
    %s21 = sphi 0, %s18
    %s22 = sphi 0, %s19
    %s23 = sphi 0, %s20
    %s24 = sphi 0, %s21
    %s40 = sphi 0, %s42
    %s43 = sphi 0, %s40
    %s44 = sphi 0, %s43
    %s60 = sphi 0, %s44
    %s68 = sphi 0, %s70
    %s71 = sphi 0, %s68
    %s72 = sphi 0, %s71
    %s88 = sphi 0, %s72
    %s94 = sphi 0, %s96
    %s97 = sphi 0, %s94
    %s98 = sphi 0, %s97
    %s114 = sphi 0, %s98
    %s122 = sphi 0, %s124
    %s125 = sphi 0, %s122
    %s126 = sphi 0, %s125
    %s142 = sphi 0, %s126
  $region4: #{_lambda_.21} parent=0 // loop_header_branch
    %12 = sbr.rel (%p10) target = $region8
  $region5: #{_lambda_.21} parent=0 // loop_body
    %s14 = ssub.s32 %s9, 1
    %s15 = ssub.s32 %s9, 2
    %s25 = sadd.s32 1, %s18
    %p26 = scmp.ge.s32.totalorder %s25, 4
    %s27 = scalar_select %p26, 0, %s25
    %s28 = sadd.s32 1, %s17
    %s29 = scalar_select %p26, %s28, %s17
    %p30 = scmp.ge.s32.totalorder %s29, 1
    %s31 = scalar_select %p30, 0, %s29
    %s32 = sadd.s32 1, %s16
    %s33 = scalar_select %p30, %s32, %s16
    %p34 = scmp.ge.s32.totalorder %s33, 1
    %s35 = scalar_select %p34, 0, %s33
    %s36 = ssub.s32 %s16, %s35
    %s37 = ssub.s32 %s18, %s27
    %s38 = sor.u32 %s36, %s37
    %p39 = scmp.eq.s32.totalorder %s38, 0
    %s41 = sadd.s32 %s40, 1
    %s42 = scalar_select %p39, %s40, %s41
    %p45 = pneg %p39
    %p46 = scmp.eq.s32.totalorder %s9, 3
    %p47 = por %p45, %p46
    %p48 = scmp.ne.s32.totalorder %s40, %s43
    %p49 = scmp.eq.s32.totalorder %s9, 0
    %p50 = por %p48, %p49
    %p51 = scmp.ne.s32.totalorder %s40, %s43
    %p52 = scmp.eq.s32.totalorder %s14, 3
    %p53 = por %p51, %p52
    %p54 = scmp.ne.s32.totalorder %s43, %s44
    %p55 = scmp.eq.s32.totalorder %s14, 0
    %p56 = por %p54, %p55
    %p57 = scmp.ne.s32.totalorder %s43, %s44
    %p58 = scmp.eq.s32.totalorder %s15, 3
    %p59 = por %p57, %p58
    %p61 = scmp.ne.s32.totalorder %s44, %s60
    %p62 = scmp.eq.s32.totalorder %s15, 0
    %p63 = por %p61, %p62
    %s64 = ssub.s32 %s18, %s27
    %s65 = ssub.s32 %s17, %s31
    %s66 = sor.u32 %s64, %s65
    %p67 = scmp.eq.s32.totalorder %s66, 0
    %s69 = sadd.s32 %s68, 1
    %s70 = scalar_select %p67, %s68, %s69
    %p73 = pneg %p67
    %p74 = scmp.eq.s32.totalorder %s9, 3
    %p75 = por %p73, %p74
    %p76 = scmp.ne.s32.totalorder %s68, %s71
    %p77 = scmp.eq.s32.totalorder %s9, 0
    %p78 = por %p76, %p77
    %p79 = scmp.ne.s32.totalorder %s68, %s71
    %p80 = scmp.eq.s32.totalorder %s14, 3
    %p81 = por %p79, %p80
    %p82 = scmp.ne.s32.totalorder %s71, %s72
    %p83 = scmp.eq.s32.totalorder %s14, 0
    %p84 = por %p82, %p83
    %p85 = scmp.ne.s32.totalorder %s71, %s72
    %p86 = scmp.eq.s32.totalorder %s15, 3
    %p87 = por %p85, %p86
    %p89 = scmp.ne.s32.totalorder %s72, %s88
    %p90 = scmp.eq.s32.totalorder %s15, 0
    %p91 = por %p89, %p90
    %s92 = ssub.s32 %s17, %s31
    %p93 = scmp.eq.s32.totalorder %s92, 0
    %s95 = sadd.s32 %s94, 1
    %s96 = scalar_select %p93, %s94, %s95
    %p99 = pneg %p93
    %p100 = scmp.eq.s32.totalorder %s9, 3
    %p101 = por %p99, %p100
    %p102 = scmp.ne.s32.totalorder %s94, %s97
    %p103 = scmp.eq.s32.totalorder %s9, 0
    %p104 = por %p102, %p103
    %p105 = scmp.ne.s32.totalorder %s94, %s97
    %p106 = scmp.eq.s32.totalorder %s14, 3
    %p107 = por %p105, %p106
    %p108 = scmp.ne.s32.totalorder %s97, %s98
    %p109 = scmp.eq.s32.totalorder %s14, 0
    %p110 = por %p108, %p109
    %p111 = scmp.ne.s32.totalorder %s97, %s98
    %p112 = scmp.eq.s32.totalorder %s15, 3
    %p113 = por %p111, %p112
    %p115 = scmp.ne.s32.totalorder %s98, %s114
    %p116 = scmp.eq.s32.totalorder %s15, 0
    %p117 = por %p115, %p116
    %s118 = ssub.s32 %s16, %s35
    %s119 = ssub.s32 %s17, %s31
    %s120 = sor.u32 %s118, %s119
    %p121 = scmp.eq.s32.totalorder %s120, 0
    %s123 = sadd.s32 %s122, 1
    %s124 = scalar_select %p121, %s122, %s123
    %p127 = pneg %p121
    %p128 = scmp.eq.s32.totalorder %s9, 3
    %p129 = por %p127, %p128
    %p130 = scmp.ne.s32.totalorder %s122, %s125
    %p131 = scmp.eq.s32.totalorder %s9, 0
    %p132 = por %p130, %p131
    %p133 = scmp.ne.s32.totalorder %s122, %s125
    %p134 = scmp.eq.s32.totalorder %s14, 3
    %p135 = por %p133, %p134
    %p136 = scmp.ne.s32.totalorder %s125, %s126
    %p137 = scmp.eq.s32.totalorder %s14, 0
    %p138 = por %p136, %p137
    %p139 = scmp.ne.s32.totalorder %s125, %s126
    %p140 = scmp.eq.s32.totalorder %s15, 3
    %p141 = por %p139, %p140
    %p143 = scmp.ne.s32.totalorder %s126, %s142
    %p144 = scmp.eq.s32.totalorder %s15, 0
    %p145 = por %p143, %p144
    %p146 = scmp.le.s32.totalorder 1, %s9
    %p147 = scmp.lt.s32.totalorder %s9, 5
    %p148 = pnand %p146, %p147
    %p149 = pneg %p148
    // Predicated region
    $region9: #{_lambda_.21} parent=5 // pred_check
      _
    $region10: #{_lambda_.21} parent=5 // pred_check_branch
      %151 = sbr.rel (%p148) target = $region12
    $region11: #{_lambda_.21} parent=5 // pred_region
      %s152 = ssub.s32 %s9, 1
      // Predicated region
      $region13: #{_lambda_.21} parent=11 // pred_check
        %p153 = pneg %p110
      $region14: #{_lambda_.21} parent=11 // pred_check_branch
        %155 = sbr.rel (%p153) target = $region16
      $region15: #{_lambda_.21} parent=11 // pred_region
        %p156 = scmp.lt.s32.totalorder %s20, 0
        %s157 = scalar_select %p156, %s20, 0
        %s158 = smul.addr %s157, 8
        %s159 = scalar_lea.vmem %s2, %s158
      $region16: #{_lambda_.21} parent=11 // pred_fallthru
        _
    $region12: #{_lambda_.21} parent=5 // pred_fallthru
      _
    %p160 = scmp.lt.s32.totalorder %s9, 4
    // Predicated region
    $region17: #{_lambda_.21} parent=5 // pred_check
      %p161 = pneg %p160
    $region18: #{_lambda_.21} parent=5 // pred_check_branch
      %163 = sbr.rel (%p161) target = $region20
    $region19: #{_lambda_.21} parent=5 // pred_region
      // Predicated region
      $region21: #{_lambda_.21} parent=19 // pred_check
        %p164 = pneg %p50
      $region22: #{_lambda_.21} parent=19 // pred_check_branch
        %166 = sbr.rel (%p164) target = $region24
      $region23: #{_lambda_.21} parent=19 // pred_region
        %s167 = smul.u32 8, %s18
        %p168 = scmp.lt.s32.totalorder %s16, 0
        %s169 = scalar_select %p168, %s16, 0
        %p170 = scmp.lt.s32.totalorder %s167, 31
        %s171 = scalar_select %p170, %s167, 31
        %s172 = smul.addr %s169, 32
        %s173 = sadd.s32 %s171, %s172
        %s174 = smul.addr %s173, 4
        %s175 = scalar_lea.vmem %s0, %s174
        %s176 = smul.u32 8, %s18
      $region24: #{_lambda_.21} parent=19 // pred_fallthru
        _
      // Predicated region
      $region25: #{_lambda_.21} parent=19 // pred_check
        %p177 = pneg %p78
      $region26: #{_lambda_.21} parent=19 // pred_check_branch
        %179 = sbr.rel (%p177) target = $region28
      $region27: #{_lambda_.21} parent=19 // pred_region
        %s180 = smul.u32 128, %s18
        %p181 = scmp.lt.s32.totalorder %s180, 511
        %s182 = scalar_select %p181, %s180, 511
        %p183 = scmp.lt.s32.totalorder %s17, 0
        %s184 = scalar_select %p183, %s17, 0
        %s185 = sadd.s32 %s184, %s182
        %s186 = smul.addr %s185, 4
        %s187 = scalar_lea.vmem %s1, %s186
        %s188 = smul.u32 128, %s18
      $region28: #{_lambda_.21} parent=19 // pred_fallthru
        _
    $region20: #{_lambda_.21} parent=5 // pred_fallthru
      _
    %p189 = scmp.le.s32.totalorder 1, %s9
    %p190 = scmp.lt.s32.totalorder %s9, 5
    %p191 = pnand %p189, %p190
    %p192 = pneg %p191
    // Predicated region
    $region29: #{_lambda_.21} parent=5 // pred_check
      _
    $region30: #{_lambda_.21} parent=5 // pred_check_branch
      %194 = sbr.rel (%p191) target = $region32
    $region31: #{_lambda_.21} parent=5 // pred_region
      %s195 = ssub.s32 %s9, 1
      %s196 = smul.u32 8, %s21
      %p197 = scmp.lt.s32.totalorder %s19, 0
      %s198 = scalar_select %p197, %s19, 0
      %p199 = scmp.lt.s32.totalorder %s196, 31
      %s200 = scalar_select %p199, %s196, 31
      %s201 = smul.addr %s198, 32
      %s202 = sadd.s32 %s200, %s201
      %s203 = smul.addr %s202, 4
      %s204 = scalar_lea.vmem %s0, %s203
      %p205 = pneg %p56
      %p206 = pneg %p53
      %s207 = smul.u32 128, %s21
      %p208 = scmp.lt.s32.totalorder %s207, 511
      %s209 = scalar_select %p208, %s207, 511
      %p210 = scmp.lt.s32.totalorder %s20, 0
      %s211 = scalar_select %p210, %s20, 0
      %s212 = sadd.s32 %s211, %s209
      %s213 = smul.addr %s212, 4
      %s214 = scalar_lea.vmem %s1, %s213
      %p215 = pneg %p84
      %p216 = pneg %p81
      %p217 = scmp.lt.s32.totalorder %s20, 0
      %s218 = scalar_select %p217, %s20, 0
      %s219 = smul.addr %s218, 8
      %s220 = scalar_lea.vmem %s2, %s219
      %p221 = pneg %p110
      %p222 = pneg %p107
      %p223 = pneg %p138
      %p224 = pneg %p135
      %p225 = scmp.lt.s32.totalorder %s19, 0
      %s226 = scalar_select %p225, %s19, 0
      %p227 = scmp.lt.s32.totalorder %s20, 0
      %s228 = scalar_select %p227, %s20, 0
      %s229 = sadd.s32 %s228, %s226
      %s230 = smul.addr %s229, 8
      %s231 = scalar_lea.vmem %s3, %s230
      %s232 = smul.u32 8, %s21
      %p233 = scmp.lt.s32.totalorder %s19, 0
      %s234 = scalar_select %p233, %s19, 0
      %p235 = scmp.lt.s32.totalorder %s232, 31
      %s236 = scalar_select %p235, %s232, 31
      %s237 = smul.addr %s234, 32
      %s238 = sadd.s32 %s236, %s237
      %s239 = smul.addr %s238, 4
      %s240 = scalar_lea.vmem %s0, %s239
      %s241 = smul.u32 8, %s21
      %s242 = smul.u32 128, %s21
      %p243 = scmp.lt.s32.totalorder %s242, 511
      %s244 = scalar_select %p243, %s242, 511
      %p245 = scmp.lt.s32.totalorder %s20, 0
      %s246 = scalar_select %p245, %s20, 0
      %s247 = sadd.s32 %s246, %s244
      %s248 = smul.addr %s247, 4
      %s249 = scalar_lea.vmem %s1, %s248
      %s250 = smul.u32 128, %s21
      %p251 = scmp.lt.s32.totalorder %s20, 0
      %s252 = scalar_select %p251, %s20, 0
      %s253 = smul.addr %s252, 8
      %s254 = scalar_lea.vmem %s2, %s253
      %p255 = scmp.lt.s32.totalorder %s19, 0
      %s256 = scalar_select %p255, %s19, 0
      %p257 = scmp.lt.s32.totalorder %s20, 0
      %s258 = scalar_select %p257, %s20, 0
      %s259 = sadd.s32 %s258, %s256
      %s260 = smul.addr %s259, 8
      %s261 = scalar_lea.vmem %s3, %s260
      %p262 = scmp.eq.s32.totalorder %s21, 0
      // Predicated region
      $region33: #{_lambda_.21} parent=31 // pred_check
        %p263 = pneg %p262
      $region34: #{_lambda_.21} parent=31 // pred_check_branch
        %265 = sbr.rel (%p263) target = $region36
      $region35: #{_lambda_.21} parent=31 // pred_region
        %266 = vst [vmem:[#allocation2] sm:$0xff] 0.0
      $region36: #{_lambda_.21} parent=31 // pred_fallthru
        _
      %v267 = vld [vmem:[#allocation2] sm:$0xff]
      %v268 = vld [vmem:[%s240] sm:$0xff]
      %v269 = vld [vmem:[%s240 + $0x8] sm:$0xff]
      %v270 = vld [vmem:[%s240 + $0x10] sm:$0xff]
      %v271 = vld [vmem:[%s240 + $0x18] sm:$0xff]
      %v272 = vld [vmem:[%s249] sm:$0xf]
      %v273 = vld [vmem:[%s249 + $0x4] sm:$0xf]
      %v274 = vld [vmem:[%s249 + $0x8] sm:$0xf]
      %v275 = vld [vmem:[%s249 + $0xc] sm:$0xf]
      %v276 = vld [vmem:[%s249 + $0x10] sm:$0xf]
      %v277 = vld [vmem:[%s249 + $0x14] sm:$0xf]
      %v278 = vld [vmem:[%s249 + $0x18] sm:$0xf]
      %v279 = vld [vmem:[%s249 + $0x1c] sm:$0xf]
      %v280 = vld [vmem:[%s249 + $0x20] sm:$0xf]
      %v281 = vld [vmem:[%s249 + $0x24] sm:$0xf]
      %v282 = vld [vmem:[%s249 + $0x28] sm:$0xf]
      %v283 = vld [vmem:[%s249 + $0x2c] sm:$0xf]
      %v284 = vld [vmem:[%s249 + $0x30] sm:$0xf]
      %v285 = vld [vmem:[%s249 + $0x34] sm:$0xf]
      %v286 = vld [vmem:[%s249 + $0x38] sm:$0xf]
      %v287 = vld [vmem:[%s249 + $0x3c] sm:$0xf]
      %v288 = vld [vmem:[%s249 + $0x40] sm:$0xf]
      %v289 = vld [vmem:[%s249 + $0x44] sm:$0xf]
      %v290 = vld [vmem:[%s249 + $0x48] sm:$0xf]
      %v291 = vld [vmem:[%s249 + $0x4c] sm:$0xf]
      %v292 = vld [vmem:[%s249 + $0x50] sm:$0xf]
      %v293 = vld [vmem:[%s249 + $0x54] sm:$0xf]
      %v294 = vld [vmem:[%s249 + $0x58] sm:$0xf]
      %v295 = vld [vmem:[%s249 + $0x5c] sm:$0xf]
      %v296 = vld [vmem:[%s249 + $0x60] sm:$0xf]
      %v297 = vld [vmem:[%s249 + $0x64] sm:$0xf]
      %v298 = vld [vmem:[%s249 + $0x68] sm:$0xf]
      %v299 = vld [vmem:[%s249 + $0x6c] sm:$0xf]
      %v300 = vld [vmem:[%s249 + $0x70] sm:$0xf]
      %v301 = vld [vmem:[%s249 + $0x74] sm:$0xf]
      %v302 = vld [vmem:[%s249 + $0x78] sm:$0xf]
      %v303 = vld [vmem:[%s249 + $0x7c] sm:$0xf]
      %v304 = vld [vmem:[%s249 + $0x80] sm:$0xf]
      %v305 = vld [vmem:[%s249 + $0x84] sm:$0xf]
      %v306 = vld [vmem:[%s249 + $0x88] sm:$0xf]
      %v307 = vld [vmem:[%s249 + $0x8c] sm:$0xf]
      %v308 = vld [vmem:[%s249 + $0x90] sm:$0xf]
      %v309 = vld [vmem:[%s249 + $0x94] sm:$0xf]
      %v310 = vld [vmem:[%s249 + $0x98] sm:$0xf]
      %v311 = vld [vmem:[%s249 + $0x9c] sm:$0xf]
      %v312 = vld [vmem:[%s249 + $0xa0] sm:$0xf]
      %v313 = vld [vmem:[%s249 + $0xa4] sm:$0xf]
      %v314 = vld [vmem:[%s249 + $0xa8] sm:$0xf]
      %v315 = vld [vmem:[%s249 + $0xac] sm:$0xf]
      %v316 = vld [vmem:[%s249 + $0xb0] sm:$0xf]
      %v317 = vld [vmem:[%s249 + $0xb4] sm:$0xf]
      %v318 = vld [vmem:[%s249 + $0xb8] sm:$0xf]
      %v319 = vld [vmem:[%s249 + $0xbc] sm:$0xf]
      %v320 = vld [vmem:[%s249 + $0xc0] sm:$0xf]
      %v321 = vld [vmem:[%s249 + $0xc4] sm:$0xf]
      %v322 = vld [vmem:[%s249 + $0xc8] sm:$0xf]
      %v323 = vld [vmem:[%s249 + $0xcc] sm:$0xf]
      %v324 = vld [vmem:[%s249 + $0xd0] sm:$0xf]
      %v325 = vld [vmem:[%s249 + $0xd4] sm:$0xf]
      %v326 = vld [vmem:[%s249 + $0xd8] sm:$0xf]
      %v327 = vld [vmem:[%s249 + $0xdc] sm:$0xf]
      %v328 = vld [vmem:[%s249 + $0xe0] sm:$0xf]
      %v329 = vld [vmem:[%s249 + $0xe4] sm:$0xf]
      %v330 = vld [vmem:[%s249 + $0xe8] sm:$0xf]
      %v331 = vld [vmem:[%s249 + $0xec] sm:$0xf]
      %v332 = vld [vmem:[%s249 + $0xf0] sm:$0xf]
      %v333 = vld [vmem:[%s249 + $0xf4] sm:$0xf]
      %v334 = vld [vmem:[%s249 + $0xf8] sm:$0xf]
      %v335 = vld [vmem:[%s249 + $0xfc] sm:$0xf]
      %v336 = vld [vmem:[%s249 + $0x100] sm:$0xf]
      %v337 = vld [vmem:[%s249 + $0x104] sm:$0xf]
      %v338 = vld [vmem:[%s249 + $0x108] sm:$0xf]
      %v339 = vld [vmem:[%s249 + $0x10c] sm:$0xf]
      %v340 = vld [vmem:[%s249 + $0x110] sm:$0xf]
      %v341 = vld [vmem:[%s249 + $0x114] sm:$0xf]
      %v342 = vld [vmem:[%s249 + $0x118] sm:$0xf]
      %v343 = vld [vmem:[%s249 + $0x11c] sm:$0xf]
      %v344 = vld [vmem:[%s249 + $0x120] sm:$0xf]
      %v345 = vld [vmem:[%s249 + $0x124] sm:$0xf]
      %v346 = vld [vmem:[%s249 + $0x128] sm:$0xf]
      %v347 = vld [vmem:[%s249 + $0x12c] sm:$0xf]
      %v348 = vld [vmem:[%s249 + $0x130] sm:$0xf]
      %v349 = vld [vmem:[%s249 + $0x134] sm:$0xf]
      %v350 = vld [vmem:[%s249 + $0x138] sm:$0xf]
      %v351 = vld [vmem:[%s249 + $0x13c] sm:$0xf]
      %v352 = vld [vmem:[%s249 + $0x140] sm:$0xf]
      %v353 = vld [vmem:[%s249 + $0x144] sm:$0xf]
      %v354 = vld [vmem:[%s249 + $0x148] sm:$0xf]
      %v355 = vld [vmem:[%s249 + $0x14c] sm:$0xf]
      %v356 = vld [vmem:[%s249 + $0x150] sm:$0xf]
      %v357 = vld [vmem:[%s249 + $0x154] sm:$0xf]
      %v358 = vld [vmem:[%s249 + $0x158] sm:$0xf]
      %v359 = vld [vmem:[%s249 + $0x15c] sm:$0xf]
      %v360 = vld [vmem:[%s249 + $0x160] sm:$0xf]
      %v361 = vld [vmem:[%s249 + $0x164] sm:$0xf]
      %v362 = vld [vmem:[%s249 + $0x168] sm:$0xf]
      %v363 = vld [vmem:[%s249 + $0x16c] sm:$0xf]
      %v364 = vld [vmem:[%s249 + $0x170] sm:$0xf]
      %v365 = vld [vmem:[%s249 + $0x174] sm:$0xf]
      %v366 = vld [vmem:[%s249 + $0x178] sm:$0xf]
      %v367 = vld [vmem:[%s249 + $0x17c] sm:$0xf]
      %v368 = vld [vmem:[%s249 + $0x180] sm:$0xf]
      %v369 = vld [vmem:[%s249 + $0x184] sm:$0xf]
      %v370 = vld [vmem:[%s249 + $0x188] sm:$0xf]
      %v371 = vld [vmem:[%s249 + $0x18c] sm:$0xf]
      %v372 = vld [vmem:[%s249 + $0x190] sm:$0xf]
      %v373 = vld [vmem:[%s249 + $0x194] sm:$0xf]
      %v374 = vld [vmem:[%s249 + $0x198] sm:$0xf]
      %v375 = vld [vmem:[%s249 + $0x19c] sm:$0xf]
      %v376 = vld [vmem:[%s249 + $0x1a0] sm:$0xf]
      %v377 = vld [vmem:[%s249 + $0x1a4] sm:$0xf]
      %v378 = vld [vmem:[%s249 + $0x1a8] sm:$0xf]
      %v379 = vld [vmem:[%s249 + $0x1ac] sm:$0xf]
      %v380 = vld [vmem:[%s249 + $0x1b0] sm:$0xf]
      %v381 = vld [vmem:[%s249 + $0x1b4] sm:$0xf]
      %v382 = vld [vmem:[%s249 + $0x1b8] sm:$0xf]
      %v383 = vld [vmem:[%s249 + $0x1bc] sm:$0xf]
      %v384 = vld [vmem:[%s249 + $0x1c0] sm:$0xf]
      %v385 = vld [vmem:[%s249 + $0x1c4] sm:$0xf]
      %v386 = vld [vmem:[%s249 + $0x1c8] sm:$0xf]
      %v387 = vld [vmem:[%s249 + $0x1cc] sm:$0xf]
      %v388 = vld [vmem:[%s249 + $0x1d0] sm:$0xf]
      %v389 = vld [vmem:[%s249 + $0x1d4] sm:$0xf]
      %v390 = vld [vmem:[%s249 + $0x1d8] sm:$0xf]
      %v391 = vld [vmem:[%s249 + $0x1dc] sm:$0xf]
      %v392 = vld [vmem:[%s249 + $0x1e0] sm:$0xf]
      %v393 = vld [vmem:[%s249 + $0x1e4] sm:$0xf]
      %v394 = vld [vmem:[%s249 + $0x1e8] sm:$0xf]
      %v395 = vld [vmem:[%s249 + $0x1ec] sm:$0xf]
      %v396 = vld [vmem:[%s249 + $0x1f0] sm:$0xf]
      %v397 = vld [vmem:[%s249 + $0x1f4] sm:$0xf]
      %v398 = vld [vmem:[%s249 + $0x1f8] sm:$0xf]
      %v399 = vld [vmem:[%s249 + $0x1fc] sm:$0xf]
      %v404 = vunpack.c.l.b16 %v268
      %v405 = vunpack.c.h.b16 %v268
      %v406 = vunpack.c.l.b16 %v269
      %v407 = vunpack.c.h.b16 %v269
      %v408 = vunpack.c.l.b16 %v270
      %v409 = vunpack.c.h.b16 %v270
      %v410 = vunpack.c.l.b16 %v271
      %v411 = vunpack.c.h.b16 %v271
      %v412 = vpack.c.b16 %v404, %v404
      %v413 = vpack.c.b16 %v405, %v405
      %v414 = vpack.c.b16 %v406, %v406
      %v415 = vpack.c.b16 %v407, %v407
      %v416 = vpack.c.b16 %v408, %v408
      %v417 = vpack.c.b16 %v409, %v409
      %v418 = vpack.c.b16 %v410, %v410
      %v419 = vpack.c.b16 %v411, %v411
      %v556 = vunpack.c.l.b16 %v272
      %v557 = vunpack.c.l.b16 %v273
      %v558 = vunpack.c.l.b16 %v274
      %v559 = vunpack.c.l.b16 %v275
      %v560 = vunpack.c.l.b16 %v276
      %v561 = vunpack.c.l.b16 %v277
      %v562 = vunpack.c.l.b16 %v278
      %v563 = vunpack.c.l.b16 %v279
      %v564 = vunpack.c.l.b16 %v280
      %v565 = vunpack.c.l.b16 %v281
      %v566 = vunpack.c.l.b16 %v282
      %v567 = vunpack.c.l.b16 %v283
      %v568 = vunpack.c.l.b16 %v284
      %v569 = vunpack.c.l.b16 %v285
      %v570 = vunpack.c.l.b16 %v286
      %v571 = vunpack.c.l.b16 %v287
      %v572 = vunpack.c.l.b16 %v288
      %v573 = vunpack.c.l.b16 %v289
      %v574 = vunpack.c.l.b16 %v290
      %v575 = vunpack.c.l.b16 %v291
      %v576 = vunpack.c.l.b16 %v292
      %v577 = vunpack.c.l.b16 %v293
      %v578 = vunpack.c.l.b16 %v294
      %v579 = vunpack.c.l.b16 %v295
      %v580 = vunpack.c.l.b16 %v296
      %v581 = vunpack.c.l.b16 %v297
      %v582 = vunpack.c.l.b16 %v298
      %v583 = vunpack.c.l.b16 %v299
      %v584 = vunpack.c.l.b16 %v300
      %v585 = vunpack.c.l.b16 %v301
      %v586 = vunpack.c.l.b16 %v302
      %v587 = vunpack.c.l.b16 %v303
      %v588 = vunpack.c.l.b16 %v304
      %v589 = vunpack.c.l.b16 %v305
      %v590 = vunpack.c.l.b16 %v306
      %v591 = vunpack.c.l.b16 %v307
      %v592 = vunpack.c.l.b16 %v308
      %v593 = vunpack.c.l.b16 %v309
      %v594 = vunpack.c.l.b16 %v310
      %v595 = vunpack.c.l.b16 %v311
      %v596 = vunpack.c.l.b16 %v312
      %v597 = vunpack.c.l.b16 %v313
      %v598 = vunpack.c.l.b16 %v314
      %v599 = vunpack.c.l.b16 %v315
      %v600 = vunpack.c.l.b16 %v316
      %v601 = vunpack.c.l.b16 %v317
      %v602 = vunpack.c.l.b16 %v318
      %v603 = vunpack.c.l.b16 %v319
      %v604 = vunpack.c.l.b16 %v320
      %v605 = vunpack.c.l.b16 %v321
      %v606 = vunpack.c.l.b16 %v322
      %v607 = vunpack.c.l.b16 %v323
      %v608 = vunpack.c.l.b16 %v324
      %v609 = vunpack.c.l.b16 %v325
      %v610 = vunpack.c.l.b16 %v326
      %v611 = vunpack.c.l.b16 %v327
      %v612 = vunpack.c.l.b16 %v328
      %v613 = vunpack.c.l.b16 %v329
      %v614 = vunpack.c.l.b16 %v330
      %v615 = vunpack.c.l.b16 %v331
      %v616 = vunpack.c.l.b16 %v332
      %v617 = vunpack.c.l.b16 %v333
      %v618 = vunpack.c.l.b16 %v334
      %v619 = vunpack.c.l.b16 %v335
      %v620 = vunpack.c.l.b16 %v336
      %v621 = vunpack.c.l.b16 %v337
      %v622 = vunpack.c.l.b16 %v338
      %v623 = vunpack.c.l.b16 %v339
      %v624 = vunpack.c.l.b16 %v340
      %v625 = vunpack.c.l.b16 %v341
      %v626 = vunpack.c.l.b16 %v342
      %v627 = vunpack.c.l.b16 %v343
      %v628 = vunpack.c.l.b16 %v344
      %v629 = vunpack.c.l.b16 %v345
      %v630 = vunpack.c.l.b16 %v346
      %v631 = vunpack.c.l.b16 %v347
      %v632 = vunpack.c.l.b16 %v348
      %v633 = vunpack.c.l.b16 %v349
      %v634 = vunpack.c.l.b16 %v350
      %v635 = vunpack.c.l.b16 %v351
      %v636 = vunpack.c.l.b16 %v352
      %v637 = vunpack.c.l.b16 %v353
      %v638 = vunpack.c.l.b16 %v354
      %v639 = vunpack.c.l.b16 %v355
      %v640 = vunpack.c.l.b16 %v356
      %v641 = vunpack.c.l.b16 %v357
      %v642 = vunpack.c.l.b16 %v358
      %v643 = vunpack.c.l.b16 %v359
      %v644 = vunpack.c.l.b16 %v360
      %v645 = vunpack.c.l.b16 %v361
      %v646 = vunpack.c.l.b16 %v362
      %v647 = vunpack.c.l.b16 %v363
      %v648 = vunpack.c.l.b16 %v364
      %v649 = vunpack.c.l.b16 %v365
      %v650 = vunpack.c.l.b16 %v366
      %v651 = vunpack.c.l.b16 %v367
      %v652 = vunpack.c.l.b16 %v368
      %v653 = vunpack.c.l.b16 %v369
      %v654 = vunpack.c.l.b16 %v370
      %v655 = vunpack.c.l.b16 %v371
      %v656 = vunpack.c.l.b16 %v372
      %v657 = vunpack.c.l.b16 %v373
      %v658 = vunpack.c.l.b16 %v374
      %v659 = vunpack.c.l.b16 %v375
      %v660 = vunpack.c.l.b16 %v376
      %v661 = vunpack.c.l.b16 %v377
      %v662 = vunpack.c.l.b16 %v378
      %v663 = vunpack.c.l.b16 %v379
      %v664 = vunpack.c.l.b16 %v380
      %v665 = vunpack.c.l.b16 %v381
      %v666 = vunpack.c.l.b16 %v382
      %v667 = vunpack.c.l.b16 %v383
      %v668 = vunpack.c.l.b16 %v384
      %v669 = vunpack.c.l.b16 %v385
      %v670 = vunpack.c.l.b16 %v386
      %v671 = vunpack.c.l.b16 %v387
      %v672 = vunpack.c.l.b16 %v388
      %v673 = vunpack.c.l.b16 %v389
      %v674 = vunpack.c.l.b16 %v390
      %v675 = vunpack.c.l.b16 %v391
      %v676 = vunpack.c.l.b16 %v392
      %v677 = vunpack.c.l.b16 %v393
      %v678 = vunpack.c.l.b16 %v394
      %v679 = vunpack.c.l.b16 %v395
      %v680 = vunpack.c.l.b16 %v396
      %v681 = vunpack.c.l.b16 %v397
      %v682 = vunpack.c.l.b16 %v398
      %v683 = vunpack.c.l.b16 %v399
      %v684 = vpack.c.b16 %v557, %v556
      %v685 = vpack.c.b16 %v559, %v558
      %v686 = vpack.c.b16 %v561, %v560
      %v687 = vpack.c.b16 %v563, %v562
      %v688 = vpack.c.b16 %v565, %v564
      %v689 = vpack.c.b16 %v567, %v566
      %v690 = vpack.c.b16 %v569, %v568
      %v691 = vpack.c.b16 %v571, %v570
      %v692 = vpack.c.b16 %v573, %v572
      %v693 = vpack.c.b16 %v575, %v574
      %v694 = vpack.c.b16 %v577, %v576
      %v695 = vpack.c.b16 %v579, %v578
      %v696 = vpack.c.b16 %v581, %v580
      %v697 = vpack.c.b16 %v583, %v582
      %v698 = vpack.c.b16 %v585, %v584
      %v699 = vpack.c.b16 %v587, %v586
      %v700 = vpack.c.b16 %v589, %v588
      %v701 = vpack.c.b16 %v591, %v590
      %v702 = vpack.c.b16 %v593, %v592
      %v703 = vpack.c.b16 %v595, %v594
      %v704 = vpack.c.b16 %v597, %v596
      %v705 = vpack.c.b16 %v599, %v598
      %v706 = vpack.c.b16 %v601, %v600
      %v707 = vpack.c.b16 %v603, %v602
      %v708 = vpack.c.b16 %v605, %v604
      %v709 = vpack.c.b16 %v607, %v606
      %v710 = vpack.c.b16 %v609, %v608
      %v711 = vpack.c.b16 %v611, %v610
      %v712 = vpack.c.b16 %v613, %v612
      %v713 = vpack.c.b16 %v615, %v614
      %v714 = vpack.c.b16 %v617, %v616
      %v715 = vpack.c.b16 %v619, %v618
      %v716 = vpack.c.b16 %v621, %v620
      %v717 = vpack.c.b16 %v623, %v622
      %v718 = vpack.c.b16 %v625, %v624
      %v719 = vpack.c.b16 %v627, %v626
      %v720 = vpack.c.b16 %v629, %v628
      %v721 = vpack.c.b16 %v631, %v630
      %v722 = vpack.c.b16 %v633, %v632
      %v723 = vpack.c.b16 %v635, %v634
      %v724 = vpack.c.b16 %v637, %v636
      %v725 = vpack.c.b16 %v639, %v638
      %v726 = vpack.c.b16 %v641, %v640
      %v727 = vpack.c.b16 %v643, %v642
      %v728 = vpack.c.b16 %v645, %v644
      %v729 = vpack.c.b16 %v647, %v646
      %v730 = vpack.c.b16 %v649, %v648
      %v731 = vpack.c.b16 %v651, %v650
      %v732 = vpack.c.b16 %v653, %v652
      %v733 = vpack.c.b16 %v655, %v654
      %v734 = vpack.c.b16 %v657, %v656
      %v735 = vpack.c.b16 %v659, %v658
      %v736 = vpack.c.b16 %v661, %v660
      %v737 = vpack.c.b16 %v663, %v662
      %v738 = vpack.c.b16 %v665, %v664
      %v739 = vpack.c.b16 %v667, %v666
      %v740 = vpack.c.b16 %v669, %v668
      %v741 = vpack.c.b16 %v671, %v670
      %v742 = vpack.c.b16 %v673, %v672
      %v743 = vpack.c.b16 %v675, %v674
      %v744 = vpack.c.b16 %v677, %v676
      %v745 = vpack.c.b16 %v679, %v678
      %v746 = vpack.c.b16 %v681, %v680
      %v747 = vpack.c.b16 %v683, %v682
      %812 = vmatpush.bf16.msra.mxu0 %v691
      %813 = vmatpush.bf16.msra.mxu0 %v690
      %814 = vmatpush.bf16.msra.mxu0 %v689
      %815 = vmatpush.bf16.msra.mxu0 %v688
      %816 = vmatpush.bf16.msra.mxu0 %v687
      %817 = vmatpush.bf16.msra.mxu0 %v686
      %818 = vmatpush.bf16.msra.mxu0 %v685
      %819 = vmatpush.bf16.msra.mxu0 %v684
      %820 = vmatmul.bf16.gmra.mxu0 %v412
      %v821 = vpop.f32.mrf.mxu0
      %v822 = vadd.f32 0.0, %v821
      %v823 = vpop.f32.mrf.mxu0
      %824 = vdwg.mxu0
      %825 = vmatpush.bf16.msra.mxu0 %v699
      %826 = vmatpush.bf16.msra.mxu0 %v698
      %827 = vmatpush.bf16.msra.mxu0 %v697
      %828 = vmatpush.bf16.msra.mxu0 %v696
      %829 = vmatpush.bf16.msra.mxu0 %v695
      %830 = vmatpush.bf16.msra.mxu0 %v694
      %831 = vmatpush.bf16.msra.mxu0 %v693
      %832 = vmatpush.bf16.msra.mxu0 %v692
      %833 = vmatmul.bf16.gmra.mxu0 %v413
      %v834 = vpop.f32.mrf.mxu0
      %v835 = vadd.f32 %v822, %v834
      %v836 = vpop.f32.mrf.mxu0
      %837 = vdwg.mxu0
      %838 = vmatpush.bf16.msra.mxu0 %v707
      %839 = vmatpush.bf16.msra.mxu0 %v706
      %840 = vmatpush.bf16.msra.mxu0 %v705
      %841 = vmatpush.bf16.msra.mxu0 %v704
      %842 = vmatpush.bf16.msra.mxu0 %v703
      %843 = vmatpush.bf16.msra.mxu0 %v702
      %844 = vmatpush.bf16.msra.mxu0 %v701
      %845 = vmatpush.bf16.msra.mxu0 %v700
      %846 = vmatmul.bf16.gmra.mxu0 %v414
      %v847 = vpop.f32.mrf.mxu0
      %v848 = vadd.f32 %v835, %v847
      %v849 = vpop.f32.mrf.mxu0
      %850 = vdwg.mxu0
      %851 = vmatpush.bf16.msra.mxu0 %v715
      %852 = vmatpush.bf16.msra.mxu0 %v714
      %853 = vmatpush.bf16.msra.mxu0 %v713
      %854 = vmatpush.bf16.msra.mxu0 %v712
      %855 = vmatpush.bf16.msra.mxu0 %v711
      %856 = vmatpush.bf16.msra.mxu0 %v710
      %857 = vmatpush.bf16.msra.mxu0 %v709
      %858 = vmatpush.bf16.msra.mxu0 %v708
      %859 = vmatmul.bf16.gmra.mxu0 %v415
      %v860 = vpop.f32.mrf.mxu0
      %v861 = vadd.f32 %v848, %v860
      %v862 = vpop.f32.mrf.mxu0
      %863 = vdwg.mxu0
      %864 = vmatpush.bf16.msra.mxu0 %v723
      %865 = vmatpush.bf16.msra.mxu0 %v722
      %866 = vmatpush.bf16.msra.mxu0 %v721
      %867 = vmatpush.bf16.msra.mxu0 %v720
      %868 = vmatpush.bf16.msra.mxu0 %v719
      %869 = vmatpush.bf16.msra.mxu0 %v718
      %870 = vmatpush.bf16.msra.mxu0 %v717
      %871 = vmatpush.bf16.msra.mxu0 %v716
      %872 = vmatmul.bf16.gmra.mxu0 %v416
      %v873 = vpop.f32.mrf.mxu0
      %v874 = vadd.f32 %v861, %v873
      %v875 = vpop.f32.mrf.mxu0
      %876 = vdwg.mxu0
      %877 = vmatpush.bf16.msra.mxu0 %v731
      %878 = vmatpush.bf16.msra.mxu0 %v730
      %879 = vmatpush.bf16.msra.mxu0 %v729
      %880 = vmatpush.bf16.msra.mxu0 %v728
      %881 = vmatpush.bf16.msra.mxu0 %v727
      %882 = vmatpush.bf16.msra.mxu0 %v726
      %883 = vmatpush.bf16.msra.mxu0 %v725
      %884 = vmatpush.bf16.msra.mxu0 %v724
      %885 = vmatmul.bf16.gmra.mxu0 %v417
      %v886 = vpop.f32.mrf.mxu0
      %v887 = vadd.f32 %v874, %v886
      %v888 = vpop.f32.mrf.mxu0
      %889 = vdwg.mxu0
      %890 = vmatpush.bf16.msra.mxu0 %v739
      %891 = vmatpush.bf16.msra.mxu0 %v738
      %892 = vmatpush.bf16.msra.mxu0 %v737
      %893 = vmatpush.bf16.msra.mxu0 %v736
      %894 = vmatpush.bf16.msra.mxu0 %v735
      %895 = vmatpush.bf16.msra.mxu0 %v734
      %896 = vmatpush.bf16.msra.mxu0 %v733
      %897 = vmatpush.bf16.msra.mxu0 %v732
      %898 = vmatmul.bf16.gmra.mxu0 %v418
      %v899 = vpop.f32.mrf.mxu0
      %v900 = vadd.f32 %v887, %v899
      %v901 = vpop.f32.mrf.mxu0
      %902 = vdwg.mxu0
      %903 = vmatpush.bf16.msra.mxu0 %v747
      %904 = vmatpush.bf16.msra.mxu0 %v746
      %905 = vmatpush.bf16.msra.mxu0 %v745
      %906 = vmatpush.bf16.msra.mxu0 %v744
      %907 = vmatpush.bf16.msra.mxu0 %v743
      %908 = vmatpush.bf16.msra.mxu0 %v742
      %909 = vmatpush.bf16.msra.mxu0 %v741
      %910 = vmatpush.bf16.msra.mxu0 %v740
      %911 = vmatmul.bf16.gmra.mxu0 %v419
      %v912 = vpop.f32.mrf.mxu0
      %v913 = vadd.f32 %v900, %v912
      %v914 = vpop.f32.mrf.mxu0
      %915 = vdwg.mxu0
      %v916 = vadd.f32 %v267, %v913
      %917 = vst [vmem:[#allocation2] sm:$0xff] %v916
      %p918 = scmp.eq.s32.totalorder %s21, 3
      // Predicated region
      $region37: #{_lambda_.21} parent=31 // pred_check
        %p919 = pneg %p918
      $region38: #{_lambda_.21} parent=31 // pred_check_branch
        %921 = sbr.rel (%p919) target = $region40
      $region39: #{_lambda_.21} parent=31 // pred_region
        %v922 = vld [vmem:[#allocation2] sm:$0xff]
        %v923 = vld [vmem:[%s254] sm:$0x1]
        %v924 = vperm.slane %v923, 0
        %v925 = vadd.f32 %v922, %v924
        %v926 = vld [vmem:[%s254 + $0x1] sm:$0x1]
        %v927 = vperm.slane %v926, 0
        %v928 = vadd.f32 %v925, %v927
        %929 = vst [vmem:[%s261] sm:$0xff] %v928
      $region40: #{_lambda_.21} parent=31 // pred_fallthru
        _
      %p930 = scmp.lt.s32.totalorder %s19, 0
      %s931 = scalar_select %p930, %s19, 0
      %p932 = scmp.lt.s32.totalorder %s20, 0
      %s933 = scalar_select %p932, %s20, 0
      %s934 = sadd.s32 %s933, %s931
      %s935 = smul.addr %s934, 8
      %s936 = scalar_lea.vmem %s3, %s935
      // Predicated region
      $region41: #{_lambda_.21} parent=31 // pred_check
        %p937 = pneg %p135
      $region42: #{_lambda_.21} parent=31 // pred_check_branch
        %939 = sbr.rel (%p937) target = $region44
      $region43: #{_lambda_.21} parent=31 // pred_region
        _
      $region44: #{_lambda_.21} parent=31 // pred_fallthru
        _
      // Predicated region
      $region45: #{_lambda_.21} parent=31 // pred_check
        %p940 = pneg %p135
      $region46: #{_lambda_.21} parent=31 // pred_check_branch
        %942 = sbr.rel (%p940) target = $region48
      $region47: #{_lambda_.21} parent=31 // pred_region
        %p943 = scmp.lt.s32.totalorder %s19, 0
        %s944 = scalar_select %p943, %s19, 0
        %p945 = scmp.lt.s32.totalorder %s20, 0
        %s946 = scalar_select %p945, %s20, 0
        %s947 = sadd.s32 %s946, %s944
        %s948 = smul.addr %s947, 8
        %s949 = scalar_lea.vmem %s3, %s948
      $region48: #{_lambda_.21} parent=31 // pred_fallthru
        _
    $region32: #{_lambda_.21} parent=5 // pred_fallthru
      _
    %p950 = scmp.le.s32.totalorder 2, %s9
    // Predicated region
    $region49: #{_lambda_.21} parent=5 // pred_check
      %p951 = pneg %p950
    $region50: #{_lambda_.21} parent=5 // pred_check_branch
      %953 = sbr.rel (%p951) target = $region52
    $region51: #{_lambda_.21} parent=5 // pred_region
      %s954 = ssub.s32 %s9, 2
    $region52: #{_lambda_.21} parent=5 // pred_fallthru
      _
  $region6: #{_lambda_.21} parent=0 // loop_footer
    %s13 = sadd.s32 1, %s9
  $region7: #{_lambda_.21} parent=0 // loop_footer_branch
    %8 = sbr.rel target = $region3
  $region8: #{_lambda_.21} parent=0 // loop_exit
    _

// kernel: _lambda_.19
$region0: #{_lambda_.19}
  #allocation0 [shape = 'u32[]', space=smem, size = 0x4, offset = 0x4, fixed_abs, tag = 'smem constant byte address 0x4 - core index']
  #allocation1 [shape = 'u32[72,128]{1,0:T(1,128)}', space=vmem, size = 0x9000, scoped, tag = 'internal scratch']
  #allocation2 [shape = 'f32[8,512]{1,0:T(8,128)}', space=vmem, size = 0x4000, scoped, tag = 'scratch operand']
  %s0 = inlined_call_operand.vmem [shape: bf16[8,256], index: 0, kind: input, shape index: {}]
  %s1 = inlined_call_operand.hbm [shape: bf16[256,4096], index: 1, kind: input, shape index: {}]
  %s2 = inlined_call_operand.hbm [shape: f32[8,4096], index: 2, kind: input, shape index: {}]
  %s3 = inlined_call_operand.vmem [shape: bf16[8,4096], index: 3, kind: output, shape index: {}]
  %s4 = sld [smem:[#allocation0]]
  $region61: #{_lambda_.19} parent=0
    _
  %s6 = ssub.s32 1, %s4
  %s7 = scalar_select 0, %s6, %s4
  $region1: #{_lambda_.19} parent=0
    #allocation3 [shape = 'u8[524288]{0}', space=vmem, size = 0x80000, scoped, tag = 'input window, operand 1']
    #allocation4 [shape = 's32[2]{0}', space=sflag, size = 0x8, scoped, tag = 'scoped memory for _lambda_.19']
    #allocation5 [shape = 'u8[32768]{0}', space=vmem, size = 0x8000, scoped, tag = 'input window, operand 2']
    #allocation6 [shape = 's32[2]{0}', space=sflag, size = 0x8, scoped, tag = 'scoped memory for _lambda_.19']
    %8 = vsyncpa [#allocation4], 0
    %s9 = scalar_lea.sflag [#allocation4], 1
    %10 = vsyncpa %s9, 0
    %11 = vsyncpa [#allocation6], 0
    %s12 = scalar_lea.sflag [#allocation6], 1
    %13 = vsyncpa %s12, 0
    loop: start=0, step=1, limit=10
    $region2: #{_lambda_.19} parent=1 // loop_pre_header
      _
    $region3: #{_lambda_.19} parent=1 // loop_header
      %s15 = sphi 0, %s19
      %p16 = scmp.ge.s32.totalorder %s15, 10
      %s22 = sphi 0, %s41
      %s23 = sphi 0, %s37
      %s24 = sphi 0, %s33
      %s25 = sphi 0, %s22
      %s26 = sphi 0, %s23
      %s27 = sphi 0, %s24
      %s28 = sphi 0, %s25
      %s29 = sphi 0, %s26
      %s30 = sphi 0, %s27
      %s46 = sphi 0, %s48
      %s49 = sphi 0, %s46
      %s50 = sphi 0, %s49
      %s66 = sphi 0, %s50
      %s74 = sphi 0, %s76
      %s77 = sphi 0, %s74
      %s78 = sphi 0, %s77
      %s94 = sphi 0, %s78
      %s100 = sphi 0, %s102
      %s103 = sphi 0, %s100
      %s104 = sphi 0, %s103
      %s120 = sphi 0, %s104
      %s128 = sphi 0, %s130
      %s131 = sphi 0, %s128
      %s132 = sphi 0, %s131
      %s148 = sphi 0, %s132
    $region4: #{_lambda_.19} parent=1 // loop_header_branch
      %18 = sbr.rel (%p16) target = $region8
    $region5: #{_lambda_.19} parent=1 // loop_body
      %s20 = ssub.s32 %s15, 1
      %s21 = ssub.s32 %s15, 2
      %s31 = sadd.s32 1, %s24
      %p32 = scmp.ge.s32.totalorder %s31, 1
      %s33 = scalar_select %p32, 0, %s31
      %s34 = sadd.s32 1, %s23
      %s35 = scalar_select %p32, %s34, %s23
      %p36 = scmp.ge.s32.totalorder %s35, 8
      %s37 = scalar_select %p36, 0, %s35
      %s38 = sadd.s32 1, %s22
      %s39 = scalar_select %p36, %s38, %s22
      %p40 = scmp.ge.s32.totalorder %s39, 1
      %s41 = scalar_select %p40, 0, %s39
      %s42 = ssub.s32 %s22, %s41
      %s43 = ssub.s32 %s24, %s33
      %s44 = sor.u32 %s42, %s43
      %p45 = scmp.eq.s32.totalorder %s44, 0
      %s47 = sadd.s32 %s46, 1
      %s48 = scalar_select %p45, %s46, %s47
      %p51 = pneg %p45
      %p52 = scmp.eq.s32.totalorder %s15, 7
      %p53 = por %p51, %p52
      %p54 = scmp.ne.s32.totalorder %s46, %s49
      %p55 = scmp.eq.s32.totalorder %s15, 0
      %p56 = por %p54, %p55
      %p57 = scmp.ne.s32.totalorder %s46, %s49
      %p58 = scmp.eq.s32.totalorder %s20, 7
      %p59 = por %p57, %p58
      %p60 = scmp.ne.s32.totalorder %s49, %s50
      %p61 = scmp.eq.s32.totalorder %s20, 0
      %p62 = por %p60, %p61
      %p63 = scmp.ne.s32.totalorder %s49, %s50
      %p64 = scmp.eq.s32.totalorder %s21, 7
      %p65 = por %p63, %p64
      %p67 = scmp.ne.s32.totalorder %s50, %s66
      %p68 = scmp.eq.s32.totalorder %s21, 0
      %p69 = por %p67, %p68
      %s70 = ssub.s32 %s24, %s33
      %s71 = ssub.s32 %s23, %s37
      %s72 = sor.u32 %s70, %s71
      %p73 = scmp.eq.s32.totalorder %s72, 0
      %s75 = sadd.s32 %s74, 1
      %s76 = scalar_select %p73, %s74, %s75
      %p79 = pneg %p73
      %p80 = scmp.eq.s32.totalorder %s15, 7
      %p81 = por %p79, %p80
      %p82 = scmp.ne.s32.totalorder %s74, %s77
      %p83 = scmp.eq.s32.totalorder %s15, 0
      %p84 = por %p82, %p83
      %p85 = scmp.ne.s32.totalorder %s74, %s77
      %p86 = scmp.eq.s32.totalorder %s20, 7
      %p87 = por %p85, %p86
      %p88 = scmp.ne.s32.totalorder %s77, %s78
      %p89 = scmp.eq.s32.totalorder %s20, 0
      %p90 = por %p88, %p89
      %p91 = scmp.ne.s32.totalorder %s77, %s78
      %p92 = scmp.eq.s32.totalorder %s21, 7
      %p93 = por %p91, %p92
      %p95 = scmp.ne.s32.totalorder %s78, %s94
      %p96 = scmp.eq.s32.totalorder %s21, 0
      %p97 = por %p95, %p96
      %s98 = ssub.s32 %s23, %s37
      %p99 = scmp.eq.s32.totalorder %s98, 0
      %s101 = sadd.s32 %s100, 1
      %s102 = scalar_select %p99, %s100, %s101
      %p105 = pneg %p99
      %p106 = scmp.eq.s32.totalorder %s15, 7
      %p107 = por %p105, %p106
      %p108 = scmp.ne.s32.totalorder %s100, %s103
      %p109 = scmp.eq.s32.totalorder %s15, 0
      %p110 = por %p108, %p109
      %p111 = scmp.ne.s32.totalorder %s100, %s103
      %p112 = scmp.eq.s32.totalorder %s20, 7
      %p113 = por %p111, %p112
      %p114 = scmp.ne.s32.totalorder %s103, %s104
      %p115 = scmp.eq.s32.totalorder %s20, 0
      %p116 = por %p114, %p115
      %p117 = scmp.ne.s32.totalorder %s103, %s104
      %p118 = scmp.eq.s32.totalorder %s21, 7
      %p119 = por %p117, %p118
      %p121 = scmp.ne.s32.totalorder %s104, %s120
      %p122 = scmp.eq.s32.totalorder %s21, 0
      %p123 = por %p121, %p122
      %s124 = ssub.s32 %s22, %s41
      %s125 = ssub.s32 %s23, %s37
      %s126 = sor.u32 %s124, %s125
      %p127 = scmp.eq.s32.totalorder %s126, 0
      %s129 = sadd.s32 %s128, 1
      %s130 = scalar_select %p127, %s128, %s129
      %p133 = pneg %p127
      %p134 = scmp.eq.s32.totalorder %s15, 7
      %p135 = por %p133, %p134
      %p136 = scmp.ne.s32.totalorder %s128, %s131
      %p137 = scmp.eq.s32.totalorder %s15, 0
      %p138 = por %p136, %p137
      %p139 = scmp.ne.s32.totalorder %s128, %s131
      %p140 = scmp.eq.s32.totalorder %s20, 7
      %p141 = por %p139, %p140
      %p142 = scmp.ne.s32.totalorder %s131, %s132
      %p143 = scmp.eq.s32.totalorder %s20, 0
      %p144 = por %p142, %p143
      %p145 = scmp.ne.s32.totalorder %s131, %s132
      %p146 = scmp.eq.s32.totalorder %s21, 7
      %p147 = por %p145, %p146
      %p149 = scmp.ne.s32.totalorder %s132, %s148
      %p150 = scmp.eq.s32.totalorder %s21, 0
      %p151 = por %p149, %p150
      %p152 = scmp.le.s32.totalorder 1, %s15
      %p153 = scmp.lt.s32.totalorder %s15, 9
      %p154 = pnand %p152, %p153
      %p155 = pneg %p154
      // Predicated region
      $region9: #{_lambda_.19} parent=5 // pred_check
        _
      $region10: #{_lambda_.19} parent=5 // pred_check_branch
        %157 = sbr.rel (%p154) target = $region12
      $region11: #{_lambda_.19} parent=5 // pred_region
        %s158 = ssub.s32 %s15, 1
        // Predicated region
        $region13: #{_lambda_.19} parent=11 // pred_check
          %p159 = pneg %p62
        $region14: #{_lambda_.19} parent=11 // pred_check_branch
          %161 = sbr.rel (%p159) target = $region16
        $region15: #{_lambda_.19} parent=11 // pred_region
          %s162 = smul.u32 2, %s27
          %p163 = scmp.lt.s32.totalorder %s25, 0
          %s164 = scalar_select %p163, %s25, 0
          %p165 = scmp.lt.s32.totalorder %s162, 1
          %s166 = scalar_select %p165, %s162, 1
          %s167 = smul.addr %s164, 2
          %s168 = sadd.s32 %s166, %s167
          %s169 = smul.addr %s168, 4
          %s170 = scalar_lea.vmem %s0, %s169
          %s171 = smul.u32 2, %s27
        $region16: #{_lambda_.19} parent=11 // pred_fallthru
          _
      $region12: #{_lambda_.19} parent=5 // pred_fallthru
        _
      %p172 = scmp.lt.s32.totalorder %s15, 8
      // Predicated region
      $region17: #{_lambda_.19} parent=5 // pred_check
        %p173 = pneg %p172
      $region18: #{_lambda_.19} parent=5 // pred_check_branch
        %175 = sbr.rel (%p173) target = $region20
      $region19: #{_lambda_.19} parent=5 // pred_region
        // Predicated region
        $region21: #{_lambda_.19} parent=19 // pred_check
          %p176 = pneg %p84
        $region22: #{_lambda_.19} parent=19 // pred_check_branch
          %178 = sbr.rel (%p176) target = $region24
        $region23: #{_lambda_.19} parent=19 // pred_region
          %s179 = sand.u32 %s74, 1
          %s180 = scalar_lea.sflag [#allocation4], %s179
          %s181 = sand.u32 %s74, 1
          %s182 = smul.addr %s181, 512
          %s183 = scalar_lea.vmem [#allocation3], %s182
          %s184 = smul.u32 32, %s24
          %s185 = smul.u32 4, %s23
          %187 = vsyncadd %s180, 0
          %s188 = smul.addr %s184, 32
          %s189 = sadd.s32 %s185, %s188
          %s190 = smul.addr %s189, 4
          %s191 = scalar_lea.hbm %s1, %s190
          %s192 = sshll.u32 %s191, 4
          %s193 = int_to_ptr.hbm [resolvable:$true] %s192
          %s194 = sshll.u32 %s183, 4
          %s195 = int_to_ptr.vmem [resolvable:$true] %s194
          %200 = dma.hbm_to_vmem [thread:$0]  %s193, 8192, %s195, %s180, 2048, 256, 16
        $region24: #{_lambda_.19} parent=19 // pred_fallthru
          _
        // Predicated region
        $region25: #{_lambda_.19} parent=19 // pred_check
          %p201 = pneg %p110
        $region26: #{_lambda_.19} parent=19 // pred_check_branch
          %203 = sbr.rel (%p201) target = $region28
        $region27: #{_lambda_.19} parent=19 // pred_region
          %s204 = sand.u32 %s100, 1
          %s205 = scalar_lea.sflag [#allocation6], %s204
          %s206 = sand.u32 %s100, 1
          %s207 = smul.addr %s206, 32
          %s208 = scalar_lea.vmem [#allocation5], %s207
          %s209 = smul.u32 4, %s23
          %211 = vsyncadd %s205, 0
          %s212 = smul.addr %s209, 8
          %s213 = scalar_lea.hbm %s2, %s212
          %s215 = sshll.u32 %s213, 4
          %s216 = int_to_ptr.hbm [resolvable:$true] %s215
          %s217 = sshll.u32 %s208, 4
          %s218 = int_to_ptr.vmem [resolvable:$true] %s217
          %220 = dma.hbm_to_vmem [thread:$0]  %s216, 512, %s218, %s205
        $region28: #{_lambda_.19} parent=19 // pred_fallthru
          _
      $region20: #{_lambda_.19} parent=5 // pred_fallthru
        _
      %p221 = scmp.le.s32.totalorder 1, %s15
      %p222 = scmp.lt.s32.totalorder %s15, 9
      %p223 = pnand %p221, %p222
      %p224 = pneg %p223
      // Predicated region
      $region29: #{_lambda_.19} parent=5 // pred_check
        _
      $region30: #{_lambda_.19} parent=5 // pred_check_branch
        %226 = sbr.rel (%p223) target = $region32
      $region31: #{_lambda_.19} parent=5 // pred_region
        %s227 = ssub.s32 %s15, 1
        %s228 = sand.u32 %s77, 1
        %s229 = scalar_lea.sflag [#allocation4], %s228
        %s230 = sand.u32 %s77, 1
        %s231 = smul.addr %s230, 512
        %s232 = scalar_lea.vmem [#allocation3], %s231
        // Predicated region
        $region33: #{_lambda_.19} parent=31 // pred_check
          %p233 = pneg %p90
        $region34: #{_lambda_.19} parent=31 // pred_check_branch
          %235 = sbr.rel (%p233) target = $region36
        $region35: #{_lambda_.19} parent=31 // pred_region
          %237 = dma.done %s229, 8192
        $region36: #{_lambda_.19} parent=31 // pred_fallthru
          _
        %s238 = sand.u32 %s103, 1
        %s239 = scalar_lea.sflag [#allocation6], %s238
        %s240 = sand.u32 %s103, 1
        %s241 = smul.addr %s240, 32
        %s242 = scalar_lea.vmem [#allocation5], %s241
        // Predicated region
        $region37: #{_lambda_.19} parent=31 // pred_check
          %p243 = pneg %p116
        $region38: #{_lambda_.19} parent=31 // pred_check_branch
          %245 = sbr.rel (%p243) target = $region40
        $region39: #{_lambda_.19} parent=31 // pred_region
          %247 = dma.done %s239, 512
        $region40: #{_lambda_.19} parent=31 // pred_fallthru
          _
        %s248 = smul.u32 2, %s27
        %p249 = scmp.lt.s32.totalorder %s25, 0
        %s250 = scalar_select %p249, %s25, 0
        %p251 = scmp.lt.s32.totalorder %s248, 1
        %s252 = scalar_select %p251, %s248, 1
        %s253 = smul.addr %s250, 2
        %s254 = sadd.s32 %s252, %s253
        %s255 = smul.addr %s254, 4
        %s256 = scalar_lea.vmem %s0, %s255
        %p257 = pneg %p62
        %p258 = pneg %p59
        %s259 = sand.u32 %s77, 1
        %s260 = scalar_lea.sflag [#allocation4], %s259
        %s261 = sand.u32 %s77, 1
        %s262 = smul.addr %s261, 512
        %s263 = scalar_lea.vmem [#allocation3], %s262
        %p264 = pneg %p90
        %p265 = pneg %p87
        %s266 = sand.u32 %s103, 1
        %s267 = scalar_lea.sflag [#allocation6], %s266
        %s268 = sand.u32 %s103, 1
        %s269 = smul.addr %s268, 32
        %s270 = scalar_lea.vmem [#allocation5], %s269
        %p271 = pneg %p116
        %p272 = pneg %p113
        %p273 = pneg %p144
        %p274 = pneg %p141
        %s275 = smul.u32 4, %s26
        %p276 = scmp.lt.s32.totalorder %s25, 0
        %s277 = scalar_select %p276, %s25, 0
        %p278 = scmp.lt.s32.totalorder %s275, 31
        %s279 = scalar_select %p278, %s275, 31
        %s280 = smul.addr %s277, 32
        %s281 = sadd.s32 %s279, %s280
        %s282 = smul.addr %s281, 4
        %s283 = scalar_lea.vmem %s3, %s282
        %s284 = smul.u32 2, %s27
        %p285 = scmp.lt.s32.totalorder %s25, 0
        %s286 = scalar_select %p285, %s25, 0
        %p287 = scmp.lt.s32.totalorder %s284, 1
        %s288 = scalar_select %p287, %s284, 1
        %s289 = smul.addr %s286, 2
        %s290 = sadd.s32 %s288, %s289
        %s291 = smul.addr %s290, 4
        %s292 = scalar_lea.vmem %s0, %s291
        %s293 = smul.u32 2, %s27
        %s294 = smul.u32 32, %s27
        %s295 = smul.u32 4, %s26
        %s296 = smul.u32 4, %s26
        %s297 = smul.u32 4, %s26
        %p298 = scmp.lt.s32.totalorder %s25, 0
        %s299 = scalar_select %p298, %s25, 0
        %p300 = scmp.lt.s32.totalorder %s297, 31
        %s301 = scalar_select %p300, %s297, 31
        %s302 = smul.addr %s299, 32
        %s303 = sadd.s32 %s301, %s302
        %s304 = smul.addr %s303, 4
        %s305 = scalar_lea.vmem %s3, %s304
        %s306 = smul.u32 4, %s26
        %p307 = scmp.eq.s32.totalorder %s27, 0
        // Predicated region
        $region41: #{_lambda_.19} parent=31 // pred_check
          %p308 = pneg %p307
        $region42: #{_lambda_.19} parent=31 // pred_check_branch
          %310 = sbr.rel (%p308) target = $region44
        $region43: #{_lambda_.19} parent=31 // pred_region
          %311 = vst [vmem:[#allocation2] sm:$0xff] 0.0
          %312 = vst [vmem:[#allocation2 + $0x8] sm:$0xff] 0.0
          %313 = vst [vmem:[#allocation2 + $0x10] sm:$0xff] 0.0
          %314 = vst [vmem:[#allocation2 + $0x18] sm:$0xff] 0.0
        $region44: #{_lambda_.19} parent=31 // pred_fallthru
          _
        %v315 = vld [vmem:[#allocation2] sm:$0xff]
        %v316 = vld [vmem:[#allocation2 + $0x8] sm:$0xff]
        %v317 = vld [vmem:[#allocation2 + $0x10] sm:$0xff]
        %v318 = vld [vmem:[#allocation2 + $0x18] sm:$0xff]
        %v319 = vld [vmem:[%s292] sm:$0xff]
        %v320 = vld [vmem:[%s232] sm:$0xff]
        %v321 = vld [vmem:[%s232 + $0x8] sm:$0xff]
        %v322 = vld [vmem:[%s232 + $0x10] sm:$0xff]
        %v323 = vld [vmem:[%s232 + $0x18] sm:$0xff]
        %v324 = vld [vmem:[%s232 + $0x20] sm:$0xff]
        %v325 = vld [vmem:[%s232 + $0x28] sm:$0xff]
        %v326 = vld [vmem:[%s232 + $0x30] sm:$0xff]
        %v327 = vld [vmem:[%s232 + $0x38] sm:$0xff]
        %v328 = vld [vmem:[%s232 + $0x40] sm:$0xff]
        %v329 = vld [vmem:[%s232 + $0x48] sm:$0xff]
        %v330 = vld [vmem:[%s232 + $0x50] sm:$0xff]
        %v331 = vld [vmem:[%s232 + $0x58] sm:$0xff]
        %v332 = vld [vmem:[%s232 + $0x60] sm:$0xff]
        %v333 = vld [vmem:[%s232 + $0x68] sm:$0xff]
        %v334 = vld [vmem:[%s232 + $0x70] sm:$0xff]
        %v335 = vld [vmem:[%s232 + $0x78] sm:$0xff]
        %v336 = vld [vmem:[%s232 + $0x80] sm:$0xff]
        %v337 = vld [vmem:[%s232 + $0x88] sm:$0xff]
        %v338 = vld [vmem:[%s232 + $0x90] sm:$0xff]
        %v339 = vld [vmem:[%s232 + $0x98] sm:$0xff]
        %v340 = vld [vmem:[%s232 + $0xa0] sm:$0xff]
        %v341 = vld [vmem:[%s232 + $0xa8] sm:$0xff]
        %v342 = vld [vmem:[%s232 + $0xb0] sm:$0xff]
        %v343 = vld [vmem:[%s232 + $0xb8] sm:$0xff]
        %v344 = vld [vmem:[%s232 + $0xc0] sm:$0xff]
        %v345 = vld [vmem:[%s232 + $0xc8] sm:$0xff]
        %v346 = vld [vmem:[%s232 + $0xd0] sm:$0xff]
        %v347 = vld [vmem:[%s232 + $0xd8] sm:$0xff]
        %v348 = vld [vmem:[%s232 + $0xe0] sm:$0xff]
        %v349 = vld [vmem:[%s232 + $0xe8] sm:$0xff]
        %v350 = vld [vmem:[%s232 + $0xf0] sm:$0xff]
        %v351 = vld [vmem:[%s232 + $0xf8] sm:$0xff]
        %v352 = vld [vmem:[%s232 + $0x100] sm:$0xff]
        %v353 = vld [vmem:[%s232 + $0x108] sm:$0xff]
        %v354 = vld [vmem:[%s232 + $0x110] sm:$0xff]
        %v355 = vld [vmem:[%s232 + $0x118] sm:$0xff]
        %v356 = vld [vmem:[%s232 + $0x120] sm:$0xff]
        %v357 = vld [vmem:[%s232 + $0x128] sm:$0xff]
        %v358 = vld [vmem:[%s232 + $0x130] sm:$0xff]
        %v359 = vld [vmem:[%s232 + $0x138] sm:$0xff]
        %v360 = vld [vmem:[%s232 + $0x140] sm:$0xff]
        %v361 = vld [vmem:[%s232 + $0x148] sm:$0xff]
        %v362 = vld [vmem:[%s232 + $0x150] sm:$0xff]
        %v363 = vld [vmem:[%s232 + $0x158] sm:$0xff]
        %v364 = vld [vmem:[%s232 + $0x160] sm:$0xff]
        %v365 = vld [vmem:[%s232 + $0x168] sm:$0xff]
        %v366 = vld [vmem:[%s232 + $0x170] sm:$0xff]
        %v367 = vld [vmem:[%s232 + $0x178] sm:$0xff]
        %v368 = vld [vmem:[%s232 + $0x180] sm:$0xff]
        %v369 = vld [vmem:[%s232 + $0x188] sm:$0xff]
        %v370 = vld [vmem:[%s232 + $0x190] sm:$0xff]
        %v371 = vld [vmem:[%s232 + $0x198] sm:$0xff]
        %v372 = vld [vmem:[%s232 + $0x1a0] sm:$0xff]
        %v373 = vld [vmem:[%s232 + $0x1a8] sm:$0xff]
        %v374 = vld [vmem:[%s232 + $0x1b0] sm:$0xff]
        %v375 = vld [vmem:[%s232 + $0x1b8] sm:$0xff]
        %v376 = vld [vmem:[%s232 + $0x1c0] sm:$0xff]
        %v377 = vld [vmem:[%s232 + $0x1c8] sm:$0xff]
        %v378 = vld [vmem:[%s232 + $0x1d0] sm:$0xff]
        %v379 = vld [vmem:[%s232 + $0x1d8] sm:$0xff]
        %v380 = vld [vmem:[%s232 + $0x1e0] sm:$0xff]
        %v381 = vld [vmem:[%s232 + $0x1e8] sm:$0xff]
        %v382 = vld [vmem:[%s232 + $0x1f0] sm:$0xff]
        %v383 = vld [vmem:[%s232 + $0x1f8] sm:$0xff]
        %v385 = vunpack.c.l.b16 %v319
        %v386 = vunpack.c.h.b16 %v319
        %v387 = vpack.c.b16 %v385, %v385
        %v388 = vpack.c.b16 %v386, %v386
        %v455 = vunpack.c.l.b16 %v320
        %v456 = vunpack.c.h.b16 %v320
        %v457 = vunpack.c.l.b16 %v321
        %v458 = vunpack.c.h.b16 %v321
        %v459 = vunpack.c.l.b16 %v322
        %v460 = vunpack.c.h.b16 %v322
        %v461 = vunpack.c.l.b16 %v323
        %v462 = vunpack.c.h.b16 %v323
        %v463 = vunpack.c.l.b16 %v324
        %v464 = vunpack.c.h.b16 %v324
        %v465 = vunpack.c.l.b16 %v325
        %v466 = vunpack.c.h.b16 %v325
        %v467 = vunpack.c.l.b16 %v326
        %v468 = vunpack.c.h.b16 %v326
        %v469 = vunpack.c.l.b16 %v327
        %v470 = vunpack.c.h.b16 %v327
        %v471 = vunpack.c.l.b16 %v328
        %v472 = vunpack.c.h.b16 %v328
        %v473 = vunpack.c.l.b16 %v329
        %v474 = vunpack.c.h.b16 %v329
        %v475 = vunpack.c.l.b16 %v330
        %v476 = vunpack.c.h.b16 %v330
        %v477 = vunpack.c.l.b16 %v331
        %v478 = vunpack.c.h.b16 %v331
        %v479 = vunpack.c.l.b16 %v332
        %v480 = vunpack.c.h.b16 %v332
        %v481 = vunpack.c.l.b16 %v333
        %v482 = vunpack.c.h.b16 %v333
        %v483 = vunpack.c.l.b16 %v334
        %v484 = vunpack.c.h.b16 %v334
        %v485 = vunpack.c.l.b16 %v335
        %v486 = vunpack.c.h.b16 %v335
        %v487 = vunpack.c.l.b16 %v336
        %v488 = vunpack.c.h.b16 %v336
        %v489 = vunpack.c.l.b16 %v337
        %v490 = vunpack.c.h.b16 %v337
        %v491 = vunpack.c.l.b16 %v338
        %v492 = vunpack.c.h.b16 %v338
        %v493 = vunpack.c.l.b16 %v339
        %v494 = vunpack.c.h.b16 %v339
        %v495 = vunpack.c.l.b16 %v340
        %v496 = vunpack.c.h.b16 %v340
        %v497 = vunpack.c.l.b16 %v341
        %v498 = vunpack.c.h.b16 %v341
        %v499 = vunpack.c.l.b16 %v342
        %v500 = vunpack.c.h.b16 %v342
        %v501 = vunpack.c.l.b16 %v343
        %v502 = vunpack.c.h.b16 %v343
        %v503 = vunpack.c.l.b16 %v344
        %v504 = vunpack.c.h.b16 %v344
        %v505 = vunpack.c.l.b16 %v345
        %v506 = vunpack.c.h.b16 %v345
        %v507 = vunpack.c.l.b16 %v346
        %v508 = vunpack.c.h.b16 %v346
        %v509 = vunpack.c.l.b16 %v347
        %v510 = vunpack.c.h.b16 %v347
        %v511 = vunpack.c.l.b16 %v348
        %v512 = vunpack.c.h.b16 %v348
        %v513 = vunpack.c.l.b16 %v349
        %v514 = vunpack.c.h.b16 %v349
        %v515 = vunpack.c.l.b16 %v350
        %v516 = vunpack.c.h.b16 %v350
        %v517 = vunpack.c.l.b16 %v351
        %v518 = vunpack.c.h.b16 %v351
        %v519 = vunpack.c.l.b16 %v352
        %v520 = vunpack.c.h.b16 %v352
        %v521 = vunpack.c.l.b16 %v353
        %v522 = vunpack.c.h.b16 %v353
        %v523 = vunpack.c.l.b16 %v354
        %v524 = vunpack.c.h.b16 %v354
        %v525 = vunpack.c.l.b16 %v355
        %v526 = vunpack.c.h.b16 %v355
        %v527 = vunpack.c.l.b16 %v356
        %v528 = vunpack.c.h.b16 %v356
        %v529 = vunpack.c.l.b16 %v357
        %v530 = vunpack.c.h.b16 %v357
        %v531 = vunpack.c.l.b16 %v358
        %v532 = vunpack.c.h.b16 %v358
        %v533 = vunpack.c.l.b16 %v359
        %v534 = vunpack.c.h.b16 %v359
        %v535 = vunpack.c.l.b16 %v360
        %v536 = vunpack.c.h.b16 %v360
        %v537 = vunpack.c.l.b16 %v361
        %v538 = vunpack.c.h.b16 %v361
        %v539 = vunpack.c.l.b16 %v362
        %v540 = vunpack.c.h.b16 %v362
        %v541 = vunpack.c.l.b16 %v363
        %v542 = vunpack.c.h.b16 %v363
        %v543 = vunpack.c.l.b16 %v364
        %v544 = vunpack.c.h.b16 %v364
        %v545 = vunpack.c.l.b16 %v365
        %v546 = vunpack.c.h.b16 %v365
        %v547 = vunpack.c.l.b16 %v366
        %v548 = vunpack.c.h.b16 %v366
        %v549 = vunpack.c.l.b16 %v367
        %v550 = vunpack.c.h.b16 %v367
        %v551 = vunpack.c.l.b16 %v368
        %v552 = vunpack.c.h.b16 %v368
        %v553 = vunpack.c.l.b16 %v369
        %v554 = vunpack.c.h.b16 %v369
        %v555 = vunpack.c.l.b16 %v370
        %v556 = vunpack.c.h.b16 %v370
        %v557 = vunpack.c.l.b16 %v371
        %v558 = vunpack.c.h.b16 %v371
        %v559 = vunpack.c.l.b16 %v372
        %v560 = vunpack.c.h.b16 %v372
        %v561 = vunpack.c.l.b16 %v373
        %v562 = vunpack.c.h.b16 %v373
        %v563 = vunpack.c.l.b16 %v374
        %v564 = vunpack.c.h.b16 %v374
        %v565 = vunpack.c.l.b16 %v375
        %v566 = vunpack.c.h.b16 %v375
        %v567 = vunpack.c.l.b16 %v376
        %v568 = vunpack.c.h.b16 %v376
        %v569 = vunpack.c.l.b16 %v377
        %v570 = vunpack.c.h.b16 %v377
        %v571 = vunpack.c.l.b16 %v378
        %v572 = vunpack.c.h.b16 %v378
        %v573 = vunpack.c.l.b16 %v379
        %v574 = vunpack.c.h.b16 %v379
        %v575 = vunpack.c.l.b16 %v380
        %v576 = vunpack.c.h.b16 %v380
        %v577 = vunpack.c.l.b16 %v381
        %v578 = vunpack.c.h.b16 %v381
        %v579 = vunpack.c.l.b16 %v382
        %v580 = vunpack.c.h.b16 %v382
        %v581 = vunpack.c.l.b16 %v383
        %v582 = vunpack.c.h.b16 %v383
        %v583 = vpack.c.b16 %v459, %v455
        %v584 = vpack.c.b16 %v460, %v456
        %v585 = vpack.c.b16 %v461, %v457
        %v586 = vpack.c.b16 %v462, %v458
        %v587 = vpack.c.b16 %v467, %v463
        %v588 = vpack.c.b16 %v468, %v464
        %v589 = vpack.c.b16 %v469, %v465
        %v590 = vpack.c.b16 %v470, %v466
        %v591 = vpack.c.b16 %v475, %v471
        %v592 = vpack.c.b16 %v476, %v472
        %v593 = vpack.c.b16 %v477, %v473
        %v594 = vpack.c.b16 %v478, %v474
        %v595 = vpack.c.b16 %v483, %v479
        %v596 = vpack.c.b16 %v484, %v480
        %v597 = vpack.c.b16 %v485, %v481
        %v598 = vpack.c.b16 %v486, %v482
        %v599 = vpack.c.b16 %v491, %v487
        %v600 = vpack.c.b16 %v492, %v488
        %v601 = vpack.c.b16 %v493, %v489
        %v602 = vpack.c.b16 %v494, %v490
        %v603 = vpack.c.b16 %v499, %v495
        %v604 = vpack.c.b16 %v500, %v496
        %v605 = vpack.c.b16 %v501, %v497
        %v606 = vpack.c.b16 %v502, %v498
        %v607 = vpack.c.b16 %v507, %v503
        %v608 = vpack.c.b16 %v508, %v504
        %v609 = vpack.c.b16 %v509, %v505
        %v610 = vpack.c.b16 %v510, %v506
        %v611 = vpack.c.b16 %v515, %v511
        %v612 = vpack.c.b16 %v516, %v512
        %v613 = vpack.c.b16 %v517, %v513
        %v614 = vpack.c.b16 %v518, %v514
        %v615 = vpack.c.b16 %v523, %v519
        %v616 = vpack.c.b16 %v524, %v520
        %v617 = vpack.c.b16 %v525, %v521
        %v618 = vpack.c.b16 %v526, %v522
        %v619 = vpack.c.b16 %v531, %v527
        %v620 = vpack.c.b16 %v532, %v528
        %v621 = vpack.c.b16 %v533, %v529
        %v622 = vpack.c.b16 %v534, %v530
        %v623 = vpack.c.b16 %v539, %v535
        %v624 = vpack.c.b16 %v540, %v536
        %v625 = vpack.c.b16 %v541, %v537
        %v626 = vpack.c.b16 %v542, %v538
        %v627 = vpack.c.b16 %v547, %v543
        %v628 = vpack.c.b16 %v548, %v544
        %v629 = vpack.c.b16 %v549, %v545
        %v630 = vpack.c.b16 %v550, %v546
        %v631 = vpack.c.b16 %v555, %v551
        %v632 = vpack.c.b16 %v556, %v552
        %v633 = vpack.c.b16 %v557, %v553
        %v634 = vpack.c.b16 %v558, %v554
        %v635 = vpack.c.b16 %v563, %v559
        %v636 = vpack.c.b16 %v564, %v560
        %v637 = vpack.c.b16 %v565, %v561
        %v638 = vpack.c.b16 %v566, %v562
        %v639 = vpack.c.b16 %v571, %v567
        %v640 = vpack.c.b16 %v572, %v568
        %v641 = vpack.c.b16 %v573, %v569
        %v642 = vpack.c.b16 %v574, %v570
        %v643 = vpack.c.b16 %v579, %v575
        %v644 = vpack.c.b16 %v580, %v576
        %v645 = vpack.c.b16 %v581, %v577
        %v646 = vpack.c.b16 %v582, %v578
        %711 = vmatpush.bf16.msra.mxu0 %v611
        %712 = vmatpush.bf16.msra.mxu0 %v607
        %713 = vmatpush.bf16.msra.mxu0 %v603
        %714 = vmatpush.bf16.msra.mxu0 %v599
        %715 = vmatpush.bf16.msra.mxu0 %v595
        %716 = vmatpush.bf16.msra.mxu0 %v591
        %717 = vmatpush.bf16.msra.mxu0 %v587
        %718 = vmatpush.bf16.msra.mxu0 %v583
        %719 = vmatmul.bf16.gmra.mxu0 %v387
        %v720 = vpop.f32.mrf.mxu0
        %v721 = vadd.f32 0.0, %v720
        %v722 = vpop.f32.mrf.mxu0
        %723 = vdwg.mxu0
        %724 = vmatpush.bf16.msra.mxu0 %v643
        %725 = vmatpush.bf16.msra.mxu0 %v639
        %726 = vmatpush.bf16.msra.mxu0 %v635
        %727 = vmatpush.bf16.msra.mxu0 %v631
        %728 = vmatpush.bf16.msra.mxu0 %v627
        %729 = vmatpush.bf16.msra.mxu0 %v623
        %730 = vmatpush.bf16.msra.mxu0 %v619
        %731 = vmatpush.bf16.msra.mxu0 %v615
        %732 = vmatmul.bf16.gmra.mxu0 %v388
        %v733 = vpop.f32.mrf.mxu0
        %v734 = vadd.f32 %v721, %v733
        %v735 = vpop.f32.mrf.mxu0
        %736 = vdwg.mxu0
        %737 = vmatpush.bf16.msra.mxu0 %v612
        %738 = vmatpush.bf16.msra.mxu0 %v608
        %739 = vmatpush.bf16.msra.mxu0 %v604
        %740 = vmatpush.bf16.msra.mxu0 %v600
        %741 = vmatpush.bf16.msra.mxu0 %v596
        %742 = vmatpush.bf16.msra.mxu0 %v592
        %743 = vmatpush.bf16.msra.mxu0 %v588
        %744 = vmatpush.bf16.msra.mxu0 %v584
        %745 = vmatmul.bf16.gmra.mxu0 %v387
        %v746 = vpop.f32.mrf.mxu0
        %v747 = vadd.f32 0.0, %v746
        %v748 = vpop.f32.mrf.mxu0
        %749 = vdwg.mxu0
        %750 = vmatpush.bf16.msra.mxu0 %v644
        %751 = vmatpush.bf16.msra.mxu0 %v640
        %752 = vmatpush.bf16.msra.mxu0 %v636
        %753 = vmatpush.bf16.msra.mxu0 %v632
        %754 = vmatpush.bf16.msra.mxu0 %v628
        %755 = vmatpush.bf16.msra.mxu0 %v624
        %756 = vmatpush.bf16.msra.mxu0 %v620
        %757 = vmatpush.bf16.msra.mxu0 %v616
        %758 = vmatmul.bf16.gmra.mxu0 %v388
        %v759 = vpop.f32.mrf.mxu0
        %v760 = vadd.f32 %v747, %v759
        %v761 = vpop.f32.mrf.mxu0
        %762 = vdwg.mxu0
        %763 = vmatpush.bf16.msra.mxu0 %v613
        %764 = vmatpush.bf16.msra.mxu0 %v609
        %765 = vmatpush.bf16.msra.mxu0 %v605
        %766 = vmatpush.bf16.msra.mxu0 %v601
        %767 = vmatpush.bf16.msra.mxu0 %v597
        %768 = vmatpush.bf16.msra.mxu0 %v593
        %769 = vmatpush.bf16.msra.mxu0 %v589
        %770 = vmatpush.bf16.msra.mxu0 %v585
        %771 = vmatmul.bf16.gmra.mxu0 %v387
        %v772 = vpop.f32.mrf.mxu0
        %v773 = vadd.f32 0.0, %v772
        %v774 = vpop.f32.mrf.mxu0
        %775 = vdwg.mxu0
        %776 = vmatpush.bf16.msra.mxu0 %v645
        %777 = vmatpush.bf16.msra.mxu0 %v641
        %778 = vmatpush.bf16.msra.mxu0 %v637
        %779 = vmatpush.bf16.msra.mxu0 %v633
        %780 = vmatpush.bf16.msra.mxu0 %v629
        %781 = vmatpush.bf16.msra.mxu0 %v625
        %782 = vmatpush.bf16.msra.mxu0 %v621
        %783 = vmatpush.bf16.msra.mxu0 %v617
        %784 = vmatmul.bf16.gmra.mxu0 %v388
        %v785 = vpop.f32.mrf.mxu0
        %v786 = vadd.f32 %v773, %v785
        %v787 = vpop.f32.mrf.mxu0
        %788 = vdwg.mxu0
        %789 = vmatpush.bf16.msra.mxu0 %v614
        %790 = vmatpush.bf16.msra.mxu0 %v610
        %791 = vmatpush.bf16.msra.mxu0 %v606
        %792 = vmatpush.bf16.msra.mxu0 %v602
        %793 = vmatpush.bf16.msra.mxu0 %v598
        %794 = vmatpush.bf16.msra.mxu0 %v594
        %795 = vmatpush.bf16.msra.mxu0 %v590
        %796 = vmatpush.bf16.msra.mxu0 %v586
        %797 = vmatmul.bf16.gmra.mxu0 %v387
        %v798 = vpop.f32.mrf.mxu0
        %v799 = vadd.f32 0.0, %v798
        %v800 = vpop.f32.mrf.mxu0
        %801 = vdwg.mxu0
        %802 = vmatpush.bf16.msra.mxu0 %v646
        %803 = vmatpush.bf16.msra.mxu0 %v642
        %804 = vmatpush.bf16.msra.mxu0 %v638
        %805 = vmatpush.bf16.msra.mxu0 %v634
        %806 = vmatpush.bf16.msra.mxu0 %v630
        %807 = vmatpush.bf16.msra.mxu0 %v626
        %808 = vmatpush.bf16.msra.mxu0 %v622
        %809 = vmatpush.bf16.msra.mxu0 %v618
        %810 = vmatmul.bf16.gmra.mxu0 %v388
        %v811 = vpop.f32.mrf.mxu0
        %v812 = vadd.f32 %v799, %v811
        %v813 = vpop.f32.mrf.mxu0
        %814 = vdwg.mxu0
        %v815 = vadd.f32 %v315, %v734
        %v816 = vadd.f32 %v316, %v760
        %v817 = vadd.f32 %v317, %v786
        %v818 = vadd.f32 %v318, %v812
        %819 = vst [vmem:[#allocation2] sm:$0xff] %v815
        %820 = vst [vmem:[#allocation2 + $0x8] sm:$0xff] %v816
        %821 = vst [vmem:[#allocation2 + $0x10] sm:$0xff] %v817
        %822 = vst [vmem:[#allocation2 + $0x18] sm:$0xff] %v818
        // Predicated region
        $region45: #{_lambda_.19} parent=31 // pred_check
          %p823 = pneg %p307
        $region46: #{_lambda_.19} parent=31 // pred_check_branch
          %825 = sbr.rel (%p823) target = $region48
        $region47: #{_lambda_.19} parent=31 // pred_region
          %v826 = vld [vmem:[#allocation2] sm:$0xff]
          %v827 = vld [vmem:[#allocation2 + $0x8] sm:$0xff]
          %v828 = vld [vmem:[#allocation2 + $0x10] sm:$0xff]
          %v829 = vld [vmem:[#allocation2 + $0x18] sm:$0xff]
          %v830 = vld [vmem:[%s242] ss:$8 sm:$0xf]
          %v832 = vperm.slane %v830, 0
          %v833 = vperm.slane %v830, 1
          %v834 = vperm.slane %v830, 2
          %v835 = vperm.slane %v830, 3
          %v840 = vadd.f32 %v826, %v832
          %v841 = vadd.f32 %v827, %v833
          %v842 = vadd.f32 %v828, %v834
          %v843 = vadd.f32 %v829, %v835
          %v844 = vmax.f32 %v840, 0.0
          %v845 = vmax.f32 %v841, 0.0
          %v846 = vmax.f32 %v842, 0.0
          %v847 = vmax.f32 %v843, 0.0
          %s848 = scalar_lea.vmem %s242, 1 [#allocation5]
          %v849 = vld [vmem:[%s848] ss:$8 sm:$0xf]
          %v851 = vperm.slane %v849, 0
          %v852 = vperm.slane %v849, 1
          %v853 = vperm.slane %v849, 2
          %v854 = vperm.slane %v849, 3
          %v859 = vadd.f32 %v844, %v851
          %v860 = vadd.f32 %v845, %v852
          %v861 = vadd.f32 %v846, %v853
          %v862 = vadd.f32 %v847, %v854
          %v863 = vpack.c.bf16 %v860, %v859
          %v864 = vpack.c.bf16 %v862, %v861
          %865 = vst [vmem:[%s305] sm:$0xff] %v863
          %866 = vst [vmem:[%s305 + $0x8] sm:$0xff] %v864
        $region48: #{_lambda_.19} parent=31 // pred_fallthru
          _
        %s867 = smul.u32 4, %s26
        %p868 = scmp.lt.s32.totalorder %s25, 0
        %s869 = scalar_select %p868, %s25, 0
        %p870 = scmp.lt.s32.totalorder %s867, 31
        %s871 = scalar_select %p870, %s867, 31
        %s872 = smul.addr %s869, 32
        %s873 = sadd.s32 %s871, %s872
        %s874 = smul.addr %s873, 4
        %s875 = scalar_lea.vmem %s3, %s874
        // Predicated region
        $region49: #{_lambda_.19} parent=31 // pred_check
          %p876 = pneg %p141
        $region50: #{_lambda_.19} parent=31 // pred_check_branch
          %878 = sbr.rel (%p876) target = $region52
        $region51: #{_lambda_.19} parent=31 // pred_region
          %s879 = smul.u32 4, %s26
        $region52: #{_lambda_.19} parent=31 // pred_fallthru
          _
      $region32: #{_lambda_.19} parent=5 // pred_fallthru
        _
      %p880 = scmp.le.s32.totalorder 2, %s15
      // Predicated region
      $region53: #{_lambda_.19} parent=5 // pred_check
        %p881 = pneg %p880
      $region54: #{_lambda_.19} parent=5 // pred_check_branch
        %883 = sbr.rel (%p881) target = $region56
      $region55: #{_lambda_.19} parent=5 // pred_region
        %s884 = ssub.s32 %s15, 2
        // Predicated region
        $region57: #{_lambda_.19} parent=55 // pred_check
          %p885 = pneg %p147
        $region58: #{_lambda_.19} parent=55 // pred_check_branch
          %887 = sbr.rel (%p885) target = $region60
        $region59: #{_lambda_.19} parent=55 // pred_region
          %s888 = smul.u32 4, %s29
          %p889 = scmp.lt.s32.totalorder %s28, 0
          %s890 = scalar_select %p889, %s28, 0
          %p891 = scmp.lt.s32.totalorder %s888, 31
          %s892 = scalar_select %p891, %s888, 31
          %s893 = smul.addr %s890, 32
          %s894 = sadd.s32 %s892, %s893
          %s895 = smul.addr %s894, 4
          %s896 = scalar_lea.vmem %s3, %s895
        $region60: #{_lambda_.19} parent=55 // pred_fallthru
          _
      $region56: #{_lambda_.19} parent=5 // pred_fallthru
        _
    $region6: #{_lambda_.19} parent=1 // loop_footer
      %s19 = sadd.s32 1, %s15
    $region7: #{_lambda_.19} parent=1 // loop_footer_branch
      %14 = sbr.rel target = $region3
    $region8: #{_lambda_.19} parent=1 // loop_exit
      _
    %897 = vsyncpa [#allocation4], 1
    %s898 = scalar_lea.sflag [#allocation4], 1
    %899 = vsyncpa %s898, 1
    %900 = vsyncpa [#allocation6], 1
    %s901 = scalar_lea.sflag [#allocation6], 1
    %902 = vsyncpa %s901, 1

// kernel: _lambda_.20
$region0: #{_lambda_.20}
  #allocation0 [shape = 'u32[]', space=smem, size = 0x4, offset = 0x4, fixed_abs, tag = 'smem constant byte address 0x4 - core index']
  #allocation1 [shape = 'u32[72,128]{1,0:T(1,128)}', space=vmem, size = 0x9000, scoped, tag = 'internal scratch']
  #allocation2 [shape = 'f32[8,512]{1,0:T(8,128)}', space=vmem, size = 0x4000, scoped, tag = 'scratch operand']
  %s0 = inlined_call_operand.vmem [shape: bf16[8,4096], index: 0, kind: input, shape index: {}]
  %s1 = inlined_call_operand.hbm [shape: bf16[4096,4096], index: 1, kind: input, shape index: {}]
  %s2 = inlined_call_operand.hbm [shape: f32[8,4096], index: 2, kind: input, shape index: {}]
  %s3 = inlined_call_operand.vmem [shape: bf16[8,4096], index: 3, kind: output, shape index: {}]
  %s4 = sld [smem:[#allocation0]]
  $region61: #{_lambda_.20} parent=0
    _
  %s6 = ssub.s32 1, %s4
  %s7 = scalar_select 0, %s6, %s4
  $region1: #{_lambda_.20} parent=0
    #allocation3 [shape = 'u8[2097152]{0}', space=vmem, size = 0x200000, scoped, tag = 'input window, operand 1']
    #allocation4 [shape = 's32[2]{0}', space=sflag, size = 0x8, scoped, tag = 'scoped memory for _lambda_.20']
    #allocation5 [shape = 'u8[32768]{0}', space=vmem, size = 0x8000, scoped, tag = 'input window, operand 2']
    #allocation6 [shape = 's32[2]{0}', space=sflag, size = 0x8, scoped, tag = 'scoped memory for _lambda_.20']
    %8 = vsyncpa [#allocation4], 0
    %s9 = scalar_lea.sflag [#allocation4], 1
    %10 = vsyncpa %s9, 0
    %11 = vsyncpa [#allocation6], 0
    %s12 = scalar_lea.sflag [#allocation6], 1
    %13 = vsyncpa %s12, 0
    loop: start=0, step=1, limit=34
    $region2: #{_lambda_.20} parent=1 // loop_pre_header
      _
    $region3: #{_lambda_.20} parent=1 // loop_header
      %s15 = sphi 0, %s19
      %p16 = scmp.ge.s32.totalorder %s15, 34
      %s22 = sphi 0, %s41
      %s23 = sphi 0, %s37
      %s24 = sphi 0, %s33
      %s25 = sphi 0, %s22
      %s26 = sphi 0, %s23
      %s27 = sphi 0, %s24
      %s28 = sphi 0, %s25
      %s29 = sphi 0, %s26
      %s30 = sphi 0, %s27
      %s46 = sphi 0, %s48
      %s49 = sphi 0, %s46
      %s50 = sphi 0, %s49
      %s66 = sphi 0, %s50
      %s74 = sphi 0, %s76
      %s77 = sphi 0, %s74
      %s78 = sphi 0, %s77
      %s94 = sphi 0, %s78
      %s100 = sphi 0, %s102
      %s103 = sphi 0, %s100
      %s104 = sphi 0, %s103
      %s120 = sphi 0, %s104
      %s128 = sphi 0, %s130
      %s131 = sphi 0, %s128
      %s132 = sphi 0, %s131
      %s148 = sphi 0, %s132
    $region4: #{_lambda_.20} parent=1 // loop_header_branch
      %18 = sbr.rel (%p16) target = $region8
    $region5: #{_lambda_.20} parent=1 // loop_body
      %s20 = ssub.s32 %s15, 1
      %s21 = ssub.s32 %s15, 2
      %s31 = sadd.s32 1, %s24
      %p32 = scmp.ge.s32.totalorder %s31, 4
      %s33 = scalar_select %p32, 0, %s31
      %s34 = sadd.s32 1, %s23
      %s35 = scalar_select %p32, %s34, %s23
      %p36 = scmp.ge.s32.totalorder %s35, 8
      %s37 = scalar_select %p36, 0, %s35
      %s38 = sadd.s32 1, %s22
      %s39 = scalar_select %p36, %s38, %s22
      %p40 = scmp.ge.s32.totalorder %s39, 1
      %s41 = scalar_select %p40, 0, %s39
      %s42 = ssub.s32 %s22, %s41
      %s43 = ssub.s32 %s24, %s33
      %s44 = sor.u32 %s42, %s43
      %p45 = scmp.eq.s32.totalorder %s44, 0
      %s47 = sadd.s32 %s46, 1
      %s48 = scalar_select %p45, %s46, %s47
      %p51 = pneg %p45
      %p52 = scmp.eq.s32.totalorder %s15, 31
      %p53 = por %p51, %p52
      %p54 = scmp.ne.s32.totalorder %s46, %s49
      %p55 = scmp.eq.s32.totalorder %s15, 0
      %p56 = por %p54, %p55
      %p57 = scmp.ne.s32.totalorder %s46, %s49
      %p58 = scmp.eq.s32.totalorder %s20, 31
      %p59 = por %p57, %p58
      %p60 = scmp.ne.s32.totalorder %s49, %s50
      %p61 = scmp.eq.s32.totalorder %s20, 0
      %p62 = por %p60, %p61
      %p63 = scmp.ne.s32.totalorder %s49, %s50
      %p64 = scmp.eq.s32.totalorder %s21, 31
      %p65 = por %p63, %p64
      %p67 = scmp.ne.s32.totalorder %s50, %s66
      %p68 = scmp.eq.s32.totalorder %s21, 0
      %p69 = por %p67, %p68
      %s70 = ssub.s32 %s24, %s33
      %s71 = ssub.s32 %s23, %s37
      %s72 = sor.u32 %s70, %s71
      %p73 = scmp.eq.s32.totalorder %s72, 0
      %s75 = sadd.s32 %s74, 1
      %s76 = scalar_select %p73, %s74, %s75
      %p79 = pneg %p73
      %p80 = scmp.eq.s32.totalorder %s15, 31
      %p81 = por %p79, %p80
      %p82 = scmp.ne.s32.totalorder %s74, %s77
      %p83 = scmp.eq.s32.totalorder %s15, 0
      %p84 = por %p82, %p83
      %p85 = scmp.ne.s32.totalorder %s74, %s77
      %p86 = scmp.eq.s32.totalorder %s20, 31
      %p87 = por %p85, %p86
      %p88 = scmp.ne.s32.totalorder %s77, %s78
      %p89 = scmp.eq.s32.totalorder %s20, 0
      %p90 = por %p88, %p89
      %p91 = scmp.ne.s32.totalorder %s77, %s78
      %p92 = scmp.eq.s32.totalorder %s21, 31
      %p93 = por %p91, %p92
      %p95 = scmp.ne.s32.totalorder %s78, %s94
      %p96 = scmp.eq.s32.totalorder %s21, 0
      %p97 = por %p95, %p96
      %s98 = ssub.s32 %s23, %s37
      %p99 = scmp.eq.s32.totalorder %s98, 0
      %s101 = sadd.s32 %s100, 1
      %s102 = scalar_select %p99, %s100, %s101
      %p105 = pneg %p99
      %p106 = scmp.eq.s32.totalorder %s15, 31
      %p107 = por %p105, %p106
      %p108 = scmp.ne.s32.totalorder %s100, %s103
      %p109 = scmp.eq.s32.totalorder %s15, 0
      %p110 = por %p108, %p109
      %p111 = scmp.ne.s32.totalorder %s100, %s103
      %p112 = scmp.eq.s32.totalorder %s20, 31
      %p113 = por %p111, %p112
      %p114 = scmp.ne.s32.totalorder %s103, %s104
      %p115 = scmp.eq.s32.totalorder %s20, 0
      %p116 = por %p114, %p115
      %p117 = scmp.ne.s32.totalorder %s103, %s104
      %p118 = scmp.eq.s32.totalorder %s21, 31
      %p119 = por %p117, %p118
      %p121 = scmp.ne.s32.totalorder %s104, %s120
      %p122 = scmp.eq.s32.totalorder %s21, 0
      %p123 = por %p121, %p122
      %s124 = ssub.s32 %s22, %s41
      %s125 = ssub.s32 %s23, %s37
      %s126 = sor.u32 %s124, %s125
      %p127 = scmp.eq.s32.totalorder %s126, 0
      %s129 = sadd.s32 %s128, 1
      %s130 = scalar_select %p127, %s128, %s129
      %p133 = pneg %p127
      %p134 = scmp.eq.s32.totalorder %s15, 31
      %p135 = por %p133, %p134
      %p136 = scmp.ne.s32.totalorder %s128, %s131
      %p137 = scmp.eq.s32.totalorder %s15, 0
      %p138 = por %p136, %p137
      %p139 = scmp.ne.s32.totalorder %s128, %s131
      %p140 = scmp.eq.s32.totalorder %s20, 31
      %p141 = por %p139, %p140
      %p142 = scmp.ne.s32.totalorder %s131, %s132
      %p143 = scmp.eq.s32.totalorder %s20, 0
      %p144 = por %p142, %p143
      %p145 = scmp.ne.s32.totalorder %s131, %s132
      %p146 = scmp.eq.s32.totalorder %s21, 31
      %p147 = por %p145, %p146
      %p149 = scmp.ne.s32.totalorder %s132, %s148
      %p150 = scmp.eq.s32.totalorder %s21, 0
      %p151 = por %p149, %p150
      %p152 = scmp.le.s32.totalorder 1, %s15
      %p153 = scmp.lt.s32.totalorder %s15, 33
      %p154 = pnand %p152, %p153
      %p155 = pneg %p154
      // Predicated region
      $region9: #{_lambda_.20} parent=5 // pred_check
        _
      $region10: #{_lambda_.20} parent=5 // pred_check_branch
        %157 = sbr.rel (%p154) target = $region12
      $region11: #{_lambda_.20} parent=5 // pred_region
        %s158 = ssub.s32 %s15, 1
      $region12: #{_lambda_.20} parent=5 // pred_fallthru
        _
      %p159 = scmp.lt.s32.totalorder %s15, 32
      // Predicated region
      $region13: #{_lambda_.20} parent=5 // pred_check
        %p160 = pneg %p159
      $region14: #{_lambda_.20} parent=5 // pred_check_branch
        %162 = sbr.rel (%p160) target = $region16
      $region15: #{_lambda_.20} parent=5 // pred_region
        // Predicated region
        $region17: #{_lambda_.20} parent=15 // pred_check
          %p163 = pneg %p56
        $region18: #{_lambda_.20} parent=15 // pred_check_branch
          %165 = sbr.rel (%p163) target = $region20
        $region19: #{_lambda_.20} parent=15 // pred_region
          %s166 = smul.u32 8, %s24
          %p167 = scmp.lt.s32.totalorder %s22, 0
          %s168 = scalar_select %p167, %s22, 0
          %p169 = scmp.lt.s32.totalorder %s166, 31
          %s170 = scalar_select %p169, %s166, 31
          %s171 = smul.addr %s168, 32
          %s172 = sadd.s32 %s170, %s171
          %s173 = smul.addr %s172, 4
          %s174 = scalar_lea.vmem %s0, %s173
          %s175 = smul.u32 8, %s24
        $region20: #{_lambda_.20} parent=15 // pred_fallthru
          _
        // Predicated region
        $region21: #{_lambda_.20} parent=15 // pred_check
          %p176 = pneg %p84
        $region22: #{_lambda_.20} parent=15 // pred_check_branch
          %178 = sbr.rel (%p176) target = $region24
        $region23: #{_lambda_.20} parent=15 // pred_region
          %s179 = sand.u32 %s74, 1
          %s180 = scalar_lea.sflag [#allocation4], %s179
          %s181 = sand.u32 %s74, 1
          %s182 = smul.addr %s181, 2048
          %s183 = scalar_lea.vmem [#allocation3], %s182
          %s184 = smul.u32 128, %s24
          %s185 = smul.u32 4, %s23
          %187 = vsyncadd %s180, 0
          %s188 = smul.addr %s184, 32
          %s189 = sadd.s32 %s185, %s188
          %s190 = smul.addr %s189, 4
          %s191 = scalar_lea.hbm %s1, %s190
          %s192 = sshll.u32 %s191, 4
          %s193 = int_to_ptr.hbm [resolvable:$true] %s192
          %s194 = sshll.u32 %s183, 4
          %s195 = int_to_ptr.vmem [resolvable:$true] %s194
          %200 = dma.hbm_to_vmem [thread:$0]  %s193, 32768, %s195, %s180, 2048, 256, 16
        $region24: #{_lambda_.20} parent=15 // pred_fallthru
          _
        // Predicated region
        $region25: #{_lambda_.20} parent=15 // pred_check
          %p201 = pneg %p110
        $region26: #{_lambda_.20} parent=15 // pred_check_branch
          %203 = sbr.rel (%p201) target = $region28
        $region27: #{_lambda_.20} parent=15 // pred_region
          %s204 = sand.u32 %s100, 1
          %s205 = scalar_lea.sflag [#allocation6], %s204
          %s206 = sand.u32 %s100, 1
          %s207 = smul.addr %s206, 32
          %s208 = scalar_lea.vmem [#allocation5], %s207
          %s209 = smul.u32 4, %s23
          %211 = vsyncadd %s205, 0
          %s212 = smul.addr %s209, 8
          %s213 = scalar_lea.hbm %s2, %s212
          %s215 = sshll.u32 %s213, 4
          %s216 = int_to_ptr.hbm [resolvable:$true] %s215
          %s217 = sshll.u32 %s208, 4
          %s218 = int_to_ptr.vmem [resolvable:$true] %s217
          %220 = dma.hbm_to_vmem [thread:$0]  %s216, 512, %s218, %s205
        $region28: #{_lambda_.20} parent=15 // pred_fallthru
          _
      $region16: #{_lambda_.20} parent=5 // pred_fallthru
        _
      %p221 = scmp.le.s32.totalorder 1, %s15
      %p222 = scmp.lt.s32.totalorder %s15, 33
      %p223 = pnand %p221, %p222
      %p224 = pneg %p223
      // Predicated region
      $region29: #{_lambda_.20} parent=5 // pred_check
        _
      $region30: #{_lambda_.20} parent=5 // pred_check_branch
        %226 = sbr.rel (%p223) target = $region32
      $region31: #{_lambda_.20} parent=5 // pred_region
        %s227 = ssub.s32 %s15, 1
        %s228 = sand.u32 %s77, 1
        %s229 = scalar_lea.sflag [#allocation4], %s228
        %s230 = sand.u32 %s77, 1
        %s231 = smul.addr %s230, 2048
        %s232 = scalar_lea.vmem [#allocation3], %s231
        // Predicated region
        $region33: #{_lambda_.20} parent=31 // pred_check
          %p233 = pneg %p90
        $region34: #{_lambda_.20} parent=31 // pred_check_branch
          %235 = sbr.rel (%p233) target = $region36
        $region35: #{_lambda_.20} parent=31 // pred_region
          %237 = dma.done %s229, 32768
        $region36: #{_lambda_.20} parent=31 // pred_fallthru
          _
        %s238 = sand.u32 %s103, 1
        %s239 = scalar_lea.sflag [#allocation6], %s238
        %s240 = sand.u32 %s103, 1
        %s241 = smul.addr %s240, 32
        %s242 = scalar_lea.vmem [#allocation5], %s241
        // Predicated region
        $region37: #{_lambda_.20} parent=31 // pred_check
          %p243 = pneg %p116
        $region38: #{_lambda_.20} parent=31 // pred_check_branch
          %245 = sbr.rel (%p243) target = $region40
        $region39: #{_lambda_.20} parent=31 // pred_region
          %247 = dma.done %s239, 512
        $region40: #{_lambda_.20} parent=31 // pred_fallthru
          _
        %s248 = smul.u32 8, %s27
        %p249 = scmp.lt.s32.totalorder %s25, 0
        %s250 = scalar_select %p249, %s25, 0
        %p251 = scmp.lt.s32.totalorder %s248, 31
        %s252 = scalar_select %p251, %s248, 31
        %s253 = smul.addr %s250, 32
        %s254 = sadd.s32 %s252, %s253
        %s255 = smul.addr %s254, 4
        %s256 = scalar_lea.vmem %s0, %s255
        %p257 = pneg %p62
        %p258 = pneg %p59
        %s259 = sand.u32 %s77, 1
        %s260 = scalar_lea.sflag [#allocation4], %s259
        %s261 = sand.u32 %s77, 1
        %s262 = smul.addr %s261, 2048
        %s263 = scalar_lea.vmem [#allocation3], %s262
        %p264 = pneg %p90
        %p265 = pneg %p87
        %s266 = sand.u32 %s103, 1
        %s267 = scalar_lea.sflag [#allocation6], %s266
        %s268 = sand.u32 %s103, 1
        %s269 = smul.addr %s268, 32
        %s270 = scalar_lea.vmem [#allocation5], %s269
        %p271 = pneg %p116
        %p272 = pneg %p113
        %p273 = pneg %p144
        %p274 = pneg %p141
        %s275 = smul.u32 4, %s26
        %p276 = scmp.lt.s32.totalorder %s25, 0
        %s277 = scalar_select %p276, %s25, 0
        %p278 = scmp.lt.s32.totalorder %s275, 31
        %s279 = scalar_select %p278, %s275, 31
        %s280 = smul.addr %s277, 32
        %s281 = sadd.s32 %s279, %s280
        %s282 = smul.addr %s281, 4
        %s283 = scalar_lea.vmem %s3, %s282
        %s284 = smul.u32 8, %s27
        %p285 = scmp.lt.s32.totalorder %s25, 0
        %s286 = scalar_select %p285, %s25, 0
        %p287 = scmp.lt.s32.totalorder %s284, 31
        %s288 = scalar_select %p287, %s284, 31
        %s289 = smul.addr %s286, 32
        %s290 = sadd.s32 %s288, %s289
        %s291 = smul.addr %s290, 4
        %s292 = scalar_lea.vmem %s0, %s291
        %s293 = smul.u32 8, %s27
        %s294 = smul.u32 128, %s27
        %s295 = smul.u32 4, %s26
        %s296 = smul.u32 4, %s26
        %s297 = smul.u32 4, %s26
        %p298 = scmp.lt.s32.totalorder %s25, 0
        %s299 = scalar_select %p298, %s25, 0
        %p300 = scmp.lt.s32.totalorder %s297, 31
        %s301 = scalar_select %p300, %s297, 31
        %s302 = smul.addr %s299, 32
        %s303 = sadd.s32 %s301, %s302
        %s304 = smul.addr %s303, 4
        %s305 = scalar_lea.vmem %s3, %s304
        %s306 = smul.u32 4, %s26
        %p307 = scmp.eq.s32.totalorder %s27, 0
        // Predicated region
        $region41: #{_lambda_.20} parent=31 // pred_check
          %p308 = pneg %p307
        $region42: #{_lambda_.20} parent=31 // pred_check_branch
          %310 = sbr.rel (%p308) target = $region44
        $region43: #{_lambda_.20} parent=31 // pred_region
          %311 = vst [vmem:[#allocation2] sm:$0xff] 0.0
          %312 = vst [vmem:[#allocation2 + $0x8] sm:$0xff] 0.0
          %313 = vst [vmem:[#allocation2 + $0x10] sm:$0xff] 0.0
          %314 = vst [vmem:[#allocation2 + $0x18] sm:$0xff] 0.0
        $region44: #{_lambda_.20} parent=31 // pred_fallthru
          _
        %v315 = vld [vmem:[#allocation2] sm:$0xff]
        %v316 = vld [vmem:[#allocation2 + $0x8] sm:$0xff]
        %v317 = vld [vmem:[#allocation2 + $0x10] sm:$0xff]
        %v318 = vld [vmem:[#allocation2 + $0x18] sm:$0xff]
        %v319 = vld [vmem:[%s292] sm:$0xff]
        %v320 = vld [vmem:[%s292 + $0x8] sm:$0xff]
        %v321 = vld [vmem:[%s292 + $0x10] sm:$0xff]
        %v322 = vld [vmem:[%s292 + $0x18] sm:$0xff]
        %v323 = vld [vmem:[%s232] sm:$0xff]
        %v324 = vld [vmem:[%s232 + $0x8] sm:$0xff]
        %v325 = vld [vmem:[%s232 + $0x10] sm:$0xff]
        %v326 = vld [vmem:[%s232 + $0x18] sm:$0xff]
        %v327 = vld [vmem:[%s232 + $0x20] sm:$0xff]
        %v328 = vld [vmem:[%s232 + $0x28] sm:$0xff]
        %v329 = vld [vmem:[%s232 + $0x30] sm:$0xff]
        %v330 = vld [vmem:[%s232 + $0x38] sm:$0xff]
        %v331 = vld [vmem:[%s232 + $0x40] sm:$0xff]
        %v332 = vld [vmem:[%s232 + $0x48] sm:$0xff]
        %v333 = vld [vmem:[%s232 + $0x50] sm:$0xff]
        %v334 = vld [vmem:[%s232 + $0x58] sm:$0xff]
        %v335 = vld [vmem:[%s232 + $0x60] sm:$0xff]
        %v336 = vld [vmem:[%s232 + $0x68] sm:$0xff]
        %v337 = vld [vmem:[%s232 + $0x70] sm:$0xff]
        %v338 = vld [vmem:[%s232 + $0x78] sm:$0xff]
        %v339 = vld [vmem:[%s232 + $0x80] sm:$0xff]
        %v340 = vld [vmem:[%s232 + $0x88] sm:$0xff]
        %v341 = vld [vmem:[%s232 + $0x90] sm:$0xff]
        %v342 = vld [vmem:[%s232 + $0x98] sm:$0xff]
        %v343 = vld [vmem:[%s232 + $0xa0] sm:$0xff]
        %v344 = vld [vmem:[%s232 + $0xa8] sm:$0xff]
        %v345 = vld [vmem:[%s232 + $0xb0] sm:$0xff]
        %v346 = vld [vmem:[%s232 + $0xb8] sm:$0xff]
        %v347 = vld [vmem:[%s232 + $0xc0] sm:$0xff]
        %v348 = vld [vmem:[%s232 + $0xc8] sm:$0xff]
        %v349 = vld [vmem:[%s232 + $0xd0] sm:$0xff]
        %v350 = vld [vmem:[%s232 + $0xd8] sm:$0xff]
        %v351 = vld [vmem:[%s232 + $0xe0] sm:$0xff]
        %v352 = vld [vmem:[%s232 + $0xe8] sm:$0xff]
        %v353 = vld [vmem:[%s232 + $0xf0] sm:$0xff]
        %v354 = vld [vmem:[%s232 + $0xf8] sm:$0xff]
        %v355 = vld [vmem:[%s232 + $0x100] sm:$0xff]
        %v356 = vld [vmem:[%s232 + $0x108] sm:$0xff]
        %v357 = vld [vmem:[%s232 + $0x110] sm:$0xff]
        %v358 = vld [vmem:[%s232 + $0x118] sm:$0xff]
        %v359 = vld [vmem:[%s232 + $0x120] sm:$0xff]
        %v360 = vld [vmem:[%s232 + $0x128] sm:$0xff]
        %v361 = vld [vmem:[%s232 + $0x130] sm:$0xff]
        %v362 = vld [vmem:[%s232 + $0x138] sm:$0xff]
        %v363 = vld [vmem:[%s232 + $0x140] sm:$0xff]
        %v364 = vld [vmem:[%s232 + $0x148] sm:$0xff]
        %v365 = vld [vmem:[%s232 + $0x150] sm:$0xff]
        %v366 = vld [vmem:[%s232 + $0x158] sm:$0xff]
        %v367 = vld [vmem:[%s232 + $0x160] sm:$0xff]
        %v368 = vld [vmem:[%s232 + $0x168] sm:$0xff]
        %v369 = vld [vmem:[%s232 + $0x170] sm:$0xff]
        %v370 = vld [vmem:[%s232 + $0x178] sm:$0xff]
        %v371 = vld [vmem:[%s232 + $0x180] sm:$0xff]
        %v372 = vld [vmem:[%s232 + $0x188] sm:$0xff]
        %v373 = vld [vmem:[%s232 + $0x190] sm:$0xff]
        %v374 = vld [vmem:[%s232 + $0x198] sm:$0xff]
        %v375 = vld [vmem:[%s232 + $0x1a0] sm:$0xff]
        %v376 = vld [vmem:[%s232 + $0x1a8] sm:$0xff]
        %v377 = vld [vmem:[%s232 + $0x1b0] sm:$0xff]
        %v378 = vld [vmem:[%s232 + $0x1b8] sm:$0xff]
        %v379 = vld [vmem:[%s232 + $0x1c0] sm:$0xff]
        %v380 = vld [vmem:[%s232 + $0x1c8] sm:$0xff]
        %v381 = vld [vmem:[%s232 + $0x1d0] sm:$0xff]
        %v382 = vld [vmem:[%s232 + $0x1d8] sm:$0xff]
        %v383 = vld [vmem:[%s232 + $0x1e0] sm:$0xff]
        %v384 = vld [vmem:[%s232 + $0x1e8] sm:$0xff]
        %v385 = vld [vmem:[%s232 + $0x1f0] sm:$0xff]
        %v386 = vld [vmem:[%s232 + $0x1f8] sm:$0xff]
        %v387 = vld [vmem:[%s232 + $0x200] sm:$0xff]
        %v388 = vld [vmem:[%s232 + $0x208] sm:$0xff]
        %v389 = vld [vmem:[%s232 + $0x210] sm:$0xff]
        %v390 = vld [vmem:[%s232 + $0x218] sm:$0xff]
        %v391 = vld [vmem:[%s232 + $0x220] sm:$0xff]
        %v392 = vld [vmem:[%s232 + $0x228] sm:$0xff]
        %v393 = vld [vmem:[%s232 + $0x230] sm:$0xff]
        %v394 = vld [vmem:[%s232 + $0x238] sm:$0xff]
        %v395 = vld [vmem:[%s232 + $0x240] sm:$0xff]
        %v396 = vld [vmem:[%s232 + $0x248] sm:$0xff]
        %v397 = vld [vmem:[%s232 + $0x250] sm:$0xff]
        %v398 = vld [vmem:[%s232 + $0x258] sm:$0xff]
        %v399 = vld [vmem:[%s232 + $0x260] sm:$0xff]
        %v400 = vld [vmem:[%s232 + $0x268] sm:$0xff]
        %v401 = vld [vmem:[%s232 + $0x270] sm:$0xff]
        %v402 = vld [vmem:[%s232 + $0x278] sm:$0xff]
        %v403 = vld [vmem:[%s232 + $0x280] sm:$0xff]
        %v404 = vld [vmem:[%s232 + $0x288] sm:$0xff]
        %v405 = vld [vmem:[%s232 + $0x290] sm:$0xff]
        %v406 = vld [vmem:[%s232 + $0x298] sm:$0xff]
        %v407 = vld [vmem:[%s232 + $0x2a0] sm:$0xff]
        %v408 = vld [vmem:[%s232 + $0x2a8] sm:$0xff]
        %v409 = vld [vmem:[%s232 + $0x2b0] sm:$0xff]
        %v410 = vld [vmem:[%s232 + $0x2b8] sm:$0xff]
        %v411 = vld [vmem:[%s232 + $0x2c0] sm:$0xff]
        %v412 = vld [vmem:[%s232 + $0x2c8] sm:$0xff]
        %v413 = vld [vmem:[%s232 + $0x2d0] sm:$0xff]
        %v414 = vld [vmem:[%s232 + $0x2d8] sm:$0xff]
        %v415 = vld [vmem:[%s232 + $0x2e0] sm:$0xff]
        %v416 = vld [vmem:[%s232 + $0x2e8] sm:$0xff]
        %v417 = vld [vmem:[%s232 + $0x2f0] sm:$0xff]
        %v418 = vld [vmem:[%s232 + $0x2f8] sm:$0xff]
        %v419 = vld [vmem:[%s232 + $0x300] sm:$0xff]
        %v420 = vld [vmem:[%s232 + $0x308] sm:$0xff]
        %v421 = vld [vmem:[%s232 + $0x310] sm:$0xff]
        %v422 = vld [vmem:[%s232 + $0x318] sm:$0xff]
        %v423 = vld [vmem:[%s232 + $0x320] sm:$0xff]
        %v424 = vld [vmem:[%s232 + $0x328] sm:$0xff]
        %v425 = vld [vmem:[%s232 + $0x330] sm:$0xff]
        %v426 = vld [vmem:[%s232 + $0x338] sm:$0xff]
        %v427 = vld [vmem:[%s232 + $0x340] sm:$0xff]
        %v428 = vld [vmem:[%s232 + $0x348] sm:$0xff]
        %v429 = vld [vmem:[%s232 + $0x350] sm:$0xff]
        %v430 = vld [vmem:[%s232 + $0x358] sm:$0xff]
        %v431 = vld [vmem:[%s232 + $0x360] sm:$0xff]
        %v432 = vld [vmem:[%s232 + $0x368] sm:$0xff]
        %v433 = vld [vmem:[%s232 + $0x370] sm:$0xff]
        %v434 = vld [vmem:[%s232 + $0x378] sm:$0xff]
        %v435 = vld [vmem:[%s232 + $0x380] sm:$0xff]
        %v436 = vld [vmem:[%s232 + $0x388] sm:$0xff]
        %v437 = vld [vmem:[%s232 + $0x390] sm:$0xff]
        %v438 = vld [vmem:[%s232 + $0x398] sm:$0xff]
        %v439 = vld [vmem:[%s232 + $0x3a0] sm:$0xff]
        %v440 = vld [vmem:[%s232 + $0x3a8] sm:$0xff]
        %v441 = vld [vmem:[%s232 + $0x3b0] sm:$0xff]
        %v442 = vld [vmem:[%s232 + $0x3b8] sm:$0xff]
        %v443 = vld [vmem:[%s232 + $0x3c0] sm:$0xff]
        %v444 = vld [vmem:[%s232 + $0x3c8] sm:$0xff]
        %v445 = vld [vmem:[%s232 + $0x3d0] sm:$0xff]
        %v446 = vld [vmem:[%s232 + $0x3d8] sm:$0xff]
        %v447 = vld [vmem:[%s232 + $0x3e0] sm:$0xff]
        %v448 = vld [vmem:[%s232 + $0x3e8] sm:$0xff]
        %v449 = vld [vmem:[%s232 + $0x3f0] sm:$0xff]
        %v450 = vld [vmem:[%s232 + $0x3f8] sm:$0xff]
        %v451 = vld [vmem:[%s232 + $0x400] sm:$0xff]
        %v452 = vld [vmem:[%s232 + $0x408] sm:$0xff]
        %v453 = vld [vmem:[%s232 + $0x410] sm:$0xff]
        %v454 = vld [vmem:[%s232 + $0x418] sm:$0xff]
        %v455 = vld [vmem:[%s232 + $0x420] sm:$0xff]
        %v456 = vld [vmem:[%s232 + $0x428] sm:$0xff]
        %v457 = vld [vmem:[%s232 + $0x430] sm:$0xff]
        %v458 = vld [vmem:[%s232 + $0x438] sm:$0xff]
        %v459 = vld [vmem:[%s232 + $0x440] sm:$0xff]
        %v460 = vld [vmem:[%s232 + $0x448] sm:$0xff]
        %v461 = vld [vmem:[%s232 + $0x450] sm:$0xff]
        %v462 = vld [vmem:[%s232 + $0x458] sm:$0xff]
        %v463 = vld [vmem:[%s232 + $0x460] sm:$0xff]
        %v464 = vld [vmem:[%s232 + $0x468] sm:$0xff]
        %v465 = vld [vmem:[%s232 + $0x470] sm:$0xff]
        %v466 = vld [vmem:[%s232 + $0x478] sm:$0xff]
        %v467 = vld [vmem:[%s232 + $0x480] sm:$0xff]
        %v468 = vld [vmem:[%s232 + $0x488] sm:$0xff]
        %v469 = vld [vmem:[%s232 + $0x490] sm:$0xff]
        %v470 = vld [vmem:[%s232 + $0x498] sm:$0xff]
        %v471 = vld [vmem:[%s232 + $0x4a0] sm:$0xff]
        %v472 = vld [vmem:[%s232 + $0x4a8] sm:$0xff]
        %v473 = vld [vmem:[%s232 + $0x4b0] sm:$0xff]
        %v474 = vld [vmem:[%s232 + $0x4b8] sm:$0xff]
        %v475 = vld [vmem:[%s232 + $0x4c0] sm:$0xff]
        %v476 = vld [vmem:[%s232 + $0x4c8] sm:$0xff]
        %v477 = vld [vmem:[%s232 + $0x4d0] sm:$0xff]
        %v478 = vld [vmem:[%s232 + $0x4d8] sm:$0xff]
        %v479 = vld [vmem:[%s232 + $0x4e0] sm:$0xff]
        %v480 = vld [vmem:[%s232 + $0x4e8] sm:$0xff]
        %v481 = vld [vmem:[%s232 + $0x4f0] sm:$0xff]
        %v482 = vld [vmem:[%s232 + $0x4f8] sm:$0xff]
        %v483 = vld [vmem:[%s232 + $0x500] sm:$0xff]
        %v484 = vld [vmem:[%s232 + $0x508] sm:$0xff]
        %v485 = vld [vmem:[%s232 + $0x510] sm:$0xff]
        %v486 = vld [vmem:[%s232 + $0x518] sm:$0xff]
        %v487 = vld [vmem:[%s232 + $0x520] sm:$0xff]
        %v488 = vld [vmem:[%s232 + $0x528] sm:$0xff]
        %v489 = vld [vmem:[%s232 + $0x530] sm:$0xff]
        %v490 = vld [vmem:[%s232 + $0x538] sm:$0xff]
        %v491 = vld [vmem:[%s232 + $0x540] sm:$0xff]
        %v492 = vld [vmem:[%s232 + $0x548] sm:$0xff]
        %v493 = vld [vmem:[%s232 + $0x550] sm:$0xff]
        %v494 = vld [vmem:[%s232 + $0x558] sm:$0xff]
        %v495 = vld [vmem:[%s232 + $0x560] sm:$0xff]
        %v496 = vld [vmem:[%s232 + $0x568] sm:$0xff]
        %v497 = vld [vmem:[%s232 + $0x570] sm:$0xff]
        %v498 = vld [vmem:[%s232 + $0x578] sm:$0xff]
        %v499 = vld [vmem:[%s232 + $0x580] sm:$0xff]
        %v500 = vld [vmem:[%s232 + $0x588] sm:$0xff]
        %v501 = vld [vmem:[%s232 + $0x590] sm:$0xff]
        %v502 = vld [vmem:[%s232 + $0x598] sm:$0xff]
        %v503 = vld [vmem:[%s232 + $0x5a0] sm:$0xff]
        %v504 = vld [vmem:[%s232 + $0x5a8] sm:$0xff]
        %v505 = vld [vmem:[%s232 + $0x5b0] sm:$0xff]
        %v506 = vld [vmem:[%s232 + $0x5b8] sm:$0xff]
        %v507 = vld [vmem:[%s232 + $0x5c0] sm:$0xff]
        %v508 = vld [vmem:[%s232 + $0x5c8] sm:$0xff]
        %v509 = vld [vmem:[%s232 + $0x5d0] sm:$0xff]
        %v510 = vld [vmem:[%s232 + $0x5d8] sm:$0xff]
        %v511 = vld [vmem:[%s232 + $0x5e0] sm:$0xff]
        %v512 = vld [vmem:[%s232 + $0x5e8] sm:$0xff]
        %v513 = vld [vmem:[%s232 + $0x5f0] sm:$0xff]
        %v514 = vld [vmem:[%s232 + $0x5f8] sm:$0xff]
        %v515 = vld [vmem:[%s232 + $0x600] sm:$0xff]
        %v516 = vld [vmem:[%s232 + $0x608] sm:$0xff]
        %v517 = vld [vmem:[%s232 + $0x610] sm:$0xff]
        %v518 = vld [vmem:[%s232 + $0x618] sm:$0xff]
        %v519 = vld [vmem:[%s232 + $0x620] sm:$0xff]
        %v520 = vld [vmem:[%s232 + $0x628] sm:$0xff]
        %v521 = vld [vmem:[%s232 + $0x630] sm:$0xff]
        %v522 = vld [vmem:[%s232 + $0x638] sm:$0xff]
        %v523 = vld [vmem:[%s232 + $0x640] sm:$0xff]
        %v524 = vld [vmem:[%s232 + $0x648] sm:$0xff]
        %v525 = vld [vmem:[%s232 + $0x650] sm:$0xff]
        %v526 = vld [vmem:[%s232 + $0x658] sm:$0xff]
        %v527 = vld [vmem:[%s232 + $0x660] sm:$0xff]
        %v528 = vld [vmem:[%s232 + $0x668] sm:$0xff]
        %v529 = vld [vmem:[%s232 + $0x670] sm:$0xff]
        %v530 = vld [vmem:[%s232 + $0x678] sm:$0xff]
        %v531 = vld [vmem:[%s232 + $0x680] sm:$0xff]
        %v532 = vld [vmem:[%s232 + $0x688] sm:$0xff]
        %v533 = vld [vmem:[%s232 + $0x690] sm:$0xff]
        %v534 = vld [vmem:[%s232 + $0x698] sm:$0xff]
        %v535 = vld [vmem:[%s232 + $0x6a0] sm:$0xff]
        %v536 = vld [vmem:[%s232 + $0x6a8] sm:$0xff]
        %v537 = vld [vmem:[%s232 + $0x6b0] sm:$0xff]
        %v538 = vld [vmem:[%s232 + $0x6b8] sm:$0xff]
        %v539 = vld [vmem:[%s232 + $0x6c0] sm:$0xff]
        %v540 = vld [vmem:[%s232 + $0x6c8] sm:$0xff]
        %v541 = vld [vmem:[%s232 + $0x6d0] sm:$0xff]
        %v542 = vld [vmem:[%s232 + $0x6d8] sm:$0xff]
        %v543 = vld [vmem:[%s232 + $0x6e0] sm:$0xff]
        %v544 = vld [vmem:[%s232 + $0x6e8] sm:$0xff]
        %v545 = vld [vmem:[%s232 + $0x6f0] sm:$0xff]
        %v546 = vld [vmem:[%s232 + $0x6f8] sm:$0xff]
        %v547 = vld [vmem:[%s232 + $0x700] sm:$0xff]
        %v548 = vld [vmem:[%s232 + $0x708] sm:$0xff]
        %v549 = vld [vmem:[%s232 + $0x710] sm:$0xff]
        %v550 = vld [vmem:[%s232 + $0x718] sm:$0xff]
        %v551 = vld [vmem:[%s232 + $0x720] sm:$0xff]
        %v552 = vld [vmem:[%s232 + $0x728] sm:$0xff]
        %v553 = vld [vmem:[%s232 + $0x730] sm:$0xff]
        %v554 = vld [vmem:[%s232 + $0x738] sm:$0xff]
        %v555 = vld [vmem:[%s232 + $0x740] sm:$0xff]
        %v556 = vld [vmem:[%s232 + $0x748] sm:$0xff]
        %v557 = vld [vmem:[%s232 + $0x750] sm:$0xff]
        %v558 = vld [vmem:[%s232 + $0x758] sm:$0xff]
        %v559 = vld [vmem:[%s232 + $0x760] sm:$0xff]
        %v560 = vld [vmem:[%s232 + $0x768] sm:$0xff]
        %v561 = vld [vmem:[%s232 + $0x770] sm:$0xff]
        %v562 = vld [vmem:[%s232 + $0x778] sm:$0xff]
        %v563 = vld [vmem:[%s232 + $0x780] sm:$0xff]
        %v564 = vld [vmem:[%s232 + $0x788] sm:$0xff]
        %v565 = vld [vmem:[%s232 + $0x790] sm:$0xff]
        %v566 = vld [vmem:[%s232 + $0x798] sm:$0xff]
        %v567 = vld [vmem:[%s232 + $0x7a0] sm:$0xff]
        %v568 = vld [vmem:[%s232 + $0x7a8] sm:$0xff]
        %v569 = vld [vmem:[%s232 + $0x7b0] sm:$0xff]
        %v570 = vld [vmem:[%s232 + $0x7b8] sm:$0xff]
        %v571 = vld [vmem:[%s232 + $0x7c0] sm:$0xff]
        %v572 = vld [vmem:[%s232 + $0x7c8] sm:$0xff]
        %v573 = vld [vmem:[%s232 + $0x7d0] sm:$0xff]
        %v574 = vld [vmem:[%s232 + $0x7d8] sm:$0xff]
        %v575 = vld [vmem:[%s232 + $0x7e0] sm:$0xff]
        %v576 = vld [vmem:[%s232 + $0x7e8] sm:$0xff]
        %v577 = vld [vmem:[%s232 + $0x7f0] sm:$0xff]
        %v578 = vld [vmem:[%s232 + $0x7f8] sm:$0xff]
        %v583 = vunpack.c.l.b16 %v319
        %v584 = vunpack.c.h.b16 %v319
        %v585 = vunpack.c.l.b16 %v320
        %v586 = vunpack.c.h.b16 %v320
        %v587 = vunpack.c.l.b16 %v321
        %v588 = vunpack.c.h.b16 %v321
        %v589 = vunpack.c.l.b16 %v322
        %v590 = vunpack.c.h.b16 %v322
        %v591 = vpack.c.b16 %v583, %v583
        %v592 = vpack.c.b16 %v584, %v584
        %v593 = vpack.c.b16 %v585, %v585
        %v594 = vpack.c.b16 %v586, %v586
        %v595 = vpack.c.b16 %v587, %v587
        %v596 = vpack.c.b16 %v588, %v588
        %v597 = vpack.c.b16 %v589, %v589
        %v598 = vpack.c.b16 %v590, %v590
        %v863 = vunpack.c.l.b16 %v323
        %v864 = vunpack.c.h.b16 %v323
        %v865 = vunpack.c.l.b16 %v324
        %v866 = vunpack.c.h.b16 %v324
        %v867 = vunpack.c.l.b16 %v325
        %v868 = vunpack.c.h.b16 %v325
        %v869 = vunpack.c.l.b16 %v326
        %v870 = vunpack.c.h.b16 %v326
        %v871 = vunpack.c.l.b16 %v327
        %v872 = vunpack.c.h.b16 %v327
        %v873 = vunpack.c.l.b16 %v328
        %v874 = vunpack.c.h.b16 %v328
        %v875 = vunpack.c.l.b16 %v329
        %v876 = vunpack.c.h.b16 %v329
        %v877 = vunpack.c.l.b16 %v330
        %v878 = vunpack.c.h.b16 %v330
        %v879 = vunpack.c.l.b16 %v331
        %v880 = vunpack.c.h.b16 %v331
        %v881 = vunpack.c.l.b16 %v332
        %v882 = vunpack.c.h.b16 %v332
        %v883 = vunpack.c.l.b16 %v333
        %v884 = vunpack.c.h.b16 %v333
        %v885 = vunpack.c.l.b16 %v334
        %v886 = vunpack.c.h.b16 %v334
        %v887 = vunpack.c.l.b16 %v335
        %v888 = vunpack.c.h.b16 %v335
        %v889 = vunpack.c.l.b16 %v336
        %v890 = vunpack.c.h.b16 %v336
        %v891 = vunpack.c.l.b16 %v337
        %v892 = vunpack.c.h.b16 %v337
        %v893 = vunpack.c.l.b16 %v338
        %v894 = vunpack.c.h.b16 %v338
        %v895 = vunpack.c.l.b16 %v339
        %v896 = vunpack.c.h.b16 %v339
        %v897 = vunpack.c.l.b16 %v340
        %v898 = vunpack.c.h.b16 %v340
        %v899 = vunpack.c.l.b16 %v341
        %v900 = vunpack.c.h.b16 %v341
        %v901 = vunpack.c.l.b16 %v342
        %v902 = vunpack.c.h.b16 %v342
        %v903 = vunpack.c.l.b16 %v343
        %v904 = vunpack.c.h.b16 %v343
        %v905 = vunpack.c.l.b16 %v344
        %v906 = vunpack.c.h.b16 %v344
        %v907 = vunpack.c.l.b16 %v345
        %v908 = vunpack.c.h.b16 %v345
        %v909 = vunpack.c.l.b16 %v346
        %v910 = vunpack.c.h.b16 %v346
        %v911 = vunpack.c.l.b16 %v347
        %v912 = vunpack.c.h.b16 %v347
        %v913 = vunpack.c.l.b16 %v348
        %v914 = vunpack.c.h.b16 %v348
        %v915 = vunpack.c.l.b16 %v349
        %v916 = vunpack.c.h.b16 %v349
        %v917 = vunpack.c.l.b16 %v350
        %v918 = vunpack.c.h.b16 %v350
        %v919 = vunpack.c.l.b16 %v351
        %v920 = vunpack.c.h.b16 %v351
        %v921 = vunpack.c.l.b16 %v352
        %v922 = vunpack.c.h.b16 %v352
        %v923 = vunpack.c.l.b16 %v353
        %v924 = vunpack.c.h.b16 %v353
        %v925 = vunpack.c.l.b16 %v354
        %v926 = vunpack.c.h.b16 %v354
        %v927 = vunpack.c.l.b16 %v355
        %v928 = vunpack.c.h.b16 %v355
        %v929 = vunpack.c.l.b16 %v356
        %v930 = vunpack.c.h.b16 %v356
        %v931 = vunpack.c.l.b16 %v357
        %v932 = vunpack.c.h.b16 %v357
        %v933 = vunpack.c.l.b16 %v358
        %v934 = vunpack.c.h.b16 %v358
        %v935 = vunpack.c.l.b16 %v359
        %v936 = vunpack.c.h.b16 %v359
        %v937 = vunpack.c.l.b16 %v360
        %v938 = vunpack.c.h.b16 %v360
        %v939 = vunpack.c.l.b16 %v361
        %v940 = vunpack.c.h.b16 %v361
        %v941 = vunpack.c.l.b16 %v362
        %v942 = vunpack.c.h.b16 %v362
        %v943 = vunpack.c.l.b16 %v363
        %v944 = vunpack.c.h.b16 %v363
        %v945 = vunpack.c.l.b16 %v364
        %v946 = vunpack.c.h.b16 %v364
        %v947 = vunpack.c.l.b16 %v365
        %v948 = vunpack.c.h.b16 %v365
        %v949 = vunpack.c.l.b16 %v366
        %v950 = vunpack.c.h.b16 %v366
        %v951 = vunpack.c.l.b16 %v367
        %v952 = vunpack.c.h.b16 %v367
        %v953 = vunpack.c.l.b16 %v368
        %v954 = vunpack.c.h.b16 %v368
        %v955 = vunpack.c.l.b16 %v369
        %v956 = vunpack.c.h.b16 %v369
        %v957 = vunpack.c.l.b16 %v370
        %v958 = vunpack.c.h.b16 %v370
        %v959 = vunpack.c.l.b16 %v371
        %v960 = vunpack.c.h.b16 %v371
        %v961 = vunpack.c.l.b16 %v372
        %v962 = vunpack.c.h.b16 %v372
        %v963 = vunpack.c.l.b16 %v373
        %v964 = vunpack.c.h.b16 %v373
        %v965 = vunpack.c.l.b16 %v374
        %v966 = vunpack.c.h.b16 %v374
        %v967 = vunpack.c.l.b16 %v375
        %v968 = vunpack.c.h.b16 %v375
        %v969 = vunpack.c.l.b16 %v376
        %v970 = vunpack.c.h.b16 %v376
        %v971 = vunpack.c.l.b16 %v377
        %v972 = vunpack.c.h.b16 %v377
        %v973 = vunpack.c.l.b16 %v378
        %v974 = vunpack.c.h.b16 %v378
        %v975 = vunpack.c.l.b16 %v379
        %v976 = vunpack.c.h.b16 %v379
        %v977 = vunpack.c.l.b16 %v380
        %v978 = vunpack.c.h.b16 %v380
        %v979 = vunpack.c.l.b16 %v381
        %v980 = vunpack.c.h.b16 %v381
        %v981 = vunpack.c.l.b16 %v382
        %v982 = vunpack.c.h.b16 %v382
        %v983 = vunpack.c.l.b16 %v383
        %v984 = vunpack.c.h.b16 %v383
        %v985 = vunpack.c.l.b16 %v384
        %v986 = vunpack.c.h.b16 %v384
        %v987 = vunpack.c.l.b16 %v385
        %v988 = vunpack.c.h.b16 %v385
        %v989 = vunpack.c.l.b16 %v386
        %v990 = vunpack.c.h.b16 %v386
        %v991 = vunpack.c.l.b16 %v387
        %v992 = vunpack.c.h.b16 %v387
        %v993 = vunpack.c.l.b16 %v388
        %v994 = vunpack.c.h.b16 %v388
        %v995 = vunpack.c.l.b16 %v389
        %v996 = vunpack.c.h.b16 %v389
        %v997 = vunpack.c.l.b16 %v390
        %v998 = vunpack.c.h.b16 %v390
        %v999 = vunpack.c.l.b16 %v391
        %v1000 = vunpack.c.h.b16 %v391
        %v1001 = vunpack.c.l.b16 %v392
        %v1002 = vunpack.c.h.b16 %v392
        %v1003 = vunpack.c.l.b16 %v393
        %v1004 = vunpack.c.h.b16 %v393
        %v1005 = vunpack.c.l.b16 %v394
        %v1006 = vunpack.c.h.b16 %v394
        %v1007 = vunpack.c.l.b16 %v395
        %v1008 = vunpack.c.h.b16 %v395
        %v1009 = vunpack.c.l.b16 %v396
        %v1010 = vunpack.c.h.b16 %v396
        %v1011 = vunpack.c.l.b16 %v397
        %v1012 = vunpack.c.h.b16 %v397
        %v1013 = vunpack.c.l.b16 %v398
        %v1014 = vunpack.c.h.b16 %v398
        %v1015 = vunpack.c.l.b16 %v399
        %v1016 = vunpack.c.h.b16 %v399
        %v1017 = vunpack.c.l.b16 %v400
        %v1018 = vunpack.c.h.b16 %v400
        %v1019 = vunpack.c.l.b16 %v401
        %v1020 = vunpack.c.h.b16 %v401
        %v1021 = vunpack.c.l.b16 %v402
        %v1022 = vunpack.c.h.b16 %v402
        %v1023 = vunpack.c.l.b16 %v403
        %v1024 = vunpack.c.h.b16 %v403
        %v1025 = vunpack.c.l.b16 %v404
        %v1026 = vunpack.c.h.b16 %v404
        %v1027 = vunpack.c.l.b16 %v405
        %v1028 = vunpack.c.h.b16 %v405
        %v1029 = vunpack.c.l.b16 %v406
        %v1030 = vunpack.c.h.b16 %v406
        %v1031 = vunpack.c.l.b16 %v407
        %v1032 = vunpack.c.h.b16 %v407
        %v1033 = vunpack.c.l.b16 %v408
        %v1034 = vunpack.c.h.b16 %v408
        %v1035 = vunpack.c.l.b16 %v409
        %v1036 = vunpack.c.h.b16 %v409
        %v1037 = vunpack.c.l.b16 %v410
        %v1038 = vunpack.c.h.b16 %v410
        %v1039 = vunpack.c.l.b16 %v411
        %v1040 = vunpack.c.h.b16 %v411
        %v1041 = vunpack.c.l.b16 %v412
        %v1042 = vunpack.c.h.b16 %v412
        %v1043 = vunpack.c.l.b16 %v413
        %v1044 = vunpack.c.h.b16 %v413
        %v1045 = vunpack.c.l.b16 %v414
        %v1046 = vunpack.c.h.b16 %v414
        %v1047 = vunpack.c.l.b16 %v415
        %v1048 = vunpack.c.h.b16 %v415
        %v1049 = vunpack.c.l.b16 %v416
        %v1050 = vunpack.c.h.b16 %v416
        %v1051 = vunpack.c.l.b16 %v417
        %v1052 = vunpack.c.h.b16 %v417
        %v1053 = vunpack.c.l.b16 %v418
        %v1054 = vunpack.c.h.b16 %v418
        %v1055 = vunpack.c.l.b16 %v419
        %v1056 = vunpack.c.h.b16 %v419
        %v1057 = vunpack.c.l.b16 %v420
        %v1058 = vunpack.c.h.b16 %v420
        %v1059 = vunpack.c.l.b16 %v421
        %v1060 = vunpack.c.h.b16 %v421
        %v1061 = vunpack.c.l.b16 %v422
        %v1062 = vunpack.c.h.b16 %v422
        %v1063 = vunpack.c.l.b16 %v423
        %v1064 = vunpack.c.h.b16 %v423
        %v1065 = vunpack.c.l.b16 %v424
        %v1066 = vunpack.c.h.b16 %v424
        %v1067 = vunpack.c.l.b16 %v425
        %v1068 = vunpack.c.h.b16 %v425
        %v1069 = vunpack.c.l.b16 %v426
        %v1070 = vunpack.c.h.b16 %v426
        %v1071 = vunpack.c.l.b16 %v427
        %v1072 = vunpack.c.h.b16 %v427
        %v1073 = vunpack.c.l.b16 %v428
        %v1074 = vunpack.c.h.b16 %v428
        %v1075 = vunpack.c.l.b16 %v429
        %v1076 = vunpack.c.h.b16 %v429
        %v1077 = vunpack.c.l.b16 %v430
        %v1078 = vunpack.c.h.b16 %v430
        %v1079 = vunpack.c.l.b16 %v431
        %v1080 = vunpack.c.h.b16 %v431
        %v1081 = vunpack.c.l.b16 %v432
        %v1082 = vunpack.c.h.b16 %v432
        %v1083 = vunpack.c.l.b16 %v433
        %v1084 = vunpack.c.h.b16 %v433
        %v1085 = vunpack.c.l.b16 %v434
        %v1086 = vunpack.c.h.b16 %v434
        %v1087 = vunpack.c.l.b16 %v435
        %v1088 = vunpack.c.h.b16 %v435
        %v1089 = vunpack.c.l.b16 %v436
        %v1090 = vunpack.c.h.b16 %v436
        %v1091 = vunpack.c.l.b16 %v437
        %v1092 = vunpack.c.h.b16 %v437
        %v1093 = vunpack.c.l.b16 %v438
        %v1094 = vunpack.c.h.b16 %v438
        %v1095 = vunpack.c.l.b16 %v439
        %v1096 = vunpack.c.h.b16 %v439
        %v1097 = vunpack.c.l.b16 %v440
        %v1098 = vunpack.c.h.b16 %v440
        %v1099 = vunpack.c.l.b16 %v441
        %v1100 = vunpack.c.h.b16 %v441
        %v1101 = vunpack.c.l.b16 %v442
        %v1102 = vunpack.c.h.b16 %v442
        %v1103 = vunpack.c.l.b16 %v443
        %v1104 = vunpack.c.h.b16 %v443
        %v1105 = vunpack.c.l.b16 %v444
        %v1106 = vunpack.c.h.b16 %v444
        %v1107 = vunpack.c.l.b16 %v445
        %v1108 = vunpack.c.h.b16 %v445
        %v1109 = vunpack.c.l.b16 %v446
        %v1110 = vunpack.c.h.b16 %v446
        %v1111 = vunpack.c.l.b16 %v447
        %v1112 = vunpack.c.h.b16 %v447
        %v1113 = vunpack.c.l.b16 %v448
        %v1114 = vunpack.c.h.b16 %v448
        %v1115 = vunpack.c.l.b16 %v449
        %v1116 = vunpack.c.h.b16 %v449
        %v1117 = vunpack.c.l.b16 %v450
        %v1118 = vunpack.c.h.b16 %v450
        %v1119 = vunpack.c.l.b16 %v451
        %v1120 = vunpack.c.h.b16 %v451
        %v1121 = vunpack.c.l.b16 %v452
        %v1122 = vunpack.c.h.b16 %v452
        %v1123 = vunpack.c.l.b16 %v453
        %v1124 = vunpack.c.h.b16 %v453
        %v1125 = vunpack.c.l.b16 %v454
        %v1126 = vunpack.c.h.b16 %v454
        %v1127 = vunpack.c.l.b16 %v455
        %v1128 = vunpack.c.h.b16 %v455
        %v1129 = vunpack.c.l.b16 %v456
        %v1130 = vunpack.c.h.b16 %v456
        %v1131 = vunpack.c.l.b16 %v457
        %v1132 = vunpack.c.h.b16 %v457
        %v1133 = vunpack.c.l.b16 %v458
        %v1134 = vunpack.c.h.b16 %v458
        %v1135 = vunpack.c.l.b16 %v459
        %v1136 = vunpack.c.h.b16 %v459
        %v1137 = vunpack.c.l.b16 %v460
        %v1138 = vunpack.c.h.b16 %v460
        %v1139 = vunpack.c.l.b16 %v461
        %v1140 = vunpack.c.h.b16 %v461
        %v1141 = vunpack.c.l.b16 %v462
        %v1142 = vunpack.c.h.b16 %v462
        %v1143 = vunpack.c.l.b16 %v463
        %v1144 = vunpack.c.h.b16 %v463
        %v1145 = vunpack.c.l.b16 %v464
        %v1146 = vunpack.c.h.b16 %v464
        %v1147 = vunpack.c.l.b16 %v465
        %v1148 = vunpack.c.h.b16 %v465
        %v1149 = vunpack.c.l.b16 %v466
        %v1150 = vunpack.c.h.b16 %v466
        %v1151 = vunpack.c.l.b16 %v467
        %v1152 = vunpack.c.h.b16 %v467
        %v1153 = vunpack.c.l.b16 %v468
        %v1154 = vunpack.c.h.b16 %v468
        %v1155 = vunpack.c.l.b16 %v469
        %v1156 = vunpack.c.h.b16 %v469
        %v1157 = vunpack.c.l.b16 %v470
        %v1158 = vunpack.c.h.b16 %v470
        %v1159 = vunpack.c.l.b16 %v471
        %v1160 = vunpack.c.h.b16 %v471
        %v1161 = vunpack.c.l.b16 %v472
        %v1162 = vunpack.c.h.b16 %v472
        %v1163 = vunpack.c.l.b16 %v473
        %v1164 = vunpack.c.h.b16 %v473
        %v1165 = vunpack.c.l.b16 %v474
        %v1166 = vunpack.c.h.b16 %v474
        %v1167 = vunpack.c.l.b16 %v475
        %v1168 = vunpack.c.h.b16 %v475
        %v1169 = vunpack.c.l.b16 %v476
        %v1170 = vunpack.c.h.b16 %v476
        %v1171 = vunpack.c.l.b16 %v477
        %v1172 = vunpack.c.h.b16 %v477
        %v1173 = vunpack.c.l.b16 %v478
        %v1174 = vunpack.c.h.b16 %v478
        %v1175 = vunpack.c.l.b16 %v479
        %v1176 = vunpack.c.h.b16 %v479
        %v1177 = vunpack.c.l.b16 %v480
        %v1178 = vunpack.c.h.b16 %v480
        %v1179 = vunpack.c.l.b16 %v481
        %v1180 = vunpack.c.h.b16 %v481
        %v1181 = vunpack.c.l.b16 %v482
        %v1182 = vunpack.c.h.b16 %v482
        %v1183 = vunpack.c.l.b16 %v483
        %v1184 = vunpack.c.h.b16 %v483
        %v1185 = vunpack.c.l.b16 %v484
        %v1186 = vunpack.c.h.b16 %v484
        %v1187 = vunpack.c.l.b16 %v485
        %v1188 = vunpack.c.h.b16 %v485
        %v1189 = vunpack.c.l.b16 %v486
        %v1190 = vunpack.c.h.b16 %v486
        %v1191 = vunpack.c.l.b16 %v487
        %v1192 = vunpack.c.h.b16 %v487
        %v1193 = vunpack.c.l.b16 %v488
        %v1194 = vunpack.c.h.b16 %v488
        %v1195 = vunpack.c.l.b16 %v489
        %v1196 = vunpack.c.h.b16 %v489
        %v1197 = vunpack.c.l.b16 %v490
        %v1198 = vunpack.c.h.b16 %v490
        %v1199 = vunpack.c.l.b16 %v491
        %v1200 = vunpack.c.h.b16 %v491
        %v1201 = vunpack.c.l.b16 %v492
        %v1202 = vunpack.c.h.b16 %v492
        %v1203 = vunpack.c.l.b16 %v493
        %v1204 = vunpack.c.h.b16 %v493
        %v1205 = vunpack.c.l.b16 %v494
        %v1206 = vunpack.c.h.b16 %v494
        %v1207 = vunpack.c.l.b16 %v495
        %v1208 = vunpack.c.h.b16 %v495
        %v1209 = vunpack.c.l.b16 %v496
        %v1210 = vunpack.c.h.b16 %v496
        %v1211 = vunpack.c.l.b16 %v497
        %v1212 = vunpack.c.h.b16 %v497
        %v1213 = vunpack.c.l.b16 %v498
        %v1214 = vunpack.c.h.b16 %v498
        %v1215 = vunpack.c.l.b16 %v499
        %v1216 = vunpack.c.h.b16 %v499
        %v1217 = vunpack.c.l.b16 %v500
        %v1218 = vunpack.c.h.b16 %v500
        %v1219 = vunpack.c.l.b16 %v501
        %v1220 = vunpack.c.h.b16 %v501
        %v1221 = vunpack.c.l.b16 %v502
        %v1222 = vunpack.c.h.b16 %v502
        %v1223 = vunpack.c.l.b16 %v503
        %v1224 = vunpack.c.h.b16 %v503
        %v1225 = vunpack.c.l.b16 %v504
        %v1226 = vunpack.c.h.b16 %v504
        %v1227 = vunpack.c.l.b16 %v505
        %v1228 = vunpack.c.h.b16 %v505
        %v1229 = vunpack.c.l.b16 %v506
        %v1230 = vunpack.c.h.b16 %v506
        %v1231 = vunpack.c.l.b16 %v507
        %v1232 = vunpack.c.h.b16 %v507
        %v1233 = vunpack.c.l.b16 %v508
        %v1234 = vunpack.c.h.b16 %v508
        %v1235 = vunpack.c.l.b16 %v509
        %v1236 = vunpack.c.h.b16 %v509
        %v1237 = vunpack.c.l.b16 %v510
        %v1238 = vunpack.c.h.b16 %v510
        %v1239 = vunpack.c.l.b16 %v511
        %v1240 = vunpack.c.h.b16 %v511
        %v1241 = vunpack.c.l.b16 %v512
        %v1242 = vunpack.c.h.b16 %v512
        %v1243 = vunpack.c.l.b16 %v513
        %v1244 = vunpack.c.h.b16 %v513
        %v1245 = vunpack.c.l.b16 %v514
        %v1246 = vunpack.c.h.b16 %v514
        %v1247 = vunpack.c.l.b16 %v515
        %v1248 = vunpack.c.h.b16 %v515
        %v1249 = vunpack.c.l.b16 %v516
        %v1250 = vunpack.c.h.b16 %v516
        %v1251 = vunpack.c.l.b16 %v517
        %v1252 = vunpack.c.h.b16 %v517
        %v1253 = vunpack.c.l.b16 %v518
        %v1254 = vunpack.c.h.b16 %v518
        %v1255 = vunpack.c.l.b16 %v519
        %v1256 = vunpack.c.h.b16 %v519
        %v1257 = vunpack.c.l.b16 %v520
        %v1258 = vunpack.c.h.b16 %v520
        %v1259 = vunpack.c.l.b16 %v521
        %v1260 = vunpack.c.h.b16 %v521
        %v1261 = vunpack.c.l.b16 %v522
        %v1262 = vunpack.c.h.b16 %v522
        %v1263 = vunpack.c.l.b16 %v523
        %v1264 = vunpack.c.h.b16 %v523
        %v1265 = vunpack.c.l.b16 %v524
        %v1266 = vunpack.c.h.b16 %v524
        %v1267 = vunpack.c.l.b16 %v525
        %v1268 = vunpack.c.h.b16 %v525
        %v1269 = vunpack.c.l.b16 %v526
        %v1270 = vunpack.c.h.b16 %v526
        %v1271 = vunpack.c.l.b16 %v527
        %v1272 = vunpack.c.h.b16 %v527
        %v1273 = vunpack.c.l.b16 %v528
        %v1274 = vunpack.c.h.b16 %v528
        %v1275 = vunpack.c.l.b16 %v529
        %v1276 = vunpack.c.h.b16 %v529
        %v1277 = vunpack.c.l.b16 %v530
        %v1278 = vunpack.c.h.b16 %v530
        %v1279 = vunpack.c.l.b16 %v531
        %v1280 = vunpack.c.h.b16 %v531
        %v1281 = vunpack.c.l.b16 %v532
        %v1282 = vunpack.c.h.b16 %v532
        %v1283 = vunpack.c.l.b16 %v533
        %v1284 = vunpack.c.h.b16 %v533
        %v1285 = vunpack.c.l.b16 %v534
        %v1286 = vunpack.c.h.b16 %v534
        %v1287 = vunpack.c.l.b16 %v535
        %v1288 = vunpack.c.h.b16 %v535
        %v1289 = vunpack.c.l.b16 %v536
        %v1290 = vunpack.c.h.b16 %v536
        %v1291 = vunpack.c.l.b16 %v537
        %v1292 = vunpack.c.h.b16 %v537
        %v1293 = vunpack.c.l.b16 %v538
        %v1294 = vunpack.c.h.b16 %v538
        %v1295 = vunpack.c.l.b16 %v539
        %v1296 = vunpack.c.h.b16 %v539
        %v1297 = vunpack.c.l.b16 %v540
        %v1298 = vunpack.c.h.b16 %v540
        %v1299 = vunpack.c.l.b16 %v541
        %v1300 = vunpack.c.h.b16 %v541
        %v1301 = vunpack.c.l.b16 %v542
        %v1302 = vunpack.c.h.b16 %v542
        %v1303 = vunpack.c.l.b16 %v543
        %v1304 = vunpack.c.h.b16 %v543
        %v1305 = vunpack.c.l.b16 %v544
        %v1306 = vunpack.c.h.b16 %v544
        %v1307 = vunpack.c.l.b16 %v545
        %v1308 = vunpack.c.h.b16 %v545
        %v1309 = vunpack.c.l.b16 %v546
        %v1310 = vunpack.c.h.b16 %v546
        %v1311 = vunpack.c.l.b16 %v547
        %v1312 = vunpack.c.h.b16 %v547
        %v1313 = vunpack.c.l.b16 %v548
        %v1314 = vunpack.c.h.b16 %v548
        %v1315 = vunpack.c.l.b16 %v549
        %v1316 = vunpack.c.h.b16 %v549
        %v1317 = vunpack.c.l.b16 %v550
        %v1318 = vunpack.c.h.b16 %v550
        %v1319 = vunpack.c.l.b16 %v551
        %v1320 = vunpack.c.h.b16 %v551
        %v1321 = vunpack.c.l.b16 %v552
        %v1322 = vunpack.c.h.b16 %v552
        %v1323 = vunpack.c.l.b16 %v553
        %v1324 = vunpack.c.h.b16 %v553
        %v1325 = vunpack.c.l.b16 %v554
        %v1326 = vunpack.c.h.b16 %v554
        %v1327 = vunpack.c.l.b16 %v555
        %v1328 = vunpack.c.h.b16 %v555
        %v1329 = vunpack.c.l.b16 %v556
        %v1330 = vunpack.c.h.b16 %v556
        %v1331 = vunpack.c.l.b16 %v557
        %v1332 = vunpack.c.h.b16 %v557
        %v1333 = vunpack.c.l.b16 %v558
        %v1334 = vunpack.c.h.b16 %v558
        %v1335 = vunpack.c.l.b16 %v559
        %v1336 = vunpack.c.h.b16 %v559
        %v1337 = vunpack.c.l.b16 %v560
        %v1338 = vunpack.c.h.b16 %v560
        %v1339 = vunpack.c.l.b16 %v561
        %v1340 = vunpack.c.h.b16 %v561
        %v1341 = vunpack.c.l.b16 %v562
        %v1342 = vunpack.c.h.b16 %v562
        %v1343 = vunpack.c.l.b16 %v563
        %v1344 = vunpack.c.h.b16 %v563
        %v1345 = vunpack.c.l.b16 %v564
        %v1346 = vunpack.c.h.b16 %v564
        %v1347 = vunpack.c.l.b16 %v565
        %v1348 = vunpack.c.h.b16 %v565
        %v1349 = vunpack.c.l.b16 %v566
        %v1350 = vunpack.c.h.b16 %v566
        %v1351 = vunpack.c.l.b16 %v567
        %v1352 = vunpack.c.h.b16 %v567
        %v1353 = vunpack.c.l.b16 %v568
        %v1354 = vunpack.c.h.b16 %v568
        %v1355 = vunpack.c.l.b16 %v569
        %v1356 = vunpack.c.h.b16 %v569
        %v1357 = vunpack.c.l.b16 %v570
        %v1358 = vunpack.c.h.b16 %v570
        %v1359 = vunpack.c.l.b16 %v571
        %v1360 = vunpack.c.h.b16 %v571
        %v1361 = vunpack.c.l.b16 %v572
        %v1362 = vunpack.c.h.b16 %v572
        %v1363 = vunpack.c.l.b16 %v573
        %v1364 = vunpack.c.h.b16 %v573
        %v1365 = vunpack.c.l.b16 %v574
        %v1366 = vunpack.c.h.b16 %v574
        %v1367 = vunpack.c.l.b16 %v575
        %v1368 = vunpack.c.h.b16 %v575
        %v1369 = vunpack.c.l.b16 %v576
        %v1370 = vunpack.c.h.b16 %v576
        %v1371 = vunpack.c.l.b16 %v577
        %v1372 = vunpack.c.h.b16 %v577
        %v1373 = vunpack.c.l.b16 %v578
        %v1374 = vunpack.c.h.b16 %v578
        %v1375 = vpack.c.b16 %v867, %v863
        %v1376 = vpack.c.b16 %v868, %v864
        %v1377 = vpack.c.b16 %v869, %v865
        %v1378 = vpack.c.b16 %v870, %v866
        %v1379 = vpack.c.b16 %v875, %v871
        %v1380 = vpack.c.b16 %v876, %v872
        %v1381 = vpack.c.b16 %v877, %v873
        %v1382 = vpack.c.b16 %v878, %v874
        %v1383 = vpack.c.b16 %v883, %v879
        %v1384 = vpack.c.b16 %v884, %v880
        %v1385 = vpack.c.b16 %v885, %v881
        %v1386 = vpack.c.b16 %v886, %v882
        %v1387 = vpack.c.b16 %v891, %v887
        %v1388 = vpack.c.b16 %v892, %v888
        %v1389 = vpack.c.b16 %v893, %v889
        %v1390 = vpack.c.b16 %v894, %v890
        %v1391 = vpack.c.b16 %v899, %v895
        %v1392 = vpack.c.b16 %v900, %v896
        %v1393 = vpack.c.b16 %v901, %v897
        %v1394 = vpack.c.b16 %v902, %v898
        %v1395 = vpack.c.b16 %v907, %v903
        %v1396 = vpack.c.b16 %v908, %v904
        %v1397 = vpack.c.b16 %v909, %v905
        %v1398 = vpack.c.b16 %v910, %v906
        %v1399 = vpack.c.b16 %v915, %v911
        %v1400 = vpack.c.b16 %v916, %v912
        %v1401 = vpack.c.b16 %v917, %v913
        %v1402 = vpack.c.b16 %v918, %v914
        %v1403 = vpack.c.b16 %v923, %v919
        %v1404 = vpack.c.b16 %v924, %v920
        %v1405 = vpack.c.b16 %v925, %v921
        %v1406 = vpack.c.b16 %v926, %v922
        %v1407 = vpack.c.b16 %v931, %v927
        %v1408 = vpack.c.b16 %v932, %v928
        %v1409 = vpack.c.b16 %v933, %v929
        %v1410 = vpack.c.b16 %v934, %v930
        %v1411 = vpack.c.b16 %v939, %v935
        %v1412 = vpack.c.b16 %v940, %v936
        %v1413 = vpack.c.b16 %v941, %v937
        %v1414 = vpack.c.b16 %v942, %v938
        %v1415 = vpack.c.b16 %v947, %v943
        %v1416 = vpack.c.b16 %v948, %v944
        %v1417 = vpack.c.b16 %v949, %v945
        %v1418 = vpack.c.b16 %v950, %v946
        %v1419 = vpack.c.b16 %v955, %v951
        %v1420 = vpack.c.b16 %v956, %v952
        %v1421 = vpack.c.b16 %v957, %v953
        %v1422 = vpack.c.b16 %v958, %v954
        %v1423 = vpack.c.b16 %v963, %v959
        %v1424 = vpack.c.b16 %v964, %v960
        %v1425 = vpack.c.b16 %v965, %v961
        %v1426 = vpack.c.b16 %v966, %v962
        %v1427 = vpack.c.b16 %v971, %v967
        %v1428 = vpack.c.b16 %v972, %v968
        %v1429 = vpack.c.b16 %v973, %v969
        %v1430 = vpack.c.b16 %v974, %v970
        %v1431 = vpack.c.b16 %v979, %v975
        %v1432 = vpack.c.b16 %v980, %v976
        %v1433 = vpack.c.b16 %v981, %v977
        %v1434 = vpack.c.b16 %v982, %v978
        %v1435 = vpack.c.b16 %v987, %v983
        %v1436 = vpack.c.b16 %v988, %v984
        %v1437 = vpack.c.b16 %v989, %v985
        %v1438 = vpack.c.b16 %v990, %v986
        %v1439 = vpack.c.b16 %v995, %v991
        %v1440 = vpack.c.b16 %v996, %v992
        %v1441 = vpack.c.b16 %v997, %v993
        %v1442 = vpack.c.b16 %v998, %v994
        %v1443 = vpack.c.b16 %v1003, %v999
        %v1444 = vpack.c.b16 %v1004, %v1000
        %v1445 = vpack.c.b16 %v1005, %v1001
        %v1446 = vpack.c.b16 %v1006, %v1002
        %v1447 = vpack.c.b16 %v1011, %v1007
        %v1448 = vpack.c.b16 %v1012, %v1008
        %v1449 = vpack.c.b16 %v1013, %v1009
        %v1450 = vpack.c.b16 %v1014, %v1010
        %v1451 = vpack.c.b16 %v1019, %v1015
        %v1452 = vpack.c.b16 %v1020, %v1016
        %v1453 = vpack.c.b16 %v1021, %v1017
        %v1454 = vpack.c.b16 %v1022, %v1018
        %v1455 = vpack.c.b16 %v1027, %v1023
        %v1456 = vpack.c.b16 %v1028, %v1024
        %v1457 = vpack.c.b16 %v1029, %v1025
        %v1458 = vpack.c.b16 %v1030, %v1026
        %v1459 = vpack.c.b16 %v1035, %v1031
        %v1460 = vpack.c.b16 %v1036, %v1032
        %v1461 = vpack.c.b16 %v1037, %v1033
        %v1462 = vpack.c.b16 %v1038, %v1034
        %v1463 = vpack.c.b16 %v1043, %v1039
        %v1464 = vpack.c.b16 %v1044, %v1040
        %v1465 = vpack.c.b16 %v1045, %v1041
        %v1466 = vpack.c.b16 %v1046, %v1042
        %v1467 = vpack.c.b16 %v1051, %v1047
        %v1468 = vpack.c.b16 %v1052, %v1048
        %v1469 = vpack.c.b16 %v1053, %v1049
        %v1470 = vpack.c.b16 %v1054, %v1050
        %v1471 = vpack.c.b16 %v1059, %v1055
        %v1472 = vpack.c.b16 %v1060, %v1056
        %v1473 = vpack.c.b16 %v1061, %v1057
        %v1474 = vpack.c.b16 %v1062, %v1058
        %v1475 = vpack.c.b16 %v1067, %v1063
        %v1476 = vpack.c.b16 %v1068, %v1064
        %v1477 = vpack.c.b16 %v1069, %v1065
        %v1478 = vpack.c.b16 %v1070, %v1066
        %v1479 = vpack.c.b16 %v1075, %v1071
        %v1480 = vpack.c.b16 %v1076, %v1072
        %v1481 = vpack.c.b16 %v1077, %v1073
        %v1482 = vpack.c.b16 %v1078, %v1074
        %v1483 = vpack.c.b16 %v1083, %v1079
        %v1484 = vpack.c.b16 %v1084, %v1080
        %v1485 = vpack.c.b16 %v1085, %v1081
        %v1486 = vpack.c.b16 %v1086, %v1082
        %v1487 = vpack.c.b16 %v1091, %v1087
        %v1488 = vpack.c.b16 %v1092, %v1088
        %v1489 = vpack.c.b16 %v1093, %v1089
        %v1490 = vpack.c.b16 %v1094, %v1090
        %v1491 = vpack.c.b16 %v1099, %v1095
        %v1492 = vpack.c.b16 %v1100, %v1096
        %v1493 = vpack.c.b16 %v1101, %v1097
        %v1494 = vpack.c.b16 %v1102, %v1098
        %v1495 = vpack.c.b16 %v1107, %v1103
        %v1496 = vpack.c.b16 %v1108, %v1104
        %v1497 = vpack.c.b16 %v1109, %v1105
        %v1498 = vpack.c.b16 %v1110, %v1106
        %v1499 = vpack.c.b16 %v1115, %v1111
        %v1500 = vpack.c.b16 %v1116, %v1112
        %v1501 = vpack.c.b16 %v1117, %v1113
        %v1502 = vpack.c.b16 %v1118, %v1114
        %v1503 = vpack.c.b16 %v1123, %v1119
        %v1504 = vpack.c.b16 %v1124, %v1120
        %v1505 = vpack.c.b16 %v1125, %v1121
        %v1506 = vpack.c.b16 %v1126, %v1122
        %v1507 = vpack.c.b16 %v1131, %v1127
        %v1508 = vpack.c.b16 %v1132, %v1128
        %v1509 = vpack.c.b16 %v1133, %v1129
        %v1510 = vpack.c.b16 %v1134, %v1130
        %v1511 = vpack.c.b16 %v1139, %v1135
        %v1512 = vpack.c.b16 %v1140, %v1136
        %v1513 = vpack.c.b16 %v1141, %v1137
        %v1514 = vpack.c.b16 %v1142, %v1138
        %v1515 = vpack.c.b16 %v1147, %v1143
        %v1516 = vpack.c.b16 %v1148, %v1144
        %v1517 = vpack.c.b16 %v1149, %v1145
        %v1518 = vpack.c.b16 %v1150, %v1146
        %v1519 = vpack.c.b16 %v1155, %v1151
        %v1520 = vpack.c.b16 %v1156, %v1152
        %v1521 = vpack.c.b16 %v1157, %v1153
        %v1522 = vpack.c.b16 %v1158, %v1154
        %v1523 = vpack.c.b16 %v1163, %v1159
        %v1524 = vpack.c.b16 %v1164, %v1160
        %v1525 = vpack.c.b16 %v1165, %v1161
        %v1526 = vpack.c.b16 %v1166, %v1162
        %v1527 = vpack.c.b16 %v1171, %v1167
        %v1528 = vpack.c.b16 %v1172, %v1168
        %v1529 = vpack.c.b16 %v1173, %v1169
        %v1530 = vpack.c.b16 %v1174, %v1170
        %v1531 = vpack.c.b16 %v1179, %v1175
        %v1532 = vpack.c.b16 %v1180, %v1176
        %v1533 = vpack.c.b16 %v1181, %v1177
        %v1534 = vpack.c.b16 %v1182, %v1178
        %v1535 = vpack.c.b16 %v1187, %v1183
        %v1536 = vpack.c.b16 %v1188, %v1184
        %v1537 = vpack.c.b16 %v1189, %v1185
        %v1538 = vpack.c.b16 %v1190, %v1186
        %v1539 = vpack.c.b16 %v1195, %v1191
        %v1540 = vpack.c.b16 %v1196, %v1192
        %v1541 = vpack.c.b16 %v1197, %v1193
        %v1542 = vpack.c.b16 %v1198, %v1194
        %v1543 = vpack.c.b16 %v1203, %v1199
        %v1544 = vpack.c.b16 %v1204, %v1200
        %v1545 = vpack.c.b16 %v1205, %v1201
        %v1546 = vpack.c.b16 %v1206, %v1202
        %v1547 = vpack.c.b16 %v1211, %v1207
        %v1548 = vpack.c.b16 %v1212, %v1208
        %v1549 = vpack.c.b16 %v1213, %v1209
        %v1550 = vpack.c.b16 %v1214, %v1210
        %v1551 = vpack.c.b16 %v1219, %v1215
        %v1552 = vpack.c.b16 %v1220, %v1216
        %v1553 = vpack.c.b16 %v1221, %v1217
        %v1554 = vpack.c.b16 %v1222, %v1218
        %v1555 = vpack.c.b16 %v1227, %v1223
        %v1556 = vpack.c.b16 %v1228, %v1224
        %v1557 = vpack.c.b16 %v1229, %v1225
        %v1558 = vpack.c.b16 %v1230, %v1226
        %v1559 = vpack.c.b16 %v1235, %v1231
        %v1560 = vpack.c.b16 %v1236, %v1232
        %v1561 = vpack.c.b16 %v1237, %v1233
        %v1562 = vpack.c.b16 %v1238, %v1234
        %v1563 = vpack.c.b16 %v1243, %v1239
        %v1564 = vpack.c.b16 %v1244, %v1240
        %v1565 = vpack.c.b16 %v1245, %v1241
        %v1566 = vpack.c.b16 %v1246, %v1242
        %v1567 = vpack.c.b16 %v1251, %v1247
        %v1568 = vpack.c.b16 %v1252, %v1248
        %v1569 = vpack.c.b16 %v1253, %v1249
        %v1570 = vpack.c.b16 %v1254, %v1250
        %v1571 = vpack.c.b16 %v1259, %v1255
        %v1572 = vpack.c.b16 %v1260, %v1256
        %v1573 = vpack.c.b16 %v1261, %v1257
        %v1574 = vpack.c.b16 %v1262, %v1258
        %v1575 = vpack.c.b16 %v1267, %v1263
        %v1576 = vpack.c.b16 %v1268, %v1264
        %v1577 = vpack.c.b16 %v1269, %v1265
        %v1578 = vpack.c.b16 %v1270, %v1266
        %v1579 = vpack.c.b16 %v1275, %v1271
        %v1580 = vpack.c.b16 %v1276, %v1272
        %v1581 = vpack.c.b16 %v1277, %v1273
        %v1582 = vpack.c.b16 %v1278, %v1274
        %v1583 = vpack.c.b16 %v1283, %v1279
        %v1584 = vpack.c.b16 %v1284, %v1280
        %v1585 = vpack.c.b16 %v1285, %v1281
        %v1586 = vpack.c.b16 %v1286, %v1282
        %v1587 = vpack.c.b16 %v1291, %v1287
        %v1588 = vpack.c.b16 %v1292, %v1288
        %v1589 = vpack.c.b16 %v1293, %v1289
        %v1590 = vpack.c.b16 %v1294, %v1290
        %v1591 = vpack.c.b16 %v1299, %v1295
        %v1592 = vpack.c.b16 %v1300, %v1296
        %v1593 = vpack.c.b16 %v1301, %v1297
        %v1594 = vpack.c.b16 %v1302, %v1298
        %v1595 = vpack.c.b16 %v1307, %v1303
        %v1596 = vpack.c.b16 %v1308, %v1304
        %v1597 = vpack.c.b16 %v1309, %v1305
        %v1598 = vpack.c.b16 %v1310, %v1306
        %v1599 = vpack.c.b16 %v1315, %v1311
        %v1600 = vpack.c.b16 %v1316, %v1312
        %v1601 = vpack.c.b16 %v1317, %v1313
        %v1602 = vpack.c.b16 %v1318, %v1314
        %v1603 = vpack.c.b16 %v1323, %v1319
        %v1604 = vpack.c.b16 %v1324, %v1320
        %v1605 = vpack.c.b16 %v1325, %v1321
        %v1606 = vpack.c.b16 %v1326, %v1322
        %v1607 = vpack.c.b16 %v1331, %v1327
        %v1608 = vpack.c.b16 %v1332, %v1328
        %v1609 = vpack.c.b16 %v1333, %v1329
        %v1610 = vpack.c.b16 %v1334, %v1330
        %v1611 = vpack.c.b16 %v1339, %v1335
        %v1612 = vpack.c.b16 %v1340, %v1336
        %v1613 = vpack.c.b16 %v1341, %v1337
        %v1614 = vpack.c.b16 %v1342, %v1338
        %v1615 = vpack.c.b16 %v1347, %v1343
        %v1616 = vpack.c.b16 %v1348, %v1344
        %v1617 = vpack.c.b16 %v1349, %v1345
        %v1618 = vpack.c.b16 %v1350, %v1346
        %v1619 = vpack.c.b16 %v1355, %v1351
        %v1620 = vpack.c.b16 %v1356, %v1352
        %v1621 = vpack.c.b16 %v1357, %v1353
        %v1622 = vpack.c.b16 %v1358, %v1354
        %v1623 = vpack.c.b16 %v1363, %v1359
        %v1624 = vpack.c.b16 %v1364, %v1360
        %v1625 = vpack.c.b16 %v1365, %v1361
        %v1626 = vpack.c.b16 %v1366, %v1362
        %v1627 = vpack.c.b16 %v1371, %v1367
        %v1628 = vpack.c.b16 %v1372, %v1368
        %v1629 = vpack.c.b16 %v1373, %v1369
        %v1630 = vpack.c.b16 %v1374, %v1370
        %1887 = vmatpush.bf16.msra.mxu0 %v1403
        %1888 = vmatpush.bf16.msra.mxu0 %v1399
        %1889 = vmatpush.bf16.msra.mxu0 %v1395
        %1890 = vmatpush.bf16.msra.mxu0 %v1391
        %1891 = vmatpush.bf16.msra.mxu0 %v1387
        %1892 = vmatpush.bf16.msra.mxu0 %v1383
        %1893 = vmatpush.bf16.msra.mxu0 %v1379
        %1894 = vmatpush.bf16.msra.mxu0 %v1375
        %1895 = vmatmul.bf16.gmra.mxu0 %v591
        %v1896 = vpop.f32.mrf.mxu0
        %v1897 = vadd.f32 0.0, %v1896
        %v1898 = vpop.f32.mrf.mxu0
        %1899 = vdwg.mxu0
        %1900 = vmatpush.bf16.msra.mxu0 %v1435
        %1901 = vmatpush.bf16.msra.mxu0 %v1431
        %1902 = vmatpush.bf16.msra.mxu0 %v1427
        %1903 = vmatpush.bf16.msra.mxu0 %v1423
        %1904 = vmatpush.bf16.msra.mxu0 %v1419
        %1905 = vmatpush.bf16.msra.mxu0 %v1415
        %1906 = vmatpush.bf16.msra.mxu0 %v1411
        %1907 = vmatpush.bf16.msra.mxu0 %v1407
        %1908 = vmatmul.bf16.gmra.mxu0 %v592
        %v1909 = vpop.f32.mrf.mxu0
        %v1910 = vadd.f32 %v1897, %v1909
        %v1911 = vpop.f32.mrf.mxu0
        %1912 = vdwg.mxu0
        %1913 = vmatpush.bf16.msra.mxu0 %v1467
        %1914 = vmatpush.bf16.msra.mxu0 %v1463
        %1915 = vmatpush.bf16.msra.mxu0 %v1459
        %1916 = vmatpush.bf16.msra.mxu0 %v1455
        %1917 = vmatpush.bf16.msra.mxu0 %v1451
        %1918 = vmatpush.bf16.msra.mxu0 %v1447
        %1919 = vmatpush.bf16.msra.mxu0 %v1443
        %1920 = vmatpush.bf16.msra.mxu0 %v1439
        %1921 = vmatmul.bf16.gmra.mxu0 %v593
        %v1922 = vpop.f32.mrf.mxu0
        %v1923 = vadd.f32 %v1910, %v1922
        %v1924 = vpop.f32.mrf.mxu0
        %1925 = vdwg.mxu0
        %1926 = vmatpush.bf16.msra.mxu0 %v1499
        %1927 = vmatpush.bf16.msra.mxu0 %v1495
        %1928 = vmatpush.bf16.msra.mxu0 %v1491
        %1929 = vmatpush.bf16.msra.mxu0 %v1487
        %1930 = vmatpush.bf16.msra.mxu0 %v1483
        %1931 = vmatpush.bf16.msra.mxu0 %v1479
        %1932 = vmatpush.bf16.msra.mxu0 %v1475
        %1933 = vmatpush.bf16.msra.mxu0 %v1471
        %1934 = vmatmul.bf16.gmra.mxu0 %v594
        %v1935 = vpop.f32.mrf.mxu0
        %v1936 = vadd.f32 %v1923, %v1935
        %v1937 = vpop.f32.mrf.mxu0
        %1938 = vdwg.mxu0
        %1939 = vmatpush.bf16.msra.mxu0 %v1531
        %1940 = vmatpush.bf16.msra.mxu0 %v1527
        %1941 = vmatpush.bf16.msra.mxu0 %v1523
        %1942 = vmatpush.bf16.msra.mxu0 %v1519
        %1943 = vmatpush.bf16.msra.mxu0 %v1515
        %1944 = vmatpush.bf16.msra.mxu0 %v1511
        %1945 = vmatpush.bf16.msra.mxu0 %v1507
        %1946 = vmatpush.bf16.msra.mxu0 %v1503
        %1947 = vmatmul.bf16.gmra.mxu0 %v595
        %v1948 = vpop.f32.mrf.mxu0
        %v1949 = vadd.f32 %v1936, %v1948
        %v1950 = vpop.f32.mrf.mxu0
        %1951 = vdwg.mxu0
        %1952 = vmatpush.bf16.msra.mxu0 %v1563
        %1953 = vmatpush.bf16.msra.mxu0 %v1559
        %1954 = vmatpush.bf16.msra.mxu0 %v1555
        %1955 = vmatpush.bf16.msra.mxu0 %v1551
        %1956 = vmatpush.bf16.msra.mxu0 %v1547
        %1957 = vmatpush.bf16.msra.mxu0 %v1543
        %1958 = vmatpush.bf16.msra.mxu0 %v1539
        %1959 = vmatpush.bf16.msra.mxu0 %v1535
        %1960 = vmatmul.bf16.gmra.mxu0 %v596
        %v1961 = vpop.f32.mrf.mxu0
        %v1962 = vadd.f32 %v1949, %v1961
        %v1963 = vpop.f32.mrf.mxu0
        %1964 = vdwg.mxu0
        %1965 = vmatpush.bf16.msra.mxu0 %v1595
        %1966 = vmatpush.bf16.msra.mxu0 %v1591
        %1967 = vmatpush.bf16.msra.mxu0 %v1587
        %1968 = vmatpush.bf16.msra.mxu0 %v1583
        %1969 = vmatpush.bf16.msra.mxu0 %v1579
        %1970 = vmatpush.bf16.msra.mxu0 %v1575
        %1971 = vmatpush.bf16.msra.mxu0 %v1571
        %1972 = vmatpush.bf16.msra.mxu0 %v1567
        %1973 = vmatmul.bf16.gmra.mxu0 %v597
        %v1974 = vpop.f32.mrf.mxu0
        %v1975 = vadd.f32 %v1962, %v1974
        %v1976 = vpop.f32.mrf.mxu0
        %1977 = vdwg.mxu0
        %1978 = vmatpush.bf16.msra.mxu0 %v1627
        %1979 = vmatpush.bf16.msra.mxu0 %v1623
        %1980 = vmatpush.bf16.msra.mxu0 %v1619
        %1981 = vmatpush.bf16.msra.mxu0 %v1615
        %1982 = vmatpush.bf16.msra.mxu0 %v1611
        %1983 = vmatpush.bf16.msra.mxu0 %v1607
        %1984 = vmatpush.bf16.msra.mxu0 %v1603
        %1985 = vmatpush.bf16.msra.mxu0 %v1599
        %1986 = vmatmul.bf16.gmra.mxu0 %v598
        %v1987 = vpop.f32.mrf.mxu0
        %v1988 = vadd.f32 %v1975, %v1987
        %v1989 = vpop.f32.mrf.mxu0
        %1990 = vdwg.mxu0
        %1991 = vmatpush.bf16.msra.mxu0 %v1404
        %1992 = vmatpush.bf16.msra.mxu0 %v1400
        %1993 = vmatpush.bf16.msra.mxu0 %v1396
        %1994 = vmatpush.bf16.msra.mxu0 %v1392
        %1995 = vmatpush.bf16.msra.mxu0 %v1388
        %1996 = vmatpush.bf16.msra.mxu0 %v1384
        %1997 = vmatpush.bf16.msra.mxu0 %v1380
        %1998 = vmatpush.bf16.msra.mxu0 %v1376
        %1999 = vmatmul.bf16.gmra.mxu0 %v591
        %v2000 = vpop.f32.mrf.mxu0
        %v2001 = vadd.f32 0.0, %v2000
        %v2002 = vpop.f32.mrf.mxu0
        %2003 = vdwg.mxu0
        %2004 = vmatpush.bf16.msra.mxu0 %v1436
        %2005 = vmatpush.bf16.msra.mxu0 %v1432
        %2006 = vmatpush.bf16.msra.mxu0 %v1428
        %2007 = vmatpush.bf16.msra.mxu0 %v1424
        %2008 = vmatpush.bf16.msra.mxu0 %v1420
        %2009 = vmatpush.bf16.msra.mxu0 %v1416
        %2010 = vmatpush.bf16.msra.mxu0 %v1412
        %2011 = vmatpush.bf16.msra.mxu0 %v1408
        %2012 = vmatmul.bf16.gmra.mxu0 %v592
        %v2013 = vpop.f32.mrf.mxu0
        %v2014 = vadd.f32 %v2001, %v2013
        %v2015 = vpop.f32.mrf.mxu0
        %2016 = vdwg.mxu0
        %2017 = vmatpush.bf16.msra.mxu0 %v1468
        %2018 = vmatpush.bf16.msra.mxu0 %v1464
        %2019 = vmatpush.bf16.msra.mxu0 %v1460
        %2020 = vmatpush.bf16.msra.mxu0 %v1456
        %2021 = vmatpush.bf16.msra.mxu0 %v1452
        %2022 = vmatpush.bf16.msra.mxu0 %v1448
        %2023 = vmatpush.bf16.msra.mxu0 %v1444
        %2024 = vmatpush.bf16.msra.mxu0 %v1440
        %2025 = vmatmul.bf16.gmra.mxu0 %v593
        %v2026 = vpop.f32.mrf.mxu0
        %v2027 = vadd.f32 %v2014, %v2026
        %v2028 = vpop.f32.mrf.mxu0
        %2029 = vdwg.mxu0
        %2030 = vmatpush.bf16.msra.mxu0 %v1500
        %2031 = vmatpush.bf16.msra.mxu0 %v1496
        %2032 = vmatpush.bf16.msra.mxu0 %v1492
        %2033 = vmatpush.bf16.msra.mxu0 %v1488
        %2034 = vmatpush.bf16.msra.mxu0 %v1484
        %2035 = vmatpush.bf16.msra.mxu0 %v1480
        %2036 = vmatpush.bf16.msra.mxu0 %v1476
        %2037 = vmatpush.bf16.msra.mxu0 %v1472
        %2038 = vmatmul.bf16.gmra.mxu0 %v594
        %v2039 = vpop.f32.mrf.mxu0
        %v2040 = vadd.f32 %v2027, %v2039
        %v2041 = vpop.f32.mrf.mxu0
        %2042 = vdwg.mxu0
        %2043 = vmatpush.bf16.msra.mxu0 %v1532
        %2044 = vmatpush.bf16.msra.mxu0 %v1528
        %2045 = vmatpush.bf16.msra.mxu0 %v1524
        %2046 = vmatpush.bf16.msra.mxu0 %v1520
        %2047 = vmatpush.bf16.msra.mxu0 %v1516
        %2048 = vmatpush.bf16.msra.mxu0 %v1512
        %2049 = vmatpush.bf16.msra.mxu0 %v1508
        %2050 = vmatpush.bf16.msra.mxu0 %v1504
        %2051 = vmatmul.bf16.gmra.mxu0 %v595
        %v2052 = vpop.f32.mrf.mxu0
        %v2053 = vadd.f32 %v2040, %v2052
        %v2054 = vpop.f32.mrf.mxu0
        %2055 = vdwg.mxu0
        %2056 = vmatpush.bf16.msra.mxu0 %v1564
        %2057 = vmatpush.bf16.msra.mxu0 %v1560
        %2058 = vmatpush.bf16.msra.mxu0 %v1556
        %2059 = vmatpush.bf16.msra.mxu0 %v1552
        %2060 = vmatpush.bf16.msra.mxu0 %v1548
        %2061 = vmatpush.bf16.msra.mxu0 %v1544
        %2062 = vmatpush.bf16.msra.mxu0 %v1540
        %2063 = vmatpush.bf16.msra.mxu0 %v1536
        %2064 = vmatmul.bf16.gmra.mxu0 %v596
        %v2065 = vpop.f32.mrf.mxu0
        %v2066 = vadd.f32 %v2053, %v2065
        %v2067 = vpop.f32.mrf.mxu0
        %2068 = vdwg.mxu0
        %2069 = vmatpush.bf16.msra.mxu0 %v1596
        %2070 = vmatpush.bf16.msra.mxu0 %v1592
        %2071 = vmatpush.bf16.msra.mxu0 %v1588
        %2072 = vmatpush.bf16.msra.mxu0 %v1584
        %2073 = vmatpush.bf16.msra.mxu0 %v1580
        %2074 = vmatpush.bf16.msra.mxu0 %v1576
        %2075 = vmatpush.bf16.msra.mxu0 %v1572
        %2076 = vmatpush.bf16.msra.mxu0 %v1568
        %2077 = vmatmul.bf16.gmra.mxu0 %v597
        %v2078 = vpop.f32.mrf.mxu0
        %v2079 = vadd.f32 %v2066, %v2078
        %v2080 = vpop.f32.mrf.mxu0
        %2081 = vdwg.mxu0
        %2082 = vmatpush.bf16.msra.mxu0 %v1628
        %2083 = vmatpush.bf16.msra.mxu0 %v1624
        %2084 = vmatpush.bf16.msra.mxu0 %v1620
        %2085 = vmatpush.bf16.msra.mxu0 %v1616
        %2086 = vmatpush.bf16.msra.mxu0 %v1612
        %2087 = vmatpush.bf16.msra.mxu0 %v1608
        %2088 = vmatpush.bf16.msra.mxu0 %v1604
        %2089 = vmatpush.bf16.msra.mxu0 %v1600
        %2090 = vmatmul.bf16.gmra.mxu0 %v598
        %v2091 = vpop.f32.mrf.mxu0
        %v2092 = vadd.f32 %v2079, %v2091
        %v2093 = vpop.f32.mrf.mxu0
        %2094 = vdwg.mxu0
        %2095 = vmatpush.bf16.msra.mxu0 %v1405
        %2096 = vmatpush.bf16.msra.mxu0 %v1401
        %2097 = vmatpush.bf16.msra.mxu0 %v1397
        %2098 = vmatpush.bf16.msra.mxu0 %v1393
        %2099 = vmatpush.bf16.msra.mxu0 %v1389
        %2100 = vmatpush.bf16.msra.mxu0 %v1385
        %2101 = vmatpush.bf16.msra.mxu0 %v1381
        %2102 = vmatpush.bf16.msra.mxu0 %v1377
        %2103 = vmatmul.bf16.gmra.mxu0 %v591
        %v2104 = vpop.f32.mrf.mxu0
        %v2105 = vadd.f32 0.0, %v2104
        %v2106 = vpop.f32.mrf.mxu0
        %2107 = vdwg.mxu0
        %2108 = vmatpush.bf16.msra.mxu0 %v1437
        %2109 = vmatpush.bf16.msra.mxu0 %v1433
        %2110 = vmatpush.bf16.msra.mxu0 %v1429
        %2111 = vmatpush.bf16.msra.mxu0 %v1425
        %2112 = vmatpush.bf16.msra.mxu0 %v1421
        %2113 = vmatpush.bf16.msra.mxu0 %v1417
        %2114 = vmatpush.bf16.msra.mxu0 %v1413
        %2115 = vmatpush.bf16.msra.mxu0 %v1409
        %2116 = vmatmul.bf16.gmra.mxu0 %v592
        %v2117 = vpop.f32.mrf.mxu0
        %v2118 = vadd.f32 %v2105, %v2117
        %v2119 = vpop.f32.mrf.mxu0
        %2120 = vdwg.mxu0
        %2121 = vmatpush.bf16.msra.mxu0 %v1469
        %2122 = vmatpush.bf16.msra.mxu0 %v1465
        %2123 = vmatpush.bf16.msra.mxu0 %v1461
        %2124 = vmatpush.bf16.msra.mxu0 %v1457
        %2125 = vmatpush.bf16.msra.mxu0 %v1453
        %2126 = vmatpush.bf16.msra.mxu0 %v1449
        %2127 = vmatpush.bf16.msra.mxu0 %v1445
        %2128 = vmatpush.bf16.msra.mxu0 %v1441
        %2129 = vmatmul.bf16.gmra.mxu0 %v593
        %v2130 = vpop.f32.mrf.mxu0
        %v2131 = vadd.f32 %v2118, %v2130
        %v2132 = vpop.f32.mrf.mxu0
        %2133 = vdwg.mxu0
        %2134 = vmatpush.bf16.msra.mxu0 %v1501
        %2135 = vmatpush.bf16.msra.mxu0 %v1497
        %2136 = vmatpush.bf16.msra.mxu0 %v1493
        %2137 = vmatpush.bf16.msra.mxu0 %v1489
        %2138 = vmatpush.bf16.msra.mxu0 %v1485
        %2139 = vmatpush.bf16.msra.mxu0 %v1481
        %2140 = vmatpush.bf16.msra.mxu0 %v1477
        %2141 = vmatpush.bf16.msra.mxu0 %v1473
        %2142 = vmatmul.bf16.gmra.mxu0 %v594
        %v2143 = vpop.f32.mrf.mxu0
        %v2144 = vadd.f32 %v2131, %v2143
        %v2145 = vpop.f32.mrf.mxu0
        %2146 = vdwg.mxu0
        %2147 = vmatpush.bf16.msra.mxu0 %v1533
        %2148 = vmatpush.bf16.msra.mxu0 %v1529
        %2149 = vmatpush.bf16.msra.mxu0 %v1525
        %2150 = vmatpush.bf16.msra.mxu0 %v1521
        %2151 = vmatpush.bf16.msra.mxu0 %v1517
        %2152 = vmatpush.bf16.msra.mxu0 %v1513
        %2153 = vmatpush.bf16.msra.mxu0 %v1509
        %2154 = vmatpush.bf16.msra.mxu0 %v1505
        %2155 = vmatmul.bf16.gmra.mxu0 %v595
        %v2156 = vpop.f32.mrf.mxu0
        %v2157 = vadd.f32 %v2144, %v2156
        %v2158 = vpop.f32.mrf.mxu0
        %2159 = vdwg.mxu0
        %2160 = vmatpush.bf16.msra.mxu0 %v1565
        %2161 = vmatpush.bf16.msra.mxu0 %v1561
        %2162 = vmatpush.bf16.msra.mxu0 %v1557
        %2163 = vmatpush.bf16.msra.mxu0 %v1553
        %2164 = vmatpush.bf16.msra.mxu0 %v1549
        %2165 = vmatpush.bf16.msra.mxu0 %v1545
        %2166 = vmatpush.bf16.msra.mxu0 %v1541
        %2167 = vmatpush.bf16.msra.mxu0 %v1537
        %2168 = vmatmul.bf16.gmra.mxu0 %v596
        %v2169 = vpop.f32.mrf.mxu0
        %v2170 = vadd.f32 %v2157, %v2169
        %v2171 = vpop.f32.mrf.mxu0
        %2172 = vdwg.mxu0
        %2173 = vmatpush.bf16.msra.mxu0 %v1597
        %2174 = vmatpush.bf16.msra.mxu0 %v1593
        %2175 = vmatpush.bf16.msra.mxu0 %v1589
        %2176 = vmatpush.bf16.msra.mxu0 %v1585
        %2177 = vmatpush.bf16.msra.mxu0 %v1581
        %2178 = vmatpush.bf16.msra.mxu0 %v1577
        %2179 = vmatpush.bf16.msra.mxu0 %v1573
        %2180 = vmatpush.bf16.msra.mxu0 %v1569
        %2181 = vmatmul.bf16.gmra.mxu0 %v597
        %v2182 = vpop.f32.mrf.mxu0
        %v2183 = vadd.f32 %v2170, %v2182
        %v2184 = vpop.f32.mrf.mxu0
        %2185 = vdwg.mxu0
        %2186 = vmatpush.bf16.msra.mxu0 %v1629
        %2187 = vmatpush.bf16.msra.mxu0 %v1625
        %2188 = vmatpush.bf16.msra.mxu0 %v1621
        %2189 = vmatpush.bf16.msra.mxu0 %v1617
        %2190 = vmatpush.bf16.msra.mxu0 %v1613
        %2191 = vmatpush.bf16.msra.mxu0 %v1609
        %2192 = vmatpush.bf16.msra.mxu0 %v1605
        %2193 = vmatpush.bf16.msra.mxu0 %v1601
        %2194 = vmatmul.bf16.gmra.mxu0 %v598
        %v2195 = vpop.f32.mrf.mxu0
        %v2196 = vadd.f32 %v2183, %v2195
        %v2197 = vpop.f32.mrf.mxu0
        %2198 = vdwg.mxu0
        %2199 = vmatpush.bf16.msra.mxu0 %v1406
        %2200 = vmatpush.bf16.msra.mxu0 %v1402
        %2201 = vmatpush.bf16.msra.mxu0 %v1398
        %2202 = vmatpush.bf16.msra.mxu0 %v1394
        %2203 = vmatpush.bf16.msra.mxu0 %v1390
        %2204 = vmatpush.bf16.msra.mxu0 %v1386
        %2205 = vmatpush.bf16.msra.mxu0 %v1382
        %2206 = vmatpush.bf16.msra.mxu0 %v1378
        %2207 = vmatmul.bf16.gmra.mxu0 %v591
        %v2208 = vpop.f32.mrf.mxu0
        %v2209 = vadd.f32 0.0, %v2208
        %v2210 = vpop.f32.mrf.mxu0
        %2211 = vdwg.mxu0
        %2212 = vmatpush.bf16.msra.mxu0 %v1438
        %2213 = vmatpush.bf16.msra.mxu0 %v1434
        %2214 = vmatpush.bf16.msra.mxu0 %v1430
        %2215 = vmatpush.bf16.msra.mxu0 %v1426
        %2216 = vmatpush.bf16.msra.mxu0 %v1422
        %2217 = vmatpush.bf16.msra.mxu0 %v1418
        %2218 = vmatpush.bf16.msra.mxu0 %v1414
        %2219 = vmatpush.bf16.msra.mxu0 %v1410
        %2220 = vmatmul.bf16.gmra.mxu0 %v592
        %v2221 = vpop.f32.mrf.mxu0
        %v2222 = vadd.f32 %v2209, %v2221
        %v2223 = vpop.f32.mrf.mxu0
        %2224 = vdwg.mxu0
        %2225 = vmatpush.bf16.msra.mxu0 %v1470
        %2226 = vmatpush.bf16.msra.mxu0 %v1466
        %2227 = vmatpush.bf16.msra.mxu0 %v1462
        %2228 = vmatpush.bf16.msra.mxu0 %v1458
        %2229 = vmatpush.bf16.msra.mxu0 %v1454
        %2230 = vmatpush.bf16.msra.mxu0 %v1450
        %2231 = vmatpush.bf16.msra.mxu0 %v1446
        %2232 = vmatpush.bf16.msra.mxu0 %v1442
        %2233 = vmatmul.bf16.gmra.mxu0 %v593
        %v2234 = vpop.f32.mrf.mxu0
        %v2235 = vadd.f32 %v2222, %v2234
        %v2236 = vpop.f32.mrf.mxu0
        %2237 = vdwg.mxu0
        %2238 = vmatpush.bf16.msra.mxu0 %v1502
        %2239 = vmatpush.bf16.msra.mxu0 %v1498
        %2240 = vmatpush.bf16.msra.mxu0 %v1494
        %2241 = vmatpush.bf16.msra.mxu0 %v1490
        %2242 = vmatpush.bf16.msra.mxu0 %v1486
        %2243 = vmatpush.bf16.msra.mxu0 %v1482
        %2244 = vmatpush.bf16.msra.mxu0 %v1478
        %2245 = vmatpush.bf16.msra.mxu0 %v1474
        %2246 = vmatmul.bf16.gmra.mxu0 %v594
        %v2247 = vpop.f32.mrf.mxu0
        %v2248 = vadd.f32 %v2235, %v2247
        %v2249 = vpop.f32.mrf.mxu0
        %2250 = vdwg.mxu0
        %2251 = vmatpush.bf16.msra.mxu0 %v1534
        %2252 = vmatpush.bf16.msra.mxu0 %v1530
        %2253 = vmatpush.bf16.msra.mxu0 %v1526
        %2254 = vmatpush.bf16.msra.mxu0 %v1522
        %2255 = vmatpush.bf16.msra.mxu0 %v1518
        %2256 = vmatpush.bf16.msra.mxu0 %v1514
        %2257 = vmatpush.bf16.msra.mxu0 %v1510
        %2258 = vmatpush.bf16.msra.mxu0 %v1506
        %2259 = vmatmul.bf16.gmra.mxu0 %v595
        %v2260 = vpop.f32.mrf.mxu0
        %v2261 = vadd.f32 %v2248, %v2260
        %v2262 = vpop.f32.mrf.mxu0
        %2263 = vdwg.mxu0
        %2264 = vmatpush.bf16.msra.mxu0 %v1566
        %2265 = vmatpush.bf16.msra.mxu0 %v1562
        %2266 = vmatpush.bf16.msra.mxu0 %v1558
        %2267 = vmatpush.bf16.msra.mxu0 %v1554
        %2268 = vmatpush.bf16.msra.mxu0 %v1550
        %2269 = vmatpush.bf16.msra.mxu0 %v1546
        %2270 = vmatpush.bf16.msra.mxu0 %v1542
        %2271 = vmatpush.bf16.msra.mxu0 %v1538
        %2272 = vmatmul.bf16.gmra.mxu0 %v596
        %v2273 = vpop.f32.mrf.mxu0
        %v2274 = vadd.f32 %v2261, %v2273
        %v2275 = vpop.f32.mrf.mxu0
        %2276 = vdwg.mxu0
        %2277 = vmatpush.bf16.msra.mxu0 %v1598
        %2278 = vmatpush.bf16.msra.mxu0 %v1594
        %2279 = vmatpush.bf16.msra.mxu0 %v1590
        %2280 = vmatpush.bf16.msra.mxu0 %v1586
        %2281 = vmatpush.bf16.msra.mxu0 %v1582
        %2282 = vmatpush.bf16.msra.mxu0 %v1578
        %2283 = vmatpush.bf16.msra.mxu0 %v1574
        %2284 = vmatpush.bf16.msra.mxu0 %v1570
        %2285 = vmatmul.bf16.gmra.mxu0 %v597
        %v2286 = vpop.f32.mrf.mxu0
        %v2287 = vadd.f32 %v2274, %v2286
        %v2288 = vpop.f32.mrf.mxu0
        %2289 = vdwg.mxu0
        %2290 = vmatpush.bf16.msra.mxu0 %v1630
        %2291 = vmatpush.bf16.msra.mxu0 %v1626
        %2292 = vmatpush.bf16.msra.mxu0 %v1622
        %2293 = vmatpush.bf16.msra.mxu0 %v1618
        %2294 = vmatpush.bf16.msra.mxu0 %v1614
        %2295 = vmatpush.bf16.msra.mxu0 %v1610
        %2296 = vmatpush.bf16.msra.mxu0 %v1606
        %2297 = vmatpush.bf16.msra.mxu0 %v1602
        %2298 = vmatmul.bf16.gmra.mxu0 %v598
        %v2299 = vpop.f32.mrf.mxu0
        %v2300 = vadd.f32 %v2287, %v2299
        %v2301 = vpop.f32.mrf.mxu0
        %2302 = vdwg.mxu0
        %v2303 = vadd.f32 %v315, %v1988
        %v2304 = vadd.f32 %v316, %v2092
        %v2305 = vadd.f32 %v317, %v2196
        %v2306 = vadd.f32 %v318, %v2300
        %2307 = vst [vmem:[#allocation2] sm:$0xff] %v2303
        %2308 = vst [vmem:[#allocation2 + $0x8] sm:$0xff] %v2304
        %2309 = vst [vmem:[#allocation2 + $0x10] sm:$0xff] %v2305
        %2310 = vst [vmem:[#allocation2 + $0x18] sm:$0xff] %v2306
        %p2311 = scmp.eq.s32.totalorder %s27, 3
        // Predicated region
        $region45: #{_lambda_.20} parent=31 // pred_check
          %p2312 = pneg %p2311
        $region46: #{_lambda_.20} parent=31 // pred_check_branch
          %2314 = sbr.rel (%p2312) target = $region48
        $region47: #{_lambda_.20} parent=31 // pred_region
          %v2315 = vld [vmem:[#allocation2] sm:$0xff]
          %v2316 = vld [vmem:[#allocation2 + $0x8] sm:$0xff]
          %v2317 = vld [vmem:[#allocation2 + $0x10] sm:$0xff]
          %v2318 = vld [vmem:[#allocation2 + $0x18] sm:$0xff]
          %v2319 = vld [vmem:[%s242] ss:$8 sm:$0xf]
          %v2321 = vperm.slane %v2319, 0
          %v2322 = vperm.slane %v2319, 1
          %v2323 = vperm.slane %v2319, 2
          %v2324 = vperm.slane %v2319, 3
          %v2329 = vadd.f32 %v2315, %v2321
          %v2330 = vadd.f32 %v2316, %v2322
          %v2331 = vadd.f32 %v2317, %v2323
          %v2332 = vadd.f32 %v2318, %v2324
          %v2333 = vmax.f32 %v2329, 0.0
          %v2334 = vmax.f32 %v2330, 0.0
          %v2335 = vmax.f32 %v2331, 0.0
          %v2336 = vmax.f32 %v2332, 0.0
          %s2337 = scalar_lea.vmem %s242, 1 [#allocation5]
          %v2338 = vld [vmem:[%s2337] ss:$8 sm:$0xf]
          %v2340 = vperm.slane %v2338, 0
          %v2341 = vperm.slane %v2338, 1
          %v2342 = vperm.slane %v2338, 2
          %v2343 = vperm.slane %v2338, 3
          %v2348 = vadd.f32 %v2333, %v2340
          %v2349 = vadd.f32 %v2334, %v2341
          %v2350 = vadd.f32 %v2335, %v2342
          %v2351 = vadd.f32 %v2336, %v2343
          %v2352 = vpack.c.bf16 %v2349, %v2348
          %v2353 = vpack.c.bf16 %v2351, %v2350
          %2354 = vst [vmem:[%s305] sm:$0xff] %v2352
          %2355 = vst [vmem:[%s305 + $0x8] sm:$0xff] %v2353
        $region48: #{_lambda_.20} parent=31 // pred_fallthru
          _
        %s2356 = smul.u32 4, %s26
        %p2357 = scmp.lt.s32.totalorder %s25, 0
        %s2358 = scalar_select %p2357, %s25, 0
        %p2359 = scmp.lt.s32.totalorder %s2356, 31
        %s2360 = scalar_select %p2359, %s2356, 31
        %s2361 = smul.addr %s2358, 32
        %s2362 = sadd.s32 %s2360, %s2361
        %s2363 = smul.addr %s2362, 4
        %s2364 = scalar_lea.vmem %s3, %s2363
        // Predicated region
        $region49: #{_lambda_.20} parent=31 // pred_check
          %p2365 = pneg %p141
        $region50: #{_lambda_.20} parent=31 // pred_check_branch
          %2367 = sbr.rel (%p2365) target = $region52
        $region51: #{_lambda_.20} parent=31 // pred_region
          %s2368 = smul.u32 4, %s26
        $region52: #{_lambda_.20} parent=31 // pred_fallthru
          _
      $region32: #{_lambda_.20} parent=5 // pred_fallthru
        _
      %p2369 = scmp.le.s32.totalorder 2, %s15
      // Predicated region
      $region53: #{_lambda_.20} parent=5 // pred_check
        %p2370 = pneg %p2369
      $region54: #{_lambda_.20} parent=5 // pred_check_branch
        %2372 = sbr.rel (%p2370) target = $region56
      $region55: #{_lambda_.20} parent=5 // pred_region
        %s2373 = ssub.s32 %s15, 2
        // Predicated region
        $region57: #{_lambda_.20} parent=55 // pred_check
          %p2374 = pneg %p147
        $region58: #{_lambda_.20} parent=55 // pred_check_branch
          %2376 = sbr.rel (%p2374) target = $region60
        $region59: #{_lambda_.20} parent=55 // pred_region
          %s2377 = smul.u32 4, %s29
          %p2378 = scmp.lt.s32.totalorder %s28, 0
          %s2379 = scalar_select %p2378, %s28, 0
          %p2380 = scmp.lt.s32.totalorder %s2377, 31
          %s2381 = scalar_select %p2380, %s2377, 31
          %s2382 = smul.addr %s2379, 32
          %s2383 = sadd.s32 %s2381, %s2382
          %s2384 = smul.addr %s2383, 4
          %s2385 = scalar_lea.vmem %s3, %s2384
        $region60: #{_lambda_.20} parent=55 // pred_fallthru
          _
      $region56: #{_lambda_.20} parent=5 // pred_fallthru
        _
    $region6: #{_lambda_.20} parent=1 // loop_footer
      %s19 = sadd.s32 1, %s15
    $region7: #{_lambda_.20} parent=1 // loop_footer_branch
      %14 = sbr.rel target = $region3
    $region8: #{_lambda_.20} parent=1 // loop_exit
      _
    %2386 = vsyncpa [#allocation4], 1
    %s2387 = scalar_lea.sflag [#allocation4], 1
    %2388 = vsyncpa %s2387, 1
    %2389 = vsyncpa [#allocation6], 1
    %s2390 = scalar_lea.sflag [#allocation6], 1
    %2391 = vsyncpa %s2390, 1

</llo_original>
